<compile_context>
chip_gen: v7x
topology: tpu7x:2x2x1
jax: 0.10.0
libtpu: 0.0.40
codegen_flags: <defaults>
</compile_context>

<pallas_src>
import math

import jax
import jax.numpy as jnp
from jax.experimental import pallas as pl
from jax.experimental.pallas import tpu as pltpu

MXU_DTYPE = jnp.bfloat16   # MXU operand dtype; accumulation stays float32

# Column-phase decomposition of a 3x3 conv applied after 2x nearest upsampling:
# output column 2j+b only reads original columns {j-1, j} (b=0) or {j, j+1} (b=1).
# _COL_START gives each folded tap's start column in the 1-pixel-padded buffer.
_COL_START = ((0, 1), (1, 2))


# ---------------------------------------------------------------------------
# Stage 1: fused  upsample(2x nearest) -> [conv1 | conv3] -> BN1 -> ELU(conv1)
# ---------------------------------------------------------------------------
def _stage1_kernel(x_ref, w_ref, p_ref, h_ref, s_ref, pad_ref):
    """x_ref   : (1, H, W, Cin)           bf16  pre-upsample input (one batch elem)
       w_ref   : (12, Cin, Ntot)          bf16  phase-folded taps, index (b*3+di)*2+v
       p_ref   : (2, Ntot)                f32   [scale ; shift] per output column
       h_ref   : (2H*W, 2*Chalf)          bf16  ELU(BN1(conv1)), column-phase packed
       s_ref   : (2H*W, 2*Cout)           bf16  conv3 skip,      column-phase packed
       pad_ref : (2H+2, W+2, Cin) scratch bf16  row-upsampled, zero-padded input"""
    hh, ww, cin = x_ref.shape[1], x_ref.shape[2], x_ref.shape[3]
    hu = 2 * hh
    c_half = h_ref.shape[1] // 2
    c_out = s_ref.shape[1] // 2
    ntot = c_half + c_out

    # Zero the halo, then write the row-upsampled input into the interior.  The row
    # repeat is a broadcast + leading-dim reshape (layout-safe on Mosaic).
    pad_ref[...] = jnp.zeros(pad_ref.shape, pad_ref.dtype)
    x = x_ref[0]
    x_up = jnp.broadcast_to(x[:, None, :, :], (hh, 2, ww, cin)).reshape(hu, ww, cin)
    pad_ref[1:hu + 1, 1:ww + 1, :] = x_up

    scale = p_ref[0:1, :]
    shift = p_ref[1:2, :]

    for b in range(2):                                     # output-column parity
        acc = jnp.zeros((hu * ww, ntot), jnp.float32)
        for di in range(3):                                # row taps (upsampled grid)
            for v in range(2):                             # folded column taps
                c0 = _COL_START[b][v]
                tap = pad_ref[di:di + hu, c0:c0 + ww, :].reshape(hu * ww, cin)
                acc += jnp.dot(tap, w_ref[(b * 3 + di) * 2 + v],
                               preferred_element_type=jnp.float32)
        y = acc * scale + shift
        h = y[:, :c_half]
        h = jnp.where(h > 0.0, h, jnp.exp(h) - 1.0)        # ELU on the conv1 half only
        h_ref[:, b * c_half:(b + 1) * c_half] = h.astype(h_ref.dtype)
        s_ref[:, b * c_out:(b + 1) * c_out] = y[:, c_half:].astype(s_ref.dtype)


# ---------------------------------------------------------------------------
# Stage 2: fused  conv2 -> (+skip) -> BN2 -> ELU
# ---------------------------------------------------------------------------
def _stage2_kernel(h_ref, w_ref, skip_ref, p_ref, o_ref, pad_ref):
    """h_ref    : (1, Hu, Wu, Chalf)   bf16
       w_ref    : (9, Chalf, Cout)     bf16  taps, index di*3 + dj
       skip_ref : (Hu*Wu, Cout)        bf16
       p_ref    : (2, Cout)            f32   [scale ; shift]
       o_ref    : (Hu*Wu, Cout)        f32
       pad_ref  : (Hu+2, Wu+2, Chalf)  bf16 scratch, zero-padded h"""
    hu, wu, ch = h_ref.shape[1], h_ref.shape[2], h_ref.shape[3]
    m = hu * wu
    c_out = o_ref.shape[1]

    pad_ref[...] = jnp.zeros(pad_ref.shape, pad_ref.dtype)
    pad_ref[1:hu + 1, 1:wu + 1, :] = h_ref[0]

    acc = jnp.zeros((m, c_out), jnp.float32)
    for di in range(3):
        for dj in range(3):
            tap = pad_ref[di:di + hu, dj:dj + wu, :].reshape(m, ch)
            acc += jnp.dot(tap, w_ref[di * 3 + dj],
                           preferred_element_type=jnp.float32)

    y = (acc + skip_ref[...].astype(jnp.float32)) * p_ref[0:1, :] + p_ref[1:2, :]
    o_ref[...] = jnp.where(y > 0.0, y, jnp.exp(y) - 1.0).astype(o_ref.dtype)


# ---------------------------------------------------------------------------
# Glue helpers
# ---------------------------------------------------------------------------
def _fold_bn(bn):
    gamma, beta, mean, var, eps = bn
    s = gamma / jnp.sqrt(var + eps)
    return s, beta - mean * s


def _taps(w):
    """PyTorch [Cout, Cin, 3, 3] -> tap matrices [3(di), 3(dj), Cin, Cout]."""
    return jnp.transpose(w, (2, 3, 1, 0))


def _vmem_limit(block_bytes):
    # Cap below the smallest physical VMEM (v7x: 64 MiB); generous floor elsewhere.
    return int(min(48 << 20, max(16 << 20, 2 * int(block_bytes) + (4 << 20))))


# ---------------------------------------------------------------------------
# ResUp forward (eval-mode BN), 2 pallas_calls total
# ---------------------------------------------------------------------------
def res_up_forward(x_nchw, params, scale_factor=2):
    assert scale_factor == 2, "only the module default scale_factor=2 is supported"
    n, cin, hh, ww = x_nchw.shape
    x = jnp.transpose(x_nchw, (0, 2, 3, 1)).astype(MXU_DTYPE)        # NHWC, bf16

    w1, b1 = params["w1"], params["b1"]
    w2, b2 = params["w2"], params["b2"]
    w3, b3 = params["w3"], params["b3"]
    assert w1.shape[2] == 3, "only the module default kernel_size=3 is supported"
    c_half, c_out = w1.shape[0], w3.shape[0]
    ntot = c_half + c_out
    hu, wu = 2 * hh, 2 * ww
    m1 = hu * ww                      # rows per batch elem, column-phase packed
    m2 = hu * wu                      # rows per batch elem, full resolution

    # ---- stage 1: shared-input conv1|conv3, upsample folded into the taps -------
    w_cat = _taps(jnp.concatenate([w1, w3], axis=0))                 # [3,3,Cin,Ntot]
    wk1 = jnp.stack([
        jnp.stack([w_cat[:, 0], w_cat[:, 1] + w_cat[:, 2]], axis=1),   # phase b=0
        jnp.stack([w_cat[:, 0] + w_cat[:, 1], w_cat[:, 2]], axis=1),   # phase b=1
    ], axis=0).reshape(12, cin, ntot).astype(MXU_DTYPE)
    s1, t1 = _fold_bn(params["bn1"])
    p1 = jnp.stack([
        jnp.concatenate([s1, jnp.ones((c_out,), jnp.float32)]),         # scale
        jnp.concatenate([b1 * s1 + t1, b3]),                            # bias folded
    ]).astype(jnp.float32)

    bytes1 = (hh * ww * cin * 2 + wk1.size * 2 + p1.size * 4
              + m1 * 2 * ntot * 2                        # h + skip output blocks
              + (hu + 2) * (ww + 2) * cin * 2            # halo scratch
              + m1 * ntot * 4)                           # accumulator
    h_packed, skip_packed = pl.pallas_call(
        _stage1_kernel,
        out_shape=(jax.ShapeDtypeStruct((n * m1, 2 * c_half), MXU_DTYPE),
                   jax.ShapeDtypeStruct((n * m1, 2 * c_out), MXU_DTYPE)),
        grid_spec=pltpu.PrefetchScalarGridSpec(
            num_scalar_prefetch=0,
            grid=(n,),
            in_specs=[
                pl.BlockSpec((1, hh, ww, cin), lambda i: (i, 0, 0, 0)),
                pl.BlockSpec((12, cin, ntot), lambda i: (0, 0, 0)),
                pl.BlockSpec((2, ntot), lambda i: (0, 0)),
            ],
            out_specs=[
                pl.BlockSpec((m1, 2 * c_half), lambda i: (i, 0)),
                pl.BlockSpec((m1, 2 * c_out), lambda i: (i, 0)),
            ],
            scratch_shapes=[pltpu.VMEM((hu + 2, ww + 2, cin), MXU_DTYPE)],
        ),
        compiler_params=pltpu.CompilerParams(
            dimension_semantics=("parallel",),
            vmem_limit_bytes=_vmem_limit(bytes1)),
    )(x, wk1, p1)

    # Column-phase packed [N*2H*W, 2*C] is exactly the contiguous layout of
    # [N, 2H, 2W, C]: these reshapes are free (no data movement).
    h_nhwc = h_packed.reshape(n, hu, wu, c_half)
    skip_flat = skip_packed.reshape(n * m2, c_out)

    # ---- stage 2: conv2 + skip add + BN2 + ELU ----------------------------------
    wk2 = _taps(w2).reshape(9, c_half, c_out).astype(MXU_DTYPE)
    s2, t2 = _fold_bn(params["bn2"])
    p2 = jnp.stack([s2, b2 * s2 + t2]).astype(jnp.float32)

    bytes2 = (m2 * c_half * 2 + wk2.size * 2 + p2.size * 4
              + m2 * c_out * 2                           # skip block (bf16)
              + m2 * c_out * 4                           # output block (f32)
              + (hu + 2) * (wu + 2) * c_half * 2         # halo scratch
              + m2 * c_out * 4)                          # accumulator
    out_flat = pl.pallas_call(
        _stage2_kernel,
        out_shape=jax.ShapeDtypeStruct((n * m2, c_out), jnp.float32),
        grid_spec=pltpu.PrefetchScalarGridSpec(
            num_scalar_prefetch=0,
            grid=(n,),
            in_specs=[
                pl.BlockSpec((1, hu, wu, c_half), lambda i: (i, 0, 0, 0)),
                pl.BlockSpec((9, c_half, c_out), lambda i: (0, 0, 0)),
                pl.BlockSpec((m2, c_out), lambda i: (i, 0)),
                pl.BlockSpec((2, c_out), lambda i: (0, 0)),
            ],
            out_specs=pl.BlockSpec((m2, c_out), lambda i: (i, 0)),
            scratch_shapes=[pltpu.VMEM((hu + 2, wu + 2, c_half), MXU_DTYPE)],
        ),
        compiler_params=pltpu.CompilerParams(
            dimension_semantics=("parallel",),
            vmem_limit_bytes=_vmem_limit(bytes2)),
    )(h_nhwc, wk2, skip_flat, p2)

    out = out_flat.reshape(n, hu, wu, c_out)
    # TODO(synk): if the surrounding model is NHWC, return `out` directly and skip
    # this transpose (kept to match the PyTorch NCHW interface).
    return jnp.transpose(out, (0, 3, 1, 2))


# ---------------------------------------------------------------------------
# Pure-JAX reference (lax.conv) for correctness checking
# ---------------------------------------------------------------------------
def res_up_reference(x_nchw, params, scale_factor=2):
    def conv(x, w, b, pad):
        y = jax.lax.conv_general_dilated(
            x, w, window_strides=(1, 1), padding=[(pad, pad), (pad, pad)],
            dimension_numbers=("NCHW", "OIHW", "NCHW"))
        return y + b[None, :, None, None]

    def bn(x, bnp):
        s, t = _fold_bn(bnp)
        return x * s[None, :, None, None] + t[None, :, None, None]

    def elu(x):
        return jnp.where(x > 0, x, jnp.expm1(x))

    k = params["w1"].shape[2]
    pad = k // 2
    x = jnp.repeat(jnp.repeat(x_nchw, scale_factor, axis=2), scale_factor, axis=3)
    skip = conv(x, params["w3"], params["b3"], pad)
    h = elu(bn(conv(x, params["w1"], params["b1"], pad), params["bn1"]))
    h = conv(h, params["w2"], params["b2"], pad)
    return elu(bn(h + skip, params["bn2"]))


# ---------------------------------------------------------------------------
# Deterministic parameter initialization (PyTorch-like uniform fan-in bounds)
# ---------------------------------------------------------------------------
def _init_conv(key, cout, cin, k):
    kw_, kb_ = jax.random.split(key)
    bound = 1.0 / math.sqrt(cin * k * k)
    w = jax.random.uniform(kw_, (cout, cin, k, k), jnp.float32, -bound, bound)
    b = jax.random.uniform(kb_, (cout,), jnp.float32, -bound, bound)
    return w, b


def _init_bn(key, c):
    k1, k2, k3 = jax.random.split(key, 3)
    gamma = 1.0 + 0.1 * jax.random.normal(k1, (c,), jnp.float32)
    beta = 0.1 * jax.random.normal(k2, (c,), jnp.float32)
    mean = 0.1 * jax.random.normal(k3, (c,), jnp.float32)
    var = jnp.ones((c,), jnp.float32)
    return (gamma, beta, mean, var, 1e-4)   # eps=0.0001, as in the reference module


def init_res_up_params(key, channel_in, channel_out, kernel_size=3):
    ks = jax.random.split(key, 5)
    w1, b1 = _init_conv(ks[0], channel_in // 2, channel_in, kernel_size)
    w2, b2 = _init_conv(ks[1], channel_out, channel_in // 2, kernel_size)
    w3, b3 = _init_conv(ks[2], channel_out, channel_in, kernel_size)
    return {
        "w1": w1, "b1": b1, "bn1": _init_bn(ks[3], channel_in // 2),
        "w2": w2, "b2": b2, "bn2": _init_bn(ks[4], channel_out),
        "w3": w3, "b3": b3,
    }


if __name__ == "__main__":
    key = jax.random.PRNGKey(0)
    k_params, k_x = jax.random.split(key)

    # Decoder-realistic channel counts (keeps MXU / output lanes reasonably dense
    # per the perf review) at small batch/spatial: 8x8 -> 16x16 output.
    channel_in, channel_out = 128, 64
    params = init_res_up_params(k_params, channel_in, channel_out, kernel_size=3)
    x = jax.random.normal(k_x, (2, channel_in, 8, 8), jnp.float32)   # NCHW

    out = jax.jit(res_up_forward)(x, params)
    jax.block_until_ready(out)
    assert out.shape == (2, channel_out, 16, 16), out.shape

    ref = jax.jit(res_up_reference)(x, params)
    jax.block_until_ready(ref)
    max_err = float(jnp.max(jnp.abs(out - ref)))
    # bf16 MXU operands / bf16 h & skip streams with f32 accumulation.
    assert max_err < 0.1, f"max abs error vs reference: {max_err}"

    print("KERNEL_OK")
</pallas_src>

<mosaic_0001>
module attributes {stable_mosaic.version = 11 : i64} {
  func.func @_stage1_kernel(%arg0: i32, %arg1: memref<1x8x8x128xbf16, #tpu.memory_space<vmem>>, %arg2: memref<12x128x128xbf16, #tpu.memory_space<vmem>>, %arg3: memref<2x128xf32, #tpu.memory_space<vmem>>, %arg4: memref<128x128xbf16, #tpu.memory_space<vmem>>, %arg5: memref<128x128xbf16, #tpu.memory_space<vmem>>, %arg6: memref<18x10x128xbf16, #tpu.memory_space<vmem>>) attributes {dimension_semantics = [#tpu.dimension_semantics<parallel>], iteration_bounds = array<i64: 2>, scalar_prefetch = 0 : i64, scratch_operands = 1 : i64, tpu.core_type = #tpu.core_type<tc>, window_params = [{transform_indices = @transform_0, window_bounds = array<i64: 1, 8, 8, 128>}, {pipeline_mode = #tpu.pipeline_mode<synchronous>, transform_indices = @transform_1, window_bounds = array<i64: 12, 128, 128>}, {pipeline_mode = #tpu.pipeline_mode<synchronous>, transform_indices = @transform_2, window_bounds = array<i64: 2, 128>}, {transform_indices = @transform_3, window_bounds = array<i64: 128, 128>}, {transform_indices = @transform_4, window_bounds = array<i64: 128, 128>}]} {
    %cst = arith.constant 0.000000e+00 : bf16
    %0 = vector.broadcast %cst : bf16 to vector<18x10x128xbf16>
    %c0 = arith.constant 0 : index
    %c0_0 = arith.constant 0 : index
    %c0_1 = arith.constant 0 : index
    %1 = vector.load %arg6[%c0, %c0_0, %c0_1] : memref<18x10x128xbf16, #tpu.memory_space<vmem>>, vector<18x10x128xbf16>
    tpu.vector_store %arg6[%c0, %c0_0, %c0_1], %0 {strides = array<i32>} : memref<18x10x128xbf16, #tpu.memory_space<vmem>>, vector<18x10x128xbf16>,
    %c0_2 = arith.constant 0 : index
    %c0_3 = arith.constant 0 : index
    %c0_4 = arith.constant 0 : index
    %c0_5 = arith.constant 0 : index
    %2 = vector.load %arg1[%c0_2, %c0_3, %c0_4, %c0_5] : memref<1x8x8x128xbf16, #tpu.memory_space<vmem>>, vector<1x8x8x128xbf16>
    %3 = vector.shape_cast %2 : vector<1x8x8x128xbf16> to vector<8x8x128xbf16>
    %4 = vector.shape_cast %3 : vector<8x8x128xbf16> to vector<8x1x8x128xbf16>
    %5 = vector.shape_cast %4 : vector<8x1x8x128xbf16> to vector<8x1x8x128xbf16>
    %6 = vector.broadcast %5 : vector<8x1x8x128xbf16> to vector<8x2x8x128xbf16>
    %7 = vector.shape_cast %6 : vector<8x2x8x128xbf16> to vector<16x8x128xbf16>
    %c1 = arith.constant 1 : index
    %c1_6 = arith.constant 1 : index
    %c0_7 = arith.constant 0 : index
    %8 = vector.load %arg6[%c1, %c1_6, %c0_7] : memref<18x10x128xbf16, #tpu.memory_space<vmem>>, vector<16x8x128xbf16>
    tpu.vector_store %arg6[%c1, %c1_6, %c0_7], %7 {strides = array<i32>} : memref<18x10x128xbf16, #tpu.memory_space<vmem>>, vector<16x8x128xbf16>,
    %c0_8 = arith.constant 0 : index
    %c0_9 = arith.constant 0 : index
    %9 = vector.load %arg3[%c0_8, %c0_9] : memref<2x128xf32, #tpu.memory_space<vmem>>, vector<1x128xf32>
    %c1_10 = arith.constant 1 : index
    %c0_11 = arith.constant 0 : index
    %10 = vector.load %arg3[%c1_10, %c0_11] : memref<2x128xf32, #tpu.memory_space<vmem>>, vector<1x128xf32>
    %cst_12 = arith.constant 0.000000e+00 : f32
    %11 = vector.broadcast %cst_12 : f32 to vector<128x128xf32>
    %c0_13 = arith.constant 0 : index
    %c0_14 = arith.constant 0 : index
    %c0_15 = arith.constant 0 : index
    %12 = vector.load %arg6[%c0_13, %c0_14, %c0_15] : memref<18x10x128xbf16, #tpu.memory_space<vmem>>, vector<16x8x128xbf16>
    %13 = vector.shape_cast %12 : vector<16x8x128xbf16> to vector<128x128xbf16>
    %c0_16 = arith.constant 0 : index
    %c0_17 = arith.constant 0 : index
    %c0_18 = arith.constant 0 : index
    %14 = vector.load %arg2[%c0_16, %c0_17, %c0_18] : memref<12x128x128xbf16, #tpu.memory_space<vmem>>, vector<1x128x128xbf16>
    %15 = vector.shape_cast %14 : vector<1x128x128xbf16> to vector<128x128xbf16>
    %cst_19 = arith.constant dense<0.000000e+00> : vector<128x128xf32>
    %16 = tpu.matmul %13, %15, %cst_19 {dimension_numbers = #tpu.dot_dimension_numbers<[1], [0], [0], [1], [0, 0, 1, 1], [], []>} : vector<128x128xbf16>, vector<128x128xbf16>, vector<128x128xf32> -> vector<128x128xf32>
    %17 = arith.addf %11, %16 : vector<128x128xf32>
    %c0_20 = arith.constant 0 : index
    %c1_21 = arith.constant 1 : index
    %c0_22 = arith.constant 0 : index
    %18 = vector.load %arg6[%c0_20, %c1_21, %c0_22] : memref<18x10x128xbf16, #tpu.memory_space<vmem>>, vector<16x8x128xbf16>
    %19 = vector.shape_cast %18 : vector<16x8x128xbf16> to vector<128x128xbf16>
    %c1_23 = arith.constant 1 : index
    %c0_24 = arith.constant 0 : index
    %c0_25 = arith.constant 0 : index
    %20 = vector.load %arg2[%c1_23, %c0_24, %c0_25] : memref<12x128x128xbf16, #tpu.memory_space<vmem>>, vector<1x128x128xbf16>
    %21 = vector.shape_cast %20 : vector<1x128x128xbf16> to vector<128x128xbf16>
    %cst_26 = arith.constant dense<0.000000e+00> : vector<128x128xf32>
    %22 = tpu.matmul %19, %21, %cst_26 {dimension_numbers = #tpu.dot_dimension_numbers<[1], [0], [0], [1], [0, 0, 1, 1], [], []>} : vector<128x128xbf16>, vector<128x128xbf16>, vector<128x128xf32> -> vector<128x128xf32>
    %23 = arith.addf %17, %22 : vector<128x128xf32>
    %c1_27 = arith.constant 1 : index
    %c0_28 = arith.constant 0 : index
    %c0_29 = arith.constant 0 : index
    %24 = vector.load %arg6[%c1_27, %c0_28, %c0_29] : memref<18x10x128xbf16, #tpu.memory_space<vmem>>, vector<16x8x128xbf16>
    %25 = vector.shape_cast %24 : vector<16x8x128xbf16> to vector<128x128xbf16>
    %c2 = arith.constant 2 : index
    %c0_30 = arith.constant 0 : index
    %c0_31 = arith.constant 0 : index
    %26 = vector.load %arg2[%c2, %c0_30, %c0_31] : memref<12x128x128xbf16, #tpu.memory_space<vmem>>, vector<1x128x128xbf16>
    %27 = vector.shape_cast %26 : vector<1x128x128xbf16> to vector<128x128xbf16>
    %cst_32 = arith.constant dense<0.000000e+00> : vector<128x128xf32>
    %28 = tpu.matmul %25, %27, %cst_32 {dimension_numbers = #tpu.dot_dimension_numbers<[1], [0], [0], [1], [0, 0, 1, 1], [], []>} : vector<128x128xbf16>, vector<128x128xbf16>, vector<128x128xf32> -> vector<128x128xf32>
    %29 = arith.addf %23, %28 : vector<128x128xf32>
    %c1_33 = arith.constant 1 : index
    %c1_34 = arith.constant 1 : index
    %c0_35 = arith.constant 0 : index
    %30 = vector.load %arg6[%c1_33, %c1_34, %c0_35] : memref<18x10x128xbf16, #tpu.memory_space<vmem>>, vector<16x8x128xbf16>
    %31 = vector.shape_cast %30 : vector<16x8x128xbf16> to vector<128x128xbf16>
    %c3 = arith.constant 3 : index
    %c0_36 = arith.constant 0 : index
    %c0_37 = arith.constant 0 : index
    %32 = vector.load %arg2[%c3, %c0_36, %c0_37] : memref<12x128x128xbf16, #tpu.memory_space<vmem>>, vector<1x128x128xbf16>
    %33 = vector.shape_cast %32 : vector<1x128x128xbf16> to vector<128x128xbf16>
    %cst_38 = arith.constant dense<0.000000e+00> : vector<128x128xf32>
    %34 = tpu.matmul %31, %33, %cst_38 {dimension_numbers = #tpu.dot_dimension_numbers<[1], [0], [0], [1], [0, 0, 1, 1], [], []>} : vector<128x128xbf16>, vector<128x128xbf16>, vector<128x128xf32> -> vector<128x128xf32>
    %35 = arith.addf %29, %34 : vector<128x128xf32>
    %c2_39 = arith.constant 2 : index
    %c0_40 = arith.constant 0 : index
    %c0_41 = arith.constant 0 : index
    %36 = vector.load %arg6[%c2_39, %c0_40, %c0_41] : memref<18x10x128xbf16, #tpu.memory_space<vmem>>, vector<16x8x128xbf16>
    %37 = vector.shape_cast %36 : vector<16x8x128xbf16> to vector<128x128xbf16>
    %c4 = arith.constant 4 : index
    %c0_42 = arith.constant 0 : index
    %c0_43 = arith.constant 0 : index
    %38 = vector.load %arg2[%c4, %c0_42, %c0_43] : memref<12x128x128xbf16, #tpu.memory_space<vmem>>, vector<1x128x128xbf16>
    %39 = vector.shape_cast %38 : vector<1x128x128xbf16> to vector<128x128xbf16>
    %cst_44 = arith.constant dense<0.000000e+00> : vector<128x128xf32>
    %40 = tpu.matmul %37, %39, %cst_44 {dimension_numbers = #tpu.dot_dimension_numbers<[1], [0], [0], [1], [0, 0, 1, 1], [], []>} : vector<128x128xbf16>, vector<128x128xbf16>, vector<128x128xf32> -> vector<128x128xf32>
    %41 = arith.addf %35, %40 : vector<128x128xf32>
    %c2_45 = arith.constant 2 : index
    %c1_46 = arith.constant 1 : index
    %c0_47 = arith.constant 0 : index
    %42 = vector.load %arg6[%c2_45, %c1_46, %c0_47] : memref<18x10x128xbf16, #tpu.memory_space<vmem>>, vector<16x8x128xbf16>
    %43 = vector.shape_cast %42 : vector<16x8x128xbf16> to vector<128x128xbf16>
    %c5 = arith.constant 5 : index
    %c0_48 = arith.constant 0 : index
    %c0_49 = arith.constant 0 : index
    %44 = vector.load %arg2[%c5, %c0_48, %c0_49] : memref<12x128x128xbf16, #tpu.memory_space<vmem>>, vector<1x128x128xbf16>
    %45 = vector.shape_cast %44 : vector<1x128x128xbf16> to vector<128x128xbf16>
    %cst_50 = arith.constant dense<0.000000e+00> : vector<128x128xf32>
    %46 = tpu.matmul %43, %45, %cst_50 {dimension_numbers = #tpu.dot_dimension_numbers<[1], [0], [0], [1], [0, 0, 1, 1], [], []>} : vector<128x128xbf16>, vector<128x128xbf16>, vector<128x128xf32> -> vector<128x128xf32>
    %47 = arith.addf %41, %46 : vector<128x128xf32>
    %48 = vector.broadcast %9 : vector<1x128xf32> to vector<128x128xf32>
    %49 = arith.mulf %47, %48 : vector<128x128xf32>
    %50 = vector.broadcast %10 : vector<1x128xf32> to vector<128x128xf32>
    %51 = arith.addf %49, %50 : vector<128x128xf32>
    %52 = vector.extract_strided_slice %51 {offsets = [0, 0], sizes = [128, 64], strides = [1, 1]} : vector<128x128xf32> to vector<128x64xf32>
    %cst_51 = arith.constant 0.000000e+00 : f32
    %53 = vector.broadcast %cst_51 : f32 to vector<128x64xf32>
    %54 = arith.cmpf ogt, %52, %53 : vector<128x64xf32>
    %55 = math.exp %52 : vector<128x64xf32>
    %cst_52 = arith.constant 1.000000e+00 : f32
    %56 = vector.broadcast %cst_52 : f32 to vector<128x64xf32>
    %57 = arith.subf %55, %56 : vector<128x64xf32>
    %58 = arith.select %54, %52, %57 : vector<128x64xi1>, vector<128x64xf32>
    %59 = arith.truncf %58 : vector<128x64xf32> to vector<128x64xbf16>
    %c0_53 = arith.constant 0 : index
    %c0_54 = arith.constant 0 : index
    %60 = vector.load %arg4[%c0_53, %c0_54] : memref<128x128xbf16, #tpu.memory_space<vmem>>, vector<128x64xbf16>
    tpu.vector_store %arg4[%c0_53, %c0_54], %59 {strides = array<i32>} : memref<128x128xbf16, #tpu.memory_space<vmem>>, vector<128x64xbf16>,
    %61 = vector.extract_strided_slice %51 {offsets = [0, 64], sizes = [128, 64], strides = [1, 1]} : vector<128x128xf32> to vector<128x64xf32>
    %62 = arith.truncf %61 : vector<128x64xf32> to vector<128x64xbf16>
    %c0_55 = arith.constant 0 : index
    %c0_56 = arith.constant 0 : index
    %63 = vector.load %arg5[%c0_55, %c0_56] : memref<128x128xbf16, #tpu.memory_space<vmem>>, vector<128x64xbf16>
    tpu.vector_store %arg5[%c0_55, %c0_56], %62 {strides = array<i32>} : memref<128x128xbf16, #tpu.memory_space<vmem>>, vector<128x64xbf16>,
    %cst_57 = arith.constant 0.000000e+00 : f32
    %64 = vector.broadcast %cst_57 : f32 to vector<128x128xf32>
    %c0_58 = arith.constant 0 : index
    %c1_59 = arith.constant 1 : index
    %c0_60 = arith.constant 0 : index
    %65 = vector.load %arg6[%c0_58, %c1_59, %c0_60] : memref<18x10x128xbf16, #tpu.memory_space<vmem>>, vector<16x8x128xbf16>
    %66 = vector.shape_cast %65 : vector<16x8x128xbf16> to vector<128x128xbf16>
    %c6 = arith.constant 6 : index
    %c0_61 = arith.constant 0 : index
    %c0_62 = arith.constant 0 : index
    %67 = vector.load %arg2[%c6, %c0_61, %c0_62] : memref<12x128x128xbf16, #tpu.memory_space<vmem>>, vector<1x128x128xbf16>
    %68 = vector.shape_cast %67 : vector<1x128x128xbf16> to vector<128x128xbf16>
    %cst_63 = arith.constant dense<0.000000e+00> : vector<128x128xf32>
    %69 = tpu.matmul %66, %68, %cst_63 {dimension_numbers = #tpu.dot_dimension_numbers<[1], [0], [0], [1], [0, 0, 1, 1], [], []>} : vector<128x128xbf16>, vector<128x128xbf16>, vector<128x128xf32> -> vector<128x128xf32>
    %70 = arith.addf %64, %69 : vector<128x128xf32>
    %c0_64 = arith.constant 0 : index
    %c2_65 = arith.constant 2 : index
    %c0_66 = arith.constant 0 : index
    %71 = vector.load %arg6[%c0_64, %c2_65, %c0_66] : memref<18x10x128xbf16, #tpu.memory_space<vmem>>, vector<16x8x128xbf16>
    %72 = vector.shape_cast %71 : vector<16x8x128xbf16> to vector<128x128xbf16>
    %c7 = arith.constant 7 : index
    %c0_67 = arith.constant 0 : index
    %c0_68 = arith.constant 0 : index
    %73 = vector.load %arg2[%c7, %c0_67, %c0_68] : memref<12x128x128xbf16, #tpu.memory_space<vmem>>, vector<1x128x128xbf16>
    %74 = vector.shape_cast %73 : vector<1x128x128xbf16> to vector<128x128xbf16>
    %cst_69 = arith.constant dense<0.000000e+00> : vector<128x128xf32>
    %75 = tpu.matmul %72, %74, %cst_69 {dimension_numbers = #tpu.dot_dimension_numbers<[1], [0], [0], [1], [0, 0, 1, 1], [], []>} : vector<128x128xbf16>, vector<128x128xbf16>, vector<128x128xf32> -> vector<128x128xf32>
    %76 = arith.addf %70, %75 : vector<128x128xf32>
    %c1_70 = arith.constant 1 : index
    %c1_71 = arith.constant 1 : index
    %c0_72 = arith.constant 0 : index
    %77 = vector.load %arg6[%c1_70, %c1_71, %c0_72] : memref<18x10x128xbf16, #tpu.memory_space<vmem>>, vector<16x8x128xbf16>
    %78 = vector.shape_cast %77 : vector<16x8x128xbf16> to vector<128x128xbf16>
    %c8 = arith.constant 8 : index
    %c0_73 = arith.constant 0 : index
    %c0_74 = arith.constant 0 : index
    %79 = vector.load %arg2[%c8, %c0_73, %c0_74] : memref<12x128x128xbf16, #tpu.memory_space<vmem>>, vector<1x128x128xbf16>
    %80 = vector.shape_cast %79 : vector<1x128x128xbf16> to vector<128x128xbf16>
    %cst_75 = arith.constant dense<0.000000e+00> : vector<128x128xf32>
    %81 = tpu.matmul %78, %80, %cst_75 {dimension_numbers = #tpu.dot_dimension_numbers<[1], [0], [0], [1], [0, 0, 1, 1], [], []>} : vector<128x128xbf16>, vector<128x128xbf16>, vector<128x128xf32> -> vector<128x128xf32>
    %82 = arith.addf %76, %81 : vector<128x128xf32>
    %c1_76 = arith.constant 1 : index
    %c2_77 = arith.constant 2 : index
    %c0_78 = arith.constant 0 : index
    %83 = vector.load %arg6[%c1_76, %c2_77, %c0_78] : memref<18x10x128xbf16, #tpu.memory_space<vmem>>, vector<16x8x128xbf16>
    %84 = vector.shape_cast %83 : vector<16x8x128xbf16> to vector<128x128xbf16>
    %c9 = arith.constant 9 : index
    %c0_79 = arith.constant 0 : index
    %c0_80 = arith.constant 0 : index
    %85 = vector.load %arg2[%c9, %c0_79, %c0_80] : memref<12x128x128xbf16, #tpu.memory_space<vmem>>, vector<1x128x128xbf16>
    %86 = vector.shape_cast %85 : vector<1x128x128xbf16> to vector<128x128xbf16>
    %cst_81 = arith.constant dense<0.000000e+00> : vector<128x128xf32>
    %87 = tpu.matmul %84, %86, %cst_81 {dimension_numbers = #tpu.dot_dimension_numbers<[1], [0], [0], [1], [0, 0, 1, 1], [], []>} : vector<128x128xbf16>, vector<128x128xbf16>, vector<128x128xf32> -> vector<128x128xf32>
    %88 = arith.addf %82, %87 : vector<128x128xf32>
    %c2_82 = arith.constant 2 : index
    %c1_83 = arith.constant 1 : index
    %c0_84 = arith.constant 0 : index
    %89 = vector.load %arg6[%c2_82, %c1_83, %c0_84] : memref<18x10x128xbf16, #tpu.memory_space<vmem>>, vector<16x8x128xbf16>
    %90 = vector.shape_cast %89 : vector<16x8x128xbf16> to vector<128x128xbf16>
    %c10 = arith.constant 10 : index
    %c0_85 = arith.constant 0 : index
    %c0_86 = arith.constant 0 : index
    %91 = vector.load %arg2[%c10, %c0_85, %c0_86] : memref<12x128x128xbf16, #tpu.memory_space<vmem>>, vector<1x128x128xbf16>
    %92 = vector.shape_cast %91 : vector<1x128x128xbf16> to vector<128x128xbf16>
    %cst_87 = arith.constant dense<0.000000e+00> : vector<128x128xf32>
    %93 = tpu.matmul %90, %92, %cst_87 {dimension_numbers = #tpu.dot_dimension_numbers<[1], [0], [0], [1], [0, 0, 1, 1], [], []>} : vector<128x128xbf16>, vector<128x128xbf16>, vector<128x128xf32> -> vector<128x128xf32>
    %94 = arith.addf %88, %93 : vector<128x128xf32>
    %c2_88 = arith.constant 2 : index
    %c2_89 = arith.constant 2 : index
    %c0_90 = arith.constant 0 : index
    %95 = vector.load %arg6[%c2_88, %c2_89, %c0_90] : memref<18x10x128xbf16, #tpu.memory_space<vmem>>, vector<16x8x128xbf16>
    %96 = vector.shape_cast %95 : vector<16x8x128xbf16> to vector<128x128xbf16>
    %c11 = arith.constant 11 : index
    %c0_91 = arith.constant 0 : index
    %c0_92 = arith.constant 0 : index
    %97 = vector.load %arg2[%c11, %c0_91, %c0_92] : memref<12x128x128xbf16, #tpu.memory_space<vmem>>, vector<1x128x128xbf16>
    %98 = vector.shape_cast %97 : vector<1x128x128xbf16> to vector<128x128xbf16>
    %cst_93 = arith.constant dense<0.000000e+00> : vector<128x128xf32>
    %99 = tpu.matmul %96, %98, %cst_93 {dimension_numbers = #tpu.dot_dimension_numbers<[1], [0], [0], [1], [0, 0, 1, 1], [], []>} : vector<128x128xbf16>, vector<128x128xbf16>, vector<128x128xf32> -> vector<128x128xf32>
    %100 = arith.addf %94, %99 : vector<128x128xf32>
    %101 = vector.broadcast %9 : vector<1x128xf32> to vector<128x128xf32>
    %102 = arith.mulf %100, %101 : vector<128x128xf32>
    %103 = vector.broadcast %10 : vector<1x128xf32> to vector<128x128xf32>
    %104 = arith.addf %102, %103 : vector<128x128xf32>
    %105 = vector.extract_strided_slice %104 {offsets = [0, 0], sizes = [128, 64], strides = [1, 1]} : vector<128x128xf32> to vector<128x64xf32>
    %cst_94 = arith.constant 0.000000e+00 : f32
    %106 = vector.broadcast %cst_94 : f32 to vector<128x64xf32>
    %107 = arith.cmpf ogt, %105, %106 : vector<128x64xf32>
    %108 = math.exp %105 : vector<128x64xf32>
    %cst_95 = arith.constant 1.000000e+00 : f32
    %109 = vector.broadcast %cst_95 : f32 to vector<128x64xf32>
    %110 = arith.subf %108, %109 : vector<128x64xf32>
    %111 = arith.select %107, %105, %110 : vector<128x64xi1>, vector<128x64xf32>
    %112 = arith.truncf %111 : vector<128x64xf32> to vector<128x64xbf16>
    %c0_96 = arith.constant 0 : index
    %c64 = arith.constant 64 : index
    %113 = vector.load %arg4[%c0_96, %c64] : memref<128x128xbf16, #tpu.memory_space<vmem>>, vector<128x64xbf16>
    tpu.vector_store %arg4[%c0_96, %c64], %112 {strides = array<i32>} : memref<128x128xbf16, #tpu.memory_space<vmem>>, vector<128x64xbf16>,
    %114 = vector.extract_strided_slice %104 {offsets = [0, 64], sizes = [128, 64], strides = [1, 1]} : vector<128x128xf32> to vector<128x64xf32>
    %115 = arith.truncf %114 : vector<128x64xf32> to vector<128x64xbf16>
    %c0_97 = arith.constant 0 : index
    %c64_98 = arith.constant 64 : index
    %116 = vector.load %arg5[%c0_97, %c64_98] : memref<128x128xbf16, #tpu.memory_space<vmem>>, vector<128x64xbf16>
    tpu.vector_store %arg5[%c0_97, %c64_98], %115 {strides = array<i32>} : memref<128x128xbf16, #tpu.memory_space<vmem>>, vector<128x64xbf16>,
    return
  }
  func.func @transform_0(%arg0: i32) -> (i32, i32, i32, i32) {
    %c0_i32 = arith.constant 0 : i32
    %c0_i32_0 = arith.constant 0 : i32
    %c0_i32_1 = arith.constant 0 : i32
    %c0_i32_2 = arith.constant 0 : i32
    return %arg0, %c0_i32, %c0_i32_0, %c0_i32_1 : i32, i32, i32, i32
  }
  func.func @transform_1(%arg0: i32) -> (i32, i32, i32) {
    %c0_i32 = arith.constant 0 : i32
    %c0_i32_0 = arith.constant 0 : i32
    %c0_i32_1 = arith.constant 0 : i32
    %c0_i32_2 = arith.constant 0 : i32
    return %c0_i32, %c0_i32_0, %c0_i32_1 : i32, i32, i32
  }
  func.func @transform_2(%arg0: i32) -> (i32, i32) {
    %c0_i32 = arith.constant 0 : i32
    %c0_i32_0 = arith.constant 0 : i32
    %c0_i32_1 = arith.constant 0 : i32
    return %c0_i32, %c0_i32_0 : i32, i32
  }
  func.func @transform_3(%arg0: i32) -> (i32, i32) {
    %c0_i32 = arith.constant 0 : i32
    %c0_i32_0 = arith.constant 0 : i32
    return %arg0, %c0_i32 : i32, i32
  }
  func.func @transform_4(%arg0: i32) -> (i32, i32) {
    %c0_i32 = arith.constant 0 : i32
    %c0_i32_0 = arith.constant 0 : i32
    return %arg0, %c0_i32 : i32, i32
  }
}

module attributes {stable_mosaic.version = 11 : i64} {
  func.func @_stage2_kernel(%arg0: i32, %arg1: memref<1x16x16x64xbf16, #tpu.memory_space<vmem>>, %arg2: memref<9x64x64xbf16, #tpu.memory_space<vmem>>, %arg3: memref<256x64xbf16, #tpu.memory_space<vmem>>, %arg4: memref<2x64xf32, #tpu.memory_space<vmem>>, %arg5: memref<256x64xf32, #tpu.memory_space<vmem>>, %arg6: memref<18x18x64xbf16, #tpu.memory_space<vmem>>) attributes {dimension_semantics = [#tpu.dimension_semantics<parallel>], iteration_bounds = array<i64: 2>, scalar_prefetch = 0 : i64, scratch_operands = 1 : i64, tpu.core_type = #tpu.core_type<tc>, window_params = [{transform_indices = @transform_0, window_bounds = array<i64: 1, 16, 16, 64>}, {pipeline_mode = #tpu.pipeline_mode<synchronous>, transform_indices = @transform_1, window_bounds = array<i64: 9, 64, 64>}, {transform_indices = @transform_2, window_bounds = array<i64: 256, 64>}, {pipeline_mode = #tpu.pipeline_mode<synchronous>, transform_indices = @transform_3, window_bounds = array<i64: 2, 64>}, {transform_indices = @transform_4, window_bounds = array<i64: 256, 64>}]} {
    %cst = arith.constant 0.000000e+00 : bf16
    %0 = vector.broadcast %cst : bf16 to vector<18x18x64xbf16>
    %c0 = arith.constant 0 : index
    %c0_0 = arith.constant 0 : index
    %c0_1 = arith.constant 0 : index
    %1 = vector.load %arg6[%c0, %c0_0, %c0_1] : memref<18x18x64xbf16, #tpu.memory_space<vmem>>, vector<18x18x64xbf16>
    tpu.vector_store %arg6[%c0, %c0_0, %c0_1], %0 {strides = array<i32>} : memref<18x18x64xbf16, #tpu.memory_space<vmem>>, vector<18x18x64xbf16>,
    %c0_2 = arith.constant 0 : index
    %c0_3 = arith.constant 0 : index
    %c0_4 = arith.constant 0 : index
    %c0_5 = arith.constant 0 : index
    %2 = vector.load %arg1[%c0_2, %c0_3, %c0_4, %c0_5] : memref<1x16x16x64xbf16, #tpu.memory_space<vmem>>, vector<1x16x16x64xbf16>
    %3 = vector.shape_cast %2 : vector<1x16x16x64xbf16> to vector<16x16x64xbf16>
    %c1 = arith.constant 1 : index
    %c1_6 = arith.constant 1 : index
    %c0_7 = arith.constant 0 : index
    %4 = vector.load %arg6[%c1, %c1_6, %c0_7] : memref<18x18x64xbf16, #tpu.memory_space<vmem>>, vector<16x16x64xbf16>
    tpu.vector_store %arg6[%c1, %c1_6, %c0_7], %3 {strides = array<i32>} : memref<18x18x64xbf16, #tpu.memory_space<vmem>>, vector<16x16x64xbf16>,
    %cst_8 = arith.constant 0.000000e+00 : f32
    %5 = vector.broadcast %cst_8 : f32 to vector<256x64xf32>
    %c0_9 = arith.constant 0 : index
    %c0_10 = arith.constant 0 : index
    %c0_11 = arith.constant 0 : index
    %6 = vector.load %arg6[%c0_9, %c0_10, %c0_11] : memref<18x18x64xbf16, #tpu.memory_space<vmem>>, vector<16x16x64xbf16>
    %7 = vector.shape_cast %6 : vector<16x16x64xbf16> to vector<256x64xbf16>
    %c0_12 = arith.constant 0 : index
    %c0_13 = arith.constant 0 : index
    %c0_14 = arith.constant 0 : index
    %8 = vector.load %arg2[%c0_12, %c0_13, %c0_14] : memref<9x64x64xbf16, #tpu.memory_space<vmem>>, vector<1x64x64xbf16>
    %9 = vector.shape_cast %8 : vector<1x64x64xbf16> to vector<64x64xbf16>
    %cst_15 = arith.constant dense<0.000000e+00> : vector<256x64xf32>
    %10 = tpu.matmul %7, %9, %cst_15 {dimension_numbers = #tpu.dot_dimension_numbers<[1], [0], [0], [1], [0, 0, 1, 1], [], []>} : vector<256x64xbf16>, vector<64x64xbf16>, vector<256x64xf32> -> vector<256x64xf32>
    %11 = arith.addf %5, %10 : vector<256x64xf32>
    %c0_16 = arith.constant 0 : index
    %c1_17 = arith.constant 1 : index
    %c0_18 = arith.constant 0 : index
    %12 = vector.load %arg6[%c0_16, %c1_17, %c0_18] : memref<18x18x64xbf16, #tpu.memory_space<vmem>>, vector<16x16x64xbf16>
    %13 = vector.shape_cast %12 : vector<16x16x64xbf16> to vector<256x64xbf16>
    %c1_19 = arith.constant 1 : index
    %c0_20 = arith.constant 0 : index
    %c0_21 = arith.constant 0 : index
    %14 = vector.load %arg2[%c1_19, %c0_20, %c0_21] : memref<9x64x64xbf16, #tpu.memory_space<vmem>>, vector<1x64x64xbf16>
    %15 = vector.shape_cast %14 : vector<1x64x64xbf16> to vector<64x64xbf16>
    %cst_22 = arith.constant dense<0.000000e+00> : vector<256x64xf32>
    %16 = tpu.matmul %13, %15, %cst_22 {dimension_numbers = #tpu.dot_dimension_numbers<[1], [0], [0], [1], [0, 0, 1, 1], [], []>} : vector<256x64xbf16>, vector<64x64xbf16>, vector<256x64xf32> -> vector<256x64xf32>
    %17 = arith.addf %11, %16 : vector<256x64xf32>
    %c0_23 = arith.constant 0 : index
    %c2 = arith.constant 2 : index
    %c0_24 = arith.constant 0 : index
    %18 = vector.load %arg6[%c0_23, %c2, %c0_24] : memref<18x18x64xbf16, #tpu.memory_space<vmem>>, vector<16x16x64xbf16>
    %19 = vector.shape_cast %18 : vector<16x16x64xbf16> to vector<256x64xbf16>
    %c2_25 = arith.constant 2 : index
    %c0_26 = arith.constant 0 : index
    %c0_27 = arith.constant 0 : index
    %20 = vector.load %arg2[%c2_25, %c0_26, %c0_27] : memref<9x64x64xbf16, #tpu.memory_space<vmem>>, vector<1x64x64xbf16>
    %21 = vector.shape_cast %20 : vector<1x64x64xbf16> to vector<64x64xbf16>
    %cst_28 = arith.constant dense<0.000000e+00> : vector<256x64xf32>
    %22 = tpu.matmul %19, %21, %cst_28 {dimension_numbers = #tpu.dot_dimension_numbers<[1], [0], [0], [1], [0, 0, 1, 1], [], []>} : vector<256x64xbf16>, vector<64x64xbf16>, vector<256x64xf32> -> vector<256x64xf32>
    %23 = arith.addf %17, %22 : vector<256x64xf32>
    %c1_29 = arith.constant 1 : index
    %c0_30 = arith.constant 0 : index
    %c0_31 = arith.constant 0 : index
    %24 = vector.load %arg6[%c1_29, %c0_30, %c0_31] : memref<18x18x64xbf16, #tpu.memory_space<vmem>>, vector<16x16x64xbf16>
    %25 = vector.shape_cast %24 : vector<16x16x64xbf16> to vector<256x64xbf16>
    %c3 = arith.constant 3 : index
    %c0_32 = arith.constant 0 : index
    %c0_33 = arith.constant 0 : index
    %26 = vector.load %arg2[%c3, %c0_32, %c0_33] : memref<9x64x64xbf16, #tpu.memory_space<vmem>>, vector<1x64x64xbf16>
    %27 = vector.shape_cast %26 : vector<1x64x64xbf16> to vector<64x64xbf16>
    %cst_34 = arith.constant dense<0.000000e+00> : vector<256x64xf32>
    %28 = tpu.matmul %25, %27, %cst_34 {dimension_numbers = #tpu.dot_dimension_numbers<[1], [0], [0], [1], [0, 0, 1, 1], [], []>} : vector<256x64xbf16>, vector<64x64xbf16>, vector<256x64xf32> -> vector<256x64xf32>
    %29 = arith.addf %23, %28 : vector<256x64xf32>
    %c1_35 = arith.constant 1 : index
    %c1_36 = arith.constant 1 : index
    %c0_37 = arith.constant 0 : index
    %30 = vector.load %arg6[%c1_35, %c1_36, %c0_37] : memref<18x18x64xbf16, #tpu.memory_space<vmem>>, vector<16x16x64xbf16>
    %31 = vector.shape_cast %30 : vector<16x16x64xbf16> to vector<256x64xbf16>
    %c4 = arith.constant 4 : index
    %c0_38 = arith.constant 0 : index
    %c0_39 = arith.constant 0 : index
    %32 = vector.load %arg2[%c4, %c0_38, %c0_39] : memref<9x64x64xbf16, #tpu.memory_space<vmem>>, vector<1x64x64xbf16>
    %33 = vector.shape_cast %32 : vector<1x64x64xbf16> to vector<64x64xbf16>
    %cst_40 = arith.constant dense<0.000000e+00> : vector<256x64xf32>
    %34 = tpu.matmul %31, %33, %cst_40 {dimension_numbers = #tpu.dot_dimension_numbers<[1], [0], [0], [1], [0, 0, 1, 1], [], []>} : vector<256x64xbf16>, vector<64x64xbf16>, vector<256x64xf32> -> vector<256x64xf32>
    %35 = arith.addf %29, %34 : vector<256x64xf32>
    %c1_41 = arith.constant 1 : index
    %c2_42 = arith.constant 2 : index
    %c0_43 = arith.constant 0 : index
    %36 = vector.load %arg6[%c1_41, %c2_42, %c0_43] : memref<18x18x64xbf16, #tpu.memory_space<vmem>>, vector<16x16x64xbf16>
    %37 = vector.shape_cast %36 : vector<16x16x64xbf16> to vector<256x64xbf16>
    %c5 = arith.constant 5 : index
    %c0_44 = arith.constant 0 : index
    %c0_45 = arith.constant 0 : index
    %38 = vector.load %arg2[%c5, %c0_44, %c0_45] : memref<9x64x64xbf16, #tpu.memory_space<vmem>>, vector<1x64x64xbf16>
    %39 = vector.shape_cast %38 : vector<1x64x64xbf16> to vector<64x64xbf16>
    %cst_46 = arith.constant dense<0.000000e+00> : vector<256x64xf32>
    %40 = tpu.matmul %37, %39, %cst_46 {dimension_numbers = #tpu.dot_dimension_numbers<[1], [0], [0], [1], [0, 0, 1, 1], [], []>} : vector<256x64xbf16>, vector<64x64xbf16>, vector<256x64xf32> -> vector<256x64xf32>
    %41 = arith.addf %35, %40 : vector<256x64xf32>
    %c2_47 = arith.constant 2 : index
    %c0_48 = arith.constant 0 : index
    %c0_49 = arith.constant 0 : index
    %42 = vector.load %arg6[%c2_47, %c0_48, %c0_49] : memref<18x18x64xbf16, #tpu.memory_space<vmem>>, vector<16x16x64xbf16>
    %43 = vector.shape_cast %42 : vector<16x16x64xbf16> to vector<256x64xbf16>
    %c6 = arith.constant 6 : index
    %c0_50 = arith.constant 0 : index
    %c0_51 = arith.constant 0 : index
    %44 = vector.load %arg2[%c6, %c0_50, %c0_51] : memref<9x64x64xbf16, #tpu.memory_space<vmem>>, vector<1x64x64xbf16>
    %45 = vector.shape_cast %44 : vector<1x64x64xbf16> to vector<64x64xbf16>
    %cst_52 = arith.constant dense<0.000000e+00> : vector<256x64xf32>
    %46 = tpu.matmul %43, %45, %cst_52 {dimension_numbers = #tpu.dot_dimension_numbers<[1], [0], [0], [1], [0, 0, 1, 1], [], []>} : vector<256x64xbf16>, vector<64x64xbf16>, vector<256x64xf32> -> vector<256x64xf32>
    %47 = arith.addf %41, %46 : vector<256x64xf32>
    %c2_53 = arith.constant 2 : index
    %c1_54 = arith.constant 1 : index
    %c0_55 = arith.constant 0 : index
    %48 = vector.load %arg6[%c2_53, %c1_54, %c0_55] : memref<18x18x64xbf16, #tpu.memory_space<vmem>>, vector<16x16x64xbf16>
    %49 = vector.shape_cast %48 : vector<16x16x64xbf16> to vector<256x64xbf16>
    %c7 = arith.constant 7 : index
    %c0_56 = arith.constant 0 : index
    %c0_57 = arith.constant 0 : index
    %50 = vector.load %arg2[%c7, %c0_56, %c0_57] : memref<9x64x64xbf16, #tpu.memory_space<vmem>>, vector<1x64x64xbf16>
    %51 = vector.shape_cast %50 : vector<1x64x64xbf16> to vector<64x64xbf16>
    %cst_58 = arith.constant dense<0.000000e+00> : vector<256x64xf32>
    %52 = tpu.matmul %49, %51, %cst_58 {dimension_numbers = #tpu.dot_dimension_numbers<[1], [0], [0], [1], [0, 0, 1, 1], [], []>} : vector<256x64xbf16>, vector<64x64xbf16>, vector<256x64xf32> -> vector<256x64xf32>
    %53 = arith.addf %47, %52 : vector<256x64xf32>
    %c2_59 = arith.constant 2 : index
    %c2_60 = arith.constant 2 : index
    %c0_61 = arith.constant 0 : index
    %54 = vector.load %arg6[%c2_59, %c2_60, %c0_61] : memref<18x18x64xbf16, #tpu.memory_space<vmem>>, vector<16x16x64xbf16>
    %55 = vector.shape_cast %54 : vector<16x16x64xbf16> to vector<256x64xbf16>
    %c8 = arith.constant 8 : index
    %c0_62 = arith.constant 0 : index
    %c0_63 = arith.constant 0 : index
    %56 = vector.load %arg2[%c8, %c0_62, %c0_63] : memref<9x64x64xbf16, #tpu.memory_space<vmem>>, vector<1x64x64xbf16>
    %57 = vector.shape_cast %56 : vector<1x64x64xbf16> to vector<64x64xbf16>
    %cst_64 = arith.constant dense<0.000000e+00> : vector<256x64xf32>
    %58 = tpu.matmul %55, %57, %cst_64 {dimension_numbers = #tpu.dot_dimension_numbers<[1], [0], [0], [1], [0, 0, 1, 1], [], []>} : vector<256x64xbf16>, vector<64x64xbf16>, vector<256x64xf32> -> vector<256x64xf32>
    %59 = arith.addf %53, %58 : vector<256x64xf32>
    %c0_65 = arith.constant 0 : index
    %c0_66 = arith.constant 0 : index
    %60 = vector.load %arg3[%c0_65, %c0_66] : memref<256x64xbf16, #tpu.memory_space<vmem>>, vector<256x64xbf16>
    %61 = arith.extf %60 : vector<256x64xbf16> to vector<256x64xf32>
    %62 = arith.addf %59, %61 : vector<256x64xf32>
    %c0_67 = arith.constant 0 : index
    %c0_68 = arith.constant 0 : index
    %63 = vector.load %arg4[%c0_67, %c0_68] : memref<2x64xf32, #tpu.memory_space<vmem>>, vector<1x64xf32>
    %64 = vector.broadcast %63 : vector<1x64xf32> to vector<256x64xf32>
    %65 = arith.mulf %62, %64 : vector<256x64xf32>
    %c1_69 = arith.constant 1 : index
    %c0_70 = arith.constant 0 : index
    %66 = vector.load %arg4[%c1_69, %c0_70] : memref<2x64xf32, #tpu.memory_space<vmem>>, vector<1x64xf32>
    %67 = vector.broadcast %66 : vector<1x64xf32> to vector<256x64xf32>
    %68 = arith.addf %65, %67 : vector<256x64xf32>
    %cst_71 = arith.constant 0.000000e+00 : f32
    %69 = vector.broadcast %cst_71 : f32 to vector<256x64xf32>
    %70 = arith.cmpf ogt, %68, %69 : vector<256x64xf32>
    %71 = math.exp %68 : vector<256x64xf32>
    %cst_72 = arith.constant 1.000000e+00 : f32
    %72 = vector.broadcast %cst_72 : f32 to vector<256x64xf32>
    %73 = arith.subf %71, %72 : vector<256x64xf32>
    %74 = arith.select %70, %68, %73 : vector<256x64xi1>, vector<256x64xf32>
    %c0_73 = arith.constant 0 : index
    %c0_74 = arith.constant 0 : index
    %75 = vector.load %arg5[%c0_73, %c0_74] : memref<256x64xf32, #tpu.memory_space<vmem>>, vector<256x64xf32>
    tpu.vector_store %arg5[%c0_73, %c0_74], %74 {strides = array<i32>} : memref<256x64xf32, #tpu.memory_space<vmem>>, vector<256x64xf32>,
    return
  }
  func.func @transform_0(%arg0: i32) -> (i32, i32, i32, i32) {
    %c0_i32 = arith.constant 0 : i32
    %c0_i32_0 = arith.constant 0 : i32
    %c0_i32_1 = arith.constant 0 : i32
    %c0_i32_2 = arith.constant 0 : i32
    return %arg0, %c0_i32, %c0_i32_0, %c0_i32_1 : i32, i32, i32, i32
  }
  func.func @transform_1(%arg0: i32) -> (i32, i32, i32) {
    %c0_i32 = arith.constant 0 : i32
    %c0_i32_0 = arith.constant 0 : i32
    %c0_i32_1 = arith.constant 0 : i32
    %c0_i32_2 = arith.constant 0 : i32
    return %c0_i32, %c0_i32_0, %c0_i32_1 : i32, i32, i32
  }
  func.func @transform_2(%arg0: i32) -> (i32, i32) {
    %c0_i32 = arith.constant 0 : i32
    %c0_i32_0 = arith.constant 0 : i32
    return %arg0, %c0_i32 : i32, i32
  }
  func.func @transform_3(%arg0: i32) -> (i32, i32) {
    %c0_i32 = arith.constant 0 : i32
    %c0_i32_0 = arith.constant 0 : i32
    %c0_i32_1 = arith.constant 0 : i32
    return %c0_i32, %c0_i32_0 : i32, i32
  }
  func.func @transform_4(%arg0: i32) -> (i32, i32) {
    %c0_i32 = arith.constant 0 : i32
    %c0_i32_0 = arith.constant 0 : i32
    return %arg0, %c0_i32 : i32, i32
  }
}

</mosaic_0001>

<llo_original>
// kernel: res_up_forward.2
$region0: #{res_up_forward.2}
  #allocation0 [shape = 'u32[]', space=smem, size = 0x4, offset = 0x4, fixed_abs, tag = 'smem constant byte address 0x4 - core index']
  #allocation1 [shape = 'u32[144,128]{1,0:T(1,128)}', space=vmem, size = 0x12000, scoped, tag = 'internal scratch']
  #allocation2 [shape = 'bf16[18,10,128]{2,1,0:T(8,128)(2,1)}', space=vmem, size = 0x12000, scoped, tag = 'scratch operand']
  %s0 = inlined_call_operand.vmem [shape: bf16[2,8,8,128], index: 0, kind: input, shape index: {}]
  %s1 = inlined_call_operand.vmem [shape: bf16[12,128,128], index: 1, kind: input, shape index: {}]
  %s2 = inlined_call_operand.vmem [shape: f32[2,128], index: 2, kind: input, shape index: {}]
  %s3 = inlined_call_operand.vmem [shape: bf16[256,128], index: 3, kind: output, shape index: {0}]
  %s4 = inlined_call_operand.vmem [shape: bf16[256,128], index: 4, kind: output, shape index: {1}]
  %5 = xla_tuple %s3, %s4
  %s6 = sld [smem:[#allocation0]]
  $region53: #{res_up_forward.2} parent=0
    _
  %s8 = ssub.s32 1, %s6
  %s9 = scalar_select 0, %s8, %s6
  loop: start=0, step=1, limit=4
  $region2: #{res_up_forward.2} parent=0 // loop_pre_header
    _
  $region3: #{res_up_forward.2} parent=0 // loop_header
    %s11 = sphi 0, %s15
    %p12 = scmp.ge.s32.totalorder %s11, 4
    %s21 = sphi 0, %s23
    %s24 = sphi 0, %s21
    %s25 = sphi 0, %s24
    %s41 = sphi 0, %s25
    %s45 = sphi 0, %s45
    %s47 = sphi 0, %s45
    %s48 = sphi 0, %s47
    %s62 = sphi 0, %s48
    %s66 = sphi 0, %s66
    %s68 = sphi 0, %s66
    %s69 = sphi 0, %s68
    %s83 = sphi 0, %s69
    %s89 = sphi 0, %s91
    %s92 = sphi 0, %s89
    %s93 = sphi 0, %s92
    %s109 = sphi 0, %s93
    %s115 = sphi 0, %s117
    %s118 = sphi 0, %s115
    %s119 = sphi 0, %s118
    %s135 = sphi 0, %s119
  $region4: #{res_up_forward.2} parent=0 // loop_header_branch
    %14 = sbr.rel (%p12) target = $region8
  $region5: #{res_up_forward.2} parent=0 // loop_body
    %s16 = ssub.s32 %s11, 1
    %s17 = ssub.s32 %s11, 2
    %s18 = sadd.s32 %s11, 1
    %s19 = ssub.s32 %s11, %s18
    %p20 = scmp.eq.s32.totalorder %s19, 0
    %s22 = sadd.s32 %s21, 1
    %s23 = scalar_select %p20, %s21, %s22
    %p26 = pneg %p20
    %p27 = scmp.eq.s32.totalorder %s11, 1
    %p28 = por %p26, %p27
    %p29 = scmp.ne.s32.totalorder %s21, %s24
    %p30 = scmp.eq.s32.totalorder %s11, 0
    %p31 = por %p29, %p30
    %p32 = scmp.ne.s32.totalorder %s21, %s24
    %p33 = scmp.eq.s32.totalorder %s16, 1
    %p34 = por %p32, %p33
    %p35 = scmp.ne.s32.totalorder %s24, %s25
    %p36 = scmp.eq.s32.totalorder %s16, 0
    %p37 = por %p35, %p36
    %p38 = scmp.ne.s32.totalorder %s24, %s25
    %p39 = scmp.eq.s32.totalorder %s17, 1
    %p40 = por %p38, %p39
    %p42 = scmp.ne.s32.totalorder %s25, %s41
    %p43 = scmp.eq.s32.totalorder %s17, 0
    %p44 = por %p42, %p43
    %s46 = sadd.s32 %s45, 1
    %p49 = scmp.eq.s32.totalorder %s11, 1
    %p50 = scmp.ne.s32.totalorder %s45, %s47
    %p51 = scmp.eq.s32.totalorder %s11, 0
    %p52 = por %p50, %p51
    %p53 = scmp.ne.s32.totalorder %s45, %s47
    %p54 = scmp.eq.s32.totalorder %s16, 1
    %p55 = por %p53, %p54
    %p56 = scmp.ne.s32.totalorder %s47, %s48
    %p57 = scmp.eq.s32.totalorder %s16, 0
    %p58 = por %p56, %p57
    %p59 = scmp.ne.s32.totalorder %s47, %s48
    %p60 = scmp.eq.s32.totalorder %s17, 1
    %p61 = por %p59, %p60
    %p63 = scmp.ne.s32.totalorder %s48, %s62
    %p64 = scmp.eq.s32.totalorder %s17, 0
    %p65 = por %p63, %p64
    %s67 = sadd.s32 %s66, 1
    %p70 = scmp.eq.s32.totalorder %s11, 1
    %p71 = scmp.ne.s32.totalorder %s66, %s68
    %p72 = scmp.eq.s32.totalorder %s11, 0
    %p73 = por %p71, %p72
    %p74 = scmp.ne.s32.totalorder %s66, %s68
    %p75 = scmp.eq.s32.totalorder %s16, 1
    %p76 = por %p74, %p75
    %p77 = scmp.ne.s32.totalorder %s68, %s69
    %p78 = scmp.eq.s32.totalorder %s16, 0
    %p79 = por %p77, %p78
    %p80 = scmp.ne.s32.totalorder %s68, %s69
    %p81 = scmp.eq.s32.totalorder %s17, 1
    %p82 = por %p80, %p81
    %p84 = scmp.ne.s32.totalorder %s69, %s83
    %p85 = scmp.eq.s32.totalorder %s17, 0
    %p86 = por %p84, %p85
    %s87 = ssub.s32 %s11, %s18
    %p88 = scmp.eq.s32.totalorder %s87, 0
    %s90 = sadd.s32 %s89, 1
    %s91 = scalar_select %p88, %s89, %s90
    %p94 = pneg %p88
    %p95 = scmp.eq.s32.totalorder %s11, 1
    %p96 = por %p94, %p95
    %p97 = scmp.ne.s32.totalorder %s89, %s92
    %p98 = scmp.eq.s32.totalorder %s11, 0
    %p99 = por %p97, %p98
    %p100 = scmp.ne.s32.totalorder %s89, %s92
    %p101 = scmp.eq.s32.totalorder %s16, 1
    %p102 = por %p100, %p101
    %p103 = scmp.ne.s32.totalorder %s92, %s93
    %p104 = scmp.eq.s32.totalorder %s16, 0
    %p105 = por %p103, %p104
    %p106 = scmp.ne.s32.totalorder %s92, %s93
    %p107 = scmp.eq.s32.totalorder %s17, 1
    %p108 = por %p106, %p107
    %p110 = scmp.ne.s32.totalorder %s93, %s109
    %p111 = scmp.eq.s32.totalorder %s17, 0
    %p112 = por %p110, %p111
    %s113 = ssub.s32 %s11, %s18
    %p114 = scmp.eq.s32.totalorder %s113, 0
    %s116 = sadd.s32 %s115, 1
    %s117 = scalar_select %p114, %s115, %s116
    %p120 = pneg %p114
    %p121 = scmp.eq.s32.totalorder %s11, 1
    %p122 = por %p120, %p121
    %p123 = scmp.ne.s32.totalorder %s115, %s118
    %p124 = scmp.eq.s32.totalorder %s11, 0
    %p125 = por %p123, %p124
    %p126 = scmp.ne.s32.totalorder %s115, %s118
    %p127 = scmp.eq.s32.totalorder %s16, 1
    %p128 = por %p126, %p127
    %p129 = scmp.ne.s32.totalorder %s118, %s119
    %p130 = scmp.eq.s32.totalorder %s16, 0
    %p131 = por %p129, %p130
    %p132 = scmp.ne.s32.totalorder %s118, %s119
    %p133 = scmp.eq.s32.totalorder %s17, 1
    %p134 = por %p132, %p133
    %p136 = scmp.ne.s32.totalorder %s119, %s135
    %p137 = scmp.eq.s32.totalorder %s17, 0
    %p138 = por %p136, %p137
    %p139 = scmp.le.s32.totalorder 1, %s11
    %p140 = scmp.lt.s32.totalorder %s11, 3
    %p141 = pnand %p139, %p140
    %p142 = pneg %p141
    // Predicated region
    $region9: #{res_up_forward.2} parent=5 // pred_check
      _
    $region10: #{res_up_forward.2} parent=5 // pred_check_branch
      %144 = sbr.rel (%p141) target = $region12
    $region11: #{res_up_forward.2} parent=5 // pred_region
      %s145 = ssub.s32 %s11, 1
      // Predicated region
      $region13: #{res_up_forward.2} parent=11 // pred_check
        %p146 = pneg %p58
      $region14: #{res_up_forward.2} parent=11 // pred_check_branch
        %148 = sbr.rel (%p146) target = $region16
      $region15: #{res_up_forward.2} parent=11 // pred_region
        _
      $region16: #{res_up_forward.2} parent=11 // pred_fallthru
        _
      // Predicated region
      $region17: #{res_up_forward.2} parent=11 // pred_check
        %p149 = pneg %p79
      $region18: #{res_up_forward.2} parent=11 // pred_check_branch
        %151 = sbr.rel (%p149) target = $region20
      $region19: #{res_up_forward.2} parent=11 // pred_region
        _
      $region20: #{res_up_forward.2} parent=11 // pred_fallthru
        _
    $region12: #{res_up_forward.2} parent=5 // pred_fallthru
      _
    %p152 = scmp.lt.s32.totalorder %s11, 2
    // Predicated region
    $region21: #{res_up_forward.2} parent=5 // pred_check
      %p153 = pneg %p152
    $region22: #{res_up_forward.2} parent=5 // pred_check_branch
      %155 = sbr.rel (%p153) target = $region24
    $region23: #{res_up_forward.2} parent=5 // pred_region
      // Predicated region
      $region25: #{res_up_forward.2} parent=23 // pred_check
        %p156 = pneg %p31
      $region26: #{res_up_forward.2} parent=23 // pred_check_branch
        %158 = sbr.rel (%p156) target = $region28
      $region27: #{res_up_forward.2} parent=23 // pred_region
        %p159 = scmp.lt.s32.totalorder %s11, 1
        %s160 = scalar_select %p159, %s11, 1
        %s161 = smul.addr %s160, 8
        %s162 = smul.addr %s161, 4
        %s163 = scalar_lea.vmem %s0, %s162
      $region28: #{res_up_forward.2} parent=23 // pred_fallthru
        _
    $region24: #{res_up_forward.2} parent=5 // pred_fallthru
      _
    %p164 = scmp.le.s32.totalorder 1, %s11
    %p165 = scmp.lt.s32.totalorder %s11, 3
    %p166 = pnand %p164, %p165
    %p167 = pneg %p166
    // Predicated region
    $region29: #{res_up_forward.2} parent=5 // pred_check
      _
    $region30: #{res_up_forward.2} parent=5 // pred_check_branch
      %169 = sbr.rel (%p166) target = $region32
    $region31: #{res_up_forward.2} parent=5 // pred_region
      %s170 = ssub.s32 %s11, 1
      %p171 = scmp.lt.s32.totalorder %s16, 1
      %s172 = scalar_select %p171, %s16, 1
      %s173 = smul.addr %s172, 8
      %s174 = smul.addr %s173, 4
      %s175 = scalar_lea.vmem %s0, %s174
      %p176 = pneg %p37
      %p177 = pneg %p34
      %p178 = pneg %p58
      %p179 = pneg %p55
      %p180 = pneg %p79
      %p181 = pneg %p76
      %p182 = pneg %p105
      %p183 = pneg %p102
      %s184 = smul.u32 16, %s16
      %p185 = scmp.lt.s32.totalorder %s184, 31
      %s186 = scalar_select %p185, %s184, 31
      %s187 = smul.addr %s186, 4
      %s188 = scalar_lea.vmem %s3, %s187
      %p189 = pneg %p131
      %p190 = pneg %p128
      %s191 = smul.u32 16, %s16
      %p192 = scmp.lt.s32.totalorder %s191, 31
      %s193 = scalar_select %p192, %s191, 31
      %s194 = smul.addr %s193, 4
      %s195 = scalar_lea.vmem %s4, %s194
      %p196 = scmp.lt.s32.totalorder %s16, 1
      %s197 = scalar_select %p196, %s16, 1
      %s198 = smul.addr %s197, 8
      %s199 = smul.addr %s198, 4
      %s200 = scalar_lea.vmem %s0, %s199
      %s201 = smul.u32 16, %s16
      %p202 = scmp.lt.s32.totalorder %s201, 31
      %s203 = scalar_select %p202, %s201, 31
      %s204 = smul.addr %s203, 4
      %s205 = scalar_lea.vmem %s3, %s204
      %s206 = smul.u32 16, %s16
      %s207 = smul.u32 16, %s16
      %p208 = scmp.lt.s32.totalorder %s207, 31
      %s209 = scalar_select %p208, %s207, 31
      %s210 = smul.addr %s209, 4
      %s211 = scalar_lea.vmem %s4, %s210
      %s212 = smul.u32 16, %s16
      %214 = vst [vmem:[#allocation2] sm:$0xf] 0
      %215 = vst [vmem:[#allocation2 + $0x4] sm:$0x1] 0
      %216 = vst [vmem:[#allocation2 + $0x8] sm:$0xf] 0
      %217 = vst [vmem:[#allocation2 + $0xc] sm:$0x1] 0
      %218 = vst [vmem:[#allocation2 + $0x10] sm:$0xf] 0
      %219 = vst [vmem:[#allocation2 + $0x14] sm:$0x1] 0
      %220 = vst [vmem:[#allocation2 + $0x18] sm:$0xf] 0
      %221 = vst [vmem:[#allocation2 + $0x1c] sm:$0x1] 0
      %222 = vst [vmem:[#allocation2 + $0x20] sm:$0xf] 0
      %223 = vst [vmem:[#allocation2 + $0x24] sm:$0x1] 0
      %224 = vst [vmem:[#allocation2 + $0x28] sm:$0xf] 0
      %225 = vst [vmem:[#allocation2 + $0x2c] sm:$0x1] 0
      %226 = vst [vmem:[#allocation2 + $0x30] sm:$0xf] 0
      %227 = vst [vmem:[#allocation2 + $0x34] sm:$0x1] 0
      %228 = vst [vmem:[#allocation2 + $0x38] sm:$0xf] 0
      %229 = vst [vmem:[#allocation2 + $0x3c] sm:$0x1] 0
      %230 = vst [vmem:[#allocation2 + $0x40] sm:$0xf] 0
      %231 = vst [vmem:[#allocation2 + $0x44] sm:$0x1] 0
      %232 = vst [vmem:[#allocation2 + $0x48] sm:$0xf] 0
      %233 = vst [vmem:[#allocation2 + $0x4c] sm:$0x1] 0
      %234 = vst [vmem:[#allocation2 + $0x50] sm:$0xf] 0
      %235 = vst [vmem:[#allocation2 + $0x54] sm:$0x1] 0
      %236 = vst [vmem:[#allocation2 + $0x58] sm:$0xf] 0
      %237 = vst [vmem:[#allocation2 + $0x5c] sm:$0x1] 0
      %238 = vst [vmem:[#allocation2 + $0x60] sm:$0xf] 0
      %239 = vst [vmem:[#allocation2 + $0x64] sm:$0x1] 0
      %240 = vst [vmem:[#allocation2 + $0x68] sm:$0xf] 0
      %241 = vst [vmem:[#allocation2 + $0x6c] sm:$0x1] 0
      %242 = vst [vmem:[#allocation2 + $0x70] sm:$0xf] 0
      %243 = vst [vmem:[#allocation2 + $0x74] sm:$0x1] 0
      %244 = vst [vmem:[#allocation2 + $0x78] sm:$0xf] 0
      %245 = vst [vmem:[#allocation2 + $0x7c] sm:$0x1] 0
      %246 = vst [vmem:[#allocation2 + $0x80] sm:$0xf] 0
      %247 = vst [vmem:[#allocation2 + $0x84] sm:$0x1] 0
      %248 = vst [vmem:[#allocation2 + $0x88] sm:$0xf] 0
      %249 = vst [vmem:[#allocation2 + $0x8c] sm:$0x1] 0
      %v250 = vld [vmem:[%s200] sm:$0xf]
      %v251 = vld [vmem:[%s200 + $0x4] sm:$0xf]
      %v252 = vld [vmem:[%s200 + $0x8] sm:$0xf]
      %v253 = vld [vmem:[%s200 + $0xc] sm:$0xf]
      %v254 = vld [vmem:[%s200 + $0x10] sm:$0xf]
      %v255 = vld [vmem:[%s200 + $0x14] sm:$0xf]
      %v256 = vld [vmem:[%s200 + $0x18] sm:$0xf]
      %v257 = vld [vmem:[%s200 + $0x1c] sm:$0xf]
      %v259 = vshrl.u32 %v250, 16
      %v261 = vrot.slane %v259, 7
      %v262 = vshll.u32 %v250, 16
      %v264 = vor.u32 %v261, %v262
      %v265 = vrot.slane %v261, 4
      %v267 = vshrl.u32 %v251, 16
      %v269 = vrot.slane %v267, 7
      %v270 = vshll.u32 %v251, 16
      %v272 = vor.u32 %v269, %v270
      %v273 = vrot.slane %v269, 4
      %v275 = vshrl.u32 %v252, 16
      %v277 = vrot.slane %v275, 7
      %v278 = vshll.u32 %v252, 16
      %v280 = vor.u32 %v277, %v278
      %v281 = vrot.slane %v277, 4
      %v283 = vshrl.u32 %v253, 16
      %v285 = vrot.slane %v283, 7
      %v286 = vshll.u32 %v253, 16
      %v288 = vor.u32 %v285, %v286
      %v289 = vrot.slane %v285, 4
      %v291 = vshrl.u32 %v254, 16
      %v293 = vrot.slane %v291, 7
      %v294 = vshll.u32 %v254, 16
      %v296 = vor.u32 %v293, %v294
      %v297 = vrot.slane %v293, 4
      %v299 = vshrl.u32 %v255, 16
      %v301 = vrot.slane %v299, 7
      %v302 = vshll.u32 %v255, 16
      %v304 = vor.u32 %v301, %v302
      %v305 = vrot.slane %v301, 4
      %v307 = vshrl.u32 %v256, 16
      %v309 = vrot.slane %v307, 7
      %v310 = vshll.u32 %v256, 16
      %v312 = vor.u32 %v309, %v310
      %v313 = vrot.slane %v309, 4
      %v315 = vshrl.u32 %v257, 16
      %v317 = vrot.slane %v315, 7
      %v318 = vshll.u32 %v257, 16
      %v320 = vor.u32 %v317, %v318
      %v321 = vrot.slane %v317, 4
      %s338 = scalar_lea.vmem [#allocation2], 8
      %vm339 = vcmask 1043456
      %vm340 = vsmask.f32 7938
      %vm341 = vmand %vm339, %vm340
      %v342 = vld [vmem:[%s338] sm:$0xf]
      %v343 = vsel %vm341, %v264, %v342
      %344 = vst [vmem:[%s338] sm:$0xf] %v343
      %vm345 = vcmask 1040384
      %vm346 = vsmask.f32 256
      %vm347 = vmand %vm345, %vm346
      %v348 = vld [vmem:[%s338 + $0x4] sm:$0x1]
      %v349 = vsel %vm347, %v265, %v348
      %350 = vst [vmem:[%s338 + $0x4] sm:$0x1] %v349
      %v351 = vld [vmem:[%s338 + $0x8] sm:$0xf]
      %v352 = vsel %vm341, %v264, %v351
      %353 = vst [vmem:[%s338 + $0x8] sm:$0xf] %v352
      %v354 = vld [vmem:[%s338 + $0xc] sm:$0x1]
      %v355 = vsel %vm347, %v265, %v354
      %356 = vst [vmem:[%s338 + $0xc] sm:$0x1] %v355
      %v357 = vld [vmem:[%s338 + $0x10] sm:$0xf]
      %v358 = vsel %vm341, %v272, %v357
      %359 = vst [vmem:[%s338 + $0x10] sm:$0xf] %v358
      %v360 = vld [vmem:[%s338 + $0x14] sm:$0x1]
      %v361 = vsel %vm347, %v273, %v360
      %362 = vst [vmem:[%s338 + $0x14] sm:$0x1] %v361
      %v363 = vld [vmem:[%s338 + $0x18] sm:$0xf]
      %v364 = vsel %vm341, %v272, %v363
      %365 = vst [vmem:[%s338 + $0x18] sm:$0xf] %v364
      %v366 = vld [vmem:[%s338 + $0x1c] sm:$0x1]
      %v367 = vsel %vm347, %v273, %v366
      %368 = vst [vmem:[%s338 + $0x1c] sm:$0x1] %v367
      %v369 = vld [vmem:[%s338 + $0x20] sm:$0xf]
      %v370 = vsel %vm341, %v280, %v369
      %371 = vst [vmem:[%s338 + $0x20] sm:$0xf] %v370
      %v372 = vld [vmem:[%s338 + $0x24] sm:$0x1]
      %v373 = vsel %vm347, %v281, %v372
      %374 = vst [vmem:[%s338 + $0x24] sm:$0x1] %v373
      %v375 = vld [vmem:[%s338 + $0x28] sm:$0xf]
      %v376 = vsel %vm341, %v280, %v375
      %377 = vst [vmem:[%s338 + $0x28] sm:$0xf] %v376
      %v378 = vld [vmem:[%s338 + $0x2c] sm:$0x1]
      %v379 = vsel %vm347, %v281, %v378
      %380 = vst [vmem:[%s338 + $0x2c] sm:$0x1] %v379
      %v381 = vld [vmem:[%s338 + $0x30] sm:$0xf]
      %v382 = vsel %vm341, %v288, %v381
      %383 = vst [vmem:[%s338 + $0x30] sm:$0xf] %v382
      %v384 = vld [vmem:[%s338 + $0x34] sm:$0x1]
      %v385 = vsel %vm347, %v289, %v384
      %386 = vst [vmem:[%s338 + $0x34] sm:$0x1] %v385
      %v387 = vld [vmem:[%s338 + $0x38] sm:$0xf]
      %v388 = vsel %vm341, %v288, %v387
      %389 = vst [vmem:[%s338 + $0x38] sm:$0xf] %v388
      %v390 = vld [vmem:[%s338 + $0x3c] sm:$0x1]
      %v391 = vsel %vm347, %v289, %v390
      %392 = vst [vmem:[%s338 + $0x3c] sm:$0x1] %v391
      %v393 = vld [vmem:[%s338 + $0x40] sm:$0xf]
      %v394 = vsel %vm341, %v296, %v393
      %395 = vst [vmem:[%s338 + $0x40] sm:$0xf] %v394
      %v396 = vld [vmem:[%s338 + $0x44] sm:$0x1]
      %v397 = vsel %vm347, %v297, %v396
      %398 = vst [vmem:[%s338 + $0x44] sm:$0x1] %v397
      %v399 = vld [vmem:[%s338 + $0x48] sm:$0xf]
      %v400 = vsel %vm341, %v296, %v399
      %401 = vst [vmem:[%s338 + $0x48] sm:$0xf] %v400
      %v402 = vld [vmem:[%s338 + $0x4c] sm:$0x1]
      %v403 = vsel %vm347, %v297, %v402
      %404 = vst [vmem:[%s338 + $0x4c] sm:$0x1] %v403
      %v405 = vld [vmem:[%s338 + $0x50] sm:$0xf]
      %v406 = vsel %vm341, %v304, %v405
      %407 = vst [vmem:[%s338 + $0x50] sm:$0xf] %v406
      %v408 = vld [vmem:[%s338 + $0x54] sm:$0x1]
      %v409 = vsel %vm347, %v305, %v408
      %410 = vst [vmem:[%s338 + $0x54] sm:$0x1] %v409
      %v411 = vld [vmem:[%s338 + $0x58] sm:$0xf]
      %v412 = vsel %vm341, %v304, %v411
      %413 = vst [vmem:[%s338 + $0x58] sm:$0xf] %v412
      %v414 = vld [vmem:[%s338 + $0x5c] sm:$0x1]
      %v415 = vsel %vm347, %v305, %v414
      %416 = vst [vmem:[%s338 + $0x5c] sm:$0x1] %v415
      %v417 = vld [vmem:[%s338 + $0x60] sm:$0xf]
      %v418 = vsel %vm341, %v312, %v417
      %419 = vst [vmem:[%s338 + $0x60] sm:$0xf] %v418
      %v420 = vld [vmem:[%s338 + $0x64] sm:$0x1]
      %v421 = vsel %vm347, %v313, %v420
      %422 = vst [vmem:[%s338 + $0x64] sm:$0x1] %v421
      %v423 = vld [vmem:[%s338 + $0x68] sm:$0xf]
      %v424 = vsel %vm341, %v312, %v423
      %425 = vst [vmem:[%s338 + $0x68] sm:$0xf] %v424
      %v426 = vld [vmem:[%s338 + $0x6c] sm:$0x1]
      %v427 = vsel %vm347, %v313, %v426
      %428 = vst [vmem:[%s338 + $0x6c] sm:$0x1] %v427
      %v429 = vld [vmem:[%s338 + $0x70] sm:$0xf]
      %v430 = vsel %vm341, %v320, %v429
      %431 = vst [vmem:[%s338 + $0x70] sm:$0xf] %v430
      %v432 = vld [vmem:[%s338 + $0x74] sm:$0x1]
      %v433 = vsel %vm347, %v321, %v432
      %434 = vst [vmem:[%s338 + $0x74] sm:$0x1] %v433
      %v435 = vld [vmem:[%s338 + $0x78] sm:$0xf]
      %v436 = vsel %vm341, %v320, %v435
      %437 = vst [vmem:[%s338 + $0x78] sm:$0xf] %v436
      %v438 = vld [vmem:[%s338 + $0x7c] sm:$0x1]
      %v439 = vsel %vm347, %v321, %v438
      %440 = vst [vmem:[%s338 + $0x7c] sm:$0x1] %v439
      %v441 = vld [vmem:[%s2] sm:$0x1]
      %v442 = vld [vmem:[%s2 + $0x1] sm:$0x1]
      %v443 = vld [vmem:[#allocation2] sm:$0xf]
      %v444 = vld [vmem:[#allocation2 + $0x8] sm:$0xf]
      %v445 = vld [vmem:[#allocation2 + $0x10] sm:$0xf]
      %v446 = vld [vmem:[#allocation2 + $0x18] sm:$0xf]
      %v447 = vld [vmem:[#allocation2 + $0x20] sm:$0xf]
      %v448 = vld [vmem:[#allocation2 + $0x28] sm:$0xf]
      %v449 = vld [vmem:[#allocation2 + $0x30] sm:$0xf]
      %v450 = vld [vmem:[#allocation2 + $0x38] sm:$0xf]
      %v451 = vld [vmem:[#allocation2 + $0x40] sm:$0xf]
      %v452 = vld [vmem:[#allocation2 + $0x48] sm:$0xf]
      %v453 = vld [vmem:[#allocation2 + $0x50] sm:$0xf]
      %v454 = vld [vmem:[#allocation2 + $0x58] sm:$0xf]
      %v455 = vld [vmem:[#allocation2 + $0x60] sm:$0xf]
      %v456 = vld [vmem:[#allocation2 + $0x68] sm:$0xf]
      %v457 = vld [vmem:[#allocation2 + $0x70] sm:$0xf]
      %v458 = vld [vmem:[#allocation2 + $0x78] sm:$0xf]
      %v459 = vld [vmem:[%s1] sm:$0xf]
      %v460 = vld [vmem:[%s1 + $0x4] sm:$0xf]
      %v461 = vld [vmem:[%s1 + $0x8] sm:$0xf]
      %v462 = vld [vmem:[%s1 + $0xc] sm:$0xf]
      %v463 = vld [vmem:[%s1 + $0x10] sm:$0xf]
      %v464 = vld [vmem:[%s1 + $0x14] sm:$0xf]
      %v465 = vld [vmem:[%s1 + $0x18] sm:$0xf]
      %v466 = vld [vmem:[%s1 + $0x1c] sm:$0xf]
      %v467 = vld [vmem:[%s1 + $0x20] sm:$0xf]
      %v468 = vld [vmem:[%s1 + $0x24] sm:$0xf]
      %v469 = vld [vmem:[%s1 + $0x28] sm:$0xf]
      %v470 = vld [vmem:[%s1 + $0x2c] sm:$0xf]
      %v471 = vld [vmem:[%s1 + $0x30] sm:$0xf]
      %v472 = vld [vmem:[%s1 + $0x34] sm:$0xf]
      %v473 = vld [vmem:[%s1 + $0x38] sm:$0xf]
      %v474 = vld [vmem:[%s1 + $0x3c] sm:$0xf]
      %v475 = vld [vmem:[#allocation2 + $0x4] sm:$0x1]
      %v476 = vld [vmem:[#allocation2 + $0xc] sm:$0x1]
      %v477 = vld [vmem:[#allocation2 + $0x14] sm:$0x1]
      %v478 = vld [vmem:[#allocation2 + $0x1c] sm:$0x1]
      %v479 = vld [vmem:[#allocation2 + $0x24] sm:$0x1]
      %v480 = vld [vmem:[#allocation2 + $0x2c] sm:$0x1]
      %v481 = vld [vmem:[#allocation2 + $0x34] sm:$0x1]
      %v482 = vld [vmem:[#allocation2 + $0x3c] sm:$0x1]
      %v483 = vld [vmem:[#allocation2 + $0x44] sm:$0x1]
      %v484 = vld [vmem:[#allocation2 + $0x4c] sm:$0x1]
      %v485 = vld [vmem:[#allocation2 + $0x54] sm:$0x1]
      %v486 = vld [vmem:[#allocation2 + $0x5c] sm:$0x1]
      %v487 = vld [vmem:[#allocation2 + $0x64] sm:$0x1]
      %v488 = vld [vmem:[#allocation2 + $0x6c] sm:$0x1]
      %v489 = vld [vmem:[#allocation2 + $0x74] sm:$0x1]
      %v490 = vld [vmem:[#allocation2 + $0x7c] sm:$0x1]
      %vm491 = vsmask.f32 3328
      %vm492 = vsmask.f32 7440
      %vm493 = vmor %vm491, %vm492
      %v495 = vshrl.u32 %v443, 16
      %v497 = vrot.slane %v495, 4
      %v498 = vshll.u32 %v443, 16
      %v500 = vrot.slane %v498, 5
      %v501 = vor.u32 %v497, %v500
      %v502 = vrot.slane %v501, 4
      %v504 = vshll.u32 %v475, 16
      %v506 = vrot.slane %v504, 5
      %v507 = vsel %vm493, %v502, %v506
      %v509 = vshrl.u32 %v444, 16
      %v511 = vrot.slane %v509, 4
      %v512 = vshll.u32 %v444, 16
      %v514 = vrot.slane %v512, 5
      %v515 = vor.u32 %v511, %v514
      %v516 = vrot.slane %v515, 4
      %v518 = vshll.u32 %v476, 16
      %v520 = vrot.slane %v518, 5
      %v521 = vsel %vm493, %v516, %v520
      %v523 = vshrl.u32 %v445, 16
      %v525 = vrot.slane %v523, 4
      %v526 = vshll.u32 %v445, 16
      %v528 = vrot.slane %v526, 5
      %v529 = vor.u32 %v525, %v528
      %v530 = vrot.slane %v529, 4
      %v532 = vshll.u32 %v477, 16
      %v534 = vrot.slane %v532, 5
      %v535 = vsel %vm493, %v530, %v534
      %v537 = vshrl.u32 %v446, 16
      %v539 = vrot.slane %v537, 4
      %v540 = vshll.u32 %v446, 16
      %v542 = vrot.slane %v540, 5
      %v543 = vor.u32 %v539, %v542
      %v544 = vrot.slane %v543, 4
      %v546 = vshll.u32 %v478, 16
      %v548 = vrot.slane %v546, 5
      %v549 = vsel %vm493, %v544, %v548
      %v551 = vshrl.u32 %v447, 16
      %v553 = vrot.slane %v551, 4
      %v554 = vshll.u32 %v447, 16
      %v556 = vrot.slane %v554, 5
      %v557 = vor.u32 %v553, %v556
      %v558 = vrot.slane %v557, 4
      %v560 = vshll.u32 %v479, 16
      %v562 = vrot.slane %v560, 5
      %v563 = vsel %vm493, %v558, %v562
      %v565 = vshrl.u32 %v448, 16
      %v567 = vrot.slane %v565, 4
      %v568 = vshll.u32 %v448, 16
      %v570 = vrot.slane %v568, 5
      %v571 = vor.u32 %v567, %v570
      %v572 = vrot.slane %v571, 4
      %v574 = vshll.u32 %v480, 16
      %v576 = vrot.slane %v574, 5
      %v577 = vsel %vm493, %v572, %v576
      %v579 = vshrl.u32 %v449, 16
      %v581 = vrot.slane %v579, 4
      %v582 = vshll.u32 %v449, 16
      %v584 = vrot.slane %v582, 5
      %v585 = vor.u32 %v581, %v584
      %v586 = vrot.slane %v585, 4
      %v588 = vshll.u32 %v481, 16
      %v590 = vrot.slane %v588, 5
      %v591 = vsel %vm493, %v586, %v590
      %v593 = vshrl.u32 %v450, 16
      %v595 = vrot.slane %v593, 4
      %v596 = vshll.u32 %v450, 16
      %v598 = vrot.slane %v596, 5
      %v599 = vor.u32 %v595, %v598
      %v600 = vrot.slane %v599, 4
      %v602 = vshll.u32 %v482, 16
      %v604 = vrot.slane %v602, 5
      %v605 = vsel %vm493, %v600, %v604
      %v607 = vshrl.u32 %v451, 16
      %v609 = vrot.slane %v607, 4
      %v610 = vshll.u32 %v451, 16
      %v612 = vrot.slane %v610, 5
      %v613 = vor.u32 %v609, %v612
      %v614 = vrot.slane %v613, 4
      %v616 = vshll.u32 %v483, 16
      %v618 = vrot.slane %v616, 5
      %v619 = vsel %vm493, %v614, %v618
      %v621 = vshrl.u32 %v452, 16
      %v623 = vrot.slane %v621, 4
      %v624 = vshll.u32 %v452, 16
      %v626 = vrot.slane %v624, 5
      %v627 = vor.u32 %v623, %v626
      %v628 = vrot.slane %v627, 4
      %v630 = vshll.u32 %v484, 16
      %v632 = vrot.slane %v630, 5
      %v633 = vsel %vm493, %v628, %v632
      %v635 = vshrl.u32 %v453, 16
      %v637 = vrot.slane %v635, 4
      %v638 = vshll.u32 %v453, 16
      %v640 = vrot.slane %v638, 5
      %v641 = vor.u32 %v637, %v640
      %v642 = vrot.slane %v641, 4
      %v644 = vshll.u32 %v485, 16
      %v646 = vrot.slane %v644, 5
      %v647 = vsel %vm493, %v642, %v646
      %v649 = vshrl.u32 %v454, 16
      %v651 = vrot.slane %v649, 4
      %v652 = vshll.u32 %v454, 16
      %v654 = vrot.slane %v652, 5
      %v655 = vor.u32 %v651, %v654
      %v656 = vrot.slane %v655, 4
      %v658 = vshll.u32 %v486, 16
      %v660 = vrot.slane %v658, 5
      %v661 = vsel %vm493, %v656, %v660
      %v663 = vshrl.u32 %v455, 16
      %v665 = vrot.slane %v663, 4
      %v666 = vshll.u32 %v455, 16
      %v668 = vrot.slane %v666, 5
      %v669 = vor.u32 %v665, %v668
      %v670 = vrot.slane %v669, 4
      %v672 = vshll.u32 %v487, 16
      %v674 = vrot.slane %v672, 5
      %v675 = vsel %vm493, %v670, %v674
      %v677 = vshrl.u32 %v456, 16
      %v679 = vrot.slane %v677, 4
      %v680 = vshll.u32 %v456, 16
      %v682 = vrot.slane %v680, 5
      %v683 = vor.u32 %v679, %v682
      %v684 = vrot.slane %v683, 4
      %v686 = vshll.u32 %v488, 16
      %v688 = vrot.slane %v686, 5
      %v689 = vsel %vm493, %v684, %v688
      %v691 = vshrl.u32 %v457, 16
      %v693 = vrot.slane %v691, 4
      %v694 = vshll.u32 %v457, 16
      %v696 = vrot.slane %v694, 5
      %v697 = vor.u32 %v693, %v696
      %v698 = vrot.slane %v697, 4
      %v700 = vshll.u32 %v489, 16
      %v702 = vrot.slane %v700, 5
      %v703 = vsel %vm493, %v698, %v702
      %v705 = vshrl.u32 %v458, 16
      %v707 = vrot.slane %v705, 4
      %v708 = vshll.u32 %v458, 16
      %v710 = vrot.slane %v708, 5
      %v711 = vor.u32 %v707, %v710
      %v712 = vrot.slane %v711, 4
      %v714 = vshll.u32 %v490, 16
      %v716 = vrot.slane %v714, 5
      %v717 = vsel %vm493, %v712, %v716
      %s718 = scalar_lea.vmem %s1, 64
      %v719 = vld [vmem:[%s718] sm:$0xf]
      %v720 = vld [vmem:[%s718 + $0x4] sm:$0xf]
      %v721 = vld [vmem:[%s718 + $0x8] sm:$0xf]
      %v722 = vld [vmem:[%s718 + $0xc] sm:$0xf]
      %v723 = vld [vmem:[%s718 + $0x10] sm:$0xf]
      %v724 = vld [vmem:[%s718 + $0x14] sm:$0xf]
      %v725 = vld [vmem:[%s718 + $0x18] sm:$0xf]
      %v726 = vld [vmem:[%s718 + $0x1c] sm:$0xf]
      %v727 = vld [vmem:[%s718 + $0x20] sm:$0xf]
      %v728 = vld [vmem:[%s718 + $0x24] sm:$0xf]
      %v729 = vld [vmem:[%s718 + $0x28] sm:$0xf]
      %v730 = vld [vmem:[%s718 + $0x2c] sm:$0xf]
      %v731 = vld [vmem:[%s718 + $0x30] sm:$0xf]
      %v732 = vld [vmem:[%s718 + $0x34] sm:$0xf]
      %v733 = vld [vmem:[%s718 + $0x38] sm:$0xf]
      %v734 = vld [vmem:[%s718 + $0x3c] sm:$0xf]
      %v735 = vunpack.c.l.b16 %v507
      %v736 = vunpack.c.l.b16 %v521
      %v737 = vunpack.c.l.b16 %v535
      %v738 = vunpack.c.l.b16 %v549
      %v739 = vunpack.c.l.b16 %v563
      %v740 = vunpack.c.l.b16 %v577
      %v741 = vunpack.c.l.b16 %v591
      %v742 = vunpack.c.l.b16 %v605
      %v743 = vunpack.c.l.b16 %v619
      %v744 = vunpack.c.l.b16 %v633
      %v745 = vunpack.c.l.b16 %v647
      %v746 = vunpack.c.l.b16 %v661
      %v747 = vunpack.c.l.b16 %v675
      %v748 = vunpack.c.l.b16 %v689
      %v749 = vunpack.c.l.b16 %v703
      %v750 = vunpack.c.l.b16 %v717
      %v751 = vpack.c.b16 %v736, %v735
      %v752 = vpack.c.b16 %v738, %v737
      %v753 = vpack.c.b16 %v740, %v739
      %v754 = vpack.c.b16 %v742, %v741
      %v755 = vpack.c.b16 %v744, %v743
      %v756 = vpack.c.b16 %v746, %v745
      %v757 = vpack.c.b16 %v748, %v747
      %v758 = vpack.c.b16 %v750, %v749
      %v783 = vunpack.c.l.b16 %v719
      %v784 = vunpack.c.l.b16 %v720
      %v785 = vunpack.c.l.b16 %v721
      %v786 = vunpack.c.l.b16 %v722
      %v787 = vunpack.c.l.b16 %v723
      %v788 = vunpack.c.l.b16 %v724
      %v789 = vunpack.c.l.b16 %v725
      %v790 = vunpack.c.l.b16 %v726
      %v791 = vunpack.c.l.b16 %v727
      %v792 = vunpack.c.l.b16 %v728
      %v793 = vunpack.c.l.b16 %v729
      %v794 = vunpack.c.l.b16 %v730
      %v795 = vunpack.c.l.b16 %v731
      %v796 = vunpack.c.l.b16 %v732
      %v797 = vunpack.c.l.b16 %v733
      %v798 = vunpack.c.l.b16 %v734
      %v799 = vpack.c.b16 %v784, %v783
      %v800 = vpack.c.b16 %v786, %v785
      %v801 = vpack.c.b16 %v788, %v787
      %v802 = vpack.c.b16 %v790, %v789
      %v803 = vpack.c.b16 %v792, %v791
      %v804 = vpack.c.b16 %v794, %v793
      %v805 = vpack.c.b16 %v796, %v795
      %v806 = vpack.c.b16 %v798, %v797
      %815 = vmatprep.subr.bf16.mxu0 0
      %816 = vmatpush1.bf16.msra.mxu0 %v799
      %817 = vmatprep.subr.bf16.mxu0 0
      %818 = vmatpush1.bf16.msra.mxu0 %v800
      %819 = vmatprep.subr.bf16.mxu0 0
      %820 = vmatpush1.bf16.msra.mxu0 %v801
      %821 = vmatprep.subr.bf16.mxu0 0
      %822 = vmatpush1.bf16.msra.mxu0 %v802
      %823 = vmatprep.subr.bf16.mxu0 0
      %824 = vmatpush1.bf16.msra.mxu0 %v803
      %825 = vmatprep.subr.bf16.mxu0 0
      %826 = vmatpush1.bf16.msra.mxu0 %v804
      %827 = vmatprep.subr.bf16.mxu0 0
      %828 = vmatpush1.bf16.msra.mxu0 %v805
      %829 = vmatprep.subr.bf16.mxu0 0
      %830 = vmatpush1.bf16.msra.mxu0 %v806
      %831 = vmatprep.subr.bf16.mxu0 0
      %832 = vmatpush1.bf16.msra.mxu0 0
      %833 = vmatprep.subr.bf16.mxu0 0
      %834 = vmatpush1.bf16.msra.mxu0 0
      %835 = vmatprep.subr.bf16.mxu0 0
      %836 = vmatpush1.bf16.msra.mxu0 0
      %837 = vmatprep.subr.bf16.mxu0 0
      %838 = vmatpush1.bf16.msra.mxu0 0
      %839 = vmatprep.subr.bf16.mxu0 0
      %840 = vmatpush1.bf16.msra.mxu0 0
      %841 = vmatprep.subr.bf16.mxu0 0
      %842 = vmatpush1.bf16.msra.mxu0 0
      %843 = vmatprep.subr.bf16.mxu0 0
      %844 = vmatpush1.bf16.msra.mxu0 0
      %845 = vmatprep.subr.bf16.mxu0 0
      %846 = vmatpush1.bf16.msra.mxu0 0
      %847 = vmatprep.mubr.bf16.mxu0 0
      %848 = vmatmul.mubr.bf16.gmra.mrb[0].mxu0 %v751
      %v849 = vpop.f32.mrb[0].mxu0
      %v850 = vadd.f32 0.0, %v849
      %v851 = vpop.f32.mrb[0].mxu0
      %v852 = vpop.f32.mrb[0].mxu0
      %v853 = vadd.f32 0.0, %v852
      %v854 = vpop.f32.mrb[0].mxu0
      %855 = vmatprep.mubr.bf16.mxu0 0
      %856 = vmatmul.mubr.bf16.gmra.mrb[0].mxu0 %v752
      %v857 = vpop.f32.mrb[0].mxu0
      %v858 = vadd.f32 0.0, %v857
      %v859 = vpop.f32.mrb[0].mxu0
      %v860 = vpop.f32.mrb[0].mxu0
      %v861 = vadd.f32 0.0, %v860
      %v862 = vpop.f32.mrb[0].mxu0
      %863 = vmatprep.mubr.bf16.mxu0 0
      %864 = vmatmul.mubr.bf16.gmra.mrb[0].mxu0 %v753
      %v865 = vpop.f32.mrb[0].mxu0
      %v866 = vadd.f32 0.0, %v865
      %v867 = vpop.f32.mrb[0].mxu0
      %v868 = vpop.f32.mrb[0].mxu0
      %v869 = vadd.f32 0.0, %v868
      %v870 = vpop.f32.mrb[0].mxu0
      %871 = vmatprep.mubr.bf16.mxu0 0
      %872 = vmatmul.mubr.bf16.gmra.mrb[0].mxu0 %v754
      %v873 = vpop.f32.mrb[0].mxu0
      %v874 = vadd.f32 0.0, %v873
      %v875 = vpop.f32.mrb[0].mxu0
      %v876 = vpop.f32.mrb[0].mxu0
      %v877 = vadd.f32 0.0, %v876
      %v878 = vpop.f32.mrb[0].mxu0
      %879 = vmatprep.mubr.bf16.mxu0 0
      %880 = vmatmul.mubr.bf16.gmra.mrb[0].mxu0 %v755
      %v881 = vpop.f32.mrb[0].mxu0
      %v882 = vadd.f32 0.0, %v881
      %v883 = vpop.f32.mrb[0].mxu0
      %v884 = vpop.f32.mrb[0].mxu0
      %v885 = vadd.f32 0.0, %v884
      %v886 = vpop.f32.mrb[0].mxu0
      %887 = vmatprep.mubr.bf16.mxu0 0
      %888 = vmatmul.mubr.bf16.gmra.mrb[0].mxu0 %v756
      %v889 = vpop.f32.mrb[0].mxu0
      %v890 = vadd.f32 0.0, %v889
      %v891 = vpop.f32.mrb[0].mxu0
      %v892 = vpop.f32.mrb[0].mxu0
      %v893 = vadd.f32 0.0, %v892
      %v894 = vpop.f32.mrb[0].mxu0
      %895 = vmatprep.mubr.bf16.mxu0 0
      %896 = vmatmul.mubr.bf16.gmra.mrb[0].mxu0 %v757
      %v897 = vpop.f32.mrb[0].mxu0
      %v898 = vadd.f32 0.0, %v897
      %v899 = vpop.f32.mrb[0].mxu0
      %v900 = vpop.f32.mrb[0].mxu0
      %v901 = vadd.f32 0.0, %v900
      %v902 = vpop.f32.mrb[0].mxu0
      %903 = vmatprep.mubr.bf16.mxu0 0
      %904 = vmatmul.mubr.bf16.gmra.mrb[0].mxu0 %v758
      %v905 = vpop.f32.mrb[0].mxu0
      %v906 = vadd.f32 0.0, %v905
      %v907 = vpop.f32.mrb[0].mxu0
      %v908 = vpop.f32.mrb[0].mxu0
      %v909 = vadd.f32 0.0, %v908
      %v910 = vpop.f32.mrb[0].mxu0
      %911 = vdwg.mxu0
      %v928 = vunpack.c.l.b16 %v443
      %v929 = vunpack.c.l.b16 %v444
      %v930 = vunpack.c.l.b16 %v445
      %v931 = vunpack.c.l.b16 %v446
      %v932 = vunpack.c.l.b16 %v447
      %v933 = vunpack.c.l.b16 %v448
      %v934 = vunpack.c.l.b16 %v449
      %v935 = vunpack.c.l.b16 %v450
      %v936 = vunpack.c.l.b16 %v451
      %v937 = vunpack.c.l.b16 %v452
      %v938 = vunpack.c.l.b16 %v453
      %v939 = vunpack.c.l.b16 %v454
      %v940 = vunpack.c.l.b16 %v455
      %v941 = vunpack.c.l.b16 %v456
      %v942 = vunpack.c.l.b16 %v457
      %v943 = vunpack.c.l.b16 %v458
      %v944 = vpack.c.b16 %v929, %v928
      %v945 = vpack.c.b16 %v931, %v930
      %v946 = vpack.c.b16 %v933, %v932
      %v947 = vpack.c.b16 %v935, %v934
      %v948 = vpack.c.b16 %v937, %v936
      %v949 = vpack.c.b16 %v939, %v938
      %v950 = vpack.c.b16 %v941, %v940
      %v951 = vpack.c.b16 %v943, %v942
      %v976 = vunpack.c.l.b16 %v459
      %v977 = vunpack.c.l.b16 %v460
      %v978 = vunpack.c.l.b16 %v461
      %v979 = vunpack.c.l.b16 %v462
      %v980 = vunpack.c.l.b16 %v463
      %v981 = vunpack.c.l.b16 %v464
      %v982 = vunpack.c.l.b16 %v465
      %v983 = vunpack.c.l.b16 %v466
      %v984 = vunpack.c.l.b16 %v467
      %v985 = vunpack.c.l.b16 %v468
      %v986 = vunpack.c.l.b16 %v469
      %v987 = vunpack.c.l.b16 %v470
      %v988 = vunpack.c.l.b16 %v471
      %v989 = vunpack.c.l.b16 %v472
      %v990 = vunpack.c.l.b16 %v473
      %v991 = vunpack.c.l.b16 %v474
      %v992 = vpack.c.b16 %v977, %v976
      %v993 = vpack.c.b16 %v979, %v978
      %v994 = vpack.c.b16 %v981, %v980
      %v995 = vpack.c.b16 %v983, %v982
      %v996 = vpack.c.b16 %v985, %v984
      %v997 = vpack.c.b16 %v987, %v986
      %v998 = vpack.c.b16 %v989, %v988
      %v999 = vpack.c.b16 %v991, %v990
      %1008 = vmatprep.subr.bf16.mxu0 0
      %1009 = vmatpush1.bf16.msra.mxu0 %v992
      %1010 = vmatprep.subr.bf16.mxu0 0
      %1011 = vmatpush1.bf16.msra.mxu0 %v993
      %1012 = vmatprep.subr.bf16.mxu0 0
      %1013 = vmatpush1.bf16.msra.mxu0 %v994
      %1014 = vmatprep.subr.bf16.mxu0 0
      %1015 = vmatpush1.bf16.msra.mxu0 %v995
      %1016 = vmatprep.subr.bf16.mxu0 0
      %1017 = vmatpush1.bf16.msra.mxu0 %v996
      %1018 = vmatprep.subr.bf16.mxu0 0
      %1019 = vmatpush1.bf16.msra.mxu0 %v997
      %1020 = vmatprep.subr.bf16.mxu0 0
      %1021 = vmatpush1.bf16.msra.mxu0 %v998
      %1022 = vmatprep.subr.bf16.mxu0 0
      %1023 = vmatpush1.bf16.msra.mxu0 %v999
      %1024 = vmatprep.subr.bf16.mxu0 0
      %1025 = vmatpush1.bf16.msra.mxu0 0
      %1026 = vmatprep.subr.bf16.mxu0 0
      %1027 = vmatpush1.bf16.msra.mxu0 0
      %1028 = vmatprep.subr.bf16.mxu0 0
      %1029 = vmatpush1.bf16.msra.mxu0 0
      %1030 = vmatprep.subr.bf16.mxu0 0
      %1031 = vmatpush1.bf16.msra.mxu0 0
      %1032 = vmatprep.subr.bf16.mxu0 0
      %1033 = vmatpush1.bf16.msra.mxu0 0
      %1034 = vmatprep.subr.bf16.mxu0 0
      %1035 = vmatpush1.bf16.msra.mxu0 0
      %1036 = vmatprep.subr.bf16.mxu0 0
      %1037 = vmatpush1.bf16.msra.mxu0 0
      %1038 = vmatprep.subr.bf16.mxu0 0
      %1039 = vmatpush1.bf16.msra.mxu0 0
      %1040 = vmatprep.mubr.bf16.mxu0 0
      %1041 = vmatmul.mubr.bf16.gmra.mrb[0].mxu0 %v944
      %v1042 = vpop.f32.mrb[0].mxu0
      %v1043 = vadd.f32 %v850, %v1042
      %v1044 = vpop.f32.mrb[0].mxu0
      %v1045 = vpop.f32.mrb[0].mxu0
      %v1046 = vadd.f32 %v853, %v1045
      %v1047 = vpop.f32.mrb[0].mxu0
      %1048 = vmatprep.mubr.bf16.mxu0 0
      %1049 = vmatmul.mubr.bf16.gmra.mrb[0].mxu0 %v945
      %v1050 = vpop.f32.mrb[0].mxu0
      %v1051 = vadd.f32 %v858, %v1050
      %v1052 = vpop.f32.mrb[0].mxu0
      %v1053 = vpop.f32.mrb[0].mxu0
      %v1054 = vadd.f32 %v861, %v1053
      %v1055 = vpop.f32.mrb[0].mxu0
      %1056 = vmatprep.mubr.bf16.mxu0 0
      %1057 = vmatmul.mubr.bf16.gmra.mrb[0].mxu0 %v946
      %v1058 = vpop.f32.mrb[0].mxu0
      %v1059 = vadd.f32 %v866, %v1058
      %v1060 = vpop.f32.mrb[0].mxu0
      %v1061 = vpop.f32.mrb[0].mxu0
      %v1062 = vadd.f32 %v869, %v1061
      %v1063 = vpop.f32.mrb[0].mxu0
      %1064 = vmatprep.mubr.bf16.mxu0 0
      %1065 = vmatmul.mubr.bf16.gmra.mrb[0].mxu0 %v947
      %v1066 = vpop.f32.mrb[0].mxu0
      %v1067 = vadd.f32 %v874, %v1066
      %v1068 = vpop.f32.mrb[0].mxu0
      %v1069 = vpop.f32.mrb[0].mxu0
      %v1070 = vadd.f32 %v877, %v1069
      %v1071 = vpop.f32.mrb[0].mxu0
      %1072 = vmatprep.mubr.bf16.mxu0 0
      %1073 = vmatmul.mubr.bf16.gmra.mrb[0].mxu0 %v948
      %v1074 = vpop.f32.mrb[0].mxu0
      %v1075 = vadd.f32 %v882, %v1074
      %v1076 = vpop.f32.mrb[0].mxu0
      %v1077 = vpop.f32.mrb[0].mxu0
      %v1078 = vadd.f32 %v885, %v1077
      %v1079 = vpop.f32.mrb[0].mxu0
      %1080 = vmatprep.mubr.bf16.mxu0 0
      %1081 = vmatmul.mubr.bf16.gmra.mrb[0].mxu0 %v949
      %v1082 = vpop.f32.mrb[0].mxu0
      %v1083 = vadd.f32 %v890, %v1082
      %v1084 = vpop.f32.mrb[0].mxu0
      %v1085 = vpop.f32.mrb[0].mxu0
      %v1086 = vadd.f32 %v893, %v1085
      %v1087 = vpop.f32.mrb[0].mxu0
      %1088 = vmatprep.mubr.bf16.mxu0 0
      %1089 = vmatmul.mubr.bf16.gmra.mrb[0].mxu0 %v950
      %v1090 = vpop.f32.mrb[0].mxu0
      %v1091 = vadd.f32 %v898, %v1090
      %v1092 = vpop.f32.mrb[0].mxu0
      %v1093 = vpop.f32.mrb[0].mxu0
      %v1094 = vadd.f32 %v901, %v1093
      %v1095 = vpop.f32.mrb[0].mxu0
      %1096 = vmatprep.mubr.bf16.mxu0 0
      %1097 = vmatmul.mubr.bf16.gmra.mrb[0].mxu0 %v951
      %v1098 = vpop.f32.mrb[0].mxu0
      %v1099 = vadd.f32 %v906, %v1098
      %v1100 = vpop.f32.mrb[0].mxu0
      %v1101 = vpop.f32.mrb[0].mxu0
      %v1102 = vadd.f32 %v909, %v1101
      %v1103 = vpop.f32.mrb[0].mxu0
      %1104 = vdwg.mxu0
      %v1105 = vld [vmem:[%s338] sm:$0xf]
      %v1106 = vld [vmem:[%s338 + $0x8] sm:$0xf]
      %v1107 = vld [vmem:[%s338 + $0x10] sm:$0xf]
      %v1108 = vld [vmem:[%s338 + $0x18] sm:$0xf]
      %v1109 = vld [vmem:[%s338 + $0x20] sm:$0xf]
      %v1110 = vld [vmem:[%s338 + $0x28] sm:$0xf]
      %v1111 = vld [vmem:[%s338 + $0x30] sm:$0xf]
      %v1112 = vld [vmem:[%s338 + $0x38] sm:$0xf]
      %v1113 = vld [vmem:[%s338 + $0x40] sm:$0xf]
      %v1114 = vld [vmem:[%s338 + $0x48] sm:$0xf]
      %v1115 = vld [vmem:[%s338 + $0x50] sm:$0xf]
      %v1116 = vld [vmem:[%s338 + $0x58] sm:$0xf]
      %v1117 = vld [vmem:[%s338 + $0x60] sm:$0xf]
      %v1118 = vld [vmem:[%s338 + $0x68] sm:$0xf]
      %v1119 = vld [vmem:[%s338 + $0x70] sm:$0xf]
      %v1120 = vld [vmem:[%s338 + $0x78] sm:$0xf]
      %s1121 = scalar_lea.vmem %s1, 128
      %v1122 = vld [vmem:[%s1121] sm:$0xf]
      %v1123 = vld [vmem:[%s1121 + $0x4] sm:$0xf]
      %v1124 = vld [vmem:[%s1121 + $0x8] sm:$0xf]
      %v1125 = vld [vmem:[%s1121 + $0xc] sm:$0xf]
      %v1126 = vld [vmem:[%s1121 + $0x10] sm:$0xf]
      %v1127 = vld [vmem:[%s1121 + $0x14] sm:$0xf]
      %v1128 = vld [vmem:[%s1121 + $0x18] sm:$0xf]
      %v1129 = vld [vmem:[%s1121 + $0x1c] sm:$0xf]
      %v1130 = vld [vmem:[%s1121 + $0x20] sm:$0xf]
      %v1131 = vld [vmem:[%s1121 + $0x24] sm:$0xf]
      %v1132 = vld [vmem:[%s1121 + $0x28] sm:$0xf]
      %v1133 = vld [vmem:[%s1121 + $0x2c] sm:$0xf]
      %v1134 = vld [vmem:[%s1121 + $0x30] sm:$0xf]
      %v1135 = vld [vmem:[%s1121 + $0x34] sm:$0xf]
      %v1136 = vld [vmem:[%s1121 + $0x38] sm:$0xf]
      %v1137 = vld [vmem:[%s1121 + $0x3c] sm:$0xf]
      %v1154 = vunpack.c.l.b16 %v1105
      %v1155 = vunpack.c.l.b16 %v1106
      %v1156 = vunpack.c.l.b16 %v1107
      %v1157 = vunpack.c.l.b16 %v1108
      %v1158 = vunpack.c.l.b16 %v1109
      %v1159 = vunpack.c.l.b16 %v1110
      %v1160 = vunpack.c.l.b16 %v1111
      %v1161 = vunpack.c.l.b16 %v1112
      %v1162 = vunpack.c.l.b16 %v1113
      %v1163 = vunpack.c.l.b16 %v1114
      %v1164 = vunpack.c.l.b16 %v1115
      %v1165 = vunpack.c.l.b16 %v1116
      %v1166 = vunpack.c.l.b16 %v1117
      %v1167 = vunpack.c.l.b16 %v1118
      %v1168 = vunpack.c.l.b16 %v1119
      %v1169 = vunpack.c.l.b16 %v1120
      %v1170 = vpack.c.b16 %v1155, %v1154
      %v1171 = vpack.c.b16 %v1157, %v1156
      %v1172 = vpack.c.b16 %v1159, %v1158
      %v1173 = vpack.c.b16 %v1161, %v1160
      %v1174 = vpack.c.b16 %v1163, %v1162
      %v1175 = vpack.c.b16 %v1165, %v1164
      %v1176 = vpack.c.b16 %v1167, %v1166
      %v1177 = vpack.c.b16 %v1169, %v1168
      %v1202 = vunpack.c.l.b16 %v1122
      %v1203 = vunpack.c.l.b16 %v1123
      %v1204 = vunpack.c.l.b16 %v1124
      %v1205 = vunpack.c.l.b16 %v1125
      %v1206 = vunpack.c.l.b16 %v1126
      %v1207 = vunpack.c.l.b16 %v1127
      %v1208 = vunpack.c.l.b16 %v1128
      %v1209 = vunpack.c.l.b16 %v1129
      %v1210 = vunpack.c.l.b16 %v1130
      %v1211 = vunpack.c.l.b16 %v1131
      %v1212 = vunpack.c.l.b16 %v1132
      %v1213 = vunpack.c.l.b16 %v1133
      %v1214 = vunpack.c.l.b16 %v1134
      %v1215 = vunpack.c.l.b16 %v1135
      %v1216 = vunpack.c.l.b16 %v1136
      %v1217 = vunpack.c.l.b16 %v1137
      %v1218 = vpack.c.b16 %v1203, %v1202
      %v1219 = vpack.c.b16 %v1205, %v1204
      %v1220 = vpack.c.b16 %v1207, %v1206
      %v1221 = vpack.c.b16 %v1209, %v1208
      %v1222 = vpack.c.b16 %v1211, %v1210
      %v1223 = vpack.c.b16 %v1213, %v1212
      %v1224 = vpack.c.b16 %v1215, %v1214
      %v1225 = vpack.c.b16 %v1217, %v1216
      %1234 = vmatprep.subr.bf16.mxu0 0
      %1235 = vmatpush1.bf16.msra.mxu0 %v1218
      %1236 = vmatprep.subr.bf16.mxu0 0
      %1237 = vmatpush1.bf16.msra.mxu0 %v1219
      %1238 = vmatprep.subr.bf16.mxu0 0
      %1239 = vmatpush1.bf16.msra.mxu0 %v1220
      %1240 = vmatprep.subr.bf16.mxu0 0
      %1241 = vmatpush1.bf16.msra.mxu0 %v1221
      %1242 = vmatprep.subr.bf16.mxu0 0
      %1243 = vmatpush1.bf16.msra.mxu0 %v1222
      %1244 = vmatprep.subr.bf16.mxu0 0
      %1245 = vmatpush1.bf16.msra.mxu0 %v1223
      %1246 = vmatprep.subr.bf16.mxu0 0
      %1247 = vmatpush1.bf16.msra.mxu0 %v1224
      %1248 = vmatprep.subr.bf16.mxu0 0
      %1249 = vmatpush1.bf16.msra.mxu0 %v1225
      %1250 = vmatprep.subr.bf16.mxu0 0
      %1251 = vmatpush1.bf16.msra.mxu0 0
      %1252 = vmatprep.subr.bf16.mxu0 0
      %1253 = vmatpush1.bf16.msra.mxu0 0
      %1254 = vmatprep.subr.bf16.mxu0 0
      %1255 = vmatpush1.bf16.msra.mxu0 0
      %1256 = vmatprep.subr.bf16.mxu0 0
      %1257 = vmatpush1.bf16.msra.mxu0 0
      %1258 = vmatprep.subr.bf16.mxu0 0
      %1259 = vmatpush1.bf16.msra.mxu0 0
      %1260 = vmatprep.subr.bf16.mxu0 0
      %1261 = vmatpush1.bf16.msra.mxu0 0
      %1262 = vmatprep.subr.bf16.mxu0 0
      %1263 = vmatpush1.bf16.msra.mxu0 0
      %1264 = vmatprep.subr.bf16.mxu0 0
      %1265 = vmatpush1.bf16.msra.mxu0 0
      %1266 = vmatprep.mubr.bf16.mxu0 0
      %1267 = vmatmul.mubr.bf16.gmra.mrb[0].mxu0 %v1170
      %v1268 = vpop.f32.mrb[0].mxu0
      %v1269 = vadd.f32 0.0, %v1268
      %v1270 = vpop.f32.mrb[0].mxu0
      %v1271 = vpop.f32.mrb[0].mxu0
      %v1272 = vadd.f32 0.0, %v1271
      %v1273 = vpop.f32.mrb[0].mxu0
      %1274 = vmatprep.mubr.bf16.mxu0 0
      %1275 = vmatmul.mubr.bf16.gmra.mrb[0].mxu0 %v1171
      %v1276 = vpop.f32.mrb[0].mxu0
      %v1277 = vadd.f32 0.0, %v1276
      %v1278 = vpop.f32.mrb[0].mxu0
      %v1279 = vpop.f32.mrb[0].mxu0
      %v1280 = vadd.f32 0.0, %v1279
      %v1281 = vpop.f32.mrb[0].mxu0
      %1282 = vmatprep.mubr.bf16.mxu0 0
      %1283 = vmatmul.mubr.bf16.gmra.mrb[0].mxu0 %v1172
      %v1284 = vpop.f32.mrb[0].mxu0
      %v1285 = vadd.f32 0.0, %v1284
      %v1286 = vpop.f32.mrb[0].mxu0
      %v1287 = vpop.f32.mrb[0].mxu0
      %v1288 = vadd.f32 0.0, %v1287
      %v1289 = vpop.f32.mrb[0].mxu0
      %1290 = vmatprep.mubr.bf16.mxu0 0
      %1291 = vmatmul.mubr.bf16.gmra.mrb[0].mxu0 %v1173
      %v1292 = vpop.f32.mrb[0].mxu0
      %v1293 = vadd.f32 0.0, %v1292
      %v1294 = vpop.f32.mrb[0].mxu0
      %v1295 = vpop.f32.mrb[0].mxu0
      %v1296 = vadd.f32 0.0, %v1295
      %v1297 = vpop.f32.mrb[0].mxu0
      %1298 = vmatprep.mubr.bf16.mxu0 0
      %1299 = vmatmul.mubr.bf16.gmra.mrb[0].mxu0 %v1174
      %v1300 = vpop.f32.mrb[0].mxu0
      %v1301 = vadd.f32 0.0, %v1300
      %v1302 = vpop.f32.mrb[0].mxu0
      %v1303 = vpop.f32.mrb[0].mxu0
      %v1304 = vadd.f32 0.0, %v1303
      %v1305 = vpop.f32.mrb[0].mxu0
      %1306 = vmatprep.mubr.bf16.mxu0 0
      %1307 = vmatmul.mubr.bf16.gmra.mrb[0].mxu0 %v1175
      %v1308 = vpop.f32.mrb[0].mxu0
      %v1309 = vadd.f32 0.0, %v1308
      %v1310 = vpop.f32.mrb[0].mxu0
      %v1311 = vpop.f32.mrb[0].mxu0
      %v1312 = vadd.f32 0.0, %v1311
      %v1313 = vpop.f32.mrb[0].mxu0
      %1314 = vmatprep.mubr.bf16.mxu0 0
      %1315 = vmatmul.mubr.bf16.gmra.mrb[0].mxu0 %v1176
      %v1316 = vpop.f32.mrb[0].mxu0
      %v1317 = vadd.f32 0.0, %v1316
      %v1318 = vpop.f32.mrb[0].mxu0
      %v1319 = vpop.f32.mrb[0].mxu0
      %v1320 = vadd.f32 0.0, %v1319
      %v1321 = vpop.f32.mrb[0].mxu0
      %1322 = vmatprep.mubr.bf16.mxu0 0
      %1323 = vmatmul.mubr.bf16.gmra.mrb[0].mxu0 %v1177
      %v1324 = vpop.f32.mrb[0].mxu0
      %v1325 = vadd.f32 0.0, %v1324
      %v1326 = vpop.f32.mrb[0].mxu0
      %v1327 = vpop.f32.mrb[0].mxu0
      %v1328 = vadd.f32 0.0, %v1327
      %v1329 = vpop.f32.mrb[0].mxu0
      %1330 = vdwg.mxu0
      %v1331 = vadd.f32 %v1043, %v1269
      %v1332 = vadd.f32 %v1046, %v1272
      %v1333 = vadd.f32 %v1051, %v1277
      %v1334 = vadd.f32 %v1054, %v1280
      %v1335 = vadd.f32 %v1059, %v1285
      %v1336 = vadd.f32 %v1062, %v1288
      %v1337 = vadd.f32 %v1067, %v1293
      %v1338 = vadd.f32 %v1070, %v1296
      %v1339 = vadd.f32 %v1075, %v1301
      %v1340 = vadd.f32 %v1078, %v1304
      %v1341 = vadd.f32 %v1083, %v1309
      %v1342 = vadd.f32 %v1086, %v1312
      %v1343 = vadd.f32 %v1091, %v1317
      %v1344 = vadd.f32 %v1094, %v1320
      %v1345 = vadd.f32 %v1099, %v1325
      %v1346 = vadd.f32 %v1102, %v1328
      %v1347 = vld [vmem:[%s338] sm:$0xf]
      %v1348 = vld [vmem:[%s338 + $0x4] sm:$0x1]
      %v1349 = vld [vmem:[%s338 + $0x8] sm:$0xf]
      %v1350 = vld [vmem:[%s338 + $0xc] sm:$0x1]
      %v1351 = vld [vmem:[%s338 + $0x10] sm:$0xf]
      %v1352 = vld [vmem:[%s338 + $0x14] sm:$0x1]
      %v1353 = vld [vmem:[%s338 + $0x18] sm:$0xf]
      %v1354 = vld [vmem:[%s338 + $0x1c] sm:$0x1]
      %v1355 = vld [vmem:[%s338 + $0x20] sm:$0xf]
      %v1356 = vld [vmem:[%s338 + $0x24] sm:$0x1]
      %v1357 = vld [vmem:[%s338 + $0x28] sm:$0xf]
      %v1358 = vld [vmem:[%s338 + $0x2c] sm:$0x1]
      %v1359 = vld [vmem:[%s338 + $0x30] sm:$0xf]
      %v1360 = vld [vmem:[%s338 + $0x34] sm:$0x1]
      %v1361 = vld [vmem:[%s338 + $0x38] sm:$0xf]
      %v1362 = vld [vmem:[%s338 + $0x3c] sm:$0x1]
      %v1363 = vld [vmem:[%s338 + $0x40] sm:$0xf]
      %v1364 = vld [vmem:[%s338 + $0x44] sm:$0x1]
      %v1365 = vld [vmem:[%s338 + $0x48] sm:$0xf]
      %v1366 = vld [vmem:[%s338 + $0x4c] sm:$0x1]
      %v1367 = vld [vmem:[%s338 + $0x50] sm:$0xf]
      %v1368 = vld [vmem:[%s338 + $0x54] sm:$0x1]
      %v1369 = vld [vmem:[%s338 + $0x58] sm:$0xf]
      %v1370 = vld [vmem:[%s338 + $0x5c] sm:$0x1]
      %v1371 = vld [vmem:[%s338 + $0x60] sm:$0xf]
      %v1372 = vld [vmem:[%s338 + $0x64] sm:$0x1]
      %v1373 = vld [vmem:[%s338 + $0x68] sm:$0xf]
      %v1374 = vld [vmem:[%s338 + $0x6c] sm:$0x1]
      %v1375 = vld [vmem:[%s338 + $0x70] sm:$0xf]
      %v1376 = vld [vmem:[%s338 + $0x74] sm:$0x1]
      %v1377 = vld [vmem:[%s338 + $0x78] sm:$0xf]
      %v1378 = vld [vmem:[%s338 + $0x7c] sm:$0x1]
      %v1380 = vshrl.u32 %v1347, 16
      %v1382 = vrot.slane %v1380, 4
      %v1383 = vshll.u32 %v1347, 16
      %v1385 = vrot.slane %v1383, 5
      %v1386 = vor.u32 %v1382, %v1385
      %v1387 = vrot.slane %v1386, 4
      %v1389 = vshll.u32 %v1348, 16
      %v1391 = vrot.slane %v1389, 5
      %v1392 = vsel %vm493, %v1387, %v1391
      %v1394 = vshrl.u32 %v1349, 16
      %v1396 = vrot.slane %v1394, 4
      %v1397 = vshll.u32 %v1349, 16
      %v1399 = vrot.slane %v1397, 5
      %v1400 = vor.u32 %v1396, %v1399
      %v1401 = vrot.slane %v1400, 4
      %v1403 = vshll.u32 %v1350, 16
      %v1405 = vrot.slane %v1403, 5
      %v1406 = vsel %vm493, %v1401, %v1405
      %v1408 = vshrl.u32 %v1351, 16
      %v1410 = vrot.slane %v1408, 4
      %v1411 = vshll.u32 %v1351, 16
      %v1413 = vrot.slane %v1411, 5
      %v1414 = vor.u32 %v1410, %v1413
      %v1415 = vrot.slane %v1414, 4
      %v1417 = vshll.u32 %v1352, 16
      %v1419 = vrot.slane %v1417, 5
      %v1420 = vsel %vm493, %v1415, %v1419
      %v1422 = vshrl.u32 %v1353, 16
      %v1424 = vrot.slane %v1422, 4
      %v1425 = vshll.u32 %v1353, 16
      %v1427 = vrot.slane %v1425, 5
      %v1428 = vor.u32 %v1424, %v1427
      %v1429 = vrot.slane %v1428, 4
      %v1431 = vshll.u32 %v1354, 16
      %v1433 = vrot.slane %v1431, 5
      %v1434 = vsel %vm493, %v1429, %v1433
      %v1436 = vshrl.u32 %v1355, 16
      %v1438 = vrot.slane %v1436, 4
      %v1439 = vshll.u32 %v1355, 16
      %v1441 = vrot.slane %v1439, 5
      %v1442 = vor.u32 %v1438, %v1441
      %v1443 = vrot.slane %v1442, 4
      %v1445 = vshll.u32 %v1356, 16
      %v1447 = vrot.slane %v1445, 5
      %v1448 = vsel %vm493, %v1443, %v1447
      %v1450 = vshrl.u32 %v1357, 16
      %v1452 = vrot.slane %v1450, 4
      %v1453 = vshll.u32 %v1357, 16
      %v1455 = vrot.slane %v1453, 5
      %v1456 = vor.u32 %v1452, %v1455
      %v1457 = vrot.slane %v1456, 4
      %v1459 = vshll.u32 %v1358, 16
      %v1461 = vrot.slane %v1459, 5
      %v1462 = vsel %vm493, %v1457, %v1461
      %v1464 = vshrl.u32 %v1359, 16
      %v1466 = vrot.slane %v1464, 4
      %v1467 = vshll.u32 %v1359, 16
      %v1469 = vrot.slane %v1467, 5
      %v1470 = vor.u32 %v1466, %v1469
      %v1471 = vrot.slane %v1470, 4
      %v1473 = vshll.u32 %v1360, 16
      %v1475 = vrot.slane %v1473, 5
      %v1476 = vsel %vm493, %v1471, %v1475
      %v1478 = vshrl.u32 %v1361, 16
      %v1480 = vrot.slane %v1478, 4
      %v1481 = vshll.u32 %v1361, 16
      %v1483 = vrot.slane %v1481, 5
      %v1484 = vor.u32 %v1480, %v1483
      %v1485 = vrot.slane %v1484, 4
      %v1487 = vshll.u32 %v1362, 16
      %v1489 = vrot.slane %v1487, 5
      %v1490 = vsel %vm493, %v1485, %v1489
      %v1492 = vshrl.u32 %v1363, 16
      %v1494 = vrot.slane %v1492, 4
      %v1495 = vshll.u32 %v1363, 16
      %v1497 = vrot.slane %v1495, 5
      %v1498 = vor.u32 %v1494, %v1497
      %v1499 = vrot.slane %v1498, 4
      %v1501 = vshll.u32 %v1364, 16
      %v1503 = vrot.slane %v1501, 5
      %v1504 = vsel %vm493, %v1499, %v1503
      %v1506 = vshrl.u32 %v1365, 16
      %v1508 = vrot.slane %v1506, 4
      %v1509 = vshll.u32 %v1365, 16
      %v1511 = vrot.slane %v1509, 5
      %v1512 = vor.u32 %v1508, %v1511
      %v1513 = vrot.slane %v1512, 4
      %v1515 = vshll.u32 %v1366, 16
      %v1517 = vrot.slane %v1515, 5
      %v1518 = vsel %vm493, %v1513, %v1517
      %v1520 = vshrl.u32 %v1367, 16
      %v1522 = vrot.slane %v1520, 4
      %v1523 = vshll.u32 %v1367, 16
      %v1525 = vrot.slane %v1523, 5
      %v1526 = vor.u32 %v1522, %v1525
      %v1527 = vrot.slane %v1526, 4
      %v1529 = vshll.u32 %v1368, 16
      %v1531 = vrot.slane %v1529, 5
      %v1532 = vsel %vm493, %v1527, %v1531
      %v1534 = vshrl.u32 %v1369, 16
      %v1536 = vrot.slane %v1534, 4
      %v1537 = vshll.u32 %v1369, 16
      %v1539 = vrot.slane %v1537, 5
      %v1540 = vor.u32 %v1536, %v1539
      %v1541 = vrot.slane %v1540, 4
      %v1543 = vshll.u32 %v1370, 16
      %v1545 = vrot.slane %v1543, 5
      %v1546 = vsel %vm493, %v1541, %v1545
      %v1548 = vshrl.u32 %v1371, 16
      %v1550 = vrot.slane %v1548, 4
      %v1551 = vshll.u32 %v1371, 16
      %v1553 = vrot.slane %v1551, 5
      %v1554 = vor.u32 %v1550, %v1553
      %v1555 = vrot.slane %v1554, 4
      %v1557 = vshll.u32 %v1372, 16
      %v1559 = vrot.slane %v1557, 5
      %v1560 = vsel %vm493, %v1555, %v1559
      %v1562 = vshrl.u32 %v1373, 16
      %v1564 = vrot.slane %v1562, 4
      %v1565 = vshll.u32 %v1373, 16
      %v1567 = vrot.slane %v1565, 5
      %v1568 = vor.u32 %v1564, %v1567
      %v1569 = vrot.slane %v1568, 4
      %v1571 = vshll.u32 %v1374, 16
      %v1573 = vrot.slane %v1571, 5
      %v1574 = vsel %vm493, %v1569, %v1573
      %v1576 = vshrl.u32 %v1375, 16
      %v1578 = vrot.slane %v1576, 4
      %v1579 = vshll.u32 %v1375, 16
      %v1581 = vrot.slane %v1579, 5
      %v1582 = vor.u32 %v1578, %v1581
      %v1583 = vrot.slane %v1582, 4
      %v1585 = vshll.u32 %v1376, 16
      %v1587 = vrot.slane %v1585, 5
      %v1588 = vsel %vm493, %v1583, %v1587
      %v1590 = vshrl.u32 %v1377, 16
      %v1592 = vrot.slane %v1590, 4
      %v1593 = vshll.u32 %v1377, 16
      %v1595 = vrot.slane %v1593, 5
      %v1596 = vor.u32 %v1592, %v1595
      %v1597 = vrot.slane %v1596, 4
      %v1599 = vshll.u32 %v1378, 16
      %v1601 = vrot.slane %v1599, 5
      %v1602 = vsel %vm493, %v1597, %v1601
      %s1603 = scalar_lea.vmem %s1, 192
      %v1604 = vld [vmem:[%s1603] sm:$0xf]
      %v1605 = vld [vmem:[%s1603 + $0x4] sm:$0xf]
      %v1606 = vld [vmem:[%s1603 + $0x8] sm:$0xf]
      %v1607 = vld [vmem:[%s1603 + $0xc] sm:$0xf]
      %v1608 = vld [vmem:[%s1603 + $0x10] sm:$0xf]
      %v1609 = vld [vmem:[%s1603 + $0x14] sm:$0xf]
      %v1610 = vld [vmem:[%s1603 + $0x18] sm:$0xf]
      %v1611 = vld [vmem:[%s1603 + $0x1c] sm:$0xf]
      %v1612 = vld [vmem:[%s1603 + $0x20] sm:$0xf]
      %v1613 = vld [vmem:[%s1603 + $0x24] sm:$0xf]
      %v1614 = vld [vmem:[%s1603 + $0x28] sm:$0xf]
      %v1615 = vld [vmem:[%s1603 + $0x2c] sm:$0xf]
      %v1616 = vld [vmem:[%s1603 + $0x30] sm:$0xf]
      %v1617 = vld [vmem:[%s1603 + $0x34] sm:$0xf]
      %v1618 = vld [vmem:[%s1603 + $0x38] sm:$0xf]
      %v1619 = vld [vmem:[%s1603 + $0x3c] sm:$0xf]
      %v1620 = vunpack.c.l.b16 %v1392
      %v1621 = vunpack.c.l.b16 %v1406
      %v1622 = vunpack.c.l.b16 %v1420
      %v1623 = vunpack.c.l.b16 %v1434
      %v1624 = vunpack.c.l.b16 %v1448
      %v1625 = vunpack.c.l.b16 %v1462
      %v1626 = vunpack.c.l.b16 %v1476
      %v1627 = vunpack.c.l.b16 %v1490
      %v1628 = vunpack.c.l.b16 %v1504
      %v1629 = vunpack.c.l.b16 %v1518
      %v1630 = vunpack.c.l.b16 %v1532
      %v1631 = vunpack.c.l.b16 %v1546
      %v1632 = vunpack.c.l.b16 %v1560
      %v1633 = vunpack.c.l.b16 %v1574
      %v1634 = vunpack.c.l.b16 %v1588
      %v1635 = vunpack.c.l.b16 %v1602
      %v1636 = vpack.c.b16 %v1621, %v1620
      %v1637 = vpack.c.b16 %v1623, %v1622
      %v1638 = vpack.c.b16 %v1625, %v1624
      %v1639 = vpack.c.b16 %v1627, %v1626
      %v1640 = vpack.c.b16 %v1629, %v1628
      %v1641 = vpack.c.b16 %v1631, %v1630
      %v1642 = vpack.c.b16 %v1633, %v1632
      %v1643 = vpack.c.b16 %v1635, %v1634
      %v1668 = vunpack.c.l.b16 %v1604
      %v1669 = vunpack.c.l.b16 %v1605
      %v1670 = vunpack.c.l.b16 %v1606
      %v1671 = vunpack.c.l.b16 %v1607
      %v1672 = vunpack.c.l.b16 %v1608
      %v1673 = vunpack.c.l.b16 %v1609
      %v1674 = vunpack.c.l.b16 %v1610
      %v1675 = vunpack.c.l.b16 %v1611
      %v1676 = vunpack.c.l.b16 %v1612
      %v1677 = vunpack.c.l.b16 %v1613
      %v1678 = vunpack.c.l.b16 %v1614
      %v1679 = vunpack.c.l.b16 %v1615
      %v1680 = vunpack.c.l.b16 %v1616
      %v1681 = vunpack.c.l.b16 %v1617
      %v1682 = vunpack.c.l.b16 %v1618
      %v1683 = vunpack.c.l.b16 %v1619
      %v1684 = vpack.c.b16 %v1669, %v1668
      %v1685 = vpack.c.b16 %v1671, %v1670
      %v1686 = vpack.c.b16 %v1673, %v1672
      %v1687 = vpack.c.b16 %v1675, %v1674
      %v1688 = vpack.c.b16 %v1677, %v1676
      %v1689 = vpack.c.b16 %v1679, %v1678
      %v1690 = vpack.c.b16 %v1681, %v1680
      %v1691 = vpack.c.b16 %v1683, %v1682
      %1700 = vmatprep.subr.bf16.mxu0 0
      %1701 = vmatpush1.bf16.msra.mxu0 %v1684
      %1702 = vmatprep.subr.bf16.mxu0 0
      %1703 = vmatpush1.bf16.msra.mxu0 %v1685
      %1704 = vmatprep.subr.bf16.mxu0 0
      %1705 = vmatpush1.bf16.msra.mxu0 %v1686
      %1706 = vmatprep.subr.bf16.mxu0 0
      %1707 = vmatpush1.bf16.msra.mxu0 %v1687
      %1708 = vmatprep.subr.bf16.mxu0 0
      %1709 = vmatpush1.bf16.msra.mxu0 %v1688
      %1710 = vmatprep.subr.bf16.mxu0 0
      %1711 = vmatpush1.bf16.msra.mxu0 %v1689
      %1712 = vmatprep.subr.bf16.mxu0 0
      %1713 = vmatpush1.bf16.msra.mxu0 %v1690
      %1714 = vmatprep.subr.bf16.mxu0 0
      %1715 = vmatpush1.bf16.msra.mxu0 %v1691
      %1716 = vmatprep.subr.bf16.mxu0 0
      %1717 = vmatpush1.bf16.msra.mxu0 0
      %1718 = vmatprep.subr.bf16.mxu0 0
      %1719 = vmatpush1.bf16.msra.mxu0 0
      %1720 = vmatprep.subr.bf16.mxu0 0
      %1721 = vmatpush1.bf16.msra.mxu0 0
      %1722 = vmatprep.subr.bf16.mxu0 0
      %1723 = vmatpush1.bf16.msra.mxu0 0
      %1724 = vmatprep.subr.bf16.mxu0 0
      %1725 = vmatpush1.bf16.msra.mxu0 0
      %1726 = vmatprep.subr.bf16.mxu0 0
      %1727 = vmatpush1.bf16.msra.mxu0 0
      %1728 = vmatprep.subr.bf16.mxu0 0
      %1729 = vmatpush1.bf16.msra.mxu0 0
      %1730 = vmatprep.subr.bf16.mxu0 0
      %1731 = vmatpush1.bf16.msra.mxu0 0
      %1732 = vmatprep.mubr.bf16.mxu0 0
      %1733 = vmatmul.mubr.bf16.gmra.mrb[0].mxu0 %v1636
      %v1734 = vpop.f32.mrb[0].mxu0
      %v1735 = vadd.f32 0.0, %v1734
      %v1736 = vpop.f32.mrb[0].mxu0
      %v1737 = vpop.f32.mrb[0].mxu0
      %v1738 = vadd.f32 0.0, %v1737
      %v1739 = vpop.f32.mrb[0].mxu0
      %1740 = vmatprep.mubr.bf16.mxu0 0
      %1741 = vmatmul.mubr.bf16.gmra.mrb[0].mxu0 %v1637
      %v1742 = vpop.f32.mrb[0].mxu0
      %v1743 = vadd.f32 0.0, %v1742
      %v1744 = vpop.f32.mrb[0].mxu0
      %v1745 = vpop.f32.mrb[0].mxu0
      %v1746 = vadd.f32 0.0, %v1745
      %v1747 = vpop.f32.mrb[0].mxu0
      %1748 = vmatprep.mubr.bf16.mxu0 0
      %1749 = vmatmul.mubr.bf16.gmra.mrb[0].mxu0 %v1638
      %v1750 = vpop.f32.mrb[0].mxu0
      %v1751 = vadd.f32 0.0, %v1750
      %v1752 = vpop.f32.mrb[0].mxu0
      %v1753 = vpop.f32.mrb[0].mxu0
      %v1754 = vadd.f32 0.0, %v1753
      %v1755 = vpop.f32.mrb[0].mxu0
      %1756 = vmatprep.mubr.bf16.mxu0 0
      %1757 = vmatmul.mubr.bf16.gmra.mrb[0].mxu0 %v1639
      %v1758 = vpop.f32.mrb[0].mxu0
      %v1759 = vadd.f32 0.0, %v1758
      %v1760 = vpop.f32.mrb[0].mxu0
      %v1761 = vpop.f32.mrb[0].mxu0
      %v1762 = vadd.f32 0.0, %v1761
      %v1763 = vpop.f32.mrb[0].mxu0
      %1764 = vmatprep.mubr.bf16.mxu0 0
      %1765 = vmatmul.mubr.bf16.gmra.mrb[0].mxu0 %v1640
      %v1766 = vpop.f32.mrb[0].mxu0
      %v1767 = vadd.f32 0.0, %v1766
      %v1768 = vpop.f32.mrb[0].mxu0
      %v1769 = vpop.f32.mrb[0].mxu0
      %v1770 = vadd.f32 0.0, %v1769
      %v1771 = vpop.f32.mrb[0].mxu0
      %1772 = vmatprep.mubr.bf16.mxu0 0
      %1773 = vmatmul.mubr.bf16.gmra.mrb[0].mxu0 %v1641
      %v1774 = vpop.f32.mrb[0].mxu0
      %v1775 = vadd.f32 0.0, %v1774
      %v1776 = vpop.f32.mrb[0].mxu0
      %v1777 = vpop.f32.mrb[0].mxu0
      %v1778 = vadd.f32 0.0, %v1777
      %v1779 = vpop.f32.mrb[0].mxu0
      %1780 = vmatprep.mubr.bf16.mxu0 0
      %1781 = vmatmul.mubr.bf16.gmra.mrb[0].mxu0 %v1642
      %v1782 = vpop.f32.mrb[0].mxu0
      %v1783 = vadd.f32 0.0, %v1782
      %v1784 = vpop.f32.mrb[0].mxu0
      %v1785 = vpop.f32.mrb[0].mxu0
      %v1786 = vadd.f32 0.0, %v1785
      %v1787 = vpop.f32.mrb[0].mxu0
      %1788 = vmatprep.mubr.bf16.mxu0 0
      %1789 = vmatmul.mubr.bf16.gmra.mrb[0].mxu0 %v1643
      %v1790 = vpop.f32.mrb[0].mxu0
      %v1791 = vadd.f32 0.0, %v1790
      %v1792 = vpop.f32.mrb[0].mxu0
      %v1793 = vpop.f32.mrb[0].mxu0
      %v1794 = vadd.f32 0.0, %v1793
      %v1795 = vpop.f32.mrb[0].mxu0
      %1796 = vdwg.mxu0
      %v1797 = vadd.f32 %v1331, %v1735
      %v1798 = vadd.f32 %v1332, %v1738
      %v1799 = vadd.f32 %v1333, %v1743
      %v1800 = vadd.f32 %v1334, %v1746
      %v1801 = vadd.f32 %v1335, %v1751
      %v1802 = vadd.f32 %v1336, %v1754
      %v1803 = vadd.f32 %v1337, %v1759
      %v1804 = vadd.f32 %v1338, %v1762
      %v1805 = vadd.f32 %v1339, %v1767
      %v1806 = vadd.f32 %v1340, %v1770
      %v1807 = vadd.f32 %v1341, %v1775
      %v1808 = vadd.f32 %v1342, %v1778
      %v1809 = vadd.f32 %v1343, %v1783
      %v1810 = vadd.f32 %v1344, %v1786
      %v1811 = vadd.f32 %v1345, %v1791
      %v1812 = vadd.f32 %v1346, %v1794
      %s1813 = scalar_lea.vmem [#allocation2], 16
      %v1814 = vld [vmem:[%s1813] sm:$0xf]
      %v1815 = vld [vmem:[%s1813 + $0x8] sm:$0xf]
      %v1816 = vld [vmem:[%s1813 + $0x10] sm:$0xf]
      %v1817 = vld [vmem:[%s1813 + $0x18] sm:$0xf]
      %v1818 = vld [vmem:[%s1813 + $0x20] sm:$0xf]
      %v1819 = vld [vmem:[%s1813 + $0x28] sm:$0xf]
      %v1820 = vld [vmem:[%s1813 + $0x30] sm:$0xf]
      %v1821 = vld [vmem:[%s1813 + $0x38] sm:$0xf]
      %v1822 = vld [vmem:[%s1813 + $0x40] sm:$0xf]
      %v1823 = vld [vmem:[%s1813 + $0x48] sm:$0xf]
      %v1824 = vld [vmem:[%s1813 + $0x50] sm:$0xf]
      %v1825 = vld [vmem:[%s1813 + $0x58] sm:$0xf]
      %v1826 = vld [vmem:[%s1813 + $0x60] sm:$0xf]
      %v1827 = vld [vmem:[%s1813 + $0x68] sm:$0xf]
      %v1828 = vld [vmem:[%s1813 + $0x70] sm:$0xf]
      %v1829 = vld [vmem:[%s1813 + $0x78] sm:$0xf]
      %s1830 = scalar_lea.vmem %s1, 256
      %v1831 = vld [vmem:[%s1830] sm:$0xf]
      %v1832 = vld [vmem:[%s1830 + $0x4] sm:$0xf]
      %v1833 = vld [vmem:[%s1830 + $0x8] sm:$0xf]
      %v1834 = vld [vmem:[%s1830 + $0xc] sm:$0xf]
      %v1835 = vld [vmem:[%s1830 + $0x10] sm:$0xf]
      %v1836 = vld [vmem:[%s1830 + $0x14] sm:$0xf]
      %v1837 = vld [vmem:[%s1830 + $0x18] sm:$0xf]
      %v1838 = vld [vmem:[%s1830 + $0x1c] sm:$0xf]
      %v1839 = vld [vmem:[%s1830 + $0x20] sm:$0xf]
      %v1840 = vld [vmem:[%s1830 + $0x24] sm:$0xf]
      %v1841 = vld [vmem:[%s1830 + $0x28] sm:$0xf]
      %v1842 = vld [vmem:[%s1830 + $0x2c] sm:$0xf]
      %v1843 = vld [vmem:[%s1830 + $0x30] sm:$0xf]
      %v1844 = vld [vmem:[%s1830 + $0x34] sm:$0xf]
      %v1845 = vld [vmem:[%s1830 + $0x38] sm:$0xf]
      %v1846 = vld [vmem:[%s1830 + $0x3c] sm:$0xf]
      %v1863 = vunpack.c.l.b16 %v1814
      %v1864 = vunpack.c.l.b16 %v1815
      %v1865 = vunpack.c.l.b16 %v1816
      %v1866 = vunpack.c.l.b16 %v1817
      %v1867 = vunpack.c.l.b16 %v1818
      %v1868 = vunpack.c.l.b16 %v1819
      %v1869 = vunpack.c.l.b16 %v1820
      %v1870 = vunpack.c.l.b16 %v1821
      %v1871 = vunpack.c.l.b16 %v1822
      %v1872 = vunpack.c.l.b16 %v1823
      %v1873 = vunpack.c.l.b16 %v1824
      %v1874 = vunpack.c.l.b16 %v1825
      %v1875 = vunpack.c.l.b16 %v1826
      %v1876 = vunpack.c.l.b16 %v1827
      %v1877 = vunpack.c.l.b16 %v1828
      %v1878 = vunpack.c.l.b16 %v1829
      %v1879 = vpack.c.b16 %v1864, %v1863
      %v1880 = vpack.c.b16 %v1866, %v1865
      %v1881 = vpack.c.b16 %v1868, %v1867
      %v1882 = vpack.c.b16 %v1870, %v1869
      %v1883 = vpack.c.b16 %v1872, %v1871
      %v1884 = vpack.c.b16 %v1874, %v1873
      %v1885 = vpack.c.b16 %v1876, %v1875
      %v1886 = vpack.c.b16 %v1878, %v1877
      %v1911 = vunpack.c.l.b16 %v1831
      %v1912 = vunpack.c.l.b16 %v1832
      %v1913 = vunpack.c.l.b16 %v1833
      %v1914 = vunpack.c.l.b16 %v1834
      %v1915 = vunpack.c.l.b16 %v1835
      %v1916 = vunpack.c.l.b16 %v1836
      %v1917 = vunpack.c.l.b16 %v1837
      %v1918 = vunpack.c.l.b16 %v1838
      %v1919 = vunpack.c.l.b16 %v1839
      %v1920 = vunpack.c.l.b16 %v1840
      %v1921 = vunpack.c.l.b16 %v1841
      %v1922 = vunpack.c.l.b16 %v1842
      %v1923 = vunpack.c.l.b16 %v1843
      %v1924 = vunpack.c.l.b16 %v1844
      %v1925 = vunpack.c.l.b16 %v1845
      %v1926 = vunpack.c.l.b16 %v1846
      %v1927 = vpack.c.b16 %v1912, %v1911
      %v1928 = vpack.c.b16 %v1914, %v1913
      %v1929 = vpack.c.b16 %v1916, %v1915
      %v1930 = vpack.c.b16 %v1918, %v1917
      %v1931 = vpack.c.b16 %v1920, %v1919
      %v1932 = vpack.c.b16 %v1922, %v1921
      %v1933 = vpack.c.b16 %v1924, %v1923
      %v1934 = vpack.c.b16 %v1926, %v1925
      %1943 = vmatprep.subr.bf16.mxu0 0
      %1944 = vmatpush1.bf16.msra.mxu0 %v1927
      %1945 = vmatprep.subr.bf16.mxu0 0
      %1946 = vmatpush1.bf16.msra.mxu0 %v1928
      %1947 = vmatprep.subr.bf16.mxu0 0
      %1948 = vmatpush1.bf16.msra.mxu0 %v1929
      %1949 = vmatprep.subr.bf16.mxu0 0
      %1950 = vmatpush1.bf16.msra.mxu0 %v1930
      %1951 = vmatprep.subr.bf16.mxu0 0
      %1952 = vmatpush1.bf16.msra.mxu0 %v1931
      %1953 = vmatprep.subr.bf16.mxu0 0
      %1954 = vmatpush1.bf16.msra.mxu0 %v1932
      %1955 = vmatprep.subr.bf16.mxu0 0
      %1956 = vmatpush1.bf16.msra.mxu0 %v1933
      %1957 = vmatprep.subr.bf16.mxu0 0
      %1958 = vmatpush1.bf16.msra.mxu0 %v1934
      %1959 = vmatprep.subr.bf16.mxu0 0
      %1960 = vmatpush1.bf16.msra.mxu0 0
      %1961 = vmatprep.subr.bf16.mxu0 0
      %1962 = vmatpush1.bf16.msra.mxu0 0
      %1963 = vmatprep.subr.bf16.mxu0 0
      %1964 = vmatpush1.bf16.msra.mxu0 0
      %1965 = vmatprep.subr.bf16.mxu0 0
      %1966 = vmatpush1.bf16.msra.mxu0 0
      %1967 = vmatprep.subr.bf16.mxu0 0
      %1968 = vmatpush1.bf16.msra.mxu0 0
      %1969 = vmatprep.subr.bf16.mxu0 0
      %1970 = vmatpush1.bf16.msra.mxu0 0
      %1971 = vmatprep.subr.bf16.mxu0 0
      %1972 = vmatpush1.bf16.msra.mxu0 0
      %1973 = vmatprep.subr.bf16.mxu0 0
      %1974 = vmatpush1.bf16.msra.mxu0 0
      %1975 = vmatprep.mubr.bf16.mxu0 0
      %1976 = vmatmul.mubr.bf16.gmra.mrb[0].mxu0 %v1879
      %v1977 = vpop.f32.mrb[0].mxu0
      %v1978 = vadd.f32 0.0, %v1977
      %v1979 = vpop.f32.mrb[0].mxu0
      %v1980 = vpop.f32.mrb[0].mxu0
      %v1981 = vadd.f32 0.0, %v1980
      %v1982 = vpop.f32.mrb[0].mxu0
      %1983 = vmatprep.mubr.bf16.mxu0 0
      %1984 = vmatmul.mubr.bf16.gmra.mrb[0].mxu0 %v1880
      %v1985 = vpop.f32.mrb[0].mxu0
      %v1986 = vadd.f32 0.0, %v1985
      %v1987 = vpop.f32.mrb[0].mxu0
      %v1988 = vpop.f32.mrb[0].mxu0
      %v1989 = vadd.f32 0.0, %v1988
      %v1990 = vpop.f32.mrb[0].mxu0
      %1991 = vmatprep.mubr.bf16.mxu0 0
      %1992 = vmatmul.mubr.bf16.gmra.mrb[0].mxu0 %v1881
      %v1993 = vpop.f32.mrb[0].mxu0
      %v1994 = vadd.f32 0.0, %v1993
      %v1995 = vpop.f32.mrb[0].mxu0
      %v1996 = vpop.f32.mrb[0].mxu0
      %v1997 = vadd.f32 0.0, %v1996
      %v1998 = vpop.f32.mrb[0].mxu0
      %1999 = vmatprep.mubr.bf16.mxu0 0
      %2000 = vmatmul.mubr.bf16.gmra.mrb[0].mxu0 %v1882
      %v2001 = vpop.f32.mrb[0].mxu0
      %v2002 = vadd.f32 0.0, %v2001
      %v2003 = vpop.f32.mrb[0].mxu0
      %v2004 = vpop.f32.mrb[0].mxu0
      %v2005 = vadd.f32 0.0, %v2004
      %v2006 = vpop.f32.mrb[0].mxu0
      %2007 = vmatprep.mubr.bf16.mxu0 0
      %2008 = vmatmul.mubr.bf16.gmra.mrb[0].mxu0 %v1883
      %v2009 = vpop.f32.mrb[0].mxu0
      %v2010 = vadd.f32 0.0, %v2009
      %v2011 = vpop.f32.mrb[0].mxu0
      %v2012 = vpop.f32.mrb[0].mxu0
      %v2013 = vadd.f32 0.0, %v2012
      %v2014 = vpop.f32.mrb[0].mxu0
      %2015 = vmatprep.mubr.bf16.mxu0 0
      %2016 = vmatmul.mubr.bf16.gmra.mrb[0].mxu0 %v1884
      %v2017 = vpop.f32.mrb[0].mxu0
      %v2018 = vadd.f32 0.0, %v2017
      %v2019 = vpop.f32.mrb[0].mxu0
      %v2020 = vpop.f32.mrb[0].mxu0
      %v2021 = vadd.f32 0.0, %v2020
      %v2022 = vpop.f32.mrb[0].mxu0
      %2023 = vmatprep.mubr.bf16.mxu0 0
      %2024 = vmatmul.mubr.bf16.gmra.mrb[0].mxu0 %v1885
      %v2025 = vpop.f32.mrb[0].mxu0
      %v2026 = vadd.f32 0.0, %v2025
      %v2027 = vpop.f32.mrb[0].mxu0
      %v2028 = vpop.f32.mrb[0].mxu0
      %v2029 = vadd.f32 0.0, %v2028
      %v2030 = vpop.f32.mrb[0].mxu0
      %2031 = vmatprep.mubr.bf16.mxu0 0
      %2032 = vmatmul.mubr.bf16.gmra.mrb[0].mxu0 %v1886
      %v2033 = vpop.f32.mrb[0].mxu0
      %v2034 = vadd.f32 0.0, %v2033
      %v2035 = vpop.f32.mrb[0].mxu0
      %v2036 = vpop.f32.mrb[0].mxu0
      %v2037 = vadd.f32 0.0, %v2036
      %v2038 = vpop.f32.mrb[0].mxu0
      %2039 = vdwg.mxu0
      %v2040 = vadd.f32 %v1797, %v1978
      %v2041 = vadd.f32 %v1798, %v1981
      %v2042 = vadd.f32 %v1799, %v1986
      %v2043 = vadd.f32 %v1800, %v1989
      %v2044 = vadd.f32 %v1801, %v1994
      %v2045 = vadd.f32 %v1802, %v1997
      %v2046 = vadd.f32 %v1803, %v2002
      %v2047 = vadd.f32 %v1804, %v2005
      %v2048 = vadd.f32 %v1805, %v2010
      %v2049 = vadd.f32 %v1806, %v2013
      %v2050 = vadd.f32 %v1807, %v2018
      %v2051 = vadd.f32 %v1808, %v2021
      %v2052 = vadd.f32 %v1809, %v2026
      %v2053 = vadd.f32 %v1810, %v2029
      %v2054 = vadd.f32 %v1811, %v2034
      %v2055 = vadd.f32 %v1812, %v2037
      %v2056 = vld [vmem:[%s1813] sm:$0xf]
      %v2057 = vld [vmem:[%s1813 + $0x4] sm:$0x1]
      %v2058 = vld [vmem:[%s1813 + $0x8] sm:$0xf]
      %v2059 = vld [vmem:[%s1813 + $0xc] sm:$0x1]
      %v2060 = vld [vmem:[%s1813 + $0x10] sm:$0xf]
      %v2061 = vld [vmem:[%s1813 + $0x14] sm:$0x1]
      %v2062 = vld [vmem:[%s1813 + $0x18] sm:$0xf]
      %v2063 = vld [vmem:[%s1813 + $0x1c] sm:$0x1]
      %v2064 = vld [vmem:[%s1813 + $0x20] sm:$0xf]
      %v2065 = vld [vmem:[%s1813 + $0x24] sm:$0x1]
      %v2066 = vld [vmem:[%s1813 + $0x28] sm:$0xf]
      %v2067 = vld [vmem:[%s1813 + $0x2c] sm:$0x1]
      %v2068 = vld [vmem:[%s1813 + $0x30] sm:$0xf]
      %v2069 = vld [vmem:[%s1813 + $0x34] sm:$0x1]
      %v2070 = vld [vmem:[%s1813 + $0x38] sm:$0xf]
      %v2071 = vld [vmem:[%s1813 + $0x3c] sm:$0x1]
      %v2072 = vld [vmem:[%s1813 + $0x40] sm:$0xf]
      %v2073 = vld [vmem:[%s1813 + $0x44] sm:$0x1]
      %v2074 = vld [vmem:[%s1813 + $0x48] sm:$0xf]
      %v2075 = vld [vmem:[%s1813 + $0x4c] sm:$0x1]
      %v2076 = vld [vmem:[%s1813 + $0x50] sm:$0xf]
      %v2077 = vld [vmem:[%s1813 + $0x54] sm:$0x1]
      %v2078 = vld [vmem:[%s1813 + $0x58] sm:$0xf]
      %v2079 = vld [vmem:[%s1813 + $0x5c] sm:$0x1]
      %v2080 = vld [vmem:[%s1813 + $0x60] sm:$0xf]
      %v2081 = vld [vmem:[%s1813 + $0x64] sm:$0x1]
      %v2082 = vld [vmem:[%s1813 + $0x68] sm:$0xf]
      %v2083 = vld [vmem:[%s1813 + $0x6c] sm:$0x1]
      %v2084 = vld [vmem:[%s1813 + $0x70] sm:$0xf]
      %v2085 = vld [vmem:[%s1813 + $0x74] sm:$0x1]
      %v2086 = vld [vmem:[%s1813 + $0x78] sm:$0xf]
      %v2087 = vld [vmem:[%s1813 + $0x7c] sm:$0x1]
      %v2089 = vshrl.u32 %v2056, 16
      %v2091 = vrot.slane %v2089, 4
      %v2092 = vshll.u32 %v2056, 16
      %v2094 = vrot.slane %v2092, 5
      %v2095 = vor.u32 %v2091, %v2094
      %v2096 = vrot.slane %v2095, 4
      %v2098 = vshll.u32 %v2057, 16
      %v2100 = vrot.slane %v2098, 5
      %v2101 = vsel %vm493, %v2096, %v2100
      %v2103 = vshrl.u32 %v2058, 16
      %v2105 = vrot.slane %v2103, 4
      %v2106 = vshll.u32 %v2058, 16
      %v2108 = vrot.slane %v2106, 5
      %v2109 = vor.u32 %v2105, %v2108
      %v2110 = vrot.slane %v2109, 4
      %v2112 = vshll.u32 %v2059, 16
      %v2114 = vrot.slane %v2112, 5
      %v2115 = vsel %vm493, %v2110, %v2114
      %v2117 = vshrl.u32 %v2060, 16
      %v2119 = vrot.slane %v2117, 4
      %v2120 = vshll.u32 %v2060, 16
      %v2122 = vrot.slane %v2120, 5
      %v2123 = vor.u32 %v2119, %v2122
      %v2124 = vrot.slane %v2123, 4
      %v2126 = vshll.u32 %v2061, 16
      %v2128 = vrot.slane %v2126, 5
      %v2129 = vsel %vm493, %v2124, %v2128
      %v2131 = vshrl.u32 %v2062, 16
      %v2133 = vrot.slane %v2131, 4
      %v2134 = vshll.u32 %v2062, 16
      %v2136 = vrot.slane %v2134, 5
      %v2137 = vor.u32 %v2133, %v2136
      %v2138 = vrot.slane %v2137, 4
      %v2140 = vshll.u32 %v2063, 16
      %v2142 = vrot.slane %v2140, 5
      %v2143 = vsel %vm493, %v2138, %v2142
      %v2145 = vshrl.u32 %v2064, 16
      %v2147 = vrot.slane %v2145, 4
      %v2148 = vshll.u32 %v2064, 16
      %v2150 = vrot.slane %v2148, 5
      %v2151 = vor.u32 %v2147, %v2150
      %v2152 = vrot.slane %v2151, 4
      %v2154 = vshll.u32 %v2065, 16
      %v2156 = vrot.slane %v2154, 5
      %v2157 = vsel %vm493, %v2152, %v2156
      %v2159 = vshrl.u32 %v2066, 16
      %v2161 = vrot.slane %v2159, 4
      %v2162 = vshll.u32 %v2066, 16
      %v2164 = vrot.slane %v2162, 5
      %v2165 = vor.u32 %v2161, %v2164
      %v2166 = vrot.slane %v2165, 4
      %v2168 = vshll.u32 %v2067, 16
      %v2170 = vrot.slane %v2168, 5
      %v2171 = vsel %vm493, %v2166, %v2170
      %v2173 = vshrl.u32 %v2068, 16
      %v2175 = vrot.slane %v2173, 4
      %v2176 = vshll.u32 %v2068, 16
      %v2178 = vrot.slane %v2176, 5
      %v2179 = vor.u32 %v2175, %v2178
      %v2180 = vrot.slane %v2179, 4
      %v2182 = vshll.u32 %v2069, 16
      %v2184 = vrot.slane %v2182, 5
      %v2185 = vsel %vm493, %v2180, %v2184
      %v2187 = vshrl.u32 %v2070, 16
      %v2189 = vrot.slane %v2187, 4
      %v2190 = vshll.u32 %v2070, 16
      %v2192 = vrot.slane %v2190, 5
      %v2193 = vor.u32 %v2189, %v2192
      %v2194 = vrot.slane %v2193, 4
      %v2196 = vshll.u32 %v2071, 16
      %v2198 = vrot.slane %v2196, 5
      %v2199 = vsel %vm493, %v2194, %v2198
      %v2201 = vshrl.u32 %v2072, 16
      %v2203 = vrot.slane %v2201, 4
      %v2204 = vshll.u32 %v2072, 16
      %v2206 = vrot.slane %v2204, 5
      %v2207 = vor.u32 %v2203, %v2206
      %v2208 = vrot.slane %v2207, 4
      %v2210 = vshll.u32 %v2073, 16
      %v2212 = vrot.slane %v2210, 5
      %v2213 = vsel %vm493, %v2208, %v2212
      %v2215 = vshrl.u32 %v2074, 16
      %v2217 = vrot.slane %v2215, 4
      %v2218 = vshll.u32 %v2074, 16
      %v2220 = vrot.slane %v2218, 5
      %v2221 = vor.u32 %v2217, %v2220
      %v2222 = vrot.slane %v2221, 4
      %v2224 = vshll.u32 %v2075, 16
      %v2226 = vrot.slane %v2224, 5
      %v2227 = vsel %vm493, %v2222, %v2226
      %v2229 = vshrl.u32 %v2076, 16
      %v2231 = vrot.slane %v2229, 4
      %v2232 = vshll.u32 %v2076, 16
      %v2234 = vrot.slane %v2232, 5
      %v2235 = vor.u32 %v2231, %v2234
      %v2236 = vrot.slane %v2235, 4
      %v2238 = vshll.u32 %v2077, 16
      %v2240 = vrot.slane %v2238, 5
      %v2241 = vsel %vm493, %v2236, %v2240
      %v2243 = vshrl.u32 %v2078, 16
      %v2245 = vrot.slane %v2243, 4
      %v2246 = vshll.u32 %v2078, 16
      %v2248 = vrot.slane %v2246, 5
      %v2249 = vor.u32 %v2245, %v2248
      %v2250 = vrot.slane %v2249, 4
      %v2252 = vshll.u32 %v2079, 16
      %v2254 = vrot.slane %v2252, 5
      %v2255 = vsel %vm493, %v2250, %v2254
      %v2257 = vshrl.u32 %v2080, 16
      %v2259 = vrot.slane %v2257, 4
      %v2260 = vshll.u32 %v2080, 16
      %v2262 = vrot.slane %v2260, 5
      %v2263 = vor.u32 %v2259, %v2262
      %v2264 = vrot.slane %v2263, 4
      %v2266 = vshll.u32 %v2081, 16
      %v2268 = vrot.slane %v2266, 5
      %v2269 = vsel %vm493, %v2264, %v2268
      %v2271 = vshrl.u32 %v2082, 16
      %v2273 = vrot.slane %v2271, 4
      %v2274 = vshll.u32 %v2082, 16
      %v2276 = vrot.slane %v2274, 5
      %v2277 = vor.u32 %v2273, %v2276
      %v2278 = vrot.slane %v2277, 4
      %v2280 = vshll.u32 %v2083, 16
      %v2282 = vrot.slane %v2280, 5
      %v2283 = vsel %vm493, %v2278, %v2282
      %v2285 = vshrl.u32 %v2084, 16
      %v2287 = vrot.slane %v2285, 4
      %v2288 = vshll.u32 %v2084, 16
      %v2290 = vrot.slane %v2288, 5
      %v2291 = vor.u32 %v2287, %v2290
      %v2292 = vrot.slane %v2291, 4
      %v2294 = vshll.u32 %v2085, 16
      %v2296 = vrot.slane %v2294, 5
      %v2297 = vsel %vm493, %v2292, %v2296
      %v2299 = vshrl.u32 %v2086, 16
      %v2301 = vrot.slane %v2299, 4
      %v2302 = vshll.u32 %v2086, 16
      %v2304 = vrot.slane %v2302, 5
      %v2305 = vor.u32 %v2301, %v2304
      %v2306 = vrot.slane %v2305, 4
      %v2308 = vshll.u32 %v2087, 16
      %v2310 = vrot.slane %v2308, 5
      %v2311 = vsel %vm493, %v2306, %v2310
      %s2312 = scalar_lea.vmem %s1, 320
      %v2313 = vld [vmem:[%s2312] sm:$0xf]
      %v2314 = vld [vmem:[%s2312 + $0x4] sm:$0xf]
      %v2315 = vld [vmem:[%s2312 + $0x8] sm:$0xf]
      %v2316 = vld [vmem:[%s2312 + $0xc] sm:$0xf]
      %v2317 = vld [vmem:[%s2312 + $0x10] sm:$0xf]
      %v2318 = vld [vmem:[%s2312 + $0x14] sm:$0xf]
      %v2319 = vld [vmem:[%s2312 + $0x18] sm:$0xf]
      %v2320 = vld [vmem:[%s2312 + $0x1c] sm:$0xf]
      %v2321 = vld [vmem:[%s2312 + $0x20] sm:$0xf]
      %v2322 = vld [vmem:[%s2312 + $0x24] sm:$0xf]
      %v2323 = vld [vmem:[%s2312 + $0x28] sm:$0xf]
      %v2324 = vld [vmem:[%s2312 + $0x2c] sm:$0xf]
      %v2325 = vld [vmem:[%s2312 + $0x30] sm:$0xf]
      %v2326 = vld [vmem:[%s2312 + $0x34] sm:$0xf]
      %v2327 = vld [vmem:[%s2312 + $0x38] sm:$0xf]
      %v2328 = vld [vmem:[%s2312 + $0x3c] sm:$0xf]
      %v2329 = vunpack.c.l.b16 %v2101
      %v2330 = vunpack.c.l.b16 %v2115
      %v2331 = vunpack.c.l.b16 %v2129
      %v2332 = vunpack.c.l.b16 %v2143
      %v2333 = vunpack.c.l.b16 %v2157
      %v2334 = vunpack.c.l.b16 %v2171
      %v2335 = vunpack.c.l.b16 %v2185
      %v2336 = vunpack.c.l.b16 %v2199
      %v2337 = vunpack.c.l.b16 %v2213
      %v2338 = vunpack.c.l.b16 %v2227
      %v2339 = vunpack.c.l.b16 %v2241
      %v2340 = vunpack.c.l.b16 %v2255
      %v2341 = vunpack.c.l.b16 %v2269
      %v2342 = vunpack.c.l.b16 %v2283
      %v2343 = vunpack.c.l.b16 %v2297
      %v2344 = vunpack.c.l.b16 %v2311
      %v2345 = vpack.c.b16 %v2330, %v2329
      %v2346 = vpack.c.b16 %v2332, %v2331
      %v2347 = vpack.c.b16 %v2334, %v2333
      %v2348 = vpack.c.b16 %v2336, %v2335
      %v2349 = vpack.c.b16 %v2338, %v2337
      %v2350 = vpack.c.b16 %v2340, %v2339
      %v2351 = vpack.c.b16 %v2342, %v2341
      %v2352 = vpack.c.b16 %v2344, %v2343
      %v2377 = vunpack.c.l.b16 %v2313
      %v2378 = vunpack.c.l.b16 %v2314
      %v2379 = vunpack.c.l.b16 %v2315
      %v2380 = vunpack.c.l.b16 %v2316
      %v2381 = vunpack.c.l.b16 %v2317
      %v2382 = vunpack.c.l.b16 %v2318
      %v2383 = vunpack.c.l.b16 %v2319
      %v2384 = vunpack.c.l.b16 %v2320
      %v2385 = vunpack.c.l.b16 %v2321
      %v2386 = vunpack.c.l.b16 %v2322
      %v2387 = vunpack.c.l.b16 %v2323
      %v2388 = vunpack.c.l.b16 %v2324
      %v2389 = vunpack.c.l.b16 %v2325
      %v2390 = vunpack.c.l.b16 %v2326
      %v2391 = vunpack.c.l.b16 %v2327
      %v2392 = vunpack.c.l.b16 %v2328
      %v2393 = vpack.c.b16 %v2378, %v2377
      %v2394 = vpack.c.b16 %v2380, %v2379
      %v2395 = vpack.c.b16 %v2382, %v2381
      %v2396 = vpack.c.b16 %v2384, %v2383
      %v2397 = vpack.c.b16 %v2386, %v2385
      %v2398 = vpack.c.b16 %v2388, %v2387
      %v2399 = vpack.c.b16 %v2390, %v2389
      %v2400 = vpack.c.b16 %v2392, %v2391
      %2409 = vmatprep.subr.bf16.mxu0 0
      %2410 = vmatpush1.bf16.msra.mxu0 %v2393
      %2411 = vmatprep.subr.bf16.mxu0 0
      %2412 = vmatpush1.bf16.msra.mxu0 %v2394
      %2413 = vmatprep.subr.bf16.mxu0 0
      %2414 = vmatpush1.bf16.msra.mxu0 %v2395
      %2415 = vmatprep.subr.bf16.mxu0 0
      %2416 = vmatpush1.bf16.msra.mxu0 %v2396
      %2417 = vmatprep.subr.bf16.mxu0 0
      %2418 = vmatpush1.bf16.msra.mxu0 %v2397
      %2419 = vmatprep.subr.bf16.mxu0 0
      %2420 = vmatpush1.bf16.msra.mxu0 %v2398
      %2421 = vmatprep.subr.bf16.mxu0 0
      %2422 = vmatpush1.bf16.msra.mxu0 %v2399
      %2423 = vmatprep.subr.bf16.mxu0 0
      %2424 = vmatpush1.bf16.msra.mxu0 %v2400
      %2425 = vmatprep.subr.bf16.mxu0 0
      %2426 = vmatpush1.bf16.msra.mxu0 0
      %2427 = vmatprep.subr.bf16.mxu0 0
      %2428 = vmatpush1.bf16.msra.mxu0 0
      %2429 = vmatprep.subr.bf16.mxu0 0
      %2430 = vmatpush1.bf16.msra.mxu0 0
      %2431 = vmatprep.subr.bf16.mxu0 0
      %2432 = vmatpush1.bf16.msra.mxu0 0
      %2433 = vmatprep.subr.bf16.mxu0 0
      %2434 = vmatpush1.bf16.msra.mxu0 0
      %2435 = vmatprep.subr.bf16.mxu0 0
      %2436 = vmatpush1.bf16.msra.mxu0 0
      %2437 = vmatprep.subr.bf16.mxu0 0
      %2438 = vmatpush1.bf16.msra.mxu0 0
      %2439 = vmatprep.subr.bf16.mxu0 0
      %2440 = vmatpush1.bf16.msra.mxu0 0
      %2441 = vmatprep.mubr.bf16.mxu0 0
      %2442 = vmatmul.mubr.bf16.gmra.mrb[0].mxu0 %v2345
      %v2443 = vpop.f32.mrb[0].mxu0
      %v2444 = vadd.f32 0.0, %v2443
      %v2445 = vpop.f32.mrb[0].mxu0
      %v2446 = vpop.f32.mrb[0].mxu0
      %v2447 = vadd.f32 0.0, %v2446
      %v2448 = vpop.f32.mrb[0].mxu0
      %2449 = vmatprep.mubr.bf16.mxu0 0
      %2450 = vmatmul.mubr.bf16.gmra.mrb[0].mxu0 %v2346
      %v2451 = vpop.f32.mrb[0].mxu0
      %v2452 = vadd.f32 0.0, %v2451
      %v2453 = vpop.f32.mrb[0].mxu0
      %v2454 = vpop.f32.mrb[0].mxu0
      %v2455 = vadd.f32 0.0, %v2454
      %v2456 = vpop.f32.mrb[0].mxu0
      %2457 = vmatprep.mubr.bf16.mxu0 0
      %2458 = vmatmul.mubr.bf16.gmra.mrb[0].mxu0 %v2347
      %v2459 = vpop.f32.mrb[0].mxu0
      %v2460 = vadd.f32 0.0, %v2459
      %v2461 = vpop.f32.mrb[0].mxu0
      %v2462 = vpop.f32.mrb[0].mxu0
      %v2463 = vadd.f32 0.0, %v2462
      %v2464 = vpop.f32.mrb[0].mxu0
      %2465 = vmatprep.mubr.bf16.mxu0 0
      %2466 = vmatmul.mubr.bf16.gmra.mrb[0].mxu0 %v2348
      %v2467 = vpop.f32.mrb[0].mxu0
      %v2468 = vadd.f32 0.0, %v2467
      %v2469 = vpop.f32.mrb[0].mxu0
      %v2470 = vpop.f32.mrb[0].mxu0
      %v2471 = vadd.f32 0.0, %v2470
      %v2472 = vpop.f32.mrb[0].mxu0
      %2473 = vmatprep.mubr.bf16.mxu0 0
      %2474 = vmatmul.mubr.bf16.gmra.mrb[0].mxu0 %v2349
      %v2475 = vpop.f32.mrb[0].mxu0
      %v2476 = vadd.f32 0.0, %v2475
      %v2477 = vpop.f32.mrb[0].mxu0
      %v2478 = vpop.f32.mrb[0].mxu0
      %v2479 = vadd.f32 0.0, %v2478
      %v2480 = vpop.f32.mrb[0].mxu0
      %2481 = vmatprep.mubr.bf16.mxu0 0
      %2482 = vmatmul.mubr.bf16.gmra.mrb[0].mxu0 %v2350
      %v2483 = vpop.f32.mrb[0].mxu0
      %v2484 = vadd.f32 0.0, %v2483
      %v2485 = vpop.f32.mrb[0].mxu0
      %v2486 = vpop.f32.mrb[0].mxu0
      %v2487 = vadd.f32 0.0, %v2486
      %v2488 = vpop.f32.mrb[0].mxu0
      %2489 = vmatprep.mubr.bf16.mxu0 0
      %2490 = vmatmul.mubr.bf16.gmra.mrb[0].mxu0 %v2351
      %v2491 = vpop.f32.mrb[0].mxu0
      %v2492 = vadd.f32 0.0, %v2491
      %v2493 = vpop.f32.mrb[0].mxu0
      %v2494 = vpop.f32.mrb[0].mxu0
      %v2495 = vadd.f32 0.0, %v2494
      %v2496 = vpop.f32.mrb[0].mxu0
      %2497 = vmatprep.mubr.bf16.mxu0 0
      %2498 = vmatmul.mubr.bf16.gmra.mrb[0].mxu0 %v2352
      %v2499 = vpop.f32.mrb[0].mxu0
      %v2500 = vadd.f32 0.0, %v2499
      %v2501 = vpop.f32.mrb[0].mxu0
      %v2502 = vpop.f32.mrb[0].mxu0
      %v2503 = vadd.f32 0.0, %v2502
      %v2504 = vpop.f32.mrb[0].mxu0
      %2505 = vdwg.mxu0
      %v2506 = vadd.f32 %v2040, %v2444
      %v2507 = vadd.f32 %v2041, %v2447
      %v2508 = vadd.f32 %v2042, %v2452
      %v2509 = vadd.f32 %v2043, %v2455
      %v2510 = vadd.f32 %v2044, %v2460
      %v2511 = vadd.f32 %v2045, %v2463
      %v2512 = vadd.f32 %v2046, %v2468
      %v2513 = vadd.f32 %v2047, %v2471
      %v2514 = vadd.f32 %v2048, %v2476
      %v2515 = vadd.f32 %v2049, %v2479
      %v2516 = vadd.f32 %v2050, %v2484
      %v2517 = vadd.f32 %v2051, %v2487
      %v2518 = vadd.f32 %v2052, %v2492
      %v2519 = vadd.f32 %v2053, %v2495
      %v2520 = vadd.f32 %v2054, %v2500
      %v2521 = vadd.f32 %v2055, %v2503
      %v2522 = vlaneseq
      %v2523 = vshrl.u32 %v2522, 7
      %v2524 = vsub.s32 0, %v2523
      %v2525 = vrot.slane %v441, %v2524
      %v2526 = vmul.f32 %v2506, %v2525
      %v2527 = vmul.f32 %v2507, %v2525
      %v2528 = vmul.f32 %v2508, %v2525
      %v2529 = vmul.f32 %v2509, %v2525
      %v2530 = vmul.f32 %v2510, %v2525
      %v2531 = vmul.f32 %v2511, %v2525
      %v2532 = vmul.f32 %v2512, %v2525
      %v2533 = vmul.f32 %v2513, %v2525
      %v2534 = vmul.f32 %v2514, %v2525
      %v2535 = vmul.f32 %v2515, %v2525
      %v2536 = vmul.f32 %v2516, %v2525
      %v2537 = vmul.f32 %v2517, %v2525
      %v2538 = vmul.f32 %v2518, %v2525
      %v2539 = vmul.f32 %v2519, %v2525
      %v2540 = vmul.f32 %v2520, %v2525
      %v2541 = vmul.f32 %v2521, %v2525
      %v2542 = vlaneseq
      %v2543 = vshrl.u32 %v2542, 7
      %v2544 = vsub.s32 0, %v2543
      %v2545 = vrot.slane %v442, %v2544
      %v2546 = vadd.f32 %v2526, %v2545
      %v2547 = vadd.f32 %v2527, %v2545
      %v2548 = vadd.f32 %v2528, %v2545
      %v2549 = vadd.f32 %v2529, %v2545
      %v2550 = vadd.f32 %v2530, %v2545
      %v2551 = vadd.f32 %v2531, %v2545
      %v2552 = vadd.f32 %v2532, %v2545
      %v2553 = vadd.f32 %v2533, %v2545
      %v2554 = vadd.f32 %v2534, %v2545
      %v2555 = vadd.f32 %v2535, %v2545
      %v2556 = vadd.f32 %v2536, %v2545
      %v2557 = vadd.f32 %v2537, %v2545
      %v2558 = vadd.f32 %v2538, %v2545
      %v2559 = vadd.f32 %v2539, %v2545
      %v2560 = vadd.f32 %v2540, %v2545
      %v2561 = vadd.f32 %v2541, %v2545
      %vm2562 = vcmp.gt.f32.partialorder %v2546, 0.0
      %vm2563 = vcmp.gt.f32.partialorder %v2547, 0.0
      %vm2564 = vcmp.gt.f32.partialorder %v2548, 0.0
      %vm2565 = vcmp.gt.f32.partialorder %v2549, 0.0
      %vm2566 = vcmp.gt.f32.partialorder %v2550, 0.0
      %vm2567 = vcmp.gt.f32.partialorder %v2551, 0.0
      %vm2568 = vcmp.gt.f32.partialorder %v2552, 0.0
      %vm2569 = vcmp.gt.f32.partialorder %v2553, 0.0
      %vm2570 = vcmp.gt.f32.partialorder %v2554, 0.0
      %vm2571 = vcmp.gt.f32.partialorder %v2555, 0.0
      %vm2572 = vcmp.gt.f32.partialorder %v2556, 0.0
      %vm2573 = vcmp.gt.f32.partialorder %v2557, 0.0
      %vm2574 = vcmp.gt.f32.partialorder %v2558, 0.0
      %vm2575 = vcmp.gt.f32.partialorder %v2559, 0.0
      %vm2576 = vcmp.gt.f32.partialorder %v2560, 0.0
      %vm2577 = vcmp.gt.f32.partialorder %v2561, 0.0
      %v2578 = vmul.f32 %v2546, 1.442695
      %v2579 = vpow.pop %v2578
      %v2580 = vmul.f32 %v2547, 1.442695
      %v2581 = vpow.pop %v2580
      %v2582 = vmul.f32 %v2548, 1.442695
      %v2583 = vpow.pop %v2582
      %v2584 = vmul.f32 %v2549, 1.442695
      %v2585 = vpow.pop %v2584
      %v2586 = vmul.f32 %v2550, 1.442695
      %v2587 = vpow.pop %v2586
      %v2588 = vmul.f32 %v2551, 1.442695
      %v2589 = vpow.pop %v2588
      %v2590 = vmul.f32 %v2552, 1.442695
      %v2591 = vpow.pop %v2590
      %v2592 = vmul.f32 %v2553, 1.442695
      %v2593 = vpow.pop %v2592
      %v2594 = vmul.f32 %v2554, 1.442695
      %v2595 = vpow.pop %v2594
      %v2596 = vmul.f32 %v2555, 1.442695
      %v2597 = vpow.pop %v2596
      %v2598 = vmul.f32 %v2556, 1.442695
      %v2599 = vpow.pop %v2598
      %v2600 = vmul.f32 %v2557, 1.442695
      %v2601 = vpow.pop %v2600
      %v2602 = vmul.f32 %v2558, 1.442695
      %v2603 = vpow.pop %v2602
      %v2604 = vmul.f32 %v2559, 1.442695
      %v2605 = vpow.pop %v2604
      %v2606 = vmul.f32 %v2560, 1.442695
      %v2607 = vpow.pop %v2606
      %v2608 = vmul.f32 %v2561, 1.442695
      %v2609 = vpow.pop %v2608
      %v2610 = vsub.f32 %v2579, 1.0
      %v2611 = vsub.f32 %v2581, 1.0
      %v2612 = vsub.f32 %v2583, 1.0
      %v2613 = vsub.f32 %v2585, 1.0
      %v2614 = vsub.f32 %v2587, 1.0
      %v2615 = vsub.f32 %v2589, 1.0
      %v2616 = vsub.f32 %v2591, 1.0
      %v2617 = vsub.f32 %v2593, 1.0
      %v2618 = vsub.f32 %v2595, 1.0
      %v2619 = vsub.f32 %v2597, 1.0
      %v2620 = vsub.f32 %v2599, 1.0
      %v2621 = vsub.f32 %v2601, 1.0
      %v2622 = vsub.f32 %v2603, 1.0
      %v2623 = vsub.f32 %v2605, 1.0
      %v2624 = vsub.f32 %v2607, 1.0
      %v2625 = vsub.f32 %v2609, 1.0
      %v2626 = vsel %vm2562, %v2546, %v2610
      %v2627 = vsel %vm2563, %v2547, %v2611
      %v2628 = vsel %vm2564, %v2548, %v2612
      %v2629 = vsel %vm2565, %v2549, %v2613
      %v2630 = vsel %vm2566, %v2550, %v2614
      %v2631 = vsel %vm2567, %v2551, %v2615
      %v2632 = vsel %vm2568, %v2552, %v2616
      %v2633 = vsel %vm2569, %v2553, %v2617
      %v2634 = vsel %vm2570, %v2554, %v2618
      %v2635 = vsel %vm2571, %v2555, %v2619
      %v2636 = vsel %vm2572, %v2556, %v2620
      %v2637 = vsel %vm2573, %v2557, %v2621
      %v2638 = vsel %vm2574, %v2558, %v2622
      %v2639 = vsel %vm2575, %v2559, %v2623
      %v2640 = vsel %vm2576, %v2560, %v2624
      %v2641 = vsel %vm2577, %v2561, %v2625
      %v2642 = vpack.c.bf16 %v2627, %v2626
      %v2643 = vpack.c.bf16 %v2629, %v2628
      %v2644 = vpack.c.bf16 %v2631, %v2630
      %v2645 = vpack.c.bf16 %v2633, %v2632
      %v2646 = vpack.c.bf16 %v2635, %v2634
      %v2647 = vpack.c.bf16 %v2637, %v2636
      %v2648 = vpack.c.bf16 %v2639, %v2638
      %v2649 = vpack.c.bf16 %v2641, %v2640
      %v2658 = vunpack.c.l.b16 %v2642
      %v2659 = vunpack.c.h.b16 %v2642
      %v2660 = vunpack.c.l.b16 %v2643
      %v2661 = vunpack.c.h.b16 %v2643
      %v2662 = vunpack.c.l.b16 %v2644
      %v2663 = vunpack.c.h.b16 %v2644
      %v2664 = vunpack.c.l.b16 %v2645
      %v2665 = vunpack.c.h.b16 %v2645
      %v2666 = vunpack.c.l.b16 %v2646
      %v2667 = vunpack.c.h.b16 %v2646
      %v2668 = vunpack.c.l.b16 %v2647
      %v2669 = vunpack.c.h.b16 %v2647
      %v2670 = vunpack.c.l.b16 %v2648
      %v2671 = vunpack.c.h.b16 %v2648
      %v2672 = vunpack.c.l.b16 %v2649
      %v2673 = vunpack.c.h.b16 %v2649
      %v2674 = vpack.c.b16 %v2658, %v2658
      %v2675 = vpack.c.b16 %v2659, %v2659
      %v2676 = vpack.c.b16 %v2660, %v2660
      %v2677 = vpack.c.b16 %v2661, %v2661
      %v2678 = vpack.c.b16 %v2662, %v2662
      %v2679 = vpack.c.b16 %v2663, %v2663
      %v2680 = vpack.c.b16 %v2664, %v2664
      %v2681 = vpack.c.b16 %v2665, %v2665
      %v2682 = vpack.c.b16 %v2666, %v2666
      %v2683 = vpack.c.b16 %v2667, %v2667
      %v2684 = vpack.c.b16 %v2668, %v2668
      %v2685 = vpack.c.b16 %v2669, %v2669
      %v2686 = vpack.c.b16 %v2670, %v2670
      %v2687 = vpack.c.b16 %v2671, %v2671
      %v2688 = vpack.c.b16 %v2672, %v2672
      %v2689 = vpack.c.b16 %v2673, %v2673
      %vm2706 = vcmask 519168
      %2707 = vst.msk [vmem:[%s205] sm:$0xf] %vm2706, %v2674
      %2708 = vst.msk [vmem:[%s205 + $0x4] sm:$0xf] %vm2706, %v2675
      %2709 = vst.msk [vmem:[%s205 + $0x8] sm:$0xf] %vm2706, %v2676
      %2710 = vst.msk [vmem:[%s205 + $0xc] sm:$0xf] %vm2706, %v2677
      %2711 = vst.msk [vmem:[%s205 + $0x10] sm:$0xf] %vm2706, %v2678
      %2712 = vst.msk [vmem:[%s205 + $0x14] sm:$0xf] %vm2706, %v2679
      %2713 = vst.msk [vmem:[%s205 + $0x18] sm:$0xf] %vm2706, %v2680
      %2714 = vst.msk [vmem:[%s205 + $0x1c] sm:$0xf] %vm2706, %v2681
      %2715 = vst.msk [vmem:[%s205 + $0x20] sm:$0xf] %vm2706, %v2682
      %2716 = vst.msk [vmem:[%s205 + $0x24] sm:$0xf] %vm2706, %v2683
      %2717 = vst.msk [vmem:[%s205 + $0x28] sm:$0xf] %vm2706, %v2684
      %2718 = vst.msk [vmem:[%s205 + $0x2c] sm:$0xf] %vm2706, %v2685
      %2719 = vst.msk [vmem:[%s205 + $0x30] sm:$0xf] %vm2706, %v2686
      %2720 = vst.msk [vmem:[%s205 + $0x34] sm:$0xf] %vm2706, %v2687
      %2721 = vst.msk [vmem:[%s205 + $0x38] sm:$0xf] %vm2706, %v2688
      %2722 = vst.msk [vmem:[%s205 + $0x3c] sm:$0xf] %vm2706, %v2689
      %v2723 = vpack.c.bf16 %v2547, %v2546
      %v2724 = vpack.c.bf16 %v2549, %v2548
      %v2725 = vpack.c.bf16 %v2551, %v2550
      %v2726 = vpack.c.bf16 %v2553, %v2552
      %v2727 = vpack.c.bf16 %v2555, %v2554
      %v2728 = vpack.c.bf16 %v2557, %v2556
      %v2729 = vpack.c.bf16 %v2559, %v2558
      %v2730 = vpack.c.bf16 %v2561, %v2560
      %v2739 = vunpack.c.l.b16 %v2723
      %v2740 = vunpack.c.h.b16 %v2723
      %v2741 = vunpack.c.l.b16 %v2724
      %v2742 = vunpack.c.h.b16 %v2724
      %v2743 = vunpack.c.l.b16 %v2725
      %v2744 = vunpack.c.h.b16 %v2725
      %v2745 = vunpack.c.l.b16 %v2726
      %v2746 = vunpack.c.h.b16 %v2726
      %v2747 = vunpack.c.l.b16 %v2727
      %v2748 = vunpack.c.h.b16 %v2727
      %v2749 = vunpack.c.l.b16 %v2728
      %v2750 = vunpack.c.h.b16 %v2728
      %v2751 = vunpack.c.l.b16 %v2729
      %v2752 = vunpack.c.h.b16 %v2729
      %v2753 = vunpack.c.l.b16 %v2730
      %v2754 = vunpack.c.h.b16 %v2730
      %v2755 = vpack.c.b16 %v2739, %v2739
      %v2756 = vpack.c.b16 %v2740, %v2740
      %v2757 = vpack.c.b16 %v2741, %v2741
      %v2758 = vpack.c.b16 %v2742, %v2742
      %v2759 = vpack.c.b16 %v2743, %v2743
      %v2760 = vpack.c.b16 %v2744, %v2744
      %v2761 = vpack.c.b16 %v2745, %v2745
      %v2762 = vpack.c.b16 %v2746, %v2746
      %v2763 = vpack.c.b16 %v2747, %v2747
      %v2764 = vpack.c.b16 %v2748, %v2748
      %v2765 = vpack.c.b16 %v2749, %v2749
      %v2766 = vpack.c.b16 %v2750, %v2750
      %v2767 = vpack.c.b16 %v2751, %v2751
      %v2768 = vpack.c.b16 %v2752, %v2752
      %v2769 = vpack.c.b16 %v2753, %v2753
      %v2770 = vpack.c.b16 %v2754, %v2754
      %2771 = vrot.lane.b32.xlu0 %v2755, 64
      %v2772 = vpop.permute.xlu0 %2771
      %2773 = vrot.lane.b32.xlu0 %v2756, 64
      %v2774 = vpop.permute.xlu0 %2773
      %2775 = vrot.lane.b32.xlu0 %v2757, 64
      %v2776 = vpop.permute.xlu0 %2775
      %2777 = vrot.lane.b32.xlu0 %v2758, 64
      %v2778 = vpop.permute.xlu0 %2777
      %2779 = vrot.lane.b32.xlu0 %v2759, 64
      %v2780 = vpop.permute.xlu0 %2779
      %2781 = vrot.lane.b32.xlu0 %v2760, 64
      %v2782 = vpop.permute.xlu0 %2781
      %2783 = vrot.lane.b32.xlu0 %v2761, 64
      %v2784 = vpop.permute.xlu0 %2783
      %2785 = vrot.lane.b32.xlu0 %v2762, 64
      %v2786 = vpop.permute.xlu0 %2785
      %2787 = vrot.lane.b32.xlu0 %v2763, 64
      %v2788 = vpop.permute.xlu0 %2787
      %2789 = vrot.lane.b32.xlu0 %v2764, 64
      %v2790 = vpop.permute.xlu0 %2789
      %2791 = vrot.lane.b32.xlu0 %v2765, 64
      %v2792 = vpop.permute.xlu0 %2791
      %2793 = vrot.lane.b32.xlu0 %v2766, 64
      %v2794 = vpop.permute.xlu0 %2793
      %2795 = vrot.lane.b32.xlu0 %v2767, 64
      %v2796 = vpop.permute.xlu0 %2795
      %2797 = vrot.lane.b32.xlu0 %v2768, 64
      %v2798 = vpop.permute.xlu0 %2797
      %2799 = vrot.lane.b32.xlu0 %v2769, 64
      %v2800 = vpop.permute.xlu0 %2799
      %2801 = vrot.lane.b32.xlu0 %v2770, 64
      %v2802 = vpop.permute.xlu0 %2801
      %2819 = vst.msk [vmem:[%s211] sm:$0xf] %vm2706, %v2772
      %2820 = vst.msk [vmem:[%s211 + $0x4] sm:$0xf] %vm2706, %v2774
      %2821 = vst.msk [vmem:[%s211 + $0x8] sm:$0xf] %vm2706, %v2776
      %2822 = vst.msk [vmem:[%s211 + $0xc] sm:$0xf] %vm2706, %v2778
      %2823 = vst.msk [vmem:[%s211 + $0x10] sm:$0xf] %vm2706, %v2780
      %2824 = vst.msk [vmem:[%s211 + $0x14] sm:$0xf] %vm2706, %v2782
      %2825 = vst.msk [vmem:[%s211 + $0x18] sm:$0xf] %vm2706, %v2784
      %2826 = vst.msk [vmem:[%s211 + $0x1c] sm:$0xf] %vm2706, %v2786
      %2827 = vst.msk [vmem:[%s211 + $0x20] sm:$0xf] %vm2706, %v2788
      %2828 = vst.msk [vmem:[%s211 + $0x24] sm:$0xf] %vm2706, %v2790
      %2829 = vst.msk [vmem:[%s211 + $0x28] sm:$0xf] %vm2706, %v2792
      %2830 = vst.msk [vmem:[%s211 + $0x2c] sm:$0xf] %vm2706, %v2794
      %2831 = vst.msk [vmem:[%s211 + $0x30] sm:$0xf] %vm2706, %v2796
      %2832 = vst.msk [vmem:[%s211 + $0x34] sm:$0xf] %vm2706, %v2798
      %2833 = vst.msk [vmem:[%s211 + $0x38] sm:$0xf] %vm2706, %v2800
      %2834 = vst.msk [vmem:[%s211 + $0x3c] sm:$0xf] %vm2706, %v2802
      %v2835 = vld [vmem:[#allocation2] sm:$0xf]
      %v2836 = vld [vmem:[#allocation2 + $0x4] sm:$0x1]
      %v2837 = vld [vmem:[#allocation2 + $0x8] sm:$0xf]
      %v2838 = vld [vmem:[#allocation2 + $0xc] sm:$0x1]
      %v2839 = vld [vmem:[#allocation2 + $0x10] sm:$0xf]
      %v2840 = vld [vmem:[#allocation2 + $0x14] sm:$0x1]
      %v2841 = vld [vmem:[#allocation2 + $0x18] sm:$0xf]
      %v2842 = vld [vmem:[#allocation2 + $0x1c] sm:$0x1]
      %v2843 = vld [vmem:[#allocation2 + $0x20] sm:$0xf]
      %v2844 = vld [vmem:[#allocation2 + $0x24] sm:$0x1]
      %v2845 = vld [vmem:[#allocation2 + $0x28] sm:$0xf]
      %v2846 = vld [vmem:[#allocation2 + $0x2c] sm:$0x1]
      %v2847 = vld [vmem:[#allocation2 + $0x30] sm:$0xf]
      %v2848 = vld [vmem:[#allocation2 + $0x34] sm:$0x1]
      %v2849 = vld [vmem:[#allocation2 + $0x38] sm:$0xf]
      %v2850 = vld [vmem:[#allocation2 + $0x3c] sm:$0x1]
      %v2851 = vld [vmem:[#allocation2 + $0x40] sm:$0xf]
      %v2852 = vld [vmem:[#allocation2 + $0x44] sm:$0x1]
      %v2853 = vld [vmem:[#allocation2 + $0x48] sm:$0xf]
      %v2854 = vld [vmem:[#allocation2 + $0x4c] sm:$0x1]
      %v2855 = vld [vmem:[#allocation2 + $0x50] sm:$0xf]
      %v2856 = vld [vmem:[#allocation2 + $0x54] sm:$0x1]
      %v2857 = vld [vmem:[#allocation2 + $0x58] sm:$0xf]
      %v2858 = vld [vmem:[#allocation2 + $0x5c] sm:$0x1]
      %v2859 = vld [vmem:[#allocation2 + $0x60] sm:$0xf]
      %v2860 = vld [vmem:[#allocation2 + $0x64] sm:$0x1]
      %v2861 = vld [vmem:[#allocation2 + $0x68] sm:$0xf]
      %v2862 = vld [vmem:[#allocation2 + $0x6c] sm:$0x1]
      %v2863 = vld [vmem:[#allocation2 + $0x70] sm:$0xf]
      %v2864 = vld [vmem:[#allocation2 + $0x74] sm:$0x1]
      %v2865 = vld [vmem:[#allocation2 + $0x78] sm:$0xf]
      %v2866 = vld [vmem:[#allocation2 + $0x7c] sm:$0x1]
      %v2868 = vshrl.u32 %v2835, 16
      %v2870 = vrot.slane %v2868, 4
      %v2871 = vshll.u32 %v2835, 16
      %v2873 = vrot.slane %v2871, 5
      %v2874 = vor.u32 %v2870, %v2873
      %v2875 = vrot.slane %v2874, 4
      %v2877 = vshll.u32 %v2836, 16
      %v2879 = vrot.slane %v2877, 5
      %v2880 = vsel %vm493, %v2875, %v2879
      %v2882 = vshrl.u32 %v2837, 16
      %v2884 = vrot.slane %v2882, 4
      %v2885 = vshll.u32 %v2837, 16
      %v2887 = vrot.slane %v2885, 5
      %v2888 = vor.u32 %v2884, %v2887
      %v2889 = vrot.slane %v2888, 4
      %v2891 = vshll.u32 %v2838, 16
      %v2893 = vrot.slane %v2891, 5
      %v2894 = vsel %vm493, %v2889, %v2893
      %v2896 = vshrl.u32 %v2839, 16
      %v2898 = vrot.slane %v2896, 4
      %v2899 = vshll.u32 %v2839, 16
      %v2901 = vrot.slane %v2899, 5
      %v2902 = vor.u32 %v2898, %v2901
      %v2903 = vrot.slane %v2902, 4
      %v2905 = vshll.u32 %v2840, 16
      %v2907 = vrot.slane %v2905, 5
      %v2908 = vsel %vm493, %v2903, %v2907
      %v2910 = vshrl.u32 %v2841, 16
      %v2912 = vrot.slane %v2910, 4
      %v2913 = vshll.u32 %v2841, 16
      %v2915 = vrot.slane %v2913, 5
      %v2916 = vor.u32 %v2912, %v2915
      %v2917 = vrot.slane %v2916, 4
      %v2919 = vshll.u32 %v2842, 16
      %v2921 = vrot.slane %v2919, 5
      %v2922 = vsel %vm493, %v2917, %v2921
      %v2924 = vshrl.u32 %v2843, 16
      %v2926 = vrot.slane %v2924, 4
      %v2927 = vshll.u32 %v2843, 16
      %v2929 = vrot.slane %v2927, 5
      %v2930 = vor.u32 %v2926, %v2929
      %v2931 = vrot.slane %v2930, 4
      %v2933 = vshll.u32 %v2844, 16
      %v2935 = vrot.slane %v2933, 5
      %v2936 = vsel %vm493, %v2931, %v2935
      %v2938 = vshrl.u32 %v2845, 16
      %v2940 = vrot.slane %v2938, 4
      %v2941 = vshll.u32 %v2845, 16
      %v2943 = vrot.slane %v2941, 5
      %v2944 = vor.u32 %v2940, %v2943
      %v2945 = vrot.slane %v2944, 4
      %v2947 = vshll.u32 %v2846, 16
      %v2949 = vrot.slane %v2947, 5
      %v2950 = vsel %vm493, %v2945, %v2949
      %v2952 = vshrl.u32 %v2847, 16
      %v2954 = vrot.slane %v2952, 4
      %v2955 = vshll.u32 %v2847, 16
      %v2957 = vrot.slane %v2955, 5
      %v2958 = vor.u32 %v2954, %v2957
      %v2959 = vrot.slane %v2958, 4
      %v2961 = vshll.u32 %v2848, 16
      %v2963 = vrot.slane %v2961, 5
      %v2964 = vsel %vm493, %v2959, %v2963
      %v2966 = vshrl.u32 %v2849, 16
      %v2968 = vrot.slane %v2966, 4
      %v2969 = vshll.u32 %v2849, 16
      %v2971 = vrot.slane %v2969, 5
      %v2972 = vor.u32 %v2968, %v2971
      %v2973 = vrot.slane %v2972, 4
      %v2975 = vshll.u32 %v2850, 16
      %v2977 = vrot.slane %v2975, 5
      %v2978 = vsel %vm493, %v2973, %v2977
      %v2980 = vshrl.u32 %v2851, 16
      %v2982 = vrot.slane %v2980, 4
      %v2983 = vshll.u32 %v2851, 16
      %v2985 = vrot.slane %v2983, 5
      %v2986 = vor.u32 %v2982, %v2985
      %v2987 = vrot.slane %v2986, 4
      %v2989 = vshll.u32 %v2852, 16
      %v2991 = vrot.slane %v2989, 5
      %v2992 = vsel %vm493, %v2987, %v2991
      %v2994 = vshrl.u32 %v2853, 16
      %v2996 = vrot.slane %v2994, 4
      %v2997 = vshll.u32 %v2853, 16
      %v2999 = vrot.slane %v2997, 5
      %v3000 = vor.u32 %v2996, %v2999
      %v3001 = vrot.slane %v3000, 4
      %v3003 = vshll.u32 %v2854, 16
      %v3005 = vrot.slane %v3003, 5
      %v3006 = vsel %vm493, %v3001, %v3005
      %v3008 = vshrl.u32 %v2855, 16
      %v3010 = vrot.slane %v3008, 4
      %v3011 = vshll.u32 %v2855, 16
      %v3013 = vrot.slane %v3011, 5
      %v3014 = vor.u32 %v3010, %v3013
      %v3015 = vrot.slane %v3014, 4
      %v3017 = vshll.u32 %v2856, 16
      %v3019 = vrot.slane %v3017, 5
      %v3020 = vsel %vm493, %v3015, %v3019
      %v3022 = vshrl.u32 %v2857, 16
      %v3024 = vrot.slane %v3022, 4
      %v3025 = vshll.u32 %v2857, 16
      %v3027 = vrot.slane %v3025, 5
      %v3028 = vor.u32 %v3024, %v3027
      %v3029 = vrot.slane %v3028, 4
      %v3031 = vshll.u32 %v2858, 16
      %v3033 = vrot.slane %v3031, 5
      %v3034 = vsel %vm493, %v3029, %v3033
      %v3036 = vshrl.u32 %v2859, 16
      %v3038 = vrot.slane %v3036, 4
      %v3039 = vshll.u32 %v2859, 16
      %v3041 = vrot.slane %v3039, 5
      %v3042 = vor.u32 %v3038, %v3041
      %v3043 = vrot.slane %v3042, 4
      %v3045 = vshll.u32 %v2860, 16
      %v3047 = vrot.slane %v3045, 5
      %v3048 = vsel %vm493, %v3043, %v3047
      %v3050 = vshrl.u32 %v2861, 16
      %v3052 = vrot.slane %v3050, 4
      %v3053 = vshll.u32 %v2861, 16
      %v3055 = vrot.slane %v3053, 5
      %v3056 = vor.u32 %v3052, %v3055
      %v3057 = vrot.slane %v3056, 4
      %v3059 = vshll.u32 %v2862, 16
      %v3061 = vrot.slane %v3059, 5
      %v3062 = vsel %vm493, %v3057, %v3061
      %v3064 = vshrl.u32 %v2863, 16
      %v3066 = vrot.slane %v3064, 4
      %v3067 = vshll.u32 %v2863, 16
      %v3069 = vrot.slane %v3067, 5
      %v3070 = vor.u32 %v3066, %v3069
      %v3071 = vrot.slane %v3070, 4
      %v3073 = vshll.u32 %v2864, 16
      %v3075 = vrot.slane %v3073, 5
      %v3076 = vsel %vm493, %v3071, %v3075
      %v3078 = vshrl.u32 %v2865, 16
      %v3080 = vrot.slane %v3078, 4
      %v3081 = vshll.u32 %v2865, 16
      %v3083 = vrot.slane %v3081, 5
      %v3084 = vor.u32 %v3080, %v3083
      %v3085 = vrot.slane %v3084, 4
      %v3087 = vshll.u32 %v2866, 16
      %v3089 = vrot.slane %v3087, 5
      %v3090 = vsel %vm493, %v3085, %v3089
      %s3091 = scalar_lea.vmem %s1, 384
      %v3092 = vld [vmem:[%s3091] sm:$0xf]
      %v3093 = vld [vmem:[%s3091 + $0x4] sm:$0xf]
      %v3094 = vld [vmem:[%s3091 + $0x8] sm:$0xf]
      %v3095 = vld [vmem:[%s3091 + $0xc] sm:$0xf]
      %v3096 = vld [vmem:[%s3091 + $0x10] sm:$0xf]
      %v3097 = vld [vmem:[%s3091 + $0x14] sm:$0xf]
      %v3098 = vld [vmem:[%s3091 + $0x18] sm:$0xf]
      %v3099 = vld [vmem:[%s3091 + $0x1c] sm:$0xf]
      %v3100 = vld [vmem:[%s3091 + $0x20] sm:$0xf]
      %v3101 = vld [vmem:[%s3091 + $0x24] sm:$0xf]
      %v3102 = vld [vmem:[%s3091 + $0x28] sm:$0xf]
      %v3103 = vld [vmem:[%s3091 + $0x2c] sm:$0xf]
      %v3104 = vld [vmem:[%s3091 + $0x30] sm:$0xf]
      %v3105 = vld [vmem:[%s3091 + $0x34] sm:$0xf]
      %v3106 = vld [vmem:[%s3091 + $0x38] sm:$0xf]
      %v3107 = vld [vmem:[%s3091 + $0x3c] sm:$0xf]
      %v3108 = vld [vmem:[#allocation2] sm:$0xe]
      %v3109 = vld [vmem:[#allocation2 + $0x8] sm:$0xe]
      %v3110 = vld [vmem:[#allocation2 + $0x10] sm:$0xe]
      %v3111 = vld [vmem:[#allocation2 + $0x18] sm:$0xe]
      %v3112 = vld [vmem:[#allocation2 + $0x20] sm:$0xe]
      %v3113 = vld [vmem:[#allocation2 + $0x28] sm:$0xe]
      %v3114 = vld [vmem:[#allocation2 + $0x30] sm:$0xe]
      %v3115 = vld [vmem:[#allocation2 + $0x38] sm:$0xe]
      %v3116 = vld [vmem:[#allocation2 + $0x40] sm:$0xe]
      %v3117 = vld [vmem:[#allocation2 + $0x48] sm:$0xe]
      %v3118 = vld [vmem:[#allocation2 + $0x50] sm:$0xe]
      %v3119 = vld [vmem:[#allocation2 + $0x58] sm:$0xe]
      %v3120 = vld [vmem:[#allocation2 + $0x60] sm:$0xe]
      %v3121 = vld [vmem:[#allocation2 + $0x68] sm:$0xe]
      %v3122 = vld [vmem:[#allocation2 + $0x70] sm:$0xe]
      %v3123 = vld [vmem:[#allocation2 + $0x78] sm:$0xe]
      %vm3156 = vcmask 1042432
      %vm3157 = vcmask 1046532
      %vm3158 = vmor %vm3156, %vm3157
      %v3159 = vrot.slane %v3108, 5
      %v3160 = vrot.slane %v3159, 4
      %v3161 = vrot.slane %v2836, 5
      %v3162 = vsel %vm3158, %v3160, %v3161
      %v3163 = vrot.slane %v3109, 5
      %v3164 = vrot.slane %v3163, 4
      %v3165 = vrot.slane %v2838, 5
      %v3166 = vsel %vm3158, %v3164, %v3165
      %v3167 = vrot.slane %v3110, 5
      %v3168 = vrot.slane %v3167, 4
      %v3169 = vrot.slane %v2840, 5
      %v3170 = vsel %vm3158, %v3168, %v3169
      %v3171 = vrot.slane %v3111, 5
      %v3172 = vrot.slane %v3171, 4
      %v3173 = vrot.slane %v2842, 5
      %v3174 = vsel %vm3158, %v3172, %v3173
      %v3175 = vrot.slane %v3112, 5
      %v3176 = vrot.slane %v3175, 4
      %v3177 = vrot.slane %v2844, 5
      %v3178 = vsel %vm3158, %v3176, %v3177
      %v3179 = vrot.slane %v3113, 5
      %v3180 = vrot.slane %v3179, 4
      %v3181 = vrot.slane %v2846, 5
      %v3182 = vsel %vm3158, %v3180, %v3181
      %v3183 = vrot.slane %v3114, 5
      %v3184 = vrot.slane %v3183, 4
      %v3185 = vrot.slane %v2848, 5
      %v3186 = vsel %vm3158, %v3184, %v3185
      %v3187 = vrot.slane %v3115, 5
      %v3188 = vrot.slane %v3187, 4
      %v3189 = vrot.slane %v2850, 5
      %v3190 = vsel %vm3158, %v3188, %v3189
      %v3191 = vrot.slane %v3116, 5
      %v3192 = vrot.slane %v3191, 4
      %v3193 = vrot.slane %v2852, 5
      %v3194 = vsel %vm3158, %v3192, %v3193
      %v3195 = vrot.slane %v3117, 5
      %v3196 = vrot.slane %v3195, 4
      %v3197 = vrot.slane %v2854, 5
      %v3198 = vsel %vm3158, %v3196, %v3197
      %v3199 = vrot.slane %v3118, 5
      %v3200 = vrot.slane %v3199, 4
      %v3201 = vrot.slane %v2856, 5
      %v3202 = vsel %vm3158, %v3200, %v3201
      %v3203 = vrot.slane %v3119, 5
      %v3204 = vrot.slane %v3203, 4
      %v3205 = vrot.slane %v2858, 5
      %v3206 = vsel %vm3158, %v3204, %v3205
      %v3207 = vrot.slane %v3120, 5
      %v3208 = vrot.slane %v3207, 4
      %v3209 = vrot.slane %v2860, 5
      %v3210 = vsel %vm3158, %v3208, %v3209
      %v3211 = vrot.slane %v3121, 5
      %v3212 = vrot.slane %v3211, 4
      %v3213 = vrot.slane %v2862, 5
      %v3214 = vsel %vm3158, %v3212, %v3213
      %v3215 = vrot.slane %v3122, 5
      %v3216 = vrot.slane %v3215, 4
      %v3217 = vrot.slane %v2864, 5
      %v3218 = vsel %vm3158, %v3216, %v3217
      %v3219 = vrot.slane %v3123, 5
      %v3220 = vrot.slane %v3219, 4
      %v3221 = vrot.slane %v2866, 5
      %v3222 = vsel %vm3158, %v3220, %v3221
      %s3223 = scalar_lea.vmem %s1, 448
      %v3224 = vld [vmem:[%s3223] sm:$0xf]
      %v3225 = vld [vmem:[%s3223 + $0x4] sm:$0xf]
      %v3226 = vld [vmem:[%s3223 + $0x8] sm:$0xf]
      %v3227 = vld [vmem:[%s3223 + $0xc] sm:$0xf]
      %v3228 = vld [vmem:[%s3223 + $0x10] sm:$0xf]
      %v3229 = vld [vmem:[%s3223 + $0x14] sm:$0xf]
      %v3230 = vld [vmem:[%s3223 + $0x18] sm:$0xf]
      %v3231 = vld [vmem:[%s3223 + $0x1c] sm:$0xf]
      %v3232 = vld [vmem:[%s3223 + $0x20] sm:$0xf]
      %v3233 = vld [vmem:[%s3223 + $0x24] sm:$0xf]
      %v3234 = vld [vmem:[%s3223 + $0x28] sm:$0xf]
      %v3235 = vld [vmem:[%s3223 + $0x2c] sm:$0xf]
      %v3236 = vld [vmem:[%s3223 + $0x30] sm:$0xf]
      %v3237 = vld [vmem:[%s3223 + $0x34] sm:$0xf]
      %v3238 = vld [vmem:[%s3223 + $0x38] sm:$0xf]
      %v3239 = vld [vmem:[%s3223 + $0x3c] sm:$0xf]
      %v3240 = vunpack.c.l.b16 %v3162
      %v3241 = vunpack.c.l.b16 %v3166
      %v3242 = vunpack.c.l.b16 %v3170
      %v3243 = vunpack.c.l.b16 %v3174
      %v3244 = vunpack.c.l.b16 %v3178
      %v3245 = vunpack.c.l.b16 %v3182
      %v3246 = vunpack.c.l.b16 %v3186
      %v3247 = vunpack.c.l.b16 %v3190
      %v3248 = vunpack.c.l.b16 %v3194
      %v3249 = vunpack.c.l.b16 %v3198
      %v3250 = vunpack.c.l.b16 %v3202
      %v3251 = vunpack.c.l.b16 %v3206
      %v3252 = vunpack.c.l.b16 %v3210
      %v3253 = vunpack.c.l.b16 %v3214
      %v3254 = vunpack.c.l.b16 %v3218
      %v3255 = vunpack.c.l.b16 %v3222
      %v3256 = vpack.c.b16 %v3241, %v3240
      %v3257 = vpack.c.b16 %v3243, %v3242
      %v3258 = vpack.c.b16 %v3245, %v3244
      %v3259 = vpack.c.b16 %v3247, %v3246
      %v3260 = vpack.c.b16 %v3249, %v3248
      %v3261 = vpack.c.b16 %v3251, %v3250
      %v3262 = vpack.c.b16 %v3253, %v3252
      %v3263 = vpack.c.b16 %v3255, %v3254
      %v3288 = vunpack.c.l.b16 %v3224
      %v3289 = vunpack.c.l.b16 %v3225
      %v3290 = vunpack.c.l.b16 %v3226
      %v3291 = vunpack.c.l.b16 %v3227
      %v3292 = vunpack.c.l.b16 %v3228
      %v3293 = vunpack.c.l.b16 %v3229
      %v3294 = vunpack.c.l.b16 %v3230
      %v3295 = vunpack.c.l.b16 %v3231
      %v3296 = vunpack.c.l.b16 %v3232
      %v3297 = vunpack.c.l.b16 %v3233
      %v3298 = vunpack.c.l.b16 %v3234
      %v3299 = vunpack.c.l.b16 %v3235
      %v3300 = vunpack.c.l.b16 %v3236
      %v3301 = vunpack.c.l.b16 %v3237
      %v3302 = vunpack.c.l.b16 %v3238
      %v3303 = vunpack.c.l.b16 %v3239
      %v3304 = vpack.c.b16 %v3289, %v3288
      %v3305 = vpack.c.b16 %v3291, %v3290
      %v3306 = vpack.c.b16 %v3293, %v3292
      %v3307 = vpack.c.b16 %v3295, %v3294
      %v3308 = vpack.c.b16 %v3297, %v3296
      %v3309 = vpack.c.b16 %v3299, %v3298
      %v3310 = vpack.c.b16 %v3301, %v3300
      %v3311 = vpack.c.b16 %v3303, %v3302
      %3320 = vmatprep.subr.bf16.mxu0 0
      %3321 = vmatpush1.bf16.msra.mxu0 %v3304
      %3322 = vmatprep.subr.bf16.mxu0 0
      %3323 = vmatpush1.bf16.msra.mxu0 %v3305
      %3324 = vmatprep.subr.bf16.mxu0 0
      %3325 = vmatpush1.bf16.msra.mxu0 %v3306
      %3326 = vmatprep.subr.bf16.mxu0 0
      %3327 = vmatpush1.bf16.msra.mxu0 %v3307
      %3328 = vmatprep.subr.bf16.mxu0 0
      %3329 = vmatpush1.bf16.msra.mxu0 %v3308
      %3330 = vmatprep.subr.bf16.mxu0 0
      %3331 = vmatpush1.bf16.msra.mxu0 %v3309
      %3332 = vmatprep.subr.bf16.mxu0 0
      %3333 = vmatpush1.bf16.msra.mxu0 %v3310
      %3334 = vmatprep.subr.bf16.mxu0 0
      %3335 = vmatpush1.bf16.msra.mxu0 %v3311
      %3336 = vmatprep.subr.bf16.mxu0 0
      %3337 = vmatpush1.bf16.msra.mxu0 0
      %3338 = vmatprep.subr.bf16.mxu0 0
      %3339 = vmatpush1.bf16.msra.mxu0 0
      %3340 = vmatprep.subr.bf16.mxu0 0
      %3341 = vmatpush1.bf16.msra.mxu0 0
      %3342 = vmatprep.subr.bf16.mxu0 0
      %3343 = vmatpush1.bf16.msra.mxu0 0
      %3344 = vmatprep.subr.bf16.mxu0 0
      %3345 = vmatpush1.bf16.msra.mxu0 0
      %3346 = vmatprep.subr.bf16.mxu0 0
      %3347 = vmatpush1.bf16.msra.mxu0 0
      %3348 = vmatprep.subr.bf16.mxu0 0
      %3349 = vmatpush1.bf16.msra.mxu0 0
      %3350 = vmatprep.subr.bf16.mxu0 0
      %3351 = vmatpush1.bf16.msra.mxu0 0
      %3352 = vmatprep.mubr.bf16.mxu0 0
      %3353 = vmatmul.mubr.bf16.gmra.mrb[0].mxu0 %v3256
      %v3354 = vpop.f32.mrb[0].mxu0
      %v3355 = vadd.f32 0.0, %v3354
      %v3356 = vpop.f32.mrb[0].mxu0
      %v3357 = vpop.f32.mrb[0].mxu0
      %v3358 = vadd.f32 0.0, %v3357
      %v3359 = vpop.f32.mrb[0].mxu0
      %3360 = vmatprep.mubr.bf16.mxu0 0
      %3361 = vmatmul.mubr.bf16.gmra.mrb[0].mxu0 %v3257
      %v3362 = vpop.f32.mrb[0].mxu0
      %v3363 = vadd.f32 0.0, %v3362
      %v3364 = vpop.f32.mrb[0].mxu0
      %v3365 = vpop.f32.mrb[0].mxu0
      %v3366 = vadd.f32 0.0, %v3365
      %v3367 = vpop.f32.mrb[0].mxu0
      %3368 = vmatprep.mubr.bf16.mxu0 0
      %3369 = vmatmul.mubr.bf16.gmra.mrb[0].mxu0 %v3258
      %v3370 = vpop.f32.mrb[0].mxu0
      %v3371 = vadd.f32 0.0, %v3370
      %v3372 = vpop.f32.mrb[0].mxu0
      %v3373 = vpop.f32.mrb[0].mxu0
      %v3374 = vadd.f32 0.0, %v3373
      %v3375 = vpop.f32.mrb[0].mxu0
      %3376 = vmatprep.mubr.bf16.mxu0 0
      %3377 = vmatmul.mubr.bf16.gmra.mrb[0].mxu0 %v3259
      %v3378 = vpop.f32.mrb[0].mxu0
      %v3379 = vadd.f32 0.0, %v3378
      %v3380 = vpop.f32.mrb[0].mxu0
      %v3381 = vpop.f32.mrb[0].mxu0
      %v3382 = vadd.f32 0.0, %v3381
      %v3383 = vpop.f32.mrb[0].mxu0
      %3384 = vmatprep.mubr.bf16.mxu0 0
      %3385 = vmatmul.mubr.bf16.gmra.mrb[0].mxu0 %v3260
      %v3386 = vpop.f32.mrb[0].mxu0
      %v3387 = vadd.f32 0.0, %v3386
      %v3388 = vpop.f32.mrb[0].mxu0
      %v3389 = vpop.f32.mrb[0].mxu0
      %v3390 = vadd.f32 0.0, %v3389
      %v3391 = vpop.f32.mrb[0].mxu0
      %3392 = vmatprep.mubr.bf16.mxu0 0
      %3393 = vmatmul.mubr.bf16.gmra.mrb[0].mxu0 %v3261
      %v3394 = vpop.f32.mrb[0].mxu0
      %v3395 = vadd.f32 0.0, %v3394
      %v3396 = vpop.f32.mrb[0].mxu0
      %v3397 = vpop.f32.mrb[0].mxu0
      %v3398 = vadd.f32 0.0, %v3397
      %v3399 = vpop.f32.mrb[0].mxu0
      %3400 = vmatprep.mubr.bf16.mxu0 0
      %3401 = vmatmul.mubr.bf16.gmra.mrb[0].mxu0 %v3262
      %v3402 = vpop.f32.mrb[0].mxu0
      %v3403 = vadd.f32 0.0, %v3402
      %v3404 = vpop.f32.mrb[0].mxu0
      %v3405 = vpop.f32.mrb[0].mxu0
      %v3406 = vadd.f32 0.0, %v3405
      %v3407 = vpop.f32.mrb[0].mxu0
      %3408 = vmatprep.mubr.bf16.mxu0 0
      %3409 = vmatmul.mubr.bf16.gmra.mrb[0].mxu0 %v3263
      %v3410 = vpop.f32.mrb[0].mxu0
      %v3411 = vadd.f32 0.0, %v3410
      %v3412 = vpop.f32.mrb[0].mxu0
      %v3413 = vpop.f32.mrb[0].mxu0
      %v3414 = vadd.f32 0.0, %v3413
      %v3415 = vpop.f32.mrb[0].mxu0
      %3416 = vdwg.mxu0
      %v3417 = vunpack.c.l.b16 %v2880
      %v3418 = vunpack.c.l.b16 %v2894
      %v3419 = vunpack.c.l.b16 %v2908
      %v3420 = vunpack.c.l.b16 %v2922
      %v3421 = vunpack.c.l.b16 %v2936
      %v3422 = vunpack.c.l.b16 %v2950
      %v3423 = vunpack.c.l.b16 %v2964
      %v3424 = vunpack.c.l.b16 %v2978
      %v3425 = vunpack.c.l.b16 %v2992
      %v3426 = vunpack.c.l.b16 %v3006
      %v3427 = vunpack.c.l.b16 %v3020
      %v3428 = vunpack.c.l.b16 %v3034
      %v3429 = vunpack.c.l.b16 %v3048
      %v3430 = vunpack.c.l.b16 %v3062
      %v3431 = vunpack.c.l.b16 %v3076
      %v3432 = vunpack.c.l.b16 %v3090
      %v3433 = vpack.c.b16 %v3418, %v3417
      %v3434 = vpack.c.b16 %v3420, %v3419
      %v3435 = vpack.c.b16 %v3422, %v3421
      %v3436 = vpack.c.b16 %v3424, %v3423
      %v3437 = vpack.c.b16 %v3426, %v3425
      %v3438 = vpack.c.b16 %v3428, %v3427
      %v3439 = vpack.c.b16 %v3430, %v3429
      %v3440 = vpack.c.b16 %v3432, %v3431
      %v3465 = vunpack.c.l.b16 %v3092
      %v3466 = vunpack.c.l.b16 %v3093
      %v3467 = vunpack.c.l.b16 %v3094
      %v3468 = vunpack.c.l.b16 %v3095
      %v3469 = vunpack.c.l.b16 %v3096
      %v3470 = vunpack.c.l.b16 %v3097
      %v3471 = vunpack.c.l.b16 %v3098
      %v3472 = vunpack.c.l.b16 %v3099
      %v3473 = vunpack.c.l.b16 %v3100
      %v3474 = vunpack.c.l.b16 %v3101
      %v3475 = vunpack.c.l.b16 %v3102
      %v3476 = vunpack.c.l.b16 %v3103
      %v3477 = vunpack.c.l.b16 %v3104
      %v3478 = vunpack.c.l.b16 %v3105
      %v3479 = vunpack.c.l.b16 %v3106
      %v3480 = vunpack.c.l.b16 %v3107
      %v3481 = vpack.c.b16 %v3466, %v3465
      %v3482 = vpack.c.b16 %v3468, %v3467
      %v3483 = vpack.c.b16 %v3470, %v3469
      %v3484 = vpack.c.b16 %v3472, %v3471
      %v3485 = vpack.c.b16 %v3474, %v3473
      %v3486 = vpack.c.b16 %v3476, %v3475
      %v3487 = vpack.c.b16 %v3478, %v3477
      %v3488 = vpack.c.b16 %v3480, %v3479
      %3497 = vmatprep.subr.bf16.mxu0 0
      %3498 = vmatpush1.bf16.msra.mxu0 %v3481
      %3499 = vmatprep.subr.bf16.mxu0 0
      %3500 = vmatpush1.bf16.msra.mxu0 %v3482
      %3501 = vmatprep.subr.bf16.mxu0 0
      %3502 = vmatpush1.bf16.msra.mxu0 %v3483
      %3503 = vmatprep.subr.bf16.mxu0 0
      %3504 = vmatpush1.bf16.msra.mxu0 %v3484
      %3505 = vmatprep.subr.bf16.mxu0 0
      %3506 = vmatpush1.bf16.msra.mxu0 %v3485
      %3507 = vmatprep.subr.bf16.mxu0 0
      %3508 = vmatpush1.bf16.msra.mxu0 %v3486
      %3509 = vmatprep.subr.bf16.mxu0 0
      %3510 = vmatpush1.bf16.msra.mxu0 %v3487
      %3511 = vmatprep.subr.bf16.mxu0 0
      %3512 = vmatpush1.bf16.msra.mxu0 %v3488
      %3513 = vmatprep.subr.bf16.mxu0 0
      %3514 = vmatpush1.bf16.msra.mxu0 0
      %3515 = vmatprep.subr.bf16.mxu0 0
      %3516 = vmatpush1.bf16.msra.mxu0 0
      %3517 = vmatprep.subr.bf16.mxu0 0
      %3518 = vmatpush1.bf16.msra.mxu0 0
      %3519 = vmatprep.subr.bf16.mxu0 0
      %3520 = vmatpush1.bf16.msra.mxu0 0
      %3521 = vmatprep.subr.bf16.mxu0 0
      %3522 = vmatpush1.bf16.msra.mxu0 0
      %3523 = vmatprep.subr.bf16.mxu0 0
      %3524 = vmatpush1.bf16.msra.mxu0 0
      %3525 = vmatprep.subr.bf16.mxu0 0
      %3526 = vmatpush1.bf16.msra.mxu0 0
      %3527 = vmatprep.subr.bf16.mxu0 0
      %3528 = vmatpush1.bf16.msra.mxu0 0
      %3529 = vmatprep.mubr.bf16.mxu0 0
      %3530 = vmatmul.mubr.bf16.gmra.mrb[0].mxu0 %v3433
      %v3531 = vpop.f32.mrb[0].mxu0
      %v3532 = vadd.f32 %v3355, %v3531
      %v3533 = vpop.f32.mrb[0].mxu0
      %v3534 = vpop.f32.mrb[0].mxu0
      %v3535 = vadd.f32 %v3358, %v3534
      %v3536 = vpop.f32.mrb[0].mxu0
      %3537 = vmatprep.mubr.bf16.mxu0 0
      %3538 = vmatmul.mubr.bf16.gmra.mrb[0].mxu0 %v3434
      %v3539 = vpop.f32.mrb[0].mxu0
      %v3540 = vadd.f32 %v3363, %v3539
      %v3541 = vpop.f32.mrb[0].mxu0
      %v3542 = vpop.f32.mrb[0].mxu0
      %v3543 = vadd.f32 %v3366, %v3542
      %v3544 = vpop.f32.mrb[0].mxu0
      %3545 = vmatprep.mubr.bf16.mxu0 0
      %3546 = vmatmul.mubr.bf16.gmra.mrb[0].mxu0 %v3435
      %v3547 = vpop.f32.mrb[0].mxu0
      %v3548 = vadd.f32 %v3371, %v3547
      %v3549 = vpop.f32.mrb[0].mxu0
      %v3550 = vpop.f32.mrb[0].mxu0
      %v3551 = vadd.f32 %v3374, %v3550
      %v3552 = vpop.f32.mrb[0].mxu0
      %3553 = vmatprep.mubr.bf16.mxu0 0
      %3554 = vmatmul.mubr.bf16.gmra.mrb[0].mxu0 %v3436
      %v3555 = vpop.f32.mrb[0].mxu0
      %v3556 = vadd.f32 %v3379, %v3555
      %v3557 = vpop.f32.mrb[0].mxu0
      %v3558 = vpop.f32.mrb[0].mxu0
      %v3559 = vadd.f32 %v3382, %v3558
      %v3560 = vpop.f32.mrb[0].mxu0
      %3561 = vmatprep.mubr.bf16.mxu0 0
      %3562 = vmatmul.mubr.bf16.gmra.mrb[0].mxu0 %v3437
      %v3563 = vpop.f32.mrb[0].mxu0
      %v3564 = vadd.f32 %v3387, %v3563
      %v3565 = vpop.f32.mrb[0].mxu0
      %v3566 = vpop.f32.mrb[0].mxu0
      %v3567 = vadd.f32 %v3390, %v3566
      %v3568 = vpop.f32.mrb[0].mxu0
      %3569 = vmatprep.mubr.bf16.mxu0 0
      %3570 = vmatmul.mubr.bf16.gmra.mrb[0].mxu0 %v3438
      %v3571 = vpop.f32.mrb[0].mxu0
      %v3572 = vadd.f32 %v3395, %v3571
      %v3573 = vpop.f32.mrb[0].mxu0
      %v3574 = vpop.f32.mrb[0].mxu0
      %v3575 = vadd.f32 %v3398, %v3574
      %v3576 = vpop.f32.mrb[0].mxu0
      %3577 = vmatprep.mubr.bf16.mxu0 0
      %3578 = vmatmul.mubr.bf16.gmra.mrb[0].mxu0 %v3439
      %v3579 = vpop.f32.mrb[0].mxu0
      %v3580 = vadd.f32 %v3403, %v3579
      %v3581 = vpop.f32.mrb[0].mxu0
      %v3582 = vpop.f32.mrb[0].mxu0
      %v3583 = vadd.f32 %v3406, %v3582
      %v3584 = vpop.f32.mrb[0].mxu0
      %3585 = vmatprep.mubr.bf16.mxu0 0
      %3586 = vmatmul.mubr.bf16.gmra.mrb[0].mxu0 %v3440
      %v3587 = vpop.f32.mrb[0].mxu0
      %v3588 = vadd.f32 %v3411, %v3587
      %v3589 = vpop.f32.mrb[0].mxu0
      %v3590 = vpop.f32.mrb[0].mxu0
      %v3591 = vadd.f32 %v3414, %v3590
      %v3592 = vpop.f32.mrb[0].mxu0
      %3593 = vdwg.mxu0
      %v3594 = vld [vmem:[%s338] sm:$0xf]
      %v3595 = vld [vmem:[%s338 + $0x4] sm:$0x1]
      %v3596 = vld [vmem:[%s338 + $0x8] sm:$0xf]
      %v3597 = vld [vmem:[%s338 + $0xc] sm:$0x1]
      %v3598 = vld [vmem:[%s338 + $0x10] sm:$0xf]
      %v3599 = vld [vmem:[%s338 + $0x14] sm:$0x1]
      %v3600 = vld [vmem:[%s338 + $0x18] sm:$0xf]
      %v3601 = vld [vmem:[%s338 + $0x1c] sm:$0x1]
      %v3602 = vld [vmem:[%s338 + $0x20] sm:$0xf]
      %v3603 = vld [vmem:[%s338 + $0x24] sm:$0x1]
      %v3604 = vld [vmem:[%s338 + $0x28] sm:$0xf]
      %v3605 = vld [vmem:[%s338 + $0x2c] sm:$0x1]
      %v3606 = vld [vmem:[%s338 + $0x30] sm:$0xf]
      %v3607 = vld [vmem:[%s338 + $0x34] sm:$0x1]
      %v3608 = vld [vmem:[%s338 + $0x38] sm:$0xf]
      %v3609 = vld [vmem:[%s338 + $0x3c] sm:$0x1]
      %v3610 = vld [vmem:[%s338 + $0x40] sm:$0xf]
      %v3611 = vld [vmem:[%s338 + $0x44] sm:$0x1]
      %v3612 = vld [vmem:[%s338 + $0x48] sm:$0xf]
      %v3613 = vld [vmem:[%s338 + $0x4c] sm:$0x1]
      %v3614 = vld [vmem:[%s338 + $0x50] sm:$0xf]
      %v3615 = vld [vmem:[%s338 + $0x54] sm:$0x1]
      %v3616 = vld [vmem:[%s338 + $0x58] sm:$0xf]
      %v3617 = vld [vmem:[%s338 + $0x5c] sm:$0x1]
      %v3618 = vld [vmem:[%s338 + $0x60] sm:$0xf]
      %v3619 = vld [vmem:[%s338 + $0x64] sm:$0x1]
      %v3620 = vld [vmem:[%s338 + $0x68] sm:$0xf]
      %v3621 = vld [vmem:[%s338 + $0x6c] sm:$0x1]
      %v3622 = vld [vmem:[%s338 + $0x70] sm:$0xf]
      %v3623 = vld [vmem:[%s338 + $0x74] sm:$0x1]
      %v3624 = vld [vmem:[%s338 + $0x78] sm:$0xf]
      %v3625 = vld [vmem:[%s338 + $0x7c] sm:$0x1]
      %v3627 = vshrl.u32 %v3594, 16
      %v3629 = vrot.slane %v3627, 4
      %v3630 = vshll.u32 %v3594, 16
      %v3632 = vrot.slane %v3630, 5
      %v3633 = vor.u32 %v3629, %v3632
      %v3634 = vrot.slane %v3633, 4
      %v3636 = vshll.u32 %v3595, 16
      %v3638 = vrot.slane %v3636, 5
      %v3639 = vsel %vm493, %v3634, %v3638
      %v3641 = vshrl.u32 %v3596, 16
      %v3643 = vrot.slane %v3641, 4
      %v3644 = vshll.u32 %v3596, 16
      %v3646 = vrot.slane %v3644, 5
      %v3647 = vor.u32 %v3643, %v3646
      %v3648 = vrot.slane %v3647, 4
      %v3650 = vshll.u32 %v3597, 16
      %v3652 = vrot.slane %v3650, 5
      %v3653 = vsel %vm493, %v3648, %v3652
      %v3655 = vshrl.u32 %v3598, 16
      %v3657 = vrot.slane %v3655, 4
      %v3658 = vshll.u32 %v3598, 16
      %v3660 = vrot.slane %v3658, 5
      %v3661 = vor.u32 %v3657, %v3660
      %v3662 = vrot.slane %v3661, 4
      %v3664 = vshll.u32 %v3599, 16
      %v3666 = vrot.slane %v3664, 5
      %v3667 = vsel %vm493, %v3662, %v3666
      %v3669 = vshrl.u32 %v3600, 16
      %v3671 = vrot.slane %v3669, 4
      %v3672 = vshll.u32 %v3600, 16
      %v3674 = vrot.slane %v3672, 5
      %v3675 = vor.u32 %v3671, %v3674
      %v3676 = vrot.slane %v3675, 4
      %v3678 = vshll.u32 %v3601, 16
      %v3680 = vrot.slane %v3678, 5
      %v3681 = vsel %vm493, %v3676, %v3680
      %v3683 = vshrl.u32 %v3602, 16
      %v3685 = vrot.slane %v3683, 4
      %v3686 = vshll.u32 %v3602, 16
      %v3688 = vrot.slane %v3686, 5
      %v3689 = vor.u32 %v3685, %v3688
      %v3690 = vrot.slane %v3689, 4
      %v3692 = vshll.u32 %v3603, 16
      %v3694 = vrot.slane %v3692, 5
      %v3695 = vsel %vm493, %v3690, %v3694
      %v3697 = vshrl.u32 %v3604, 16
      %v3699 = vrot.slane %v3697, 4
      %v3700 = vshll.u32 %v3604, 16
      %v3702 = vrot.slane %v3700, 5
      %v3703 = vor.u32 %v3699, %v3702
      %v3704 = vrot.slane %v3703, 4
      %v3706 = vshll.u32 %v3605, 16
      %v3708 = vrot.slane %v3706, 5
      %v3709 = vsel %vm493, %v3704, %v3708
      %v3711 = vshrl.u32 %v3606, 16
      %v3713 = vrot.slane %v3711, 4
      %v3714 = vshll.u32 %v3606, 16
      %v3716 = vrot.slane %v3714, 5
      %v3717 = vor.u32 %v3713, %v3716
      %v3718 = vrot.slane %v3717, 4
      %v3720 = vshll.u32 %v3607, 16
      %v3722 = vrot.slane %v3720, 5
      %v3723 = vsel %vm493, %v3718, %v3722
      %v3725 = vshrl.u32 %v3608, 16
      %v3727 = vrot.slane %v3725, 4
      %v3728 = vshll.u32 %v3608, 16
      %v3730 = vrot.slane %v3728, 5
      %v3731 = vor.u32 %v3727, %v3730
      %v3732 = vrot.slane %v3731, 4
      %v3734 = vshll.u32 %v3609, 16
      %v3736 = vrot.slane %v3734, 5
      %v3737 = vsel %vm493, %v3732, %v3736
      %v3739 = vshrl.u32 %v3610, 16
      %v3741 = vrot.slane %v3739, 4
      %v3742 = vshll.u32 %v3610, 16
      %v3744 = vrot.slane %v3742, 5
      %v3745 = vor.u32 %v3741, %v3744
      %v3746 = vrot.slane %v3745, 4
      %v3748 = vshll.u32 %v3611, 16
      %v3750 = vrot.slane %v3748, 5
      %v3751 = vsel %vm493, %v3746, %v3750
      %v3753 = vshrl.u32 %v3612, 16
      %v3755 = vrot.slane %v3753, 4
      %v3756 = vshll.u32 %v3612, 16
      %v3758 = vrot.slane %v3756, 5
      %v3759 = vor.u32 %v3755, %v3758
      %v3760 = vrot.slane %v3759, 4
      %v3762 = vshll.u32 %v3613, 16
      %v3764 = vrot.slane %v3762, 5
      %v3765 = vsel %vm493, %v3760, %v3764
      %v3767 = vshrl.u32 %v3614, 16
      %v3769 = vrot.slane %v3767, 4
      %v3770 = vshll.u32 %v3614, 16
      %v3772 = vrot.slane %v3770, 5
      %v3773 = vor.u32 %v3769, %v3772
      %v3774 = vrot.slane %v3773, 4
      %v3776 = vshll.u32 %v3615, 16
      %v3778 = vrot.slane %v3776, 5
      %v3779 = vsel %vm493, %v3774, %v3778
      %v3781 = vshrl.u32 %v3616, 16
      %v3783 = vrot.slane %v3781, 4
      %v3784 = vshll.u32 %v3616, 16
      %v3786 = vrot.slane %v3784, 5
      %v3787 = vor.u32 %v3783, %v3786
      %v3788 = vrot.slane %v3787, 4
      %v3790 = vshll.u32 %v3617, 16
      %v3792 = vrot.slane %v3790, 5
      %v3793 = vsel %vm493, %v3788, %v3792
      %v3795 = vshrl.u32 %v3618, 16
      %v3797 = vrot.slane %v3795, 4
      %v3798 = vshll.u32 %v3618, 16
      %v3800 = vrot.slane %v3798, 5
      %v3801 = vor.u32 %v3797, %v3800
      %v3802 = vrot.slane %v3801, 4
      %v3804 = vshll.u32 %v3619, 16
      %v3806 = vrot.slane %v3804, 5
      %v3807 = vsel %vm493, %v3802, %v3806
      %v3809 = vshrl.u32 %v3620, 16
      %v3811 = vrot.slane %v3809, 4
      %v3812 = vshll.u32 %v3620, 16
      %v3814 = vrot.slane %v3812, 5
      %v3815 = vor.u32 %v3811, %v3814
      %v3816 = vrot.slane %v3815, 4
      %v3818 = vshll.u32 %v3621, 16
      %v3820 = vrot.slane %v3818, 5
      %v3821 = vsel %vm493, %v3816, %v3820
      %v3823 = vshrl.u32 %v3622, 16
      %v3825 = vrot.slane %v3823, 4
      %v3826 = vshll.u32 %v3622, 16
      %v3828 = vrot.slane %v3826, 5
      %v3829 = vor.u32 %v3825, %v3828
      %v3830 = vrot.slane %v3829, 4
      %v3832 = vshll.u32 %v3623, 16
      %v3834 = vrot.slane %v3832, 5
      %v3835 = vsel %vm493, %v3830, %v3834
      %v3837 = vshrl.u32 %v3624, 16
      %v3839 = vrot.slane %v3837, 4
      %v3840 = vshll.u32 %v3624, 16
      %v3842 = vrot.slane %v3840, 5
      %v3843 = vor.u32 %v3839, %v3842
      %v3844 = vrot.slane %v3843, 4
      %v3846 = vshll.u32 %v3625, 16
      %v3848 = vrot.slane %v3846, 5
      %v3849 = vsel %vm493, %v3844, %v3848
      %s3850 = scalar_lea.vmem %s1, 512
      %v3851 = vld [vmem:[%s3850] sm:$0xf]
      %v3852 = vld [vmem:[%s3850 + $0x4] sm:$0xf]
      %v3853 = vld [vmem:[%s3850 + $0x8] sm:$0xf]
      %v3854 = vld [vmem:[%s3850 + $0xc] sm:$0xf]
      %v3855 = vld [vmem:[%s3850 + $0x10] sm:$0xf]
      %v3856 = vld [vmem:[%s3850 + $0x14] sm:$0xf]
      %v3857 = vld [vmem:[%s3850 + $0x18] sm:$0xf]
      %v3858 = vld [vmem:[%s3850 + $0x1c] sm:$0xf]
      %v3859 = vld [vmem:[%s3850 + $0x20] sm:$0xf]
      %v3860 = vld [vmem:[%s3850 + $0x24] sm:$0xf]
      %v3861 = vld [vmem:[%s3850 + $0x28] sm:$0xf]
      %v3862 = vld [vmem:[%s3850 + $0x2c] sm:$0xf]
      %v3863 = vld [vmem:[%s3850 + $0x30] sm:$0xf]
      %v3864 = vld [vmem:[%s3850 + $0x34] sm:$0xf]
      %v3865 = vld [vmem:[%s3850 + $0x38] sm:$0xf]
      %v3866 = vld [vmem:[%s3850 + $0x3c] sm:$0xf]
      %v3867 = vunpack.c.l.b16 %v3639
      %v3868 = vunpack.c.l.b16 %v3653
      %v3869 = vunpack.c.l.b16 %v3667
      %v3870 = vunpack.c.l.b16 %v3681
      %v3871 = vunpack.c.l.b16 %v3695
      %v3872 = vunpack.c.l.b16 %v3709
      %v3873 = vunpack.c.l.b16 %v3723
      %v3874 = vunpack.c.l.b16 %v3737
      %v3875 = vunpack.c.l.b16 %v3751
      %v3876 = vunpack.c.l.b16 %v3765
      %v3877 = vunpack.c.l.b16 %v3779
      %v3878 = vunpack.c.l.b16 %v3793
      %v3879 = vunpack.c.l.b16 %v3807
      %v3880 = vunpack.c.l.b16 %v3821
      %v3881 = vunpack.c.l.b16 %v3835
      %v3882 = vunpack.c.l.b16 %v3849
      %v3883 = vpack.c.b16 %v3868, %v3867
      %v3884 = vpack.c.b16 %v3870, %v3869
      %v3885 = vpack.c.b16 %v3872, %v3871
      %v3886 = vpack.c.b16 %v3874, %v3873
      %v3887 = vpack.c.b16 %v3876, %v3875
      %v3888 = vpack.c.b16 %v3878, %v3877
      %v3889 = vpack.c.b16 %v3880, %v3879
      %v3890 = vpack.c.b16 %v3882, %v3881
      %v3915 = vunpack.c.l.b16 %v3851
      %v3916 = vunpack.c.l.b16 %v3852
      %v3917 = vunpack.c.l.b16 %v3853
      %v3918 = vunpack.c.l.b16 %v3854
      %v3919 = vunpack.c.l.b16 %v3855
      %v3920 = vunpack.c.l.b16 %v3856
      %v3921 = vunpack.c.l.b16 %v3857
      %v3922 = vunpack.c.l.b16 %v3858
      %v3923 = vunpack.c.l.b16 %v3859
      %v3924 = vunpack.c.l.b16 %v3860
      %v3925 = vunpack.c.l.b16 %v3861
      %v3926 = vunpack.c.l.b16 %v3862
      %v3927 = vunpack.c.l.b16 %v3863
      %v3928 = vunpack.c.l.b16 %v3864
      %v3929 = vunpack.c.l.b16 %v3865
      %v3930 = vunpack.c.l.b16 %v3866
      %v3931 = vpack.c.b16 %v3916, %v3915
      %v3932 = vpack.c.b16 %v3918, %v3917
      %v3933 = vpack.c.b16 %v3920, %v3919
      %v3934 = vpack.c.b16 %v3922, %v3921
      %v3935 = vpack.c.b16 %v3924, %v3923
      %v3936 = vpack.c.b16 %v3926, %v3925
      %v3937 = vpack.c.b16 %v3928, %v3927
      %v3938 = vpack.c.b16 %v3930, %v3929
      %3947 = vmatprep.subr.bf16.mxu0 0
      %3948 = vmatpush1.bf16.msra.mxu0 %v3931
      %3949 = vmatprep.subr.bf16.mxu0 0
      %3950 = vmatpush1.bf16.msra.mxu0 %v3932
      %3951 = vmatprep.subr.bf16.mxu0 0
      %3952 = vmatpush1.bf16.msra.mxu0 %v3933
      %3953 = vmatprep.subr.bf16.mxu0 0
      %3954 = vmatpush1.bf16.msra.mxu0 %v3934
      %3955 = vmatprep.subr.bf16.mxu0 0
      %3956 = vmatpush1.bf16.msra.mxu0 %v3935
      %3957 = vmatprep.subr.bf16.mxu0 0
      %3958 = vmatpush1.bf16.msra.mxu0 %v3936
      %3959 = vmatprep.subr.bf16.mxu0 0
      %3960 = vmatpush1.bf16.msra.mxu0 %v3937
      %3961 = vmatprep.subr.bf16.mxu0 0
      %3962 = vmatpush1.bf16.msra.mxu0 %v3938
      %3963 = vmatprep.subr.bf16.mxu0 0
      %3964 = vmatpush1.bf16.msra.mxu0 0
      %3965 = vmatprep.subr.bf16.mxu0 0
      %3966 = vmatpush1.bf16.msra.mxu0 0
      %3967 = vmatprep.subr.bf16.mxu0 0
      %3968 = vmatpush1.bf16.msra.mxu0 0
      %3969 = vmatprep.subr.bf16.mxu0 0
      %3970 = vmatpush1.bf16.msra.mxu0 0
      %3971 = vmatprep.subr.bf16.mxu0 0
      %3972 = vmatpush1.bf16.msra.mxu0 0
      %3973 = vmatprep.subr.bf16.mxu0 0
      %3974 = vmatpush1.bf16.msra.mxu0 0
      %3975 = vmatprep.subr.bf16.mxu0 0
      %3976 = vmatpush1.bf16.msra.mxu0 0
      %3977 = vmatprep.subr.bf16.mxu0 0
      %3978 = vmatpush1.bf16.msra.mxu0 0
      %3979 = vmatprep.mubr.bf16.mxu0 0
      %3980 = vmatmul.mubr.bf16.gmra.mrb[0].mxu0 %v3883
      %v3981 = vpop.f32.mrb[0].mxu0
      %v3982 = vadd.f32 0.0, %v3981
      %v3983 = vpop.f32.mrb[0].mxu0
      %v3984 = vpop.f32.mrb[0].mxu0
      %v3985 = vadd.f32 0.0, %v3984
      %v3986 = vpop.f32.mrb[0].mxu0
      %3987 = vmatprep.mubr.bf16.mxu0 0
      %3988 = vmatmul.mubr.bf16.gmra.mrb[0].mxu0 %v3884
      %v3989 = vpop.f32.mrb[0].mxu0
      %v3990 = vadd.f32 0.0, %v3989
      %v3991 = vpop.f32.mrb[0].mxu0
      %v3992 = vpop.f32.mrb[0].mxu0
      %v3993 = vadd.f32 0.0, %v3992
      %v3994 = vpop.f32.mrb[0].mxu0
      %3995 = vmatprep.mubr.bf16.mxu0 0
      %3996 = vmatmul.mubr.bf16.gmra.mrb[0].mxu0 %v3885
      %v3997 = vpop.f32.mrb[0].mxu0
      %v3998 = vadd.f32 0.0, %v3997
      %v3999 = vpop.f32.mrb[0].mxu0
      %v4000 = vpop.f32.mrb[0].mxu0
      %v4001 = vadd.f32 0.0, %v4000
      %v4002 = vpop.f32.mrb[0].mxu0
      %4003 = vmatprep.mubr.bf16.mxu0 0
      %4004 = vmatmul.mubr.bf16.gmra.mrb[0].mxu0 %v3886
      %v4005 = vpop.f32.mrb[0].mxu0
      %v4006 = vadd.f32 0.0, %v4005
      %v4007 = vpop.f32.mrb[0].mxu0
      %v4008 = vpop.f32.mrb[0].mxu0
      %v4009 = vadd.f32 0.0, %v4008
      %v4010 = vpop.f32.mrb[0].mxu0
      %4011 = vmatprep.mubr.bf16.mxu0 0
      %4012 = vmatmul.mubr.bf16.gmra.mrb[0].mxu0 %v3887
      %v4013 = vpop.f32.mrb[0].mxu0
      %v4014 = vadd.f32 0.0, %v4013
      %v4015 = vpop.f32.mrb[0].mxu0
      %v4016 = vpop.f32.mrb[0].mxu0
      %v4017 = vadd.f32 0.0, %v4016
      %v4018 = vpop.f32.mrb[0].mxu0
      %4019 = vmatprep.mubr.bf16.mxu0 0
      %4020 = vmatmul.mubr.bf16.gmra.mrb[0].mxu0 %v3888
      %v4021 = vpop.f32.mrb[0].mxu0
      %v4022 = vadd.f32 0.0, %v4021
      %v4023 = vpop.f32.mrb[0].mxu0
      %v4024 = vpop.f32.mrb[0].mxu0
      %v4025 = vadd.f32 0.0, %v4024
      %v4026 = vpop.f32.mrb[0].mxu0
      %4027 = vmatprep.mubr.bf16.mxu0 0
      %4028 = vmatmul.mubr.bf16.gmra.mrb[0].mxu0 %v3889
      %v4029 = vpop.f32.mrb[0].mxu0
      %v4030 = vadd.f32 0.0, %v4029
      %v4031 = vpop.f32.mrb[0].mxu0
      %v4032 = vpop.f32.mrb[0].mxu0
      %v4033 = vadd.f32 0.0, %v4032
      %v4034 = vpop.f32.mrb[0].mxu0
      %4035 = vmatprep.mubr.bf16.mxu0 0
      %4036 = vmatmul.mubr.bf16.gmra.mrb[0].mxu0 %v3890
      %v4037 = vpop.f32.mrb[0].mxu0
      %v4038 = vadd.f32 0.0, %v4037
      %v4039 = vpop.f32.mrb[0].mxu0
      %v4040 = vpop.f32.mrb[0].mxu0
      %v4041 = vadd.f32 0.0, %v4040
      %v4042 = vpop.f32.mrb[0].mxu0
      %4043 = vdwg.mxu0
      %v4044 = vadd.f32 %v3532, %v3982
      %v4045 = vadd.f32 %v3535, %v3985
      %v4046 = vadd.f32 %v3540, %v3990
      %v4047 = vadd.f32 %v3543, %v3993
      %v4048 = vadd.f32 %v3548, %v3998
      %v4049 = vadd.f32 %v3551, %v4001
      %v4050 = vadd.f32 %v3556, %v4006
      %v4051 = vadd.f32 %v3559, %v4009
      %v4052 = vadd.f32 %v3564, %v4014
      %v4053 = vadd.f32 %v3567, %v4017
      %v4054 = vadd.f32 %v3572, %v4022
      %v4055 = vadd.f32 %v3575, %v4025
      %v4056 = vadd.f32 %v3580, %v4030
      %v4057 = vadd.f32 %v3583, %v4033
      %v4058 = vadd.f32 %v3588, %v4038
      %v4059 = vadd.f32 %v3591, %v4041
      %v4060 = vld [vmem:[%s338] sm:$0xe]
      %v4061 = vld [vmem:[%s338 + $0x8] sm:$0xe]
      %v4062 = vld [vmem:[%s338 + $0x10] sm:$0xe]
      %v4063 = vld [vmem:[%s338 + $0x18] sm:$0xe]
      %v4064 = vld [vmem:[%s338 + $0x20] sm:$0xe]
      %v4065 = vld [vmem:[%s338 + $0x28] sm:$0xe]
      %v4066 = vld [vmem:[%s338 + $0x30] sm:$0xe]
      %v4067 = vld [vmem:[%s338 + $0x38] sm:$0xe]
      %v4068 = vld [vmem:[%s338 + $0x40] sm:$0xe]
      %v4069 = vld [vmem:[%s338 + $0x48] sm:$0xe]
      %v4070 = vld [vmem:[%s338 + $0x50] sm:$0xe]
      %v4071 = vld [vmem:[%s338 + $0x58] sm:$0xe]
      %v4072 = vld [vmem:[%s338 + $0x60] sm:$0xe]
      %v4073 = vld [vmem:[%s338 + $0x68] sm:$0xe]
      %v4074 = vld [vmem:[%s338 + $0x70] sm:$0xe]
      %v4075 = vld [vmem:[%s338 + $0x78] sm:$0xe]
      %v4108 = vrot.slane %v4060, 5
      %v4109 = vrot.slane %v4108, 4
      %v4110 = vrot.slane %v3595, 5
      %v4111 = vsel %vm3158, %v4109, %v4110
      %v4112 = vrot.slane %v4061, 5
      %v4113 = vrot.slane %v4112, 4
      %v4114 = vrot.slane %v3597, 5
      %v4115 = vsel %vm3158, %v4113, %v4114
      %v4116 = vrot.slane %v4062, 5
      %v4117 = vrot.slane %v4116, 4
      %v4118 = vrot.slane %v3599, 5
      %v4119 = vsel %vm3158, %v4117, %v4118
      %v4120 = vrot.slane %v4063, 5
      %v4121 = vrot.slane %v4120, 4
      %v4122 = vrot.slane %v3601, 5
      %v4123 = vsel %vm3158, %v4121, %v4122
      %v4124 = vrot.slane %v4064, 5
      %v4125 = vrot.slane %v4124, 4
      %v4126 = vrot.slane %v3603, 5
      %v4127 = vsel %vm3158, %v4125, %v4126
      %v4128 = vrot.slane %v4065, 5
      %v4129 = vrot.slane %v4128, 4
      %v4130 = vrot.slane %v3605, 5
      %v4131 = vsel %vm3158, %v4129, %v4130
      %v4132 = vrot.slane %v4066, 5
      %v4133 = vrot.slane %v4132, 4
      %v4134 = vrot.slane %v3607, 5
      %v4135 = vsel %vm3158, %v4133, %v4134
      %v4136 = vrot.slane %v4067, 5
      %v4137 = vrot.slane %v4136, 4
      %v4138 = vrot.slane %v3609, 5
      %v4139 = vsel %vm3158, %v4137, %v4138
      %v4140 = vrot.slane %v4068, 5
      %v4141 = vrot.slane %v4140, 4
      %v4142 = vrot.slane %v3611, 5
      %v4143 = vsel %vm3158, %v4141, %v4142
      %v4144 = vrot.slane %v4069, 5
      %v4145 = vrot.slane %v4144, 4
      %v4146 = vrot.slane %v3613, 5
      %v4147 = vsel %vm3158, %v4145, %v4146
      %v4148 = vrot.slane %v4070, 5
      %v4149 = vrot.slane %v4148, 4
      %v4150 = vrot.slane %v3615, 5
      %v4151 = vsel %vm3158, %v4149, %v4150
      %v4152 = vrot.slane %v4071, 5
      %v4153 = vrot.slane %v4152, 4
      %v4154 = vrot.slane %v3617, 5
      %v4155 = vsel %vm3158, %v4153, %v4154
      %v4156 = vrot.slane %v4072, 5
      %v4157 = vrot.slane %v4156, 4
      %v4158 = vrot.slane %v3619, 5
      %v4159 = vsel %vm3158, %v4157, %v4158
      %v4160 = vrot.slane %v4073, 5
      %v4161 = vrot.slane %v4160, 4
      %v4162 = vrot.slane %v3621, 5
      %v4163 = vsel %vm3158, %v4161, %v4162
      %v4164 = vrot.slane %v4074, 5
      %v4165 = vrot.slane %v4164, 4
      %v4166 = vrot.slane %v3623, 5
      %v4167 = vsel %vm3158, %v4165, %v4166
      %v4168 = vrot.slane %v4075, 5
      %v4169 = vrot.slane %v4168, 4
      %v4170 = vrot.slane %v3625, 5
      %v4171 = vsel %vm3158, %v4169, %v4170
      %s4172 = scalar_lea.vmem %s1, 576
      %v4173 = vld [vmem:[%s4172] sm:$0xf]
      %v4174 = vld [vmem:[%s4172 + $0x4] sm:$0xf]
      %v4175 = vld [vmem:[%s4172 + $0x8] sm:$0xf]
      %v4176 = vld [vmem:[%s4172 + $0xc] sm:$0xf]
      %v4177 = vld [vmem:[%s4172 + $0x10] sm:$0xf]
      %v4178 = vld [vmem:[%s4172 + $0x14] sm:$0xf]
      %v4179 = vld [vmem:[%s4172 + $0x18] sm:$0xf]
      %v4180 = vld [vmem:[%s4172 + $0x1c] sm:$0xf]
      %v4181 = vld [vmem:[%s4172 + $0x20] sm:$0xf]
      %v4182 = vld [vmem:[%s4172 + $0x24] sm:$0xf]
      %v4183 = vld [vmem:[%s4172 + $0x28] sm:$0xf]
      %v4184 = vld [vmem:[%s4172 + $0x2c] sm:$0xf]
      %v4185 = vld [vmem:[%s4172 + $0x30] sm:$0xf]
      %v4186 = vld [vmem:[%s4172 + $0x34] sm:$0xf]
      %v4187 = vld [vmem:[%s4172 + $0x38] sm:$0xf]
      %v4188 = vld [vmem:[%s4172 + $0x3c] sm:$0xf]
      %v4189 = vunpack.c.l.b16 %v4111
      %v4190 = vunpack.c.l.b16 %v4115
      %v4191 = vunpack.c.l.b16 %v4119
      %v4192 = vunpack.c.l.b16 %v4123
      %v4193 = vunpack.c.l.b16 %v4127
      %v4194 = vunpack.c.l.b16 %v4131
      %v4195 = vunpack.c.l.b16 %v4135
      %v4196 = vunpack.c.l.b16 %v4139
      %v4197 = vunpack.c.l.b16 %v4143
      %v4198 = vunpack.c.l.b16 %v4147
      %v4199 = vunpack.c.l.b16 %v4151
      %v4200 = vunpack.c.l.b16 %v4155
      %v4201 = vunpack.c.l.b16 %v4159
      %v4202 = vunpack.c.l.b16 %v4163
      %v4203 = vunpack.c.l.b16 %v4167
      %v4204 = vunpack.c.l.b16 %v4171
      %v4205 = vpack.c.b16 %v4190, %v4189
      %v4206 = vpack.c.b16 %v4192, %v4191
      %v4207 = vpack.c.b16 %v4194, %v4193
      %v4208 = vpack.c.b16 %v4196, %v4195
      %v4209 = vpack.c.b16 %v4198, %v4197
      %v4210 = vpack.c.b16 %v4200, %v4199
      %v4211 = vpack.c.b16 %v4202, %v4201
      %v4212 = vpack.c.b16 %v4204, %v4203
      %v4237 = vunpack.c.l.b16 %v4173
      %v4238 = vunpack.c.l.b16 %v4174
      %v4239 = vunpack.c.l.b16 %v4175
      %v4240 = vunpack.c.l.b16 %v4176
      %v4241 = vunpack.c.l.b16 %v4177
      %v4242 = vunpack.c.l.b16 %v4178
      %v4243 = vunpack.c.l.b16 %v4179
      %v4244 = vunpack.c.l.b16 %v4180
      %v4245 = vunpack.c.l.b16 %v4181
      %v4246 = vunpack.c.l.b16 %v4182
      %v4247 = vunpack.c.l.b16 %v4183
      %v4248 = vunpack.c.l.b16 %v4184
      %v4249 = vunpack.c.l.b16 %v4185
      %v4250 = vunpack.c.l.b16 %v4186
      %v4251 = vunpack.c.l.b16 %v4187
      %v4252 = vunpack.c.l.b16 %v4188
      %v4253 = vpack.c.b16 %v4238, %v4237
      %v4254 = vpack.c.b16 %v4240, %v4239
      %v4255 = vpack.c.b16 %v4242, %v4241
      %v4256 = vpack.c.b16 %v4244, %v4243
      %v4257 = vpack.c.b16 %v4246, %v4245
      %v4258 = vpack.c.b16 %v4248, %v4247
      %v4259 = vpack.c.b16 %v4250, %v4249
      %v4260 = vpack.c.b16 %v4252, %v4251
      %4269 = vmatprep.subr.bf16.mxu0 0
      %4270 = vmatpush1.bf16.msra.mxu0 %v4253
      %4271 = vmatprep.subr.bf16.mxu0 0
      %4272 = vmatpush1.bf16.msra.mxu0 %v4254
      %4273 = vmatprep.subr.bf16.mxu0 0
      %4274 = vmatpush1.bf16.msra.mxu0 %v4255
      %4275 = vmatprep.subr.bf16.mxu0 0
      %4276 = vmatpush1.bf16.msra.mxu0 %v4256
      %4277 = vmatprep.subr.bf16.mxu0 0
      %4278 = vmatpush1.bf16.msra.mxu0 %v4257
      %4279 = vmatprep.subr.bf16.mxu0 0
      %4280 = vmatpush1.bf16.msra.mxu0 %v4258
      %4281 = vmatprep.subr.bf16.mxu0 0
      %4282 = vmatpush1.bf16.msra.mxu0 %v4259
      %4283 = vmatprep.subr.bf16.mxu0 0
      %4284 = vmatpush1.bf16.msra.mxu0 %v4260
      %4285 = vmatprep.subr.bf16.mxu0 0
      %4286 = vmatpush1.bf16.msra.mxu0 0
      %4287 = vmatprep.subr.bf16.mxu0 0
      %4288 = vmatpush1.bf16.msra.mxu0 0
      %4289 = vmatprep.subr.bf16.mxu0 0
      %4290 = vmatpush1.bf16.msra.mxu0 0
      %4291 = vmatprep.subr.bf16.mxu0 0
      %4292 = vmatpush1.bf16.msra.mxu0 0
      %4293 = vmatprep.subr.bf16.mxu0 0
      %4294 = vmatpush1.bf16.msra.mxu0 0
      %4295 = vmatprep.subr.bf16.mxu0 0
      %4296 = vmatpush1.bf16.msra.mxu0 0
      %4297 = vmatprep.subr.bf16.mxu0 0
      %4298 = vmatpush1.bf16.msra.mxu0 0
      %4299 = vmatprep.subr.bf16.mxu0 0
      %4300 = vmatpush1.bf16.msra.mxu0 0
      %4301 = vmatprep.mubr.bf16.mxu0 0
      %4302 = vmatmul.mubr.bf16.gmra.mrb[0].mxu0 %v4205
      %v4303 = vpop.f32.mrb[0].mxu0
      %v4304 = vadd.f32 0.0, %v4303
      %v4305 = vpop.f32.mrb[0].mxu0
      %v4306 = vpop.f32.mrb[0].mxu0
      %v4307 = vadd.f32 0.0, %v4306
      %v4308 = vpop.f32.mrb[0].mxu0
      %4309 = vmatprep.mubr.bf16.mxu0 0
      %4310 = vmatmul.mubr.bf16.gmra.mrb[0].mxu0 %v4206
      %v4311 = vpop.f32.mrb[0].mxu0
      %v4312 = vadd.f32 0.0, %v4311
      %v4313 = vpop.f32.mrb[0].mxu0
      %v4314 = vpop.f32.mrb[0].mxu0
      %v4315 = vadd.f32 0.0, %v4314
      %v4316 = vpop.f32.mrb[0].mxu0
      %4317 = vmatprep.mubr.bf16.mxu0 0
      %4318 = vmatmul.mubr.bf16.gmra.mrb[0].mxu0 %v4207
      %v4319 = vpop.f32.mrb[0].mxu0
      %v4320 = vadd.f32 0.0, %v4319
      %v4321 = vpop.f32.mrb[0].mxu0
      %v4322 = vpop.f32.mrb[0].mxu0
      %v4323 = vadd.f32 0.0, %v4322
      %v4324 = vpop.f32.mrb[0].mxu0
      %4325 = vmatprep.mubr.bf16.mxu0 0
      %4326 = vmatmul.mubr.bf16.gmra.mrb[0].mxu0 %v4208
      %v4327 = vpop.f32.mrb[0].mxu0
      %v4328 = vadd.f32 0.0, %v4327
      %v4329 = vpop.f32.mrb[0].mxu0
      %v4330 = vpop.f32.mrb[0].mxu0
      %v4331 = vadd.f32 0.0, %v4330
      %v4332 = vpop.f32.mrb[0].mxu0
      %4333 = vmatprep.mubr.bf16.mxu0 0
      %4334 = vmatmul.mubr.bf16.gmra.mrb[0].mxu0 %v4209
      %v4335 = vpop.f32.mrb[0].mxu0
      %v4336 = vadd.f32 0.0, %v4335
      %v4337 = vpop.f32.mrb[0].mxu0
      %v4338 = vpop.f32.mrb[0].mxu0
      %v4339 = vadd.f32 0.0, %v4338
      %v4340 = vpop.f32.mrb[0].mxu0
      %4341 = vmatprep.mubr.bf16.mxu0 0
      %4342 = vmatmul.mubr.bf16.gmra.mrb[0].mxu0 %v4210
      %v4343 = vpop.f32.mrb[0].mxu0
      %v4344 = vadd.f32 0.0, %v4343
      %v4345 = vpop.f32.mrb[0].mxu0
      %v4346 = vpop.f32.mrb[0].mxu0
      %v4347 = vadd.f32 0.0, %v4346
      %v4348 = vpop.f32.mrb[0].mxu0
      %4349 = vmatprep.mubr.bf16.mxu0 0
      %4350 = vmatmul.mubr.bf16.gmra.mrb[0].mxu0 %v4211
      %v4351 = vpop.f32.mrb[0].mxu0
      %v4352 = vadd.f32 0.0, %v4351
      %v4353 = vpop.f32.mrb[0].mxu0
      %v4354 = vpop.f32.mrb[0].mxu0
      %v4355 = vadd.f32 0.0, %v4354
      %v4356 = vpop.f32.mrb[0].mxu0
      %4357 = vmatprep.mubr.bf16.mxu0 0
      %4358 = vmatmul.mubr.bf16.gmra.mrb[0].mxu0 %v4212
      %v4359 = vpop.f32.mrb[0].mxu0
      %v4360 = vadd.f32 0.0, %v4359
      %v4361 = vpop.f32.mrb[0].mxu0
      %v4362 = vpop.f32.mrb[0].mxu0
      %v4363 = vadd.f32 0.0, %v4362
      %v4364 = vpop.f32.mrb[0].mxu0
      %4365 = vdwg.mxu0
      %v4366 = vadd.f32 %v4044, %v4304
      %v4367 = vadd.f32 %v4045, %v4307
      %v4368 = vadd.f32 %v4046, %v4312
      %v4369 = vadd.f32 %v4047, %v4315
      %v4370 = vadd.f32 %v4048, %v4320
      %v4371 = vadd.f32 %v4049, %v4323
      %v4372 = vadd.f32 %v4050, %v4328
      %v4373 = vadd.f32 %v4051, %v4331
      %v4374 = vadd.f32 %v4052, %v4336
      %v4375 = vadd.f32 %v4053, %v4339
      %v4376 = vadd.f32 %v4054, %v4344
      %v4377 = vadd.f32 %v4055, %v4347
      %v4378 = vadd.f32 %v4056, %v4352
      %v4379 = vadd.f32 %v4057, %v4355
      %v4380 = vadd.f32 %v4058, %v4360
      %v4381 = vadd.f32 %v4059, %v4363
      %v4382 = vld [vmem:[%s1813] sm:$0xf]
      %v4383 = vld [vmem:[%s1813 + $0x4] sm:$0x1]
      %v4384 = vld [vmem:[%s1813 + $0x8] sm:$0xf]
      %v4385 = vld [vmem:[%s1813 + $0xc] sm:$0x1]
      %v4386 = vld [vmem:[%s1813 + $0x10] sm:$0xf]
      %v4387 = vld [vmem:[%s1813 + $0x14] sm:$0x1]
      %v4388 = vld [vmem:[%s1813 + $0x18] sm:$0xf]
      %v4389 = vld [vmem:[%s1813 + $0x1c] sm:$0x1]
      %v4390 = vld [vmem:[%s1813 + $0x20] sm:$0xf]
      %v4391 = vld [vmem:[%s1813 + $0x24] sm:$0x1]
      %v4392 = vld [vmem:[%s1813 + $0x28] sm:$0xf]
      %v4393 = vld [vmem:[%s1813 + $0x2c] sm:$0x1]
      %v4394 = vld [vmem:[%s1813 + $0x30] sm:$0xf]
      %v4395 = vld [vmem:[%s1813 + $0x34] sm:$0x1]
      %v4396 = vld [vmem:[%s1813 + $0x38] sm:$0xf]
      %v4397 = vld [vmem:[%s1813 + $0x3c] sm:$0x1]
      %v4398 = vld [vmem:[%s1813 + $0x40] sm:$0xf]
      %v4399 = vld [vmem:[%s1813 + $0x44] sm:$0x1]
      %v4400 = vld [vmem:[%s1813 + $0x48] sm:$0xf]
      %v4401 = vld [vmem:[%s1813 + $0x4c] sm:$0x1]
      %v4402 = vld [vmem:[%s1813 + $0x50] sm:$0xf]
      %v4403 = vld [vmem:[%s1813 + $0x54] sm:$0x1]
      %v4404 = vld [vmem:[%s1813 + $0x58] sm:$0xf]
      %v4405 = vld [vmem:[%s1813 + $0x5c] sm:$0x1]
      %v4406 = vld [vmem:[%s1813 + $0x60] sm:$0xf]
      %v4407 = vld [vmem:[%s1813 + $0x64] sm:$0x1]
      %v4408 = vld [vmem:[%s1813 + $0x68] sm:$0xf]
      %v4409 = vld [vmem:[%s1813 + $0x6c] sm:$0x1]
      %v4410 = vld [vmem:[%s1813 + $0x70] sm:$0xf]
      %v4411 = vld [vmem:[%s1813 + $0x74] sm:$0x1]
      %v4412 = vld [vmem:[%s1813 + $0x78] sm:$0xf]
      %v4413 = vld [vmem:[%s1813 + $0x7c] sm:$0x1]
      %v4415 = vshrl.u32 %v4382, 16
      %v4417 = vrot.slane %v4415, 4
      %v4418 = vshll.u32 %v4382, 16
      %v4420 = vrot.slane %v4418, 5
      %v4421 = vor.u32 %v4417, %v4420
      %v4422 = vrot.slane %v4421, 4
      %v4424 = vshll.u32 %v4383, 16
      %v4426 = vrot.slane %v4424, 5
      %v4427 = vsel %vm493, %v4422, %v4426
      %v4429 = vshrl.u32 %v4384, 16
      %v4431 = vrot.slane %v4429, 4
      %v4432 = vshll.u32 %v4384, 16
      %v4434 = vrot.slane %v4432, 5
      %v4435 = vor.u32 %v4431, %v4434
      %v4436 = vrot.slane %v4435, 4
      %v4438 = vshll.u32 %v4385, 16
      %v4440 = vrot.slane %v4438, 5
      %v4441 = vsel %vm493, %v4436, %v4440
      %v4443 = vshrl.u32 %v4386, 16
      %v4445 = vrot.slane %v4443, 4
      %v4446 = vshll.u32 %v4386, 16
      %v4448 = vrot.slane %v4446, 5
      %v4449 = vor.u32 %v4445, %v4448
      %v4450 = vrot.slane %v4449, 4
      %v4452 = vshll.u32 %v4387, 16
      %v4454 = vrot.slane %v4452, 5
      %v4455 = vsel %vm493, %v4450, %v4454
      %v4457 = vshrl.u32 %v4388, 16
      %v4459 = vrot.slane %v4457, 4
      %v4460 = vshll.u32 %v4388, 16
      %v4462 = vrot.slane %v4460, 5
      %v4463 = vor.u32 %v4459, %v4462
      %v4464 = vrot.slane %v4463, 4
      %v4466 = vshll.u32 %v4389, 16
      %v4468 = vrot.slane %v4466, 5
      %v4469 = vsel %vm493, %v4464, %v4468
      %v4471 = vshrl.u32 %v4390, 16
      %v4473 = vrot.slane %v4471, 4
      %v4474 = vshll.u32 %v4390, 16
      %v4476 = vrot.slane %v4474, 5
      %v4477 = vor.u32 %v4473, %v4476
      %v4478 = vrot.slane %v4477, 4
      %v4480 = vshll.u32 %v4391, 16
      %v4482 = vrot.slane %v4480, 5
      %v4483 = vsel %vm493, %v4478, %v4482
      %v4485 = vshrl.u32 %v4392, 16
      %v4487 = vrot.slane %v4485, 4
      %v4488 = vshll.u32 %v4392, 16
      %v4490 = vrot.slane %v4488, 5
      %v4491 = vor.u32 %v4487, %v4490
      %v4492 = vrot.slane %v4491, 4
      %v4494 = vshll.u32 %v4393, 16
      %v4496 = vrot.slane %v4494, 5
      %v4497 = vsel %vm493, %v4492, %v4496
      %v4499 = vshrl.u32 %v4394, 16
      %v4501 = vrot.slane %v4499, 4
      %v4502 = vshll.u32 %v4394, 16
      %v4504 = vrot.slane %v4502, 5
      %v4505 = vor.u32 %v4501, %v4504
      %v4506 = vrot.slane %v4505, 4
      %v4508 = vshll.u32 %v4395, 16
      %v4510 = vrot.slane %v4508, 5
      %v4511 = vsel %vm493, %v4506, %v4510
      %v4513 = vshrl.u32 %v4396, 16
      %v4515 = vrot.slane %v4513, 4
      %v4516 = vshll.u32 %v4396, 16
      %v4518 = vrot.slane %v4516, 5
      %v4519 = vor.u32 %v4515, %v4518
      %v4520 = vrot.slane %v4519, 4
      %v4522 = vshll.u32 %v4397, 16
      %v4524 = vrot.slane %v4522, 5
      %v4525 = vsel %vm493, %v4520, %v4524
      %v4527 = vshrl.u32 %v4398, 16
      %v4529 = vrot.slane %v4527, 4
      %v4530 = vshll.u32 %v4398, 16
      %v4532 = vrot.slane %v4530, 5
      %v4533 = vor.u32 %v4529, %v4532
      %v4534 = vrot.slane %v4533, 4
      %v4536 = vshll.u32 %v4399, 16
      %v4538 = vrot.slane %v4536, 5
      %v4539 = vsel %vm493, %v4534, %v4538
      %v4541 = vshrl.u32 %v4400, 16
      %v4543 = vrot.slane %v4541, 4
      %v4544 = vshll.u32 %v4400, 16
      %v4546 = vrot.slane %v4544, 5
      %v4547 = vor.u32 %v4543, %v4546
      %v4548 = vrot.slane %v4547, 4
      %v4550 = vshll.u32 %v4401, 16
      %v4552 = vrot.slane %v4550, 5
      %v4553 = vsel %vm493, %v4548, %v4552
      %v4555 = vshrl.u32 %v4402, 16
      %v4557 = vrot.slane %v4555, 4
      %v4558 = vshll.u32 %v4402, 16
      %v4560 = vrot.slane %v4558, 5
      %v4561 = vor.u32 %v4557, %v4560
      %v4562 = vrot.slane %v4561, 4
      %v4564 = vshll.u32 %v4403, 16
      %v4566 = vrot.slane %v4564, 5
      %v4567 = vsel %vm493, %v4562, %v4566
      %v4569 = vshrl.u32 %v4404, 16
      %v4571 = vrot.slane %v4569, 4
      %v4572 = vshll.u32 %v4404, 16
      %v4574 = vrot.slane %v4572, 5
      %v4575 = vor.u32 %v4571, %v4574
      %v4576 = vrot.slane %v4575, 4
      %v4578 = vshll.u32 %v4405, 16
      %v4580 = vrot.slane %v4578, 5
      %v4581 = vsel %vm493, %v4576, %v4580
      %v4583 = vshrl.u32 %v4406, 16
      %v4585 = vrot.slane %v4583, 4
      %v4586 = vshll.u32 %v4406, 16
      %v4588 = vrot.slane %v4586, 5
      %v4589 = vor.u32 %v4585, %v4588
      %v4590 = vrot.slane %v4589, 4
      %v4592 = vshll.u32 %v4407, 16
      %v4594 = vrot.slane %v4592, 5
      %v4595 = vsel %vm493, %v4590, %v4594
      %v4597 = vshrl.u32 %v4408, 16
      %v4599 = vrot.slane %v4597, 4
      %v4600 = vshll.u32 %v4408, 16
      %v4602 = vrot.slane %v4600, 5
      %v4603 = vor.u32 %v4599, %v4602
      %v4604 = vrot.slane %v4603, 4
      %v4606 = vshll.u32 %v4409, 16
      %v4608 = vrot.slane %v4606, 5
      %v4609 = vsel %vm493, %v4604, %v4608
      %v4611 = vshrl.u32 %v4410, 16
      %v4613 = vrot.slane %v4611, 4
      %v4614 = vshll.u32 %v4410, 16
      %v4616 = vrot.slane %v4614, 5
      %v4617 = vor.u32 %v4613, %v4616
      %v4618 = vrot.slane %v4617, 4
      %v4620 = vshll.u32 %v4411, 16
      %v4622 = vrot.slane %v4620, 5
      %v4623 = vsel %vm493, %v4618, %v4622
      %v4625 = vshrl.u32 %v4412, 16
      %v4627 = vrot.slane %v4625, 4
      %v4628 = vshll.u32 %v4412, 16
      %v4630 = vrot.slane %v4628, 5
      %v4631 = vor.u32 %v4627, %v4630
      %v4632 = vrot.slane %v4631, 4
      %v4634 = vshll.u32 %v4413, 16
      %v4636 = vrot.slane %v4634, 5
      %v4637 = vsel %vm493, %v4632, %v4636
      %s4638 = scalar_lea.vmem %s1, 640
      %v4639 = vld [vmem:[%s4638] sm:$0xf]
      %v4640 = vld [vmem:[%s4638 + $0x4] sm:$0xf]
      %v4641 = vld [vmem:[%s4638 + $0x8] sm:$0xf]
      %v4642 = vld [vmem:[%s4638 + $0xc] sm:$0xf]
      %v4643 = vld [vmem:[%s4638 + $0x10] sm:$0xf]
      %v4644 = vld [vmem:[%s4638 + $0x14] sm:$0xf]
      %v4645 = vld [vmem:[%s4638 + $0x18] sm:$0xf]
      %v4646 = vld [vmem:[%s4638 + $0x1c] sm:$0xf]
      %v4647 = vld [vmem:[%s4638 + $0x20] sm:$0xf]
      %v4648 = vld [vmem:[%s4638 + $0x24] sm:$0xf]
      %v4649 = vld [vmem:[%s4638 + $0x28] sm:$0xf]
      %v4650 = vld [vmem:[%s4638 + $0x2c] sm:$0xf]
      %v4651 = vld [vmem:[%s4638 + $0x30] sm:$0xf]
      %v4652 = vld [vmem:[%s4638 + $0x34] sm:$0xf]
      %v4653 = vld [vmem:[%s4638 + $0x38] sm:$0xf]
      %v4654 = vld [vmem:[%s4638 + $0x3c] sm:$0xf]
      %v4655 = vunpack.c.l.b16 %v4427
      %v4656 = vunpack.c.l.b16 %v4441
      %v4657 = vunpack.c.l.b16 %v4455
      %v4658 = vunpack.c.l.b16 %v4469
      %v4659 = vunpack.c.l.b16 %v4483
      %v4660 = vunpack.c.l.b16 %v4497
      %v4661 = vunpack.c.l.b16 %v4511
      %v4662 = vunpack.c.l.b16 %v4525
      %v4663 = vunpack.c.l.b16 %v4539
      %v4664 = vunpack.c.l.b16 %v4553
      %v4665 = vunpack.c.l.b16 %v4567
      %v4666 = vunpack.c.l.b16 %v4581
      %v4667 = vunpack.c.l.b16 %v4595
      %v4668 = vunpack.c.l.b16 %v4609
      %v4669 = vunpack.c.l.b16 %v4623
      %v4670 = vunpack.c.l.b16 %v4637
      %v4671 = vpack.c.b16 %v4656, %v4655
      %v4672 = vpack.c.b16 %v4658, %v4657
      %v4673 = vpack.c.b16 %v4660, %v4659
      %v4674 = vpack.c.b16 %v4662, %v4661
      %v4675 = vpack.c.b16 %v4664, %v4663
      %v4676 = vpack.c.b16 %v4666, %v4665
      %v4677 = vpack.c.b16 %v4668, %v4667
      %v4678 = vpack.c.b16 %v4670, %v4669
      %v4703 = vunpack.c.l.b16 %v4639
      %v4704 = vunpack.c.l.b16 %v4640
      %v4705 = vunpack.c.l.b16 %v4641
      %v4706 = vunpack.c.l.b16 %v4642
      %v4707 = vunpack.c.l.b16 %v4643
      %v4708 = vunpack.c.l.b16 %v4644
      %v4709 = vunpack.c.l.b16 %v4645
      %v4710 = vunpack.c.l.b16 %v4646
      %v4711 = vunpack.c.l.b16 %v4647
      %v4712 = vunpack.c.l.b16 %v4648
      %v4713 = vunpack.c.l.b16 %v4649
      %v4714 = vunpack.c.l.b16 %v4650
      %v4715 = vunpack.c.l.b16 %v4651
      %v4716 = vunpack.c.l.b16 %v4652
      %v4717 = vunpack.c.l.b16 %v4653
      %v4718 = vunpack.c.l.b16 %v4654
      %v4719 = vpack.c.b16 %v4704, %v4703
      %v4720 = vpack.c.b16 %v4706, %v4705
      %v4721 = vpack.c.b16 %v4708, %v4707
      %v4722 = vpack.c.b16 %v4710, %v4709
      %v4723 = vpack.c.b16 %v4712, %v4711
      %v4724 = vpack.c.b16 %v4714, %v4713
      %v4725 = vpack.c.b16 %v4716, %v4715
      %v4726 = vpack.c.b16 %v4718, %v4717
      %4735 = vmatprep.subr.bf16.mxu0 0
      %4736 = vmatpush1.bf16.msra.mxu0 %v4719
      %4737 = vmatprep.subr.bf16.mxu0 0
      %4738 = vmatpush1.bf16.msra.mxu0 %v4720
      %4739 = vmatprep.subr.bf16.mxu0 0
      %4740 = vmatpush1.bf16.msra.mxu0 %v4721
      %4741 = vmatprep.subr.bf16.mxu0 0
      %4742 = vmatpush1.bf16.msra.mxu0 %v4722
      %4743 = vmatprep.subr.bf16.mxu0 0
      %4744 = vmatpush1.bf16.msra.mxu0 %v4723
      %4745 = vmatprep.subr.bf16.mxu0 0
      %4746 = vmatpush1.bf16.msra.mxu0 %v4724
      %4747 = vmatprep.subr.bf16.mxu0 0
      %4748 = vmatpush1.bf16.msra.mxu0 %v4725
      %4749 = vmatprep.subr.bf16.mxu0 0
      %4750 = vmatpush1.bf16.msra.mxu0 %v4726
      %4751 = vmatprep.subr.bf16.mxu0 0
      %4752 = vmatpush1.bf16.msra.mxu0 0
      %4753 = vmatprep.subr.bf16.mxu0 0
      %4754 = vmatpush1.bf16.msra.mxu0 0
      %4755 = vmatprep.subr.bf16.mxu0 0
      %4756 = vmatpush1.bf16.msra.mxu0 0
      %4757 = vmatprep.subr.bf16.mxu0 0
      %4758 = vmatpush1.bf16.msra.mxu0 0
      %4759 = vmatprep.subr.bf16.mxu0 0
      %4760 = vmatpush1.bf16.msra.mxu0 0
      %4761 = vmatprep.subr.bf16.mxu0 0
      %4762 = vmatpush1.bf16.msra.mxu0 0
      %4763 = vmatprep.subr.bf16.mxu0 0
      %4764 = vmatpush1.bf16.msra.mxu0 0
      %4765 = vmatprep.subr.bf16.mxu0 0
      %4766 = vmatpush1.bf16.msra.mxu0 0
      %4767 = vmatprep.mubr.bf16.mxu0 0
      %4768 = vmatmul.mubr.bf16.gmra.mrb[0].mxu0 %v4671
      %v4769 = vpop.f32.mrb[0].mxu0
      %v4770 = vadd.f32 0.0, %v4769
      %v4771 = vpop.f32.mrb[0].mxu0
      %v4772 = vpop.f32.mrb[0].mxu0
      %v4773 = vadd.f32 0.0, %v4772
      %v4774 = vpop.f32.mrb[0].mxu0
      %4775 = vmatprep.mubr.bf16.mxu0 0
      %4776 = vmatmul.mubr.bf16.gmra.mrb[0].mxu0 %v4672
      %v4777 = vpop.f32.mrb[0].mxu0
      %v4778 = vadd.f32 0.0, %v4777
      %v4779 = vpop.f32.mrb[0].mxu0
      %v4780 = vpop.f32.mrb[0].mxu0
      %v4781 = vadd.f32 0.0, %v4780
      %v4782 = vpop.f32.mrb[0].mxu0
      %4783 = vmatprep.mubr.bf16.mxu0 0
      %4784 = vmatmul.mubr.bf16.gmra.mrb[0].mxu0 %v4673
      %v4785 = vpop.f32.mrb[0].mxu0
      %v4786 = vadd.f32 0.0, %v4785
      %v4787 = vpop.f32.mrb[0].mxu0
      %v4788 = vpop.f32.mrb[0].mxu0
      %v4789 = vadd.f32 0.0, %v4788
      %v4790 = vpop.f32.mrb[0].mxu0
      %4791 = vmatprep.mubr.bf16.mxu0 0
      %4792 = vmatmul.mubr.bf16.gmra.mrb[0].mxu0 %v4674
      %v4793 = vpop.f32.mrb[0].mxu0
      %v4794 = vadd.f32 0.0, %v4793
      %v4795 = vpop.f32.mrb[0].mxu0
      %v4796 = vpop.f32.mrb[0].mxu0
      %v4797 = vadd.f32 0.0, %v4796
      %v4798 = vpop.f32.mrb[0].mxu0
      %4799 = vmatprep.mubr.bf16.mxu0 0
      %4800 = vmatmul.mubr.bf16.gmra.mrb[0].mxu0 %v4675
      %v4801 = vpop.f32.mrb[0].mxu0
      %v4802 = vadd.f32 0.0, %v4801
      %v4803 = vpop.f32.mrb[0].mxu0
      %v4804 = vpop.f32.mrb[0].mxu0
      %v4805 = vadd.f32 0.0, %v4804
      %v4806 = vpop.f32.mrb[0].mxu0
      %4807 = vmatprep.mubr.bf16.mxu0 0
      %4808 = vmatmul.mubr.bf16.gmra.mrb[0].mxu0 %v4676
      %v4809 = vpop.f32.mrb[0].mxu0
      %v4810 = vadd.f32 0.0, %v4809
      %v4811 = vpop.f32.mrb[0].mxu0
      %v4812 = vpop.f32.mrb[0].mxu0
      %v4813 = vadd.f32 0.0, %v4812
      %v4814 = vpop.f32.mrb[0].mxu0
      %4815 = vmatprep.mubr.bf16.mxu0 0
      %4816 = vmatmul.mubr.bf16.gmra.mrb[0].mxu0 %v4677
      %v4817 = vpop.f32.mrb[0].mxu0
      %v4818 = vadd.f32 0.0, %v4817
      %v4819 = vpop.f32.mrb[0].mxu0
      %v4820 = vpop.f32.mrb[0].mxu0
      %v4821 = vadd.f32 0.0, %v4820
      %v4822 = vpop.f32.mrb[0].mxu0
      %4823 = vmatprep.mubr.bf16.mxu0 0
      %4824 = vmatmul.mubr.bf16.gmra.mrb[0].mxu0 %v4678
      %v4825 = vpop.f32.mrb[0].mxu0
      %v4826 = vadd.f32 0.0, %v4825
      %v4827 = vpop.f32.mrb[0].mxu0
      %v4828 = vpop.f32.mrb[0].mxu0
      %v4829 = vadd.f32 0.0, %v4828
      %v4830 = vpop.f32.mrb[0].mxu0
      %4831 = vdwg.mxu0
      %v4832 = vadd.f32 %v4366, %v4770
      %v4833 = vadd.f32 %v4367, %v4773
      %v4834 = vadd.f32 %v4368, %v4778
      %v4835 = vadd.f32 %v4369, %v4781
      %v4836 = vadd.f32 %v4370, %v4786
      %v4837 = vadd.f32 %v4371, %v4789
      %v4838 = vadd.f32 %v4372, %v4794
      %v4839 = vadd.f32 %v4373, %v4797
      %v4840 = vadd.f32 %v4374, %v4802
      %v4841 = vadd.f32 %v4375, %v4805
      %v4842 = vadd.f32 %v4376, %v4810
      %v4843 = vadd.f32 %v4377, %v4813
      %v4844 = vadd.f32 %v4378, %v4818
      %v4845 = vadd.f32 %v4379, %v4821
      %v4846 = vadd.f32 %v4380, %v4826
      %v4847 = vadd.f32 %v4381, %v4829
      %v4848 = vld [vmem:[%s1813] sm:$0xe]
      %v4849 = vld [vmem:[%s1813 + $0x8] sm:$0xe]
      %v4850 = vld [vmem:[%s1813 + $0x10] sm:$0xe]
      %v4851 = vld [vmem:[%s1813 + $0x18] sm:$0xe]
      %v4852 = vld [vmem:[%s1813 + $0x20] sm:$0xe]
      %v4853 = vld [vmem:[%s1813 + $0x28] sm:$0xe]
      %v4854 = vld [vmem:[%s1813 + $0x30] sm:$0xe]
      %v4855 = vld [vmem:[%s1813 + $0x38] sm:$0xe]
      %v4856 = vld [vmem:[%s1813 + $0x40] sm:$0xe]
      %v4857 = vld [vmem:[%s1813 + $0x48] sm:$0xe]
      %v4858 = vld [vmem:[%s1813 + $0x50] sm:$0xe]
      %v4859 = vld [vmem:[%s1813 + $0x58] sm:$0xe]
      %v4860 = vld [vmem:[%s1813 + $0x60] sm:$0xe]
      %v4861 = vld [vmem:[%s1813 + $0x68] sm:$0xe]
      %v4862 = vld [vmem:[%s1813 + $0x70] sm:$0xe]
      %v4863 = vld [vmem:[%s1813 + $0x78] sm:$0xe]
      %v4896 = vrot.slane %v4848, 5
      %v4897 = vrot.slane %v4896, 4
      %v4898 = vrot.slane %v4383, 5
      %v4899 = vsel %vm3158, %v4897, %v4898
      %v4900 = vrot.slane %v4849, 5
      %v4901 = vrot.slane %v4900, 4
      %v4902 = vrot.slane %v4385, 5
      %v4903 = vsel %vm3158, %v4901, %v4902
      %v4904 = vrot.slane %v4850, 5
      %v4905 = vrot.slane %v4904, 4
      %v4906 = vrot.slane %v4387, 5
      %v4907 = vsel %vm3158, %v4905, %v4906
      %v4908 = vrot.slane %v4851, 5
      %v4909 = vrot.slane %v4908, 4
      %v4910 = vrot.slane %v4389, 5
      %v4911 = vsel %vm3158, %v4909, %v4910
      %v4912 = vrot.slane %v4852, 5
      %v4913 = vrot.slane %v4912, 4
      %v4914 = vrot.slane %v4391, 5
      %v4915 = vsel %vm3158, %v4913, %v4914
      %v4916 = vrot.slane %v4853, 5
      %v4917 = vrot.slane %v4916, 4
      %v4918 = vrot.slane %v4393, 5
      %v4919 = vsel %vm3158, %v4917, %v4918
      %v4920 = vrot.slane %v4854, 5
      %v4921 = vrot.slane %v4920, 4
      %v4922 = vrot.slane %v4395, 5
      %v4923 = vsel %vm3158, %v4921, %v4922
      %v4924 = vrot.slane %v4855, 5
      %v4925 = vrot.slane %v4924, 4
      %v4926 = vrot.slane %v4397, 5
      %v4927 = vsel %vm3158, %v4925, %v4926
      %v4928 = vrot.slane %v4856, 5
      %v4929 = vrot.slane %v4928, 4
      %v4930 = vrot.slane %v4399, 5
      %v4931 = vsel %vm3158, %v4929, %v4930
      %v4932 = vrot.slane %v4857, 5
      %v4933 = vrot.slane %v4932, 4
      %v4934 = vrot.slane %v4401, 5
      %v4935 = vsel %vm3158, %v4933, %v4934
      %v4936 = vrot.slane %v4858, 5
      %v4937 = vrot.slane %v4936, 4
      %v4938 = vrot.slane %v4403, 5
      %v4939 = vsel %vm3158, %v4937, %v4938
      %v4940 = vrot.slane %v4859, 5
      %v4941 = vrot.slane %v4940, 4
      %v4942 = vrot.slane %v4405, 5
      %v4943 = vsel %vm3158, %v4941, %v4942
      %v4944 = vrot.slane %v4860, 5
      %v4945 = vrot.slane %v4944, 4
      %v4946 = vrot.slane %v4407, 5
      %v4947 = vsel %vm3158, %v4945, %v4946
      %v4948 = vrot.slane %v4861, 5
      %v4949 = vrot.slane %v4948, 4
      %v4950 = vrot.slane %v4409, 5
      %v4951 = vsel %vm3158, %v4949, %v4950
      %v4952 = vrot.slane %v4862, 5
      %v4953 = vrot.slane %v4952, 4
      %v4954 = vrot.slane %v4411, 5
      %v4955 = vsel %vm3158, %v4953, %v4954
      %v4956 = vrot.slane %v4863, 5
      %v4957 = vrot.slane %v4956, 4
      %v4958 = vrot.slane %v4413, 5
      %v4959 = vsel %vm3158, %v4957, %v4958
      %s4960 = scalar_lea.vmem %s1, 704
      %v4961 = vld [vmem:[%s4960] sm:$0xf]
      %v4962 = vld [vmem:[%s4960 + $0x4] sm:$0xf]
      %v4963 = vld [vmem:[%s4960 + $0x8] sm:$0xf]
      %v4964 = vld [vmem:[%s4960 + $0xc] sm:$0xf]
      %v4965 = vld [vmem:[%s4960 + $0x10] sm:$0xf]
      %v4966 = vld [vmem:[%s4960 + $0x14] sm:$0xf]
      %v4967 = vld [vmem:[%s4960 + $0x18] sm:$0xf]
      %v4968 = vld [vmem:[%s4960 + $0x1c] sm:$0xf]
      %v4969 = vld [vmem:[%s4960 + $0x20] sm:$0xf]
      %v4970 = vld [vmem:[%s4960 + $0x24] sm:$0xf]
      %v4971 = vld [vmem:[%s4960 + $0x28] sm:$0xf]
      %v4972 = vld [vmem:[%s4960 + $0x2c] sm:$0xf]
      %v4973 = vld [vmem:[%s4960 + $0x30] sm:$0xf]
      %v4974 = vld [vmem:[%s4960 + $0x34] sm:$0xf]
      %v4975 = vld [vmem:[%s4960 + $0x38] sm:$0xf]
      %v4976 = vld [vmem:[%s4960 + $0x3c] sm:$0xf]
      %v4977 = vunpack.c.l.b16 %v4899
      %v4978 = vunpack.c.l.b16 %v4903
      %v4979 = vunpack.c.l.b16 %v4907
      %v4980 = vunpack.c.l.b16 %v4911
      %v4981 = vunpack.c.l.b16 %v4915
      %v4982 = vunpack.c.l.b16 %v4919
      %v4983 = vunpack.c.l.b16 %v4923
      %v4984 = vunpack.c.l.b16 %v4927
      %v4985 = vunpack.c.l.b16 %v4931
      %v4986 = vunpack.c.l.b16 %v4935
      %v4987 = vunpack.c.l.b16 %v4939
      %v4988 = vunpack.c.l.b16 %v4943
      %v4989 = vunpack.c.l.b16 %v4947
      %v4990 = vunpack.c.l.b16 %v4951
      %v4991 = vunpack.c.l.b16 %v4955
      %v4992 = vunpack.c.l.b16 %v4959
      %v4993 = vpack.c.b16 %v4978, %v4977
      %v4994 = vpack.c.b16 %v4980, %v4979
      %v4995 = vpack.c.b16 %v4982, %v4981
      %v4996 = vpack.c.b16 %v4984, %v4983
      %v4997 = vpack.c.b16 %v4986, %v4985
      %v4998 = vpack.c.b16 %v4988, %v4987
      %v4999 = vpack.c.b16 %v4990, %v4989
      %v5000 = vpack.c.b16 %v4992, %v4991
      %v5025 = vunpack.c.l.b16 %v4961
      %v5026 = vunpack.c.l.b16 %v4962
      %v5027 = vunpack.c.l.b16 %v4963
      %v5028 = vunpack.c.l.b16 %v4964
      %v5029 = vunpack.c.l.b16 %v4965
      %v5030 = vunpack.c.l.b16 %v4966
      %v5031 = vunpack.c.l.b16 %v4967
      %v5032 = vunpack.c.l.b16 %v4968
      %v5033 = vunpack.c.l.b16 %v4969
      %v5034 = vunpack.c.l.b16 %v4970
      %v5035 = vunpack.c.l.b16 %v4971
      %v5036 = vunpack.c.l.b16 %v4972
      %v5037 = vunpack.c.l.b16 %v4973
      %v5038 = vunpack.c.l.b16 %v4974
      %v5039 = vunpack.c.l.b16 %v4975
      %v5040 = vunpack.c.l.b16 %v4976
      %v5041 = vpack.c.b16 %v5026, %v5025
      %v5042 = vpack.c.b16 %v5028, %v5027
      %v5043 = vpack.c.b16 %v5030, %v5029
      %v5044 = vpack.c.b16 %v5032, %v5031
      %v5045 = vpack.c.b16 %v5034, %v5033
      %v5046 = vpack.c.b16 %v5036, %v5035
      %v5047 = vpack.c.b16 %v5038, %v5037
      %v5048 = vpack.c.b16 %v5040, %v5039
      %5057 = vmatprep.subr.bf16.mxu0 0
      %5058 = vmatpush1.bf16.msra.mxu0 %v5041
      %5059 = vmatprep.subr.bf16.mxu0 0
      %5060 = vmatpush1.bf16.msra.mxu0 %v5042
      %5061 = vmatprep.subr.bf16.mxu0 0
      %5062 = vmatpush1.bf16.msra.mxu0 %v5043
      %5063 = vmatprep.subr.bf16.mxu0 0
      %5064 = vmatpush1.bf16.msra.mxu0 %v5044
      %5065 = vmatprep.subr.bf16.mxu0 0
      %5066 = vmatpush1.bf16.msra.mxu0 %v5045
      %5067 = vmatprep.subr.bf16.mxu0 0
      %5068 = vmatpush1.bf16.msra.mxu0 %v5046
      %5069 = vmatprep.subr.bf16.mxu0 0
      %5070 = vmatpush1.bf16.msra.mxu0 %v5047
      %5071 = vmatprep.subr.bf16.mxu0 0
      %5072 = vmatpush1.bf16.msra.mxu0 %v5048
      %5073 = vmatprep.subr.bf16.mxu0 0
      %5074 = vmatpush1.bf16.msra.mxu0 0
      %5075 = vmatprep.subr.bf16.mxu0 0
      %5076 = vmatpush1.bf16.msra.mxu0 0
      %5077 = vmatprep.subr.bf16.mxu0 0
      %5078 = vmatpush1.bf16.msra.mxu0 0
      %5079 = vmatprep.subr.bf16.mxu0 0
      %5080 = vmatpush1.bf16.msra.mxu0 0
      %5081 = vmatprep.subr.bf16.mxu0 0
      %5082 = vmatpush1.bf16.msra.mxu0 0
      %5083 = vmatprep.subr.bf16.mxu0 0
      %5084 = vmatpush1.bf16.msra.mxu0 0
      %5085 = vmatprep.subr.bf16.mxu0 0
      %5086 = vmatpush1.bf16.msra.mxu0 0
      %5087 = vmatprep.subr.bf16.mxu0 0
      %5088 = vmatpush1.bf16.msra.mxu0 0
      %5089 = vmatprep.mubr.bf16.mxu0 0
      %5090 = vmatmul.mubr.bf16.gmra.mrb[0].mxu0 %v4993
      %v5091 = vpop.f32.mrb[0].mxu0
      %v5092 = vadd.f32 0.0, %v5091
      %v5093 = vpop.f32.mrb[0].mxu0
      %v5094 = vpop.f32.mrb[0].mxu0
      %v5095 = vadd.f32 0.0, %v5094
      %v5096 = vpop.f32.mrb[0].mxu0
      %5097 = vmatprep.mubr.bf16.mxu0 0
      %5098 = vmatmul.mubr.bf16.gmra.mrb[0].mxu0 %v4994
      %v5099 = vpop.f32.mrb[0].mxu0
      %v5100 = vadd.f32 0.0, %v5099
      %v5101 = vpop.f32.mrb[0].mxu0
      %v5102 = vpop.f32.mrb[0].mxu0
      %v5103 = vadd.f32 0.0, %v5102
      %v5104 = vpop.f32.mrb[0].mxu0
      %5105 = vmatprep.mubr.bf16.mxu0 0
      %5106 = vmatmul.mubr.bf16.gmra.mrb[0].mxu0 %v4995
      %v5107 = vpop.f32.mrb[0].mxu0
      %v5108 = vadd.f32 0.0, %v5107
      %v5109 = vpop.f32.mrb[0].mxu0
      %v5110 = vpop.f32.mrb[0].mxu0
      %v5111 = vadd.f32 0.0, %v5110
      %v5112 = vpop.f32.mrb[0].mxu0
      %5113 = vmatprep.mubr.bf16.mxu0 0
      %5114 = vmatmul.mubr.bf16.gmra.mrb[0].mxu0 %v4996
      %v5115 = vpop.f32.mrb[0].mxu0
      %v5116 = vadd.f32 0.0, %v5115
      %v5117 = vpop.f32.mrb[0].mxu0
      %v5118 = vpop.f32.mrb[0].mxu0
      %v5119 = vadd.f32 0.0, %v5118
      %v5120 = vpop.f32.mrb[0].mxu0
      %5121 = vmatprep.mubr.bf16.mxu0 0
      %5122 = vmatmul.mubr.bf16.gmra.mrb[0].mxu0 %v4997
      %v5123 = vpop.f32.mrb[0].mxu0
      %v5124 = vadd.f32 0.0, %v5123
      %v5125 = vpop.f32.mrb[0].mxu0
      %v5126 = vpop.f32.mrb[0].mxu0
      %v5127 = vadd.f32 0.0, %v5126
      %v5128 = vpop.f32.mrb[0].mxu0
      %5129 = vmatprep.mubr.bf16.mxu0 0
      %5130 = vmatmul.mubr.bf16.gmra.mrb[0].mxu0 %v4998
      %v5131 = vpop.f32.mrb[0].mxu0
      %v5132 = vadd.f32 0.0, %v5131
      %v5133 = vpop.f32.mrb[0].mxu0
      %v5134 = vpop.f32.mrb[0].mxu0
      %v5135 = vadd.f32 0.0, %v5134
      %v5136 = vpop.f32.mrb[0].mxu0
      %5137 = vmatprep.mubr.bf16.mxu0 0
      %5138 = vmatmul.mubr.bf16.gmra.mrb[0].mxu0 %v4999
      %v5139 = vpop.f32.mrb[0].mxu0
      %v5140 = vadd.f32 0.0, %v5139
      %v5141 = vpop.f32.mrb[0].mxu0
      %v5142 = vpop.f32.mrb[0].mxu0
      %v5143 = vadd.f32 0.0, %v5142
      %v5144 = vpop.f32.mrb[0].mxu0
      %5145 = vmatprep.mubr.bf16.mxu0 0
      %5146 = vmatmul.mubr.bf16.gmra.mrb[0].mxu0 %v5000
      %v5147 = vpop.f32.mrb[0].mxu0
      %v5148 = vadd.f32 0.0, %v5147
      %v5149 = vpop.f32.mrb[0].mxu0
      %v5150 = vpop.f32.mrb[0].mxu0
      %v5151 = vadd.f32 0.0, %v5150
      %v5152 = vpop.f32.mrb[0].mxu0
      %5153 = vdwg.mxu0
      %v5154 = vadd.f32 %v4832, %v5092
      %v5155 = vadd.f32 %v4833, %v5095
      %v5156 = vadd.f32 %v4834, %v5100
      %v5157 = vadd.f32 %v4835, %v5103
      %v5158 = vadd.f32 %v4836, %v5108
      %v5159 = vadd.f32 %v4837, %v5111
      %v5160 = vadd.f32 %v4838, %v5116
      %v5161 = vadd.f32 %v4839, %v5119
      %v5162 = vadd.f32 %v4840, %v5124
      %v5163 = vadd.f32 %v4841, %v5127
      %v5164 = vadd.f32 %v4842, %v5132
      %v5165 = vadd.f32 %v4843, %v5135
      %v5166 = vadd.f32 %v4844, %v5140
      %v5167 = vadd.f32 %v4845, %v5143
      %v5168 = vadd.f32 %v4846, %v5148
      %v5169 = vadd.f32 %v4847, %v5151
      %v5170 = vmul.f32 %v5154, %v2525
      %v5171 = vmul.f32 %v5155, %v2525
      %v5172 = vmul.f32 %v5156, %v2525
      %v5173 = vmul.f32 %v5157, %v2525
      %v5174 = vmul.f32 %v5158, %v2525
      %v5175 = vmul.f32 %v5159, %v2525
      %v5176 = vmul.f32 %v5160, %v2525
      %v5177 = vmul.f32 %v5161, %v2525
      %v5178 = vmul.f32 %v5162, %v2525
      %v5179 = vmul.f32 %v5163, %v2525
      %v5180 = vmul.f32 %v5164, %v2525
      %v5181 = vmul.f32 %v5165, %v2525
      %v5182 = vmul.f32 %v5166, %v2525
      %v5183 = vmul.f32 %v5167, %v2525
      %v5184 = vmul.f32 %v5168, %v2525
      %v5185 = vmul.f32 %v5169, %v2525
      %v5186 = vadd.f32 %v5170, %v2545
      %v5187 = vadd.f32 %v5171, %v2545
      %v5188 = vadd.f32 %v5172, %v2545
      %v5189 = vadd.f32 %v5173, %v2545
      %v5190 = vadd.f32 %v5174, %v2545
      %v5191 = vadd.f32 %v5175, %v2545
      %v5192 = vadd.f32 %v5176, %v2545
      %v5193 = vadd.f32 %v5177, %v2545
      %v5194 = vadd.f32 %v5178, %v2545
      %v5195 = vadd.f32 %v5179, %v2545
      %v5196 = vadd.f32 %v5180, %v2545
      %v5197 = vadd.f32 %v5181, %v2545
      %v5198 = vadd.f32 %v5182, %v2545
      %v5199 = vadd.f32 %v5183, %v2545
      %v5200 = vadd.f32 %v5184, %v2545
      %v5201 = vadd.f32 %v5185, %v2545
      %vm5202 = vcmp.gt.f32.partialorder %v5186, 0.0
      %vm5203 = vcmp.gt.f32.partialorder %v5187, 0.0
      %vm5204 = vcmp.gt.f32.partialorder %v5188, 0.0
      %vm5205 = vcmp.gt.f32.partialorder %v5189, 0.0
      %vm5206 = vcmp.gt.f32.partialorder %v5190, 0.0
      %vm5207 = vcmp.gt.f32.partialorder %v5191, 0.0
      %vm5208 = vcmp.gt.f32.partialorder %v5192, 0.0
      %vm5209 = vcmp.gt.f32.partialorder %v5193, 0.0
      %vm5210 = vcmp.gt.f32.partialorder %v5194, 0.0
      %vm5211 = vcmp.gt.f32.partialorder %v5195, 0.0
      %vm5212 = vcmp.gt.f32.partialorder %v5196, 0.0
      %vm5213 = vcmp.gt.f32.partialorder %v5197, 0.0
      %vm5214 = vcmp.gt.f32.partialorder %v5198, 0.0
      %vm5215 = vcmp.gt.f32.partialorder %v5199, 0.0
      %vm5216 = vcmp.gt.f32.partialorder %v5200, 0.0
      %vm5217 = vcmp.gt.f32.partialorder %v5201, 0.0
      %v5218 = vmul.f32 %v5186, 1.442695
      %v5219 = vpow.pop %v5218
      %v5220 = vmul.f32 %v5187, 1.442695
      %v5221 = vpow.pop %v5220
      %v5222 = vmul.f32 %v5188, 1.442695
      %v5223 = vpow.pop %v5222
      %v5224 = vmul.f32 %v5189, 1.442695
      %v5225 = vpow.pop %v5224
      %v5226 = vmul.f32 %v5190, 1.442695
      %v5227 = vpow.pop %v5226
      %v5228 = vmul.f32 %v5191, 1.442695
      %v5229 = vpow.pop %v5228
      %v5230 = vmul.f32 %v5192, 1.442695
      %v5231 = vpow.pop %v5230
      %v5232 = vmul.f32 %v5193, 1.442695
      %v5233 = vpow.pop %v5232
      %v5234 = vmul.f32 %v5194, 1.442695
      %v5235 = vpow.pop %v5234
      %v5236 = vmul.f32 %v5195, 1.442695
      %v5237 = vpow.pop %v5236
      %v5238 = vmul.f32 %v5196, 1.442695
      %v5239 = vpow.pop %v5238
      %v5240 = vmul.f32 %v5197, 1.442695
      %v5241 = vpow.pop %v5240
      %v5242 = vmul.f32 %v5198, 1.442695
      %v5243 = vpow.pop %v5242
      %v5244 = vmul.f32 %v5199, 1.442695
      %v5245 = vpow.pop %v5244
      %v5246 = vmul.f32 %v5200, 1.442695
      %v5247 = vpow.pop %v5246
      %v5248 = vmul.f32 %v5201, 1.442695
      %v5249 = vpow.pop %v5248
      %v5250 = vsub.f32 %v5219, 1.0
      %v5251 = vsub.f32 %v5221, 1.0
      %v5252 = vsub.f32 %v5223, 1.0
      %v5253 = vsub.f32 %v5225, 1.0
      %v5254 = vsub.f32 %v5227, 1.0
      %v5255 = vsub.f32 %v5229, 1.0
      %v5256 = vsub.f32 %v5231, 1.0
      %v5257 = vsub.f32 %v5233, 1.0
      %v5258 = vsub.f32 %v5235, 1.0
      %v5259 = vsub.f32 %v5237, 1.0
      %v5260 = vsub.f32 %v5239, 1.0
      %v5261 = vsub.f32 %v5241, 1.0
      %v5262 = vsub.f32 %v5243, 1.0
      %v5263 = vsub.f32 %v5245, 1.0
      %v5264 = vsub.f32 %v5247, 1.0
      %v5265 = vsub.f32 %v5249, 1.0
      %v5266 = vsel %vm5202, %v5186, %v5250
      %v5267 = vsel %vm5203, %v5187, %v5251
      %v5268 = vsel %vm5204, %v5188, %v5252
      %v5269 = vsel %vm5205, %v5189, %v5253
      %v5270 = vsel %vm5206, %v5190, %v5254
      %v5271 = vsel %vm5207, %v5191, %v5255
      %v5272 = vsel %vm5208, %v5192, %v5256
      %v5273 = vsel %vm5209, %v5193, %v5257
      %v5274 = vsel %vm5210, %v5194, %v5258
      %v5275 = vsel %vm5211, %v5195, %v5259
      %v5276 = vsel %vm5212, %v5196, %v5260
      %v5277 = vsel %vm5213, %v5197, %v5261
      %v5278 = vsel %vm5214, %v5198, %v5262
      %v5279 = vsel %vm5215, %v5199, %v5263
      %v5280 = vsel %vm5216, %v5200, %v5264
      %v5281 = vsel %vm5217, %v5201, %v5265
      %v5282 = vpack.c.bf16 %v5267, %v5266
      %v5283 = vpack.c.bf16 %v5269, %v5268
      %v5284 = vpack.c.bf16 %v5271, %v5270
      %v5285 = vpack.c.bf16 %v5273, %v5272
      %v5286 = vpack.c.bf16 %v5275, %v5274
      %v5287 = vpack.c.bf16 %v5277, %v5276
      %v5288 = vpack.c.bf16 %v5279, %v5278
      %v5289 = vpack.c.bf16 %v5281, %v5280
      %v5298 = vunpack.c.l.b16 %v5282
      %v5299 = vunpack.c.h.b16 %v5282
      %v5300 = vunpack.c.l.b16 %v5283
      %v5301 = vunpack.c.h.b16 %v5283
      %v5302 = vunpack.c.l.b16 %v5284
      %v5303 = vunpack.c.h.b16 %v5284
      %v5304 = vunpack.c.l.b16 %v5285
      %v5305 = vunpack.c.h.b16 %v5285
      %v5306 = vunpack.c.l.b16 %v5286
      %v5307 = vunpack.c.h.b16 %v5286
      %v5308 = vunpack.c.l.b16 %v5287
      %v5309 = vunpack.c.h.b16 %v5287
      %v5310 = vunpack.c.l.b16 %v5288
      %v5311 = vunpack.c.h.b16 %v5288
      %v5312 = vunpack.c.l.b16 %v5289
      %v5313 = vunpack.c.h.b16 %v5289
      %v5314 = vpack.c.b16 %v5298, %v5298
      %v5315 = vpack.c.b16 %v5299, %v5299
      %v5316 = vpack.c.b16 %v5300, %v5300
      %v5317 = vpack.c.b16 %v5301, %v5301
      %v5318 = vpack.c.b16 %v5302, %v5302
      %v5319 = vpack.c.b16 %v5303, %v5303
      %v5320 = vpack.c.b16 %v5304, %v5304
      %v5321 = vpack.c.b16 %v5305, %v5305
      %v5322 = vpack.c.b16 %v5306, %v5306
      %v5323 = vpack.c.b16 %v5307, %v5307
      %v5324 = vpack.c.b16 %v5308, %v5308
      %v5325 = vpack.c.b16 %v5309, %v5309
      %v5326 = vpack.c.b16 %v5310, %v5310
      %v5327 = vpack.c.b16 %v5311, %v5311
      %v5328 = vpack.c.b16 %v5312, %v5312
      %v5329 = vpack.c.b16 %v5313, %v5313
      %5330 = vrot.lane.b32.xlu0 %v5314, 64
      %v5331 = vpop.permute.xlu0 %5330
      %5332 = vrot.lane.b32.xlu0 %v5315, 64
      %v5333 = vpop.permute.xlu0 %5332
      %5334 = vrot.lane.b32.xlu0 %v5316, 64
      %v5335 = vpop.permute.xlu0 %5334
      %5336 = vrot.lane.b32.xlu0 %v5317, 64
      %v5337 = vpop.permute.xlu0 %5336
      %5338 = vrot.lane.b32.xlu0 %v5318, 64
      %v5339 = vpop.permute.xlu0 %5338
      %5340 = vrot.lane.b32.xlu0 %v5319, 64
      %v5341 = vpop.permute.xlu0 %5340
      %5342 = vrot.lane.b32.xlu0 %v5320, 64
      %v5343 = vpop.permute.xlu0 %5342
      %5344 = vrot.lane.b32.xlu0 %v5321, 64
      %v5345 = vpop.permute.xlu0 %5344
      %5346 = vrot.lane.b32.xlu0 %v5322, 64
      %v5347 = vpop.permute.xlu0 %5346
      %5348 = vrot.lane.b32.xlu0 %v5323, 64
      %v5349 = vpop.permute.xlu0 %5348
      %5350 = vrot.lane.b32.xlu0 %v5324, 64
      %v5351 = vpop.permute.xlu0 %5350
      %5352 = vrot.lane.b32.xlu0 %v5325, 64
      %v5353 = vpop.permute.xlu0 %5352
      %5354 = vrot.lane.b32.xlu0 %v5326, 64
      %v5355 = vpop.permute.xlu0 %5354
      %5356 = vrot.lane.b32.xlu0 %v5327, 64
      %v5357 = vpop.permute.xlu0 %5356
      %5358 = vrot.lane.b32.xlu0 %v5328, 64
      %v5359 = vpop.permute.xlu0 %5358
      %5360 = vrot.lane.b32.xlu0 %v5329, 64
      %v5361 = vpop.permute.xlu0 %5360
      %vm5378 = vcmask 1043968
      %5379 = vst.msk [vmem:[%s205] sm:$0xf] %vm5378, %v5331
      %5380 = vst.msk [vmem:[%s205 + $0x4] sm:$0xf] %vm5378, %v5333
      %5381 = vst.msk [vmem:[%s205 + $0x8] sm:$0xf] %vm5378, %v5335
      %5382 = vst.msk [vmem:[%s205 + $0xc] sm:$0xf] %vm5378, %v5337
      %5383 = vst.msk [vmem:[%s205 + $0x10] sm:$0xf] %vm5378, %v5339
      %5384 = vst.msk [vmem:[%s205 + $0x14] sm:$0xf] %vm5378, %v5341
      %5385 = vst.msk [vmem:[%s205 + $0x18] sm:$0xf] %vm5378, %v5343
      %5386 = vst.msk [vmem:[%s205 + $0x1c] sm:$0xf] %vm5378, %v5345
      %5387 = vst.msk [vmem:[%s205 + $0x20] sm:$0xf] %vm5378, %v5347
      %5388 = vst.msk [vmem:[%s205 + $0x24] sm:$0xf] %vm5378, %v5349
      %5389 = vst.msk [vmem:[%s205 + $0x28] sm:$0xf] %vm5378, %v5351
      %5390 = vst.msk [vmem:[%s205 + $0x2c] sm:$0xf] %vm5378, %v5353
      %5391 = vst.msk [vmem:[%s205 + $0x30] sm:$0xf] %vm5378, %v5355
      %5392 = vst.msk [vmem:[%s205 + $0x34] sm:$0xf] %vm5378, %v5357
      %5393 = vst.msk [vmem:[%s205 + $0x38] sm:$0xf] %vm5378, %v5359
      %5394 = vst.msk [vmem:[%s205 + $0x3c] sm:$0xf] %vm5378, %v5361
      %v5395 = vpack.c.bf16 %v5187, %v5186
      %v5396 = vpack.c.bf16 %v5189, %v5188
      %v5397 = vpack.c.bf16 %v5191, %v5190
      %v5398 = vpack.c.bf16 %v5193, %v5192
      %v5399 = vpack.c.bf16 %v5195, %v5194
      %v5400 = vpack.c.bf16 %v5197, %v5196
      %v5401 = vpack.c.bf16 %v5199, %v5198
      %v5402 = vpack.c.bf16 %v5201, %v5200
      %v5411 = vunpack.c.l.b16 %v5395
      %v5412 = vunpack.c.h.b16 %v5395
      %v5413 = vunpack.c.l.b16 %v5396
      %v5414 = vunpack.c.h.b16 %v5396
      %v5415 = vunpack.c.l.b16 %v5397
      %v5416 = vunpack.c.h.b16 %v5397
      %v5417 = vunpack.c.l.b16 %v5398
      %v5418 = vunpack.c.h.b16 %v5398
      %v5419 = vunpack.c.l.b16 %v5399
      %v5420 = vunpack.c.h.b16 %v5399
      %v5421 = vunpack.c.l.b16 %v5400
      %v5422 = vunpack.c.h.b16 %v5400
      %v5423 = vunpack.c.l.b16 %v5401
      %v5424 = vunpack.c.h.b16 %v5401
      %v5425 = vunpack.c.l.b16 %v5402
      %v5426 = vunpack.c.h.b16 %v5402
      %v5427 = vpack.c.b16 %v5411, %v5411
      %v5428 = vpack.c.b16 %v5412, %v5412
      %v5429 = vpack.c.b16 %v5413, %v5413
      %v5430 = vpack.c.b16 %v5414, %v5414
      %v5431 = vpack.c.b16 %v5415, %v5415
      %v5432 = vpack.c.b16 %v5416, %v5416
      %v5433 = vpack.c.b16 %v5417, %v5417
      %v5434 = vpack.c.b16 %v5418, %v5418
      %v5435 = vpack.c.b16 %v5419, %v5419
      %v5436 = vpack.c.b16 %v5420, %v5420
      %v5437 = vpack.c.b16 %v5421, %v5421
      %v5438 = vpack.c.b16 %v5422, %v5422
      %v5439 = vpack.c.b16 %v5423, %v5423
      %v5440 = vpack.c.b16 %v5424, %v5424
      %v5441 = vpack.c.b16 %v5425, %v5425
      %v5442 = vpack.c.b16 %v5426, %v5426
      %5459 = vst.msk [vmem:[%s211] sm:$0xf] %vm5378, %v5427
      %5460 = vst.msk [vmem:[%s211 + $0x4] sm:$0xf] %vm5378, %v5428
      %5461 = vst.msk [vmem:[%s211 + $0x8] sm:$0xf] %vm5378, %v5429
      %5462 = vst.msk [vmem:[%s211 + $0xc] sm:$0xf] %vm5378, %v5430
      %5463 = vst.msk [vmem:[%s211 + $0x10] sm:$0xf] %vm5378, %v5431
      %5464 = vst.msk [vmem:[%s211 + $0x14] sm:$0xf] %vm5378, %v5432
      %5465 = vst.msk [vmem:[%s211 + $0x18] sm:$0xf] %vm5378, %v5433
      %5466 = vst.msk [vmem:[%s211 + $0x1c] sm:$0xf] %vm5378, %v5434
      %5467 = vst.msk [vmem:[%s211 + $0x20] sm:$0xf] %vm5378, %v5435
      %5468 = vst.msk [vmem:[%s211 + $0x24] sm:$0xf] %vm5378, %v5436
      %5469 = vst.msk [vmem:[%s211 + $0x28] sm:$0xf] %vm5378, %v5437
      %5470 = vst.msk [vmem:[%s211 + $0x2c] sm:$0xf] %vm5378, %v5438
      %5471 = vst.msk [vmem:[%s211 + $0x30] sm:$0xf] %vm5378, %v5439
      %5472 = vst.msk [vmem:[%s211 + $0x34] sm:$0xf] %vm5378, %v5440
      %5473 = vst.msk [vmem:[%s211 + $0x38] sm:$0xf] %vm5378, %v5441
      %5474 = vst.msk [vmem:[%s211 + $0x3c] sm:$0xf] %vm5378, %v5442
      %s5475 = smul.u32 16, %s16
      %p5476 = scmp.lt.s32.totalorder %s5475, 31
      %s5477 = scalar_select %p5476, %s5475, 31
      %s5478 = smul.addr %s5477, 4
      %s5479 = scalar_lea.vmem %s3, %s5478
      %s5480 = smul.u32 16, %s16
      %p5481 = scmp.lt.s32.totalorder %s5480, 31
      %s5482 = scalar_select %p5481, %s5480, 31
      %s5483 = smul.addr %s5482, 4
      %s5484 = scalar_lea.vmem %s4, %s5483
      // Predicated region
      $region33: #{res_up_forward.2} parent=31 // pred_check
        %p5485 = pneg %p102
      $region34: #{res_up_forward.2} parent=31 // pred_check_branch
        %5487 = sbr.rel (%p5485) target = $region36
      $region35: #{res_up_forward.2} parent=31 // pred_region
        %s5488 = smul.u32 16, %s16
      $region36: #{res_up_forward.2} parent=31 // pred_fallthru
        _
      // Predicated region
      $region37: #{res_up_forward.2} parent=31 // pred_check
        %p5489 = pneg %p128
      $region38: #{res_up_forward.2} parent=31 // pred_check_branch
        %5491 = sbr.rel (%p5489) target = $region40
      $region39: #{res_up_forward.2} parent=31 // pred_region
        %s5492 = smul.u32 16, %s16
      $region40: #{res_up_forward.2} parent=31 // pred_fallthru
        _
    $region32: #{res_up_forward.2} parent=5 // pred_fallthru
      _
    %p5493 = scmp.le.s32.totalorder 2, %s11
    // Predicated region
    $region41: #{res_up_forward.2} parent=5 // pred_check
      %p5494 = pneg %p5493
    $region42: #{res_up_forward.2} parent=5 // pred_check_branch
      %5496 = sbr.rel (%p5494) target = $region44
    $region43: #{res_up_forward.2} parent=5 // pred_region
      %s5497 = ssub.s32 %s11, 2
      // Predicated region
      $region45: #{res_up_forward.2} parent=43 // pred_check
        %p5498 = pneg %p108
      $region46: #{res_up_forward.2} parent=43 // pred_check_branch
        %5500 = sbr.rel (%p5498) target = $region48
      $region47: #{res_up_forward.2} parent=43 // pred_region
        %s5501 = smul.u32 16, %s17
        %p5502 = scmp.lt.s32.totalorder %s5501, 31
        %s5503 = scalar_select %p5502, %s5501, 31
        %s5504 = smul.addr %s5503, 4
        %s5505 = scalar_lea.vmem %s3, %s5504
      $region48: #{res_up_forward.2} parent=43 // pred_fallthru
        _
      // Predicated region
      $region49: #{res_up_forward.2} parent=43 // pred_check
        %p5506 = pneg %p134
      $region50: #{res_up_forward.2} parent=43 // pred_check_branch
        %5508 = sbr.rel (%p5506) target = $region52
      $region51: #{res_up_forward.2} parent=43 // pred_region
        %s5509 = smul.u32 16, %s17
        %p5510 = scmp.lt.s32.totalorder %s5509, 31
        %s5511 = scalar_select %p5510, %s5509, 31
        %s5512 = smul.addr %s5511, 4
        %s5513 = scalar_lea.vmem %s4, %s5512
      $region52: #{res_up_forward.2} parent=43 // pred_fallthru
        _
    $region44: #{res_up_forward.2} parent=5 // pred_fallthru
      _
  $region6: #{res_up_forward.2} parent=0 // loop_footer
    %s15 = sadd.s32 1, %s11
  $region7: #{res_up_forward.2} parent=0 // loop_footer_branch
    %10 = sbr.rel target = $region3
  $region8: #{res_up_forward.2} parent=0 // loop_exit
    _

// kernel: res_up_forward.3
$region0: #{res_up_forward.3}
  #allocation0 [shape = 'u32[]', space=smem, size = 0x4, offset = 0x4, fixed_abs, tag = 'smem constant byte address 0x4 - core index']
  #allocation1 [shape = 'u32[144,128]{1,0:T(1,128)}', space=vmem, size = 0x12000, scoped, tag = 'internal scratch']
  #allocation2 [shape = 'bf16[18,18,64]{2,1,0:T(8,128)(2,1)}', space=vmem, size = 0x1b000, scoped, tag = 'scratch operand']
  %s0 = inlined_call_operand.vmem [shape: bf16[2,16,16,64], index: 0, kind: input, shape index: {}]
  %s1 = inlined_call_operand.vmem [shape: bf16[9,64,64], index: 1, kind: input, shape index: {}]
  %s2 = inlined_call_operand.vmem [shape: bf16[512,64], index: 2, kind: input, shape index: {}]
  %s3 = inlined_call_operand.vmem [shape: f32[2,64], index: 3, kind: input, shape index: {}]
  %s4 = inlined_call_operand.hbm [shape: f32[512,64], index: 4, kind: output, shape index: {}]
  %s5 = sld [smem:[#allocation0]]
  $region49: #{res_up_forward.3} parent=0
    _
  %s7 = ssub.s32 1, %s5
  %s8 = scalar_select 0, %s7, %s5
  $region1: #{res_up_forward.3} parent=0
    #allocation3 [shape = 'u8[262144]{0}', space=vmem, size = 0x40000, scoped, tag = 'output window, operand 0']
    #allocation4 [shape = 's32[2]{0}', space=sflag, size = 0x8, scoped, tag = 'scoped memory for res_up_forward.3']
    %9 = vsyncpa [#allocation4], 0
    %s10 = scalar_lea.sflag [#allocation4], 1
    %11 = vsyncpa %s10, 0
    loop: start=0, step=1, limit=4
    $region2: #{res_up_forward.3} parent=1 // loop_pre_header
      _
    $region3: #{res_up_forward.3} parent=1 // loop_header
      %s13 = sphi 0, %s17
      %p14 = scmp.ge.s32.totalorder %s13, 4
      %s23 = sphi 0, %s25
      %s26 = sphi 0, %s23
      %s27 = sphi 0, %s26
      %s43 = sphi 0, %s27
      %s47 = sphi 0, %s47
      %s49 = sphi 0, %s47
      %s50 = sphi 0, %s49
      %s64 = sphi 0, %s50
      %s70 = sphi 0, %s72
      %s73 = sphi 0, %s70
      %s74 = sphi 0, %s73
      %s90 = sphi 0, %s74
      %s94 = sphi 0, %s94
      %s96 = sphi 0, %s94
      %s97 = sphi 0, %s96
      %s111 = sphi 0, %s97
      %s117 = sphi 0, %s119
      %s120 = sphi 0, %s117
      %s121 = sphi 0, %s120
      %s137 = sphi 0, %s121
    $region4: #{res_up_forward.3} parent=1 // loop_header_branch
      %16 = sbr.rel (%p14) target = $region8
    $region5: #{res_up_forward.3} parent=1 // loop_body
      %s18 = ssub.s32 %s13, 1
      %s19 = ssub.s32 %s13, 2
      %s20 = sadd.s32 %s13, 1
      %s21 = ssub.s32 %s13, %s20
      %p22 = scmp.eq.s32.totalorder %s21, 0
      %s24 = sadd.s32 %s23, 1
      %s25 = scalar_select %p22, %s23, %s24
      %p28 = pneg %p22
      %p29 = scmp.eq.s32.totalorder %s13, 1
      %p30 = por %p28, %p29
      %p31 = scmp.ne.s32.totalorder %s23, %s26
      %p32 = scmp.eq.s32.totalorder %s13, 0
      %p33 = por %p31, %p32
      %p34 = scmp.ne.s32.totalorder %s23, %s26
      %p35 = scmp.eq.s32.totalorder %s18, 1
      %p36 = por %p34, %p35
      %p37 = scmp.ne.s32.totalorder %s26, %s27
      %p38 = scmp.eq.s32.totalorder %s18, 0
      %p39 = por %p37, %p38
      %p40 = scmp.ne.s32.totalorder %s26, %s27
      %p41 = scmp.eq.s32.totalorder %s19, 1
      %p42 = por %p40, %p41
      %p44 = scmp.ne.s32.totalorder %s27, %s43
      %p45 = scmp.eq.s32.totalorder %s19, 0
      %p46 = por %p44, %p45
      %s48 = sadd.s32 %s47, 1
      %p51 = scmp.eq.s32.totalorder %s13, 1
      %p52 = scmp.ne.s32.totalorder %s47, %s49
      %p53 = scmp.eq.s32.totalorder %s13, 0
      %p54 = por %p52, %p53
      %p55 = scmp.ne.s32.totalorder %s47, %s49
      %p56 = scmp.eq.s32.totalorder %s18, 1
      %p57 = por %p55, %p56
      %p58 = scmp.ne.s32.totalorder %s49, %s50
      %p59 = scmp.eq.s32.totalorder %s18, 0
      %p60 = por %p58, %p59
      %p61 = scmp.ne.s32.totalorder %s49, %s50
      %p62 = scmp.eq.s32.totalorder %s19, 1
      %p63 = por %p61, %p62
      %p65 = scmp.ne.s32.totalorder %s50, %s64
      %p66 = scmp.eq.s32.totalorder %s19, 0
      %p67 = por %p65, %p66
      %s68 = ssub.s32 %s13, %s20
      %p69 = scmp.eq.s32.totalorder %s68, 0
      %s71 = sadd.s32 %s70, 1
      %s72 = scalar_select %p69, %s70, %s71
      %p75 = pneg %p69
      %p76 = scmp.eq.s32.totalorder %s13, 1
      %p77 = por %p75, %p76
      %p78 = scmp.ne.s32.totalorder %s70, %s73
      %p79 = scmp.eq.s32.totalorder %s13, 0
      %p80 = por %p78, %p79
      %p81 = scmp.ne.s32.totalorder %s70, %s73
      %p82 = scmp.eq.s32.totalorder %s18, 1
      %p83 = por %p81, %p82
      %p84 = scmp.ne.s32.totalorder %s73, %s74
      %p85 = scmp.eq.s32.totalorder %s18, 0
      %p86 = por %p84, %p85
      %p87 = scmp.ne.s32.totalorder %s73, %s74
      %p88 = scmp.eq.s32.totalorder %s19, 1
      %p89 = por %p87, %p88
      %p91 = scmp.ne.s32.totalorder %s74, %s90
      %p92 = scmp.eq.s32.totalorder %s19, 0
      %p93 = por %p91, %p92
      %s95 = sadd.s32 %s94, 1
      %p98 = scmp.eq.s32.totalorder %s13, 1
      %p99 = scmp.ne.s32.totalorder %s94, %s96
      %p100 = scmp.eq.s32.totalorder %s13, 0
      %p101 = por %p99, %p100
      %p102 = scmp.ne.s32.totalorder %s94, %s96
      %p103 = scmp.eq.s32.totalorder %s18, 1
      %p104 = por %p102, %p103
      %p105 = scmp.ne.s32.totalorder %s96, %s97
      %p106 = scmp.eq.s32.totalorder %s18, 0
      %p107 = por %p105, %p106
      %p108 = scmp.ne.s32.totalorder %s96, %s97
      %p109 = scmp.eq.s32.totalorder %s19, 1
      %p110 = por %p108, %p109
      %p112 = scmp.ne.s32.totalorder %s97, %s111
      %p113 = scmp.eq.s32.totalorder %s19, 0
      %p114 = por %p112, %p113
      %s115 = ssub.s32 %s13, %s20
      %p116 = scmp.eq.s32.totalorder %s115, 0
      %s118 = sadd.s32 %s117, 1
      %s119 = scalar_select %p116, %s117, %s118
      %p122 = pneg %p116
      %p123 = scmp.eq.s32.totalorder %s13, 1
      %p124 = por %p122, %p123
      %p125 = scmp.ne.s32.totalorder %s117, %s120
      %p126 = scmp.eq.s32.totalorder %s13, 0
      %p127 = por %p125, %p126
      %p128 = scmp.ne.s32.totalorder %s117, %s120
      %p129 = scmp.eq.s32.totalorder %s18, 1
      %p130 = por %p128, %p129
      %p131 = scmp.ne.s32.totalorder %s120, %s121
      %p132 = scmp.eq.s32.totalorder %s18, 0
      %p133 = por %p131, %p132
      %p134 = scmp.ne.s32.totalorder %s120, %s121
      %p135 = scmp.eq.s32.totalorder %s19, 1
      %p136 = por %p134, %p135
      %p138 = scmp.ne.s32.totalorder %s121, %s137
      %p139 = scmp.eq.s32.totalorder %s19, 0
      %p140 = por %p138, %p139
      %p141 = scmp.le.s32.totalorder 1, %s13
      %p142 = scmp.lt.s32.totalorder %s13, 3
      %p143 = pnand %p141, %p142
      %p144 = pneg %p143
      // Predicated region
      $region9: #{res_up_forward.3} parent=5 // pred_check
        _
      $region10: #{res_up_forward.3} parent=5 // pred_check_branch
        %146 = sbr.rel (%p143) target = $region12
      $region11: #{res_up_forward.3} parent=5 // pred_region
        %s147 = ssub.s32 %s13, 1
        // Predicated region
        $region13: #{res_up_forward.3} parent=11 // pred_check
          %p148 = pneg %p60
        $region14: #{res_up_forward.3} parent=11 // pred_check_branch
          %150 = sbr.rel (%p148) target = $region16
        $region15: #{res_up_forward.3} parent=11 // pred_region
          _
        $region16: #{res_up_forward.3} parent=11 // pred_fallthru
          _
        // Predicated region
        $region17: #{res_up_forward.3} parent=11 // pred_check
          %p151 = pneg %p107
        $region18: #{res_up_forward.3} parent=11 // pred_check_branch
          %153 = sbr.rel (%p151) target = $region20
        $region19: #{res_up_forward.3} parent=11 // pred_region
          _
        $region20: #{res_up_forward.3} parent=11 // pred_fallthru
          _
      $region12: #{res_up_forward.3} parent=5 // pred_fallthru
        _
      %p154 = scmp.lt.s32.totalorder %s13, 2
      // Predicated region
      $region21: #{res_up_forward.3} parent=5 // pred_check
        %p155 = pneg %p154
      $region22: #{res_up_forward.3} parent=5 // pred_check_branch
        %157 = sbr.rel (%p155) target = $region24
      $region23: #{res_up_forward.3} parent=5 // pred_region
        // Predicated region
        $region25: #{res_up_forward.3} parent=23 // pred_check
          %p158 = pneg %p33
        $region26: #{res_up_forward.3} parent=23 // pred_check_branch
          %160 = sbr.rel (%p158) target = $region28
        $region27: #{res_up_forward.3} parent=23 // pred_region
          %p161 = scmp.lt.s32.totalorder %s13, 1
          %s162 = scalar_select %p161, %s13, 1
          %s163 = smul.addr %s162, 32
          %s164 = smul.addr %s163, 4
          %s165 = scalar_lea.vmem %s0, %s164
        $region28: #{res_up_forward.3} parent=23 // pred_fallthru
          _
        // Predicated region
        $region29: #{res_up_forward.3} parent=23 // pred_check
          %p166 = pneg %p80
        $region30: #{res_up_forward.3} parent=23 // pred_check_branch
          %168 = sbr.rel (%p166) target = $region32
        $region31: #{res_up_forward.3} parent=23 // pred_region
          %s169 = smul.u32 32, %s13
          %p170 = scmp.lt.s32.totalorder %s169, 63
          %s171 = scalar_select %p170, %s169, 63
          %s172 = smul.addr %s171, 4
          %s173 = scalar_lea.vmem %s2, %s172
          %s174 = smul.u32 32, %s13
        $region32: #{res_up_forward.3} parent=23 // pred_fallthru
          _
      $region24: #{res_up_forward.3} parent=5 // pred_fallthru
        _
      %p175 = scmp.le.s32.totalorder 1, %s13
      %p176 = scmp.lt.s32.totalorder %s13, 3
      %p177 = pnand %p175, %p176
      %p178 = pneg %p177
      // Predicated region
      $region33: #{res_up_forward.3} parent=5 // pred_check
        _
      $region34: #{res_up_forward.3} parent=5 // pred_check_branch
        %180 = sbr.rel (%p177) target = $region36
      $region35: #{res_up_forward.3} parent=5 // pred_region
        %s181 = ssub.s32 %s13, 1
        %p182 = scmp.lt.s32.totalorder %s18, 1
        %s183 = scalar_select %p182, %s18, 1
        %s184 = smul.addr %s183, 32
        %s185 = smul.addr %s184, 4
        %s186 = scalar_lea.vmem %s0, %s185
        %p187 = pneg %p39
        %p188 = pneg %p36
        %p189 = pneg %p60
        %p190 = pneg %p57
        %s191 = smul.u32 32, %s18
        %p192 = scmp.lt.s32.totalorder %s191, 63
        %s193 = scalar_select %p192, %s191, 63
        %s194 = smul.addr %s193, 4
        %s195 = scalar_lea.vmem %s2, %s194
        %p196 = pneg %p86
        %p197 = pneg %p83
        %p198 = pneg %p107
        %p199 = pneg %p104
        %p200 = pneg %p133
        %p201 = pneg %p130
        %s202 = sand.u32 %s120, 1
        %s203 = scalar_lea.sflag [#allocation4], %s202
        %s204 = sand.u32 %s120, 1
        %s205 = smul.addr %s204, 256
        %s206 = scalar_lea.vmem [#allocation3], %s205
        %p207 = scmp.lt.s32.totalorder %s18, 1
        %s208 = scalar_select %p207, %s18, 1
        %s209 = smul.addr %s208, 32
        %s210 = smul.addr %s209, 4
        %s211 = scalar_lea.vmem %s0, %s210
        %s212 = smul.u32 32, %s18
        %p213 = scmp.lt.s32.totalorder %s212, 63
        %s214 = scalar_select %p213, %s212, 63
        %s215 = smul.addr %s214, 4
        %s216 = scalar_lea.vmem %s2, %s215
        %s217 = smul.u32 32, %s18
        %s218 = smul.u32 32, %s18
        %vm220 = vcmask 519168
        %221 = vst.msk [vmem:[#allocation2] sm:$0xf] %vm220, 0
        %222 = vst.msk [vmem:[#allocation2 + $0x4] sm:$0xf] %vm220, 0
        %vm223 = vcmask 516096
        %224 = vst.msk [vmem:[#allocation2 + $0x8] sm:$0x1] %vm223, 0
        %225 = vst.msk [vmem:[#allocation2 + $0xc] sm:$0xf] %vm220, 0
        %226 = vst.msk [vmem:[#allocation2 + $0x10] sm:$0xf] %vm220, 0
        %227 = vst.msk [vmem:[#allocation2 + $0x14] sm:$0x1] %vm223, 0
        %228 = vst.msk [vmem:[#allocation2 + $0x18] sm:$0xf] %vm220, 0
        %229 = vst.msk [vmem:[#allocation2 + $0x1c] sm:$0xf] %vm220, 0
        %230 = vst.msk [vmem:[#allocation2 + $0x20] sm:$0x1] %vm223, 0
        %231 = vst.msk [vmem:[#allocation2 + $0x24] sm:$0xf] %vm220, 0
        %232 = vst.msk [vmem:[#allocation2 + $0x28] sm:$0xf] %vm220, 0
        %233 = vst.msk [vmem:[#allocation2 + $0x2c] sm:$0x1] %vm223, 0
        %234 = vst.msk [vmem:[#allocation2 + $0x30] sm:$0xf] %vm220, 0
        %235 = vst.msk [vmem:[#allocation2 + $0x34] sm:$0xf] %vm220, 0
        %236 = vst.msk [vmem:[#allocation2 + $0x38] sm:$0x1] %vm223, 0
        %237 = vst.msk [vmem:[#allocation2 + $0x3c] sm:$0xf] %vm220, 0
        %238 = vst.msk [vmem:[#allocation2 + $0x40] sm:$0xf] %vm220, 0
        %239 = vst.msk [vmem:[#allocation2 + $0x44] sm:$0x1] %vm223, 0
        %240 = vst.msk [vmem:[#allocation2 + $0x48] sm:$0xf] %vm220, 0
        %241 = vst.msk [vmem:[#allocation2 + $0x4c] sm:$0xf] %vm220, 0
        %242 = vst.msk [vmem:[#allocation2 + $0x50] sm:$0x1] %vm223, 0
        %243 = vst.msk [vmem:[#allocation2 + $0x54] sm:$0xf] %vm220, 0
        %244 = vst.msk [vmem:[#allocation2 + $0x58] sm:$0xf] %vm220, 0
        %245 = vst.msk [vmem:[#allocation2 + $0x5c] sm:$0x1] %vm223, 0
        %246 = vst.msk [vmem:[#allocation2 + $0x60] sm:$0xf] %vm220, 0
        %247 = vst.msk [vmem:[#allocation2 + $0x64] sm:$0xf] %vm220, 0
        %248 = vst.msk [vmem:[#allocation2 + $0x68] sm:$0x1] %vm223, 0
        %249 = vst.msk [vmem:[#allocation2 + $0x6c] sm:$0xf] %vm220, 0
        %250 = vst.msk [vmem:[#allocation2 + $0x70] sm:$0xf] %vm220, 0
        %251 = vst.msk [vmem:[#allocation2 + $0x74] sm:$0x1] %vm223, 0
        %252 = vst.msk [vmem:[#allocation2 + $0x78] sm:$0xf] %vm220, 0
        %253 = vst.msk [vmem:[#allocation2 + $0x7c] sm:$0xf] %vm220, 0
        %254 = vst.msk [vmem:[#allocation2 + $0x80] sm:$0x1] %vm223, 0
        %255 = vst.msk [vmem:[#allocation2 + $0x84] sm:$0xf] %vm220, 0
        %256 = vst.msk [vmem:[#allocation2 + $0x88] sm:$0xf] %vm220, 0
        %257 = vst.msk [vmem:[#allocation2 + $0x8c] sm:$0x1] %vm223, 0
        %258 = vst.msk [vmem:[#allocation2 + $0x90] sm:$0xf] %vm220, 0
        %259 = vst.msk [vmem:[#allocation2 + $0x94] sm:$0xf] %vm220, 0
        %260 = vst.msk [vmem:[#allocation2 + $0x98] sm:$0x1] %vm223, 0
        %261 = vst.msk [vmem:[#allocation2 + $0x9c] sm:$0xf] %vm220, 0
        %262 = vst.msk [vmem:[#allocation2 + $0xa0] sm:$0xf] %vm220, 0
        %263 = vst.msk [vmem:[#allocation2 + $0xa4] sm:$0x1] %vm223, 0
        %264 = vst.msk [vmem:[#allocation2 + $0xa8] sm:$0xf] %vm220, 0
        %265 = vst.msk [vmem:[#allocation2 + $0xac] sm:$0xf] %vm220, 0
        %266 = vst.msk [vmem:[#allocation2 + $0xb0] sm:$0x1] %vm223, 0
        %267 = vst.msk [vmem:[#allocation2 + $0xb4] sm:$0xf] %vm220, 0
        %268 = vst.msk [vmem:[#allocation2 + $0xb8] sm:$0xf] %vm220, 0
        %269 = vst.msk [vmem:[#allocation2 + $0xbc] sm:$0x1] %vm223, 0
        %270 = vst.msk [vmem:[#allocation2 + $0xc0] sm:$0xf] %vm220, 0
        %271 = vst.msk [vmem:[#allocation2 + $0xc4] sm:$0xf] %vm220, 0
        %272 = vst.msk [vmem:[#allocation2 + $0xc8] sm:$0x1] %vm223, 0
        %273 = vst.msk [vmem:[#allocation2 + $0xcc] sm:$0xf] %vm220, 0
        %274 = vst.msk [vmem:[#allocation2 + $0xd0] sm:$0xf] %vm220, 0
        %275 = vst.msk [vmem:[#allocation2 + $0xd4] sm:$0x1] %vm223, 0
        %v276 = vld [vmem:[%s211] sm:$0xf]
        %v277 = vld [vmem:[%s211 + $0x4] sm:$0xf]
        %v278 = vld [vmem:[%s211 + $0x8] sm:$0xf]
        %v279 = vld [vmem:[%s211 + $0xc] sm:$0xf]
        %v280 = vld [vmem:[%s211 + $0x10] sm:$0xf]
        %v281 = vld [vmem:[%s211 + $0x14] sm:$0xf]
        %v282 = vld [vmem:[%s211 + $0x18] sm:$0xf]
        %v283 = vld [vmem:[%s211 + $0x1c] sm:$0xf]
        %v284 = vld [vmem:[%s211 + $0x20] sm:$0xf]
        %v285 = vld [vmem:[%s211 + $0x24] sm:$0xf]
        %v286 = vld [vmem:[%s211 + $0x28] sm:$0xf]
        %v287 = vld [vmem:[%s211 + $0x2c] sm:$0xf]
        %v288 = vld [vmem:[%s211 + $0x30] sm:$0xf]
        %v289 = vld [vmem:[%s211 + $0x34] sm:$0xf]
        %v290 = vld [vmem:[%s211 + $0x38] sm:$0xf]
        %v291 = vld [vmem:[%s211 + $0x3c] sm:$0xf]
        %v292 = vld [vmem:[%s211 + $0x40] sm:$0xf]
        %v293 = vld [vmem:[%s211 + $0x44] sm:$0xf]
        %v294 = vld [vmem:[%s211 + $0x48] sm:$0xf]
        %v295 = vld [vmem:[%s211 + $0x4c] sm:$0xf]
        %v296 = vld [vmem:[%s211 + $0x50] sm:$0xf]
        %v297 = vld [vmem:[%s211 + $0x54] sm:$0xf]
        %v298 = vld [vmem:[%s211 + $0x58] sm:$0xf]
        %v299 = vld [vmem:[%s211 + $0x5c] sm:$0xf]
        %v300 = vld [vmem:[%s211 + $0x60] sm:$0xf]
        %v301 = vld [vmem:[%s211 + $0x64] sm:$0xf]
        %v302 = vld [vmem:[%s211 + $0x68] sm:$0xf]
        %v303 = vld [vmem:[%s211 + $0x6c] sm:$0xf]
        %v304 = vld [vmem:[%s211 + $0x70] sm:$0xf]
        %v305 = vld [vmem:[%s211 + $0x74] sm:$0xf]
        %v306 = vld [vmem:[%s211 + $0x78] sm:$0xf]
        %v307 = vld [vmem:[%s211 + $0x7c] sm:$0xf]
        %vm308 = vsmask.f32 256
        %vm309 = vsmask.f32 4368
        %vm310 = vmor %vm308, %vm309
        %v312 = vshrl.u32 %v276, 16
        %v314 = vrot.slane %v312, 7
        %v315 = vshll.u32 %v276, 16
        %v317 = vor.u32 %v314, %v315
        %v318 = vrot.slane %v314, 4
        %v320 = vshrl.u32 %v277, 16
        %v322 = vrot.slane %v320, 7
        %v323 = vshll.u32 %v277, 16
        %v325 = vor.u32 %v322, %v323
        %v326 = vsel %vm310, %v318, %v325
        %v327 = vrot.slane %v322, 4
        %v329 = vshrl.u32 %v278, 16
        %v331 = vrot.slane %v329, 7
        %v332 = vshll.u32 %v278, 16
        %v334 = vor.u32 %v331, %v332
        %v335 = vrot.slane %v331, 4
        %v337 = vshrl.u32 %v279, 16
        %v339 = vrot.slane %v337, 7
        %v340 = vshll.u32 %v279, 16
        %v342 = vor.u32 %v339, %v340
        %v343 = vsel %vm310, %v335, %v342
        %v344 = vrot.slane %v339, 4
        %v346 = vshrl.u32 %v280, 16
        %v348 = vrot.slane %v346, 7
        %v349 = vshll.u32 %v280, 16
        %v351 = vor.u32 %v348, %v349
        %v352 = vrot.slane %v348, 4
        %v354 = vshrl.u32 %v281, 16
        %v356 = vrot.slane %v354, 7
        %v357 = vshll.u32 %v281, 16
        %v359 = vor.u32 %v356, %v357
        %v360 = vsel %vm310, %v352, %v359
        %v361 = vrot.slane %v356, 4
        %v363 = vshrl.u32 %v282, 16
        %v365 = vrot.slane %v363, 7
        %v366 = vshll.u32 %v282, 16
        %v368 = vor.u32 %v365, %v366
        %v369 = vrot.slane %v365, 4
        %v371 = vshrl.u32 %v283, 16
        %v373 = vrot.slane %v371, 7
        %v374 = vshll.u32 %v283, 16
        %v376 = vor.u32 %v373, %v374
        %v377 = vsel %vm310, %v369, %v376
        %v378 = vrot.slane %v373, 4
        %v380 = vshrl.u32 %v284, 16
        %v382 = vrot.slane %v380, 7
        %v383 = vshll.u32 %v284, 16
        %v385 = vor.u32 %v382, %v383
        %v386 = vrot.slane %v382, 4
        %v388 = vshrl.u32 %v285, 16
        %v390 = vrot.slane %v388, 7
        %v391 = vshll.u32 %v285, 16
        %v393 = vor.u32 %v390, %v391
        %v394 = vsel %vm310, %v386, %v393
        %v395 = vrot.slane %v390, 4
        %v397 = vshrl.u32 %v286, 16
        %v399 = vrot.slane %v397, 7
        %v400 = vshll.u32 %v286, 16
        %v402 = vor.u32 %v399, %v400
        %v403 = vrot.slane %v399, 4
        %v405 = vshrl.u32 %v287, 16
        %v407 = vrot.slane %v405, 7
        %v408 = vshll.u32 %v287, 16
        %v410 = vor.u32 %v407, %v408
        %v411 = vsel %vm310, %v403, %v410
        %v412 = vrot.slane %v407, 4
        %v414 = vshrl.u32 %v288, 16
        %v416 = vrot.slane %v414, 7
        %v417 = vshll.u32 %v288, 16
        %v419 = vor.u32 %v416, %v417
        %v420 = vrot.slane %v416, 4
        %v422 = vshrl.u32 %v289, 16
        %v424 = vrot.slane %v422, 7
        %v425 = vshll.u32 %v289, 16
        %v427 = vor.u32 %v424, %v425
        %v428 = vsel %vm310, %v420, %v427
        %v429 = vrot.slane %v424, 4
        %v431 = vshrl.u32 %v290, 16
        %v433 = vrot.slane %v431, 7
        %v434 = vshll.u32 %v290, 16
        %v436 = vor.u32 %v433, %v434
        %v437 = vrot.slane %v433, 4
        %v439 = vshrl.u32 %v291, 16
        %v441 = vrot.slane %v439, 7
        %v442 = vshll.u32 %v291, 16
        %v444 = vor.u32 %v441, %v442
        %v445 = vsel %vm310, %v437, %v444
        %v446 = vrot.slane %v441, 4
        %v448 = vshrl.u32 %v292, 16
        %v450 = vrot.slane %v448, 7
        %v451 = vshll.u32 %v292, 16
        %v453 = vor.u32 %v450, %v451
        %v454 = vrot.slane %v450, 4
        %v456 = vshrl.u32 %v293, 16
        %v458 = vrot.slane %v456, 7
        %v459 = vshll.u32 %v293, 16
        %v461 = vor.u32 %v458, %v459
        %v462 = vsel %vm310, %v454, %v461
        %v463 = vrot.slane %v458, 4
        %v465 = vshrl.u32 %v294, 16
        %v467 = vrot.slane %v465, 7
        %v468 = vshll.u32 %v294, 16
        %v470 = vor.u32 %v467, %v468
        %v471 = vrot.slane %v467, 4
        %v473 = vshrl.u32 %v295, 16
        %v475 = vrot.slane %v473, 7
        %v476 = vshll.u32 %v295, 16
        %v478 = vor.u32 %v475, %v476
        %v479 = vsel %vm310, %v471, %v478
        %v480 = vrot.slane %v475, 4
        %v482 = vshrl.u32 %v296, 16
        %v484 = vrot.slane %v482, 7
        %v485 = vshll.u32 %v296, 16
        %v487 = vor.u32 %v484, %v485
        %v488 = vrot.slane %v484, 4
        %v490 = vshrl.u32 %v297, 16
        %v492 = vrot.slane %v490, 7
        %v493 = vshll.u32 %v297, 16
        %v495 = vor.u32 %v492, %v493
        %v496 = vsel %vm310, %v488, %v495
        %v497 = vrot.slane %v492, 4
        %v499 = vshrl.u32 %v298, 16
        %v501 = vrot.slane %v499, 7
        %v502 = vshll.u32 %v298, 16
        %v504 = vor.u32 %v501, %v502
        %v505 = vrot.slane %v501, 4
        %v507 = vshrl.u32 %v299, 16
        %v509 = vrot.slane %v507, 7
        %v510 = vshll.u32 %v299, 16
        %v512 = vor.u32 %v509, %v510
        %v513 = vsel %vm310, %v505, %v512
        %v514 = vrot.slane %v509, 4
        %v516 = vshrl.u32 %v300, 16
        %v518 = vrot.slane %v516, 7
        %v519 = vshll.u32 %v300, 16
        %v521 = vor.u32 %v518, %v519
        %v522 = vrot.slane %v518, 4
        %v524 = vshrl.u32 %v301, 16
        %v526 = vrot.slane %v524, 7
        %v527 = vshll.u32 %v301, 16
        %v529 = vor.u32 %v526, %v527
        %v530 = vsel %vm310, %v522, %v529
        %v531 = vrot.slane %v526, 4
        %v533 = vshrl.u32 %v302, 16
        %v535 = vrot.slane %v533, 7
        %v536 = vshll.u32 %v302, 16
        %v538 = vor.u32 %v535, %v536
        %v539 = vrot.slane %v535, 4
        %v541 = vshrl.u32 %v303, 16
        %v543 = vrot.slane %v541, 7
        %v544 = vshll.u32 %v303, 16
        %v546 = vor.u32 %v543, %v544
        %v547 = vsel %vm310, %v539, %v546
        %v548 = vrot.slane %v543, 4
        %v550 = vshrl.u32 %v304, 16
        %v552 = vrot.slane %v550, 7
        %v553 = vshll.u32 %v304, 16
        %v555 = vor.u32 %v552, %v553
        %v556 = vrot.slane %v552, 4
        %v558 = vshrl.u32 %v305, 16
        %v560 = vrot.slane %v558, 7
        %v561 = vshll.u32 %v305, 16
        %v563 = vor.u32 %v560, %v561
        %v564 = vsel %vm310, %v556, %v563
        %v565 = vrot.slane %v560, 4
        %v567 = vshrl.u32 %v306, 16
        %v569 = vrot.slane %v567, 7
        %v570 = vshll.u32 %v306, 16
        %v572 = vor.u32 %v569, %v570
        %v573 = vrot.slane %v569, 4
        %v575 = vshrl.u32 %v307, 16
        %v577 = vrot.slane %v575, 7
        %v578 = vshll.u32 %v307, 16
        %v580 = vor.u32 %v577, %v578
        %v581 = vsel %vm310, %v573, %v580
        %v582 = vrot.slane %v577, 4
        %s631 = scalar_lea.vmem [#allocation2], 12
        %vm632 = vcmask 519168
        %vm633 = vsmask.f32 7938
        %vm634 = vmand %vm632, %vm633
        %v635 = vld [vmem:[%s631] sm:$0xf]
        %v636 = vsel %vm634, %v317, %v635
        %637 = vst [vmem:[%s631] sm:$0xf] %v636
        %638 = vst.msk [vmem:[%s631 + $0x4] sm:$0xf] %vm220, %v326
        %vm639 = vcmask 516096
        %vm640 = vmand %vm639, %vm308
        %v641 = vld [vmem:[%s631 + $0x8] sm:$0x1]
        %v642 = vsel %vm640, %v327, %v641
        %643 = vst [vmem:[%s631 + $0x8] sm:$0x1] %v642
        %v644 = vld [vmem:[%s631 + $0xc] sm:$0xf]
        %v645 = vsel %vm634, %v334, %v644
        %646 = vst [vmem:[%s631 + $0xc] sm:$0xf] %v645
        %647 = vst.msk [vmem:[%s631 + $0x10] sm:$0xf] %vm220, %v343
        %v648 = vld [vmem:[%s631 + $0x14] sm:$0x1]
        %v649 = vsel %vm640, %v344, %v648
        %650 = vst [vmem:[%s631 + $0x14] sm:$0x1] %v649
        %v651 = vld [vmem:[%s631 + $0x18] sm:$0xf]
        %v652 = vsel %vm634, %v351, %v651
        %653 = vst [vmem:[%s631 + $0x18] sm:$0xf] %v652
        %654 = vst.msk [vmem:[%s631 + $0x1c] sm:$0xf] %vm220, %v360
        %v655 = vld [vmem:[%s631 + $0x20] sm:$0x1]
        %v656 = vsel %vm640, %v361, %v655
        %657 = vst [vmem:[%s631 + $0x20] sm:$0x1] %v656
        %v658 = vld [vmem:[%s631 + $0x24] sm:$0xf]
        %v659 = vsel %vm634, %v368, %v658
        %660 = vst [vmem:[%s631 + $0x24] sm:$0xf] %v659
        %661 = vst.msk [vmem:[%s631 + $0x28] sm:$0xf] %vm220, %v377
        %v662 = vld [vmem:[%s631 + $0x2c] sm:$0x1]
        %v663 = vsel %vm640, %v378, %v662
        %664 = vst [vmem:[%s631 + $0x2c] sm:$0x1] %v663
        %v665 = vld [vmem:[%s631 + $0x30] sm:$0xf]
        %v666 = vsel %vm634, %v385, %v665
        %667 = vst [vmem:[%s631 + $0x30] sm:$0xf] %v666
        %668 = vst.msk [vmem:[%s631 + $0x34] sm:$0xf] %vm220, %v394
        %v669 = vld [vmem:[%s631 + $0x38] sm:$0x1]
        %v670 = vsel %vm640, %v395, %v669
        %671 = vst [vmem:[%s631 + $0x38] sm:$0x1] %v670
        %v672 = vld [vmem:[%s631 + $0x3c] sm:$0xf]
        %v673 = vsel %vm634, %v402, %v672
        %674 = vst [vmem:[%s631 + $0x3c] sm:$0xf] %v673
        %675 = vst.msk [vmem:[%s631 + $0x40] sm:$0xf] %vm220, %v411
        %v676 = vld [vmem:[%s631 + $0x44] sm:$0x1]
        %v677 = vsel %vm640, %v412, %v676
        %678 = vst [vmem:[%s631 + $0x44] sm:$0x1] %v677
        %v679 = vld [vmem:[%s631 + $0x48] sm:$0xf]
        %v680 = vsel %vm634, %v419, %v679
        %681 = vst [vmem:[%s631 + $0x48] sm:$0xf] %v680
        %682 = vst.msk [vmem:[%s631 + $0x4c] sm:$0xf] %vm220, %v428
        %v683 = vld [vmem:[%s631 + $0x50] sm:$0x1]
        %v684 = vsel %vm640, %v429, %v683
        %685 = vst [vmem:[%s631 + $0x50] sm:$0x1] %v684
        %v686 = vld [vmem:[%s631 + $0x54] sm:$0xf]
        %v687 = vsel %vm634, %v436, %v686
        %688 = vst [vmem:[%s631 + $0x54] sm:$0xf] %v687
        %689 = vst.msk [vmem:[%s631 + $0x58] sm:$0xf] %vm220, %v445
        %v690 = vld [vmem:[%s631 + $0x5c] sm:$0x1]
        %v691 = vsel %vm640, %v446, %v690
        %692 = vst [vmem:[%s631 + $0x5c] sm:$0x1] %v691
        %v693 = vld [vmem:[%s631 + $0x60] sm:$0xf]
        %v694 = vsel %vm634, %v453, %v693
        %695 = vst [vmem:[%s631 + $0x60] sm:$0xf] %v694
        %696 = vst.msk [vmem:[%s631 + $0x64] sm:$0xf] %vm220, %v462
        %v697 = vld [vmem:[%s631 + $0x68] sm:$0x1]
        %v698 = vsel %vm640, %v463, %v697
        %699 = vst [vmem:[%s631 + $0x68] sm:$0x1] %v698
        %v700 = vld [vmem:[%s631 + $0x6c] sm:$0xf]
        %v701 = vsel %vm634, %v470, %v700
        %702 = vst [vmem:[%s631 + $0x6c] sm:$0xf] %v701
        %703 = vst.msk [vmem:[%s631 + $0x70] sm:$0xf] %vm220, %v479
        %v704 = vld [vmem:[%s631 + $0x74] sm:$0x1]
        %v705 = vsel %vm640, %v480, %v704
        %706 = vst [vmem:[%s631 + $0x74] sm:$0x1] %v705
        %v707 = vld [vmem:[%s631 + $0x78] sm:$0xf]
        %v708 = vsel %vm634, %v487, %v707
        %709 = vst [vmem:[%s631 + $0x78] sm:$0xf] %v708
        %710 = vst.msk [vmem:[%s631 + $0x7c] sm:$0xf] %vm220, %v496
        %v711 = vld [vmem:[%s631 + $0x80] sm:$0x1]
        %v712 = vsel %vm640, %v497, %v711
        %713 = vst [vmem:[%s631 + $0x80] sm:$0x1] %v712
        %v714 = vld [vmem:[%s631 + $0x84] sm:$0xf]
        %v715 = vsel %vm634, %v504, %v714
        %716 = vst [vmem:[%s631 + $0x84] sm:$0xf] %v715
        %717 = vst.msk [vmem:[%s631 + $0x88] sm:$0xf] %vm220, %v513
        %v718 = vld [vmem:[%s631 + $0x8c] sm:$0x1]
        %v719 = vsel %vm640, %v514, %v718
        %720 = vst [vmem:[%s631 + $0x8c] sm:$0x1] %v719
        %v721 = vld [vmem:[%s631 + $0x90] sm:$0xf]
        %v722 = vsel %vm634, %v521, %v721
        %723 = vst [vmem:[%s631 + $0x90] sm:$0xf] %v722
        %724 = vst.msk [vmem:[%s631 + $0x94] sm:$0xf] %vm220, %v530
        %v725 = vld [vmem:[%s631 + $0x98] sm:$0x1]
        %v726 = vsel %vm640, %v531, %v725
        %727 = vst [vmem:[%s631 + $0x98] sm:$0x1] %v726
        %v728 = vld [vmem:[%s631 + $0x9c] sm:$0xf]
        %v729 = vsel %vm634, %v538, %v728
        %730 = vst [vmem:[%s631 + $0x9c] sm:$0xf] %v729
        %731 = vst.msk [vmem:[%s631 + $0xa0] sm:$0xf] %vm220, %v547
        %v732 = vld [vmem:[%s631 + $0xa4] sm:$0x1]
        %v733 = vsel %vm640, %v548, %v732
        %734 = vst [vmem:[%s631 + $0xa4] sm:$0x1] %v733
        %v735 = vld [vmem:[%s631 + $0xa8] sm:$0xf]
        %v736 = vsel %vm634, %v555, %v735
        %737 = vst [vmem:[%s631 + $0xa8] sm:$0xf] %v736
        %738 = vst.msk [vmem:[%s631 + $0xac] sm:$0xf] %vm220, %v564
        %v739 = vld [vmem:[%s631 + $0xb0] sm:$0x1]
        %v740 = vsel %vm640, %v565, %v739
        %741 = vst [vmem:[%s631 + $0xb0] sm:$0x1] %v740
        %v742 = vld [vmem:[%s631 + $0xb4] sm:$0xf]
        %v743 = vsel %vm634, %v572, %v742
        %744 = vst [vmem:[%s631 + $0xb4] sm:$0xf] %v743
        %745 = vst.msk [vmem:[%s631 + $0xb8] sm:$0xf] %vm220, %v581
        %v746 = vld [vmem:[%s631 + $0xbc] sm:$0x1]
        %v747 = vsel %vm640, %v582, %v746
        %748 = vst [vmem:[%s631 + $0xbc] sm:$0x1] %v747
        %v749 = vld [vmem:[#allocation2] sm:$0xf]
        %v750 = vld [vmem:[#allocation2 + $0x4] sm:$0xf]
        %v751 = vld [vmem:[#allocation2 + $0xc] sm:$0xf]
        %v752 = vld [vmem:[#allocation2 + $0x10] sm:$0xf]
        %v753 = vld [vmem:[#allocation2 + $0x18] sm:$0xf]
        %v754 = vld [vmem:[#allocation2 + $0x1c] sm:$0xf]
        %v755 = vld [vmem:[#allocation2 + $0x24] sm:$0xf]
        %v756 = vld [vmem:[#allocation2 + $0x28] sm:$0xf]
        %v757 = vld [vmem:[#allocation2 + $0x30] sm:$0xf]
        %v758 = vld [vmem:[#allocation2 + $0x34] sm:$0xf]
        %v759 = vld [vmem:[#allocation2 + $0x3c] sm:$0xf]
        %v760 = vld [vmem:[#allocation2 + $0x40] sm:$0xf]
        %v761 = vld [vmem:[#allocation2 + $0x48] sm:$0xf]
        %v762 = vld [vmem:[#allocation2 + $0x4c] sm:$0xf]
        %v763 = vld [vmem:[#allocation2 + $0x54] sm:$0xf]
        %v764 = vld [vmem:[#allocation2 + $0x58] sm:$0xf]
        %v765 = vld [vmem:[#allocation2 + $0x60] sm:$0xf]
        %v766 = vld [vmem:[#allocation2 + $0x64] sm:$0xf]
        %v767 = vld [vmem:[#allocation2 + $0x6c] sm:$0xf]
        %v768 = vld [vmem:[#allocation2 + $0x70] sm:$0xf]
        %v769 = vld [vmem:[#allocation2 + $0x78] sm:$0xf]
        %v770 = vld [vmem:[#allocation2 + $0x7c] sm:$0xf]
        %v771 = vld [vmem:[#allocation2 + $0x84] sm:$0xf]
        %v772 = vld [vmem:[#allocation2 + $0x88] sm:$0xf]
        %v773 = vld [vmem:[#allocation2 + $0x90] sm:$0xf]
        %v774 = vld [vmem:[#allocation2 + $0x94] sm:$0xf]
        %v775 = vld [vmem:[#allocation2 + $0x9c] sm:$0xf]
        %v776 = vld [vmem:[#allocation2 + $0xa0] sm:$0xf]
        %v777 = vld [vmem:[#allocation2 + $0xa8] sm:$0xf]
        %v778 = vld [vmem:[#allocation2 + $0xac] sm:$0xf]
        %v779 = vld [vmem:[#allocation2 + $0xb4] sm:$0xf]
        %v780 = vld [vmem:[#allocation2 + $0xb8] sm:$0xf]
        %v781 = vld [vmem:[%s1] sm:$0xf]
        %v782 = vld [vmem:[%s1 + $0x4] sm:$0xf]
        %v783 = vld [vmem:[%s1 + $0x8] sm:$0xf]
        %v784 = vld [vmem:[%s1 + $0xc] sm:$0xf]
        %v785 = vld [vmem:[%s1 + $0x10] sm:$0xf]
        %v786 = vld [vmem:[%s1 + $0x14] sm:$0xf]
        %v787 = vld [vmem:[%s1 + $0x18] sm:$0xf]
        %v788 = vld [vmem:[%s1 + $0x1c] sm:$0xf]
        %v789 = vld [vmem:[#allocation2 + $0x8] sm:$0x1]
        %v790 = vld [vmem:[#allocation2 + $0x14] sm:$0x1]
        %v791 = vld [vmem:[#allocation2 + $0x20] sm:$0x1]
        %v792 = vld [vmem:[#allocation2 + $0x2c] sm:$0x1]
        %v793 = vld [vmem:[#allocation2 + $0x38] sm:$0x1]
        %v794 = vld [vmem:[#allocation2 + $0x44] sm:$0x1]
        %v795 = vld [vmem:[#allocation2 + $0x50] sm:$0x1]
        %v796 = vld [vmem:[#allocation2 + $0x5c] sm:$0x1]
        %v797 = vld [vmem:[#allocation2 + $0x68] sm:$0x1]
        %v798 = vld [vmem:[#allocation2 + $0x74] sm:$0x1]
        %v799 = vld [vmem:[#allocation2 + $0x80] sm:$0x1]
        %v800 = vld [vmem:[#allocation2 + $0x8c] sm:$0x1]
        %v801 = vld [vmem:[#allocation2 + $0x98] sm:$0x1]
        %v802 = vld [vmem:[#allocation2 + $0xa4] sm:$0x1]
        %v803 = vld [vmem:[#allocation2 + $0xb0] sm:$0x1]
        %v804 = vld [vmem:[#allocation2 + $0xbc] sm:$0x1]
        %vm805 = vsmask.f32 3328
        %vm806 = vsmask.f32 7440
        %vm807 = vmor %vm805, %vm806
        %v809 = vshrl.u32 %v749, 16
        %v811 = vrot.slane %v809, 4
        %v812 = vshll.u32 %v749, 16
        %v814 = vrot.slane %v812, 5
        %v815 = vor.u32 %v811, %v814
        %v816 = vrot.slane %v815, 4
        %v818 = vshll.u32 %v750, 16
        %v820 = vrot.slane %v818, 5
        %v821 = vsel %vm807, %v816, %v820
        %v822 = vshrl.u32 %v750, 16
        %v824 = vrot.slane %v822, 4
        %v825 = vor.u32 %v824, %v820
        %v826 = vrot.slane %v825, 4
        %v828 = vshll.u32 %v789, 16
        %v830 = vrot.slane %v828, 5
        %v831 = vsel %vm807, %v826, %v830
        %v833 = vshrl.u32 %v751, 16
        %v835 = vrot.slane %v833, 4
        %v836 = vshll.u32 %v751, 16
        %v838 = vrot.slane %v836, 5
        %v839 = vor.u32 %v835, %v838
        %v840 = vrot.slane %v839, 4
        %v842 = vshll.u32 %v752, 16
        %v844 = vrot.slane %v842, 5
        %v845 = vsel %vm807, %v840, %v844
        %v846 = vshrl.u32 %v752, 16
        %v848 = vrot.slane %v846, 4
        %v849 = vor.u32 %v848, %v844
        %v850 = vrot.slane %v849, 4
        %v852 = vshll.u32 %v790, 16
        %v854 = vrot.slane %v852, 5
        %v855 = vsel %vm807, %v850, %v854
        %v857 = vshrl.u32 %v753, 16
        %v859 = vrot.slane %v857, 4
        %v860 = vshll.u32 %v753, 16
        %v862 = vrot.slane %v860, 5
        %v863 = vor.u32 %v859, %v862
        %v864 = vrot.slane %v863, 4
        %v866 = vshll.u32 %v754, 16
        %v868 = vrot.slane %v866, 5
        %v869 = vsel %vm807, %v864, %v868
        %v870 = vshrl.u32 %v754, 16
        %v872 = vrot.slane %v870, 4
        %v873 = vor.u32 %v872, %v868
        %v874 = vrot.slane %v873, 4
        %v876 = vshll.u32 %v791, 16
        %v878 = vrot.slane %v876, 5
        %v879 = vsel %vm807, %v874, %v878
        %v881 = vshrl.u32 %v755, 16
        %v883 = vrot.slane %v881, 4
        %v884 = vshll.u32 %v755, 16
        %v886 = vrot.slane %v884, 5
        %v887 = vor.u32 %v883, %v886
        %v888 = vrot.slane %v887, 4
        %v890 = vshll.u32 %v756, 16
        %v892 = vrot.slane %v890, 5
        %v893 = vsel %vm807, %v888, %v892
        %v894 = vshrl.u32 %v756, 16
        %v896 = vrot.slane %v894, 4
        %v897 = vor.u32 %v896, %v892
        %v898 = vrot.slane %v897, 4
        %v900 = vshll.u32 %v792, 16
        %v902 = vrot.slane %v900, 5
        %v903 = vsel %vm807, %v898, %v902
        %v905 = vshrl.u32 %v757, 16
        %v907 = vrot.slane %v905, 4
        %v908 = vshll.u32 %v757, 16
        %v910 = vrot.slane %v908, 5
        %v911 = vor.u32 %v907, %v910
        %v912 = vrot.slane %v911, 4
        %v914 = vshll.u32 %v758, 16
        %v916 = vrot.slane %v914, 5
        %v917 = vsel %vm807, %v912, %v916
        %v918 = vshrl.u32 %v758, 16
        %v920 = vrot.slane %v918, 4
        %v921 = vor.u32 %v920, %v916
        %v922 = vrot.slane %v921, 4
        %v924 = vshll.u32 %v793, 16
        %v926 = vrot.slane %v924, 5
        %v927 = vsel %vm807, %v922, %v926
        %v929 = vshrl.u32 %v759, 16
        %v931 = vrot.slane %v929, 4
        %v932 = vshll.u32 %v759, 16
        %v934 = vrot.slane %v932, 5
        %v935 = vor.u32 %v931, %v934
        %v936 = vrot.slane %v935, 4
        %v938 = vshll.u32 %v760, 16
        %v940 = vrot.slane %v938, 5
        %v941 = vsel %vm807, %v936, %v940
        %v942 = vshrl.u32 %v760, 16
        %v944 = vrot.slane %v942, 4
        %v945 = vor.u32 %v944, %v940
        %v946 = vrot.slane %v945, 4
        %v948 = vshll.u32 %v794, 16
        %v950 = vrot.slane %v948, 5
        %v951 = vsel %vm807, %v946, %v950
        %v953 = vshrl.u32 %v761, 16
        %v955 = vrot.slane %v953, 4
        %v956 = vshll.u32 %v761, 16
        %v958 = vrot.slane %v956, 5
        %v959 = vor.u32 %v955, %v958
        %v960 = vrot.slane %v959, 4
        %v962 = vshll.u32 %v762, 16
        %v964 = vrot.slane %v962, 5
        %v965 = vsel %vm807, %v960, %v964
        %v966 = vshrl.u32 %v762, 16
        %v968 = vrot.slane %v966, 4
        %v969 = vor.u32 %v968, %v964
        %v970 = vrot.slane %v969, 4
        %v972 = vshll.u32 %v795, 16
        %v974 = vrot.slane %v972, 5
        %v975 = vsel %vm807, %v970, %v974
        %v977 = vshrl.u32 %v763, 16
        %v979 = vrot.slane %v977, 4
        %v980 = vshll.u32 %v763, 16
        %v982 = vrot.slane %v980, 5
        %v983 = vor.u32 %v979, %v982
        %v984 = vrot.slane %v983, 4
        %v986 = vshll.u32 %v764, 16
        %v988 = vrot.slane %v986, 5
        %v989 = vsel %vm807, %v984, %v988
        %v990 = vshrl.u32 %v764, 16
        %v992 = vrot.slane %v990, 4
        %v993 = vor.u32 %v992, %v988
        %v994 = vrot.slane %v993, 4
        %v996 = vshll.u32 %v796, 16
        %v998 = vrot.slane %v996, 5
        %v999 = vsel %vm807, %v994, %v998
        %v1001 = vshrl.u32 %v765, 16
        %v1003 = vrot.slane %v1001, 4
        %v1004 = vshll.u32 %v765, 16
        %v1006 = vrot.slane %v1004, 5
        %v1007 = vor.u32 %v1003, %v1006
        %v1008 = vrot.slane %v1007, 4
        %v1010 = vshll.u32 %v766, 16
        %v1012 = vrot.slane %v1010, 5
        %v1013 = vsel %vm807, %v1008, %v1012
        %v1014 = vshrl.u32 %v766, 16
        %v1016 = vrot.slane %v1014, 4
        %v1017 = vor.u32 %v1016, %v1012
        %v1018 = vrot.slane %v1017, 4
        %v1020 = vshll.u32 %v797, 16
        %v1022 = vrot.slane %v1020, 5
        %v1023 = vsel %vm807, %v1018, %v1022
        %v1025 = vshrl.u32 %v767, 16
        %v1027 = vrot.slane %v1025, 4
        %v1028 = vshll.u32 %v767, 16
        %v1030 = vrot.slane %v1028, 5
        %v1031 = vor.u32 %v1027, %v1030
        %v1032 = vrot.slane %v1031, 4
        %v1034 = vshll.u32 %v768, 16
        %v1036 = vrot.slane %v1034, 5
        %v1037 = vsel %vm807, %v1032, %v1036
        %v1038 = vshrl.u32 %v768, 16
        %v1040 = vrot.slane %v1038, 4
        %v1041 = vor.u32 %v1040, %v1036
        %v1042 = vrot.slane %v1041, 4
        %v1044 = vshll.u32 %v798, 16
        %v1046 = vrot.slane %v1044, 5
        %v1047 = vsel %vm807, %v1042, %v1046
        %v1049 = vshrl.u32 %v769, 16
        %v1051 = vrot.slane %v1049, 4
        %v1052 = vshll.u32 %v769, 16
        %v1054 = vrot.slane %v1052, 5
        %v1055 = vor.u32 %v1051, %v1054
        %v1056 = vrot.slane %v1055, 4
        %v1058 = vshll.u32 %v770, 16
        %v1060 = vrot.slane %v1058, 5
        %v1061 = vsel %vm807, %v1056, %v1060
        %v1062 = vshrl.u32 %v770, 16
        %v1064 = vrot.slane %v1062, 4
        %v1065 = vor.u32 %v1064, %v1060
        %v1066 = vrot.slane %v1065, 4
        %v1068 = vshll.u32 %v799, 16
        %v1070 = vrot.slane %v1068, 5
        %v1071 = vsel %vm807, %v1066, %v1070
        %v1073 = vshrl.u32 %v771, 16
        %v1075 = vrot.slane %v1073, 4
        %v1076 = vshll.u32 %v771, 16
        %v1078 = vrot.slane %v1076, 5
        %v1079 = vor.u32 %v1075, %v1078
        %v1080 = vrot.slane %v1079, 4
        %v1082 = vshll.u32 %v772, 16
        %v1084 = vrot.slane %v1082, 5
        %v1085 = vsel %vm807, %v1080, %v1084
        %v1086 = vshrl.u32 %v772, 16
        %v1088 = vrot.slane %v1086, 4
        %v1089 = vor.u32 %v1088, %v1084
        %v1090 = vrot.slane %v1089, 4
        %v1092 = vshll.u32 %v800, 16
        %v1094 = vrot.slane %v1092, 5
        %v1095 = vsel %vm807, %v1090, %v1094
        %v1097 = vshrl.u32 %v773, 16
        %v1099 = vrot.slane %v1097, 4
        %v1100 = vshll.u32 %v773, 16
        %v1102 = vrot.slane %v1100, 5
        %v1103 = vor.u32 %v1099, %v1102
        %v1104 = vrot.slane %v1103, 4
        %v1106 = vshll.u32 %v774, 16
        %v1108 = vrot.slane %v1106, 5
        %v1109 = vsel %vm807, %v1104, %v1108
        %v1110 = vshrl.u32 %v774, 16
        %v1112 = vrot.slane %v1110, 4
        %v1113 = vor.u32 %v1112, %v1108
        %v1114 = vrot.slane %v1113, 4
        %v1116 = vshll.u32 %v801, 16
        %v1118 = vrot.slane %v1116, 5
        %v1119 = vsel %vm807, %v1114, %v1118
        %v1121 = vshrl.u32 %v775, 16
        %v1123 = vrot.slane %v1121, 4
        %v1124 = vshll.u32 %v775, 16
        %v1126 = vrot.slane %v1124, 5
        %v1127 = vor.u32 %v1123, %v1126
        %v1128 = vrot.slane %v1127, 4
        %v1130 = vshll.u32 %v776, 16
        %v1132 = vrot.slane %v1130, 5
        %v1133 = vsel %vm807, %v1128, %v1132
        %v1134 = vshrl.u32 %v776, 16
        %v1136 = vrot.slane %v1134, 4
        %v1137 = vor.u32 %v1136, %v1132
        %v1138 = vrot.slane %v1137, 4
        %v1140 = vshll.u32 %v802, 16
        %v1142 = vrot.slane %v1140, 5
        %v1143 = vsel %vm807, %v1138, %v1142
        %v1145 = vshrl.u32 %v777, 16
        %v1147 = vrot.slane %v1145, 4
        %v1148 = vshll.u32 %v777, 16
        %v1150 = vrot.slane %v1148, 5
        %v1151 = vor.u32 %v1147, %v1150
        %v1152 = vrot.slane %v1151, 4
        %v1154 = vshll.u32 %v778, 16
        %v1156 = vrot.slane %v1154, 5
        %v1157 = vsel %vm807, %v1152, %v1156
        %v1158 = vshrl.u32 %v778, 16
        %v1160 = vrot.slane %v1158, 4
        %v1161 = vor.u32 %v1160, %v1156
        %v1162 = vrot.slane %v1161, 4
        %v1164 = vshll.u32 %v803, 16
        %v1166 = vrot.slane %v1164, 5
        %v1167 = vsel %vm807, %v1162, %v1166
        %v1169 = vshrl.u32 %v779, 16
        %v1171 = vrot.slane %v1169, 4
        %v1172 = vshll.u32 %v779, 16
        %v1174 = vrot.slane %v1172, 5
        %v1175 = vor.u32 %v1171, %v1174
        %v1176 = vrot.slane %v1175, 4
        %v1178 = vshll.u32 %v780, 16
        %v1180 = vrot.slane %v1178, 5
        %v1181 = vsel %vm807, %v1176, %v1180
        %v1182 = vshrl.u32 %v780, 16
        %v1184 = vrot.slane %v1182, 4
        %v1185 = vor.u32 %v1184, %v1180
        %v1186 = vrot.slane %v1185, 4
        %v1188 = vshll.u32 %v804, 16
        %v1190 = vrot.slane %v1188, 5
        %v1191 = vsel %vm807, %v1186, %v1190
        %s1192 = scalar_lea.vmem %s1, 32
        %v1193 = vld [vmem:[%s1192] sm:$0xf]
        %v1194 = vld [vmem:[%s1192 + $0x4] sm:$0xf]
        %v1195 = vld [vmem:[%s1192 + $0x8] sm:$0xf]
        %v1196 = vld [vmem:[%s1192 + $0xc] sm:$0xf]
        %v1197 = vld [vmem:[%s1192 + $0x10] sm:$0xf]
        %v1198 = vld [vmem:[%s1192 + $0x14] sm:$0xf]
        %v1199 = vld [vmem:[%s1192 + $0x18] sm:$0xf]
        %v1200 = vld [vmem:[%s1192 + $0x1c] sm:$0xf]
        %v1201 = vunpack.c.l.b16 %v821
        %v1202 = vunpack.c.l.b16 %v831
        %v1203 = vunpack.c.l.b16 %v845
        %v1204 = vunpack.c.l.b16 %v855
        %v1205 = vunpack.c.l.b16 %v869
        %v1206 = vunpack.c.l.b16 %v879
        %v1207 = vunpack.c.l.b16 %v893
        %v1208 = vunpack.c.l.b16 %v903
        %v1209 = vunpack.c.l.b16 %v917
        %v1210 = vunpack.c.l.b16 %v927
        %v1211 = vunpack.c.l.b16 %v941
        %v1212 = vunpack.c.l.b16 %v951
        %v1213 = vunpack.c.l.b16 %v965
        %v1214 = vunpack.c.l.b16 %v975
        %v1215 = vunpack.c.l.b16 %v989
        %v1216 = vunpack.c.l.b16 %v999
        %v1217 = vunpack.c.l.b16 %v1013
        %v1218 = vunpack.c.l.b16 %v1023
        %v1219 = vunpack.c.l.b16 %v1037
        %v1220 = vunpack.c.l.b16 %v1047
        %v1221 = vunpack.c.l.b16 %v1061
        %v1222 = vunpack.c.l.b16 %v1071
        %v1223 = vunpack.c.l.b16 %v1085
        %v1224 = vunpack.c.l.b16 %v1095
        %v1225 = vunpack.c.l.b16 %v1109
        %v1226 = vunpack.c.l.b16 %v1119
        %v1227 = vunpack.c.l.b16 %v1133
        %v1228 = vunpack.c.l.b16 %v1143
        %v1229 = vunpack.c.l.b16 %v1157
        %v1230 = vunpack.c.l.b16 %v1167
        %v1231 = vunpack.c.l.b16 %v1181
        %v1232 = vunpack.c.l.b16 %v1191
        %v1233 = vpack.c.b16 %v1202, %v1201
        %v1234 = vpack.c.b16 %v1204, %v1203
        %v1235 = vpack.c.b16 %v1206, %v1205
        %v1236 = vpack.c.b16 %v1208, %v1207
        %v1237 = vpack.c.b16 %v1210, %v1209
        %v1238 = vpack.c.b16 %v1212, %v1211
        %v1239 = vpack.c.b16 %v1214, %v1213
        %v1240 = vpack.c.b16 %v1216, %v1215
        %v1241 = vpack.c.b16 %v1218, %v1217
        %v1242 = vpack.c.b16 %v1220, %v1219
        %v1243 = vpack.c.b16 %v1222, %v1221
        %v1244 = vpack.c.b16 %v1224, %v1223
        %v1245 = vpack.c.b16 %v1226, %v1225
        %v1246 = vpack.c.b16 %v1228, %v1227
        %v1247 = vpack.c.b16 %v1230, %v1229
        %v1248 = vpack.c.b16 %v1232, %v1231
        %v1257 = vunpack.c.l.b16 %v1193
        %v1258 = vunpack.c.l.b16 %v1194
        %v1259 = vunpack.c.l.b16 %v1195
        %v1260 = vunpack.c.l.b16 %v1196
        %v1261 = vunpack.c.l.b16 %v1197
        %v1262 = vunpack.c.l.b16 %v1198
        %v1263 = vunpack.c.l.b16 %v1199
        %v1264 = vunpack.c.l.b16 %v1200
        %v1265 = vpack.c.b16 %v1258, %v1257
        %v1266 = vpack.c.b16 %v1260, %v1259
        %v1267 = vpack.c.b16 %v1262, %v1261
        %v1268 = vpack.c.b16 %v1264, %v1263
        %vm1273 = vcmask 523264
        %v1275 = vsel %vm1273, %v1233, 0
        %v1278 = vsel %vm1273, %v1234, 0
        %v1281 = vsel %vm1273, %v1235, 0
        %v1284 = vsel %vm1273, %v1236, 0
        %v1287 = vsel %vm1273, %v1237, 0
        %v1290 = vsel %vm1273, %v1238, 0
        %v1293 = vsel %vm1273, %v1239, 0
        %v1296 = vsel %vm1273, %v1240, 0
        %v1299 = vsel %vm1273, %v1241, 0
        %v1302 = vsel %vm1273, %v1242, 0
        %v1305 = vsel %vm1273, %v1243, 0
        %v1308 = vsel %vm1273, %v1244, 0
        %v1311 = vsel %vm1273, %v1245, 0
        %v1314 = vsel %vm1273, %v1246, 0
        %v1317 = vsel %vm1273, %v1247, 0
        %v1320 = vsel %vm1273, %v1248, 0
        %1322 = vmatprep.subr.bf16.mxu0 0
        %1323 = vmatpush1.bf16.msra.mxu0 %v1265
        %1324 = vmatprep.subr.bf16.mxu0 0
        %1325 = vmatpush1.bf16.msra.mxu0 %v1266
        %1326 = vmatprep.subr.bf16.mxu0 0
        %1327 = vmatpush1.bf16.msra.mxu0 %v1267
        %1328 = vmatprep.subr.bf16.mxu0 0
        %1329 = vmatpush1.bf16.msra.mxu0 %v1268
        %1330 = vmatprep.subr.bf16.mxu0 0
        %1331 = vmatpush1.bf16.msra.mxu0 0
        %1332 = vmatprep.subr.bf16.mxu0 0
        %1333 = vmatpush1.bf16.msra.mxu0 0
        %1334 = vmatprep.subr.bf16.mxu0 0
        %1335 = vmatpush1.bf16.msra.mxu0 0
        %1336 = vmatprep.subr.bf16.mxu0 0
        %1337 = vmatpush1.bf16.msra.mxu0 0
        %1338 = vmatprep.subr.bf16.mxu0 0
        %1339 = vmatpush1.bf16.msra.mxu0 0
        %1340 = vmatprep.subr.bf16.mxu0 0
        %1341 = vmatpush1.bf16.msra.mxu0 0
        %1342 = vmatprep.subr.bf16.mxu0 0
        %1343 = vmatpush1.bf16.msra.mxu0 0
        %1344 = vmatprep.subr.bf16.mxu0 0
        %1345 = vmatpush1.bf16.msra.mxu0 0
        %1346 = vmatprep.subr.bf16.mxu0 0
        %1347 = vmatpush1.bf16.msra.mxu0 0
        %1348 = vmatprep.subr.bf16.mxu0 0
        %1349 = vmatpush1.bf16.msra.mxu0 0
        %1350 = vmatprep.subr.bf16.mxu0 0
        %1351 = vmatpush1.bf16.msra.mxu0 0
        %1352 = vmatprep.subr.bf16.mxu0 0
        %1353 = vmatpush1.bf16.msra.mxu0 0
        %1354 = vmatprep.mubr.bf16.mxu0 0
        %1355 = vmatmul.mubr.bf16.gmra.mrb[0].mxu0 %v1275
        %v1356 = vpop.f32.mrb[0].mxu0
        %v1357 = vadd.f32 0.0, %v1356
        %v1358 = vpop.f32.mrb[0].mxu0
        %v1359 = vpop.f32.mrb[0].mxu0
        %v1360 = vadd.f32 0.0, %v1359
        %v1361 = vpop.f32.mrb[0].mxu0
        %1362 = vmatprep.mubr.bf16.mxu0 0
        %1363 = vmatmul.mubr.bf16.gmra.mrb[0].mxu0 %v1278
        %v1364 = vpop.f32.mrb[0].mxu0
        %v1365 = vadd.f32 0.0, %v1364
        %v1366 = vpop.f32.mrb[0].mxu0
        %v1367 = vpop.f32.mrb[0].mxu0
        %v1368 = vadd.f32 0.0, %v1367
        %v1369 = vpop.f32.mrb[0].mxu0
        %1370 = vmatprep.mubr.bf16.mxu0 0
        %1371 = vmatmul.mubr.bf16.gmra.mrb[0].mxu0 %v1281
        %v1372 = vpop.f32.mrb[0].mxu0
        %v1373 = vadd.f32 0.0, %v1372
        %v1374 = vpop.f32.mrb[0].mxu0
        %v1375 = vpop.f32.mrb[0].mxu0
        %v1376 = vadd.f32 0.0, %v1375
        %v1377 = vpop.f32.mrb[0].mxu0
        %1378 = vmatprep.mubr.bf16.mxu0 0
        %1379 = vmatmul.mubr.bf16.gmra.mrb[0].mxu0 %v1284
        %v1380 = vpop.f32.mrb[0].mxu0
        %v1381 = vadd.f32 0.0, %v1380
        %v1382 = vpop.f32.mrb[0].mxu0
        %v1383 = vpop.f32.mrb[0].mxu0
        %v1384 = vadd.f32 0.0, %v1383
        %v1385 = vpop.f32.mrb[0].mxu0
        %1386 = vmatprep.mubr.bf16.mxu0 0
        %1387 = vmatmul.mubr.bf16.gmra.mrb[0].mxu0 %v1287
        %v1388 = vpop.f32.mrb[0].mxu0
        %v1389 = vadd.f32 0.0, %v1388
        %v1390 = vpop.f32.mrb[0].mxu0
        %v1391 = vpop.f32.mrb[0].mxu0
        %v1392 = vadd.f32 0.0, %v1391
        %v1393 = vpop.f32.mrb[0].mxu0
        %1394 = vmatprep.mubr.bf16.mxu0 0
        %1395 = vmatmul.mubr.bf16.gmra.mrb[0].mxu0 %v1290
        %v1396 = vpop.f32.mrb[0].mxu0
        %v1397 = vadd.f32 0.0, %v1396
        %v1398 = vpop.f32.mrb[0].mxu0
        %v1399 = vpop.f32.mrb[0].mxu0
        %v1400 = vadd.f32 0.0, %v1399
        %v1401 = vpop.f32.mrb[0].mxu0
        %1402 = vmatprep.mubr.bf16.mxu0 0
        %1403 = vmatmul.mubr.bf16.gmra.mrb[0].mxu0 %v1293
        %v1404 = vpop.f32.mrb[0].mxu0
        %v1405 = vadd.f32 0.0, %v1404
        %v1406 = vpop.f32.mrb[0].mxu0
        %v1407 = vpop.f32.mrb[0].mxu0
        %v1408 = vadd.f32 0.0, %v1407
        %v1409 = vpop.f32.mrb[0].mxu0
        %1410 = vmatprep.mubr.bf16.mxu0 0
        %1411 = vmatmul.mubr.bf16.gmra.mrb[0].mxu0 %v1296
        %v1412 = vpop.f32.mrb[0].mxu0
        %v1413 = vadd.f32 0.0, %v1412
        %v1414 = vpop.f32.mrb[0].mxu0
        %v1415 = vpop.f32.mrb[0].mxu0
        %v1416 = vadd.f32 0.0, %v1415
        %v1417 = vpop.f32.mrb[0].mxu0
        %1418 = vmatprep.mubr.bf16.mxu0 0
        %1419 = vmatmul.mubr.bf16.gmra.mrb[0].mxu0 %v1299
        %v1420 = vpop.f32.mrb[0].mxu0
        %v1421 = vadd.f32 0.0, %v1420
        %v1422 = vpop.f32.mrb[0].mxu0
        %v1423 = vpop.f32.mrb[0].mxu0
        %v1424 = vadd.f32 0.0, %v1423
        %v1425 = vpop.f32.mrb[0].mxu0
        %1426 = vmatprep.mubr.bf16.mxu0 0
        %1427 = vmatmul.mubr.bf16.gmra.mrb[0].mxu0 %v1302
        %v1428 = vpop.f32.mrb[0].mxu0
        %v1429 = vadd.f32 0.0, %v1428
        %v1430 = vpop.f32.mrb[0].mxu0
        %v1431 = vpop.f32.mrb[0].mxu0
        %v1432 = vadd.f32 0.0, %v1431
        %v1433 = vpop.f32.mrb[0].mxu0
        %1434 = vmatprep.mubr.bf16.mxu0 0
        %1435 = vmatmul.mubr.bf16.gmra.mrb[0].mxu0 %v1305
        %v1436 = vpop.f32.mrb[0].mxu0
        %v1437 = vadd.f32 0.0, %v1436
        %v1438 = vpop.f32.mrb[0].mxu0
        %v1439 = vpop.f32.mrb[0].mxu0
        %v1440 = vadd.f32 0.0, %v1439
        %v1441 = vpop.f32.mrb[0].mxu0
        %1442 = vmatprep.mubr.bf16.mxu0 0
        %1443 = vmatmul.mubr.bf16.gmra.mrb[0].mxu0 %v1308
        %v1444 = vpop.f32.mrb[0].mxu0
        %v1445 = vadd.f32 0.0, %v1444
        %v1446 = vpop.f32.mrb[0].mxu0
        %v1447 = vpop.f32.mrb[0].mxu0
        %v1448 = vadd.f32 0.0, %v1447
        %v1449 = vpop.f32.mrb[0].mxu0
        %1450 = vmatprep.mubr.bf16.mxu0 0
        %1451 = vmatmul.mubr.bf16.gmra.mrb[0].mxu0 %v1311
        %v1452 = vpop.f32.mrb[0].mxu0
        %v1453 = vadd.f32 0.0, %v1452
        %v1454 = vpop.f32.mrb[0].mxu0
        %v1455 = vpop.f32.mrb[0].mxu0
        %v1456 = vadd.f32 0.0, %v1455
        %v1457 = vpop.f32.mrb[0].mxu0
        %1458 = vmatprep.mubr.bf16.mxu0 0
        %1459 = vmatmul.mubr.bf16.gmra.mrb[0].mxu0 %v1314
        %v1460 = vpop.f32.mrb[0].mxu0
        %v1461 = vadd.f32 0.0, %v1460
        %v1462 = vpop.f32.mrb[0].mxu0
        %v1463 = vpop.f32.mrb[0].mxu0
        %v1464 = vadd.f32 0.0, %v1463
        %v1465 = vpop.f32.mrb[0].mxu0
        %1466 = vmatprep.mubr.bf16.mxu0 0
        %1467 = vmatmul.mubr.bf16.gmra.mrb[0].mxu0 %v1317
        %v1468 = vpop.f32.mrb[0].mxu0
        %v1469 = vadd.f32 0.0, %v1468
        %v1470 = vpop.f32.mrb[0].mxu0
        %v1471 = vpop.f32.mrb[0].mxu0
        %v1472 = vadd.f32 0.0, %v1471
        %v1473 = vpop.f32.mrb[0].mxu0
        %1474 = vmatprep.mubr.bf16.mxu0 0
        %1475 = vmatmul.mubr.bf16.gmra.mrb[0].mxu0 %v1320
        %v1476 = vpop.f32.mrb[0].mxu0
        %v1477 = vadd.f32 0.0, %v1476
        %v1478 = vpop.f32.mrb[0].mxu0
        %v1479 = vpop.f32.mrb[0].mxu0
        %v1480 = vadd.f32 0.0, %v1479
        %v1481 = vpop.f32.mrb[0].mxu0
        %1482 = vdwg.mxu0
        %v1515 = vunpack.c.l.b16 %v749
        %v1516 = vunpack.c.l.b16 %v750
        %v1517 = vunpack.c.l.b16 %v751
        %v1518 = vunpack.c.l.b16 %v752
        %v1519 = vunpack.c.l.b16 %v753
        %v1520 = vunpack.c.l.b16 %v754
        %v1521 = vunpack.c.l.b16 %v755
        %v1522 = vunpack.c.l.b16 %v756
        %v1523 = vunpack.c.l.b16 %v757
        %v1524 = vunpack.c.l.b16 %v758
        %v1525 = vunpack.c.l.b16 %v759
        %v1526 = vunpack.c.l.b16 %v760
        %v1527 = vunpack.c.l.b16 %v761
        %v1528 = vunpack.c.l.b16 %v762
        %v1529 = vunpack.c.l.b16 %v763
        %v1530 = vunpack.c.l.b16 %v764
        %v1531 = vunpack.c.l.b16 %v765
        %v1532 = vunpack.c.l.b16 %v766
        %v1533 = vunpack.c.l.b16 %v767
        %v1534 = vunpack.c.l.b16 %v768
        %v1535 = vunpack.c.l.b16 %v769
        %v1536 = vunpack.c.l.b16 %v770
        %v1537 = vunpack.c.l.b16 %v771
        %v1538 = vunpack.c.l.b16 %v772
        %v1539 = vunpack.c.l.b16 %v773
        %v1540 = vunpack.c.l.b16 %v774
        %v1541 = vunpack.c.l.b16 %v775
        %v1542 = vunpack.c.l.b16 %v776
        %v1543 = vunpack.c.l.b16 %v777
        %v1544 = vunpack.c.l.b16 %v778
        %v1545 = vunpack.c.l.b16 %v779
        %v1546 = vunpack.c.l.b16 %v780
        %v1547 = vpack.c.b16 %v1516, %v1515
        %v1548 = vpack.c.b16 %v1518, %v1517
        %v1549 = vpack.c.b16 %v1520, %v1519
        %v1550 = vpack.c.b16 %v1522, %v1521
        %v1551 = vpack.c.b16 %v1524, %v1523
        %v1552 = vpack.c.b16 %v1526, %v1525
        %v1553 = vpack.c.b16 %v1528, %v1527
        %v1554 = vpack.c.b16 %v1530, %v1529
        %v1555 = vpack.c.b16 %v1532, %v1531
        %v1556 = vpack.c.b16 %v1534, %v1533
        %v1557 = vpack.c.b16 %v1536, %v1535
        %v1558 = vpack.c.b16 %v1538, %v1537
        %v1559 = vpack.c.b16 %v1540, %v1539
        %v1560 = vpack.c.b16 %v1542, %v1541
        %v1561 = vpack.c.b16 %v1544, %v1543
        %v1562 = vpack.c.b16 %v1546, %v1545
        %v1571 = vunpack.c.l.b16 %v781
        %v1572 = vunpack.c.l.b16 %v782
        %v1573 = vunpack.c.l.b16 %v783
        %v1574 = vunpack.c.l.b16 %v784
        %v1575 = vunpack.c.l.b16 %v785
        %v1576 = vunpack.c.l.b16 %v786
        %v1577 = vunpack.c.l.b16 %v787
        %v1578 = vunpack.c.l.b16 %v788
        %v1579 = vpack.c.b16 %v1572, %v1571
        %v1580 = vpack.c.b16 %v1574, %v1573
        %v1581 = vpack.c.b16 %v1576, %v1575
        %v1582 = vpack.c.b16 %v1578, %v1577
        %v1588 = vsel %vm1273, %v1547, 0
        %v1591 = vsel %vm1273, %v1548, 0
        %v1594 = vsel %vm1273, %v1549, 0
        %v1597 = vsel %vm1273, %v1550, 0
        %v1600 = vsel %vm1273, %v1551, 0
        %v1603 = vsel %vm1273, %v1552, 0
        %v1606 = vsel %vm1273, %v1553, 0
        %v1609 = vsel %vm1273, %v1554, 0
        %v1612 = vsel %vm1273, %v1555, 0
        %v1615 = vsel %vm1273, %v1556, 0
        %v1618 = vsel %vm1273, %v1557, 0
        %v1621 = vsel %vm1273, %v1558, 0
        %v1624 = vsel %vm1273, %v1559, 0
        %v1627 = vsel %vm1273, %v1560, 0
        %v1630 = vsel %vm1273, %v1561, 0
        %v1633 = vsel %vm1273, %v1562, 0
        %1635 = vmatprep.subr.bf16.mxu0 0
        %1636 = vmatpush1.bf16.msra.mxu0 %v1579
        %1637 = vmatprep.subr.bf16.mxu0 0
        %1638 = vmatpush1.bf16.msra.mxu0 %v1580
        %1639 = vmatprep.subr.bf16.mxu0 0
        %1640 = vmatpush1.bf16.msra.mxu0 %v1581
        %1641 = vmatprep.subr.bf16.mxu0 0
        %1642 = vmatpush1.bf16.msra.mxu0 %v1582
        %1643 = vmatprep.subr.bf16.mxu0 0
        %1644 = vmatpush1.bf16.msra.mxu0 0
        %1645 = vmatprep.subr.bf16.mxu0 0
        %1646 = vmatpush1.bf16.msra.mxu0 0
        %1647 = vmatprep.subr.bf16.mxu0 0
        %1648 = vmatpush1.bf16.msra.mxu0 0
        %1649 = vmatprep.subr.bf16.mxu0 0
        %1650 = vmatpush1.bf16.msra.mxu0 0
        %1651 = vmatprep.subr.bf16.mxu0 0
        %1652 = vmatpush1.bf16.msra.mxu0 0
        %1653 = vmatprep.subr.bf16.mxu0 0
        %1654 = vmatpush1.bf16.msra.mxu0 0
        %1655 = vmatprep.subr.bf16.mxu0 0
        %1656 = vmatpush1.bf16.msra.mxu0 0
        %1657 = vmatprep.subr.bf16.mxu0 0
        %1658 = vmatpush1.bf16.msra.mxu0 0
        %1659 = vmatprep.subr.bf16.mxu0 0
        %1660 = vmatpush1.bf16.msra.mxu0 0
        %1661 = vmatprep.subr.bf16.mxu0 0
        %1662 = vmatpush1.bf16.msra.mxu0 0
        %1663 = vmatprep.subr.bf16.mxu0 0
        %1664 = vmatpush1.bf16.msra.mxu0 0
        %1665 = vmatprep.subr.bf16.mxu0 0
        %1666 = vmatpush1.bf16.msra.mxu0 0
        %1667 = vmatprep.mubr.bf16.mxu0 0
        %1668 = vmatmul.mubr.bf16.gmra.mrb[0].mxu0 %v1588
        %v1669 = vpop.f32.mrb[0].mxu0
        %v1670 = vadd.f32 %v1357, %v1669
        %v1671 = vpop.f32.mrb[0].mxu0
        %v1672 = vpop.f32.mrb[0].mxu0
        %v1673 = vadd.f32 %v1360, %v1672
        %v1674 = vpop.f32.mrb[0].mxu0
        %1675 = vmatprep.mubr.bf16.mxu0 0
        %1676 = vmatmul.mubr.bf16.gmra.mrb[0].mxu0 %v1591
        %v1677 = vpop.f32.mrb[0].mxu0
        %v1678 = vadd.f32 %v1365, %v1677
        %v1679 = vpop.f32.mrb[0].mxu0
        %v1680 = vpop.f32.mrb[0].mxu0
        %v1681 = vadd.f32 %v1368, %v1680
        %v1682 = vpop.f32.mrb[0].mxu0
        %1683 = vmatprep.mubr.bf16.mxu0 0
        %1684 = vmatmul.mubr.bf16.gmra.mrb[0].mxu0 %v1594
        %v1685 = vpop.f32.mrb[0].mxu0
        %v1686 = vadd.f32 %v1373, %v1685
        %v1687 = vpop.f32.mrb[0].mxu0
        %v1688 = vpop.f32.mrb[0].mxu0
        %v1689 = vadd.f32 %v1376, %v1688
        %v1690 = vpop.f32.mrb[0].mxu0
        %1691 = vmatprep.mubr.bf16.mxu0 0
        %1692 = vmatmul.mubr.bf16.gmra.mrb[0].mxu0 %v1597
        %v1693 = vpop.f32.mrb[0].mxu0
        %v1694 = vadd.f32 %v1381, %v1693
        %v1695 = vpop.f32.mrb[0].mxu0
        %v1696 = vpop.f32.mrb[0].mxu0
        %v1697 = vadd.f32 %v1384, %v1696
        %v1698 = vpop.f32.mrb[0].mxu0
        %1699 = vmatprep.mubr.bf16.mxu0 0
        %1700 = vmatmul.mubr.bf16.gmra.mrb[0].mxu0 %v1600
        %v1701 = vpop.f32.mrb[0].mxu0
        %v1702 = vadd.f32 %v1389, %v1701
        %v1703 = vpop.f32.mrb[0].mxu0
        %v1704 = vpop.f32.mrb[0].mxu0
        %v1705 = vadd.f32 %v1392, %v1704
        %v1706 = vpop.f32.mrb[0].mxu0
        %1707 = vmatprep.mubr.bf16.mxu0 0
        %1708 = vmatmul.mubr.bf16.gmra.mrb[0].mxu0 %v1603
        %v1709 = vpop.f32.mrb[0].mxu0
        %v1710 = vadd.f32 %v1397, %v1709
        %v1711 = vpop.f32.mrb[0].mxu0
        %v1712 = vpop.f32.mrb[0].mxu0
        %v1713 = vadd.f32 %v1400, %v1712
        %v1714 = vpop.f32.mrb[0].mxu0
        %1715 = vmatprep.mubr.bf16.mxu0 0
        %1716 = vmatmul.mubr.bf16.gmra.mrb[0].mxu0 %v1606
        %v1717 = vpop.f32.mrb[0].mxu0
        %v1718 = vadd.f32 %v1405, %v1717
        %v1719 = vpop.f32.mrb[0].mxu0
        %v1720 = vpop.f32.mrb[0].mxu0
        %v1721 = vadd.f32 %v1408, %v1720
        %v1722 = vpop.f32.mrb[0].mxu0
        %1723 = vmatprep.mubr.bf16.mxu0 0
        %1724 = vmatmul.mubr.bf16.gmra.mrb[0].mxu0 %v1609
        %v1725 = vpop.f32.mrb[0].mxu0
        %v1726 = vadd.f32 %v1413, %v1725
        %v1727 = vpop.f32.mrb[0].mxu0
        %v1728 = vpop.f32.mrb[0].mxu0
        %v1729 = vadd.f32 %v1416, %v1728
        %v1730 = vpop.f32.mrb[0].mxu0
        %1731 = vmatprep.mubr.bf16.mxu0 0
        %1732 = vmatmul.mubr.bf16.gmra.mrb[0].mxu0 %v1612
        %v1733 = vpop.f32.mrb[0].mxu0
        %v1734 = vadd.f32 %v1421, %v1733
        %v1735 = vpop.f32.mrb[0].mxu0
        %v1736 = vpop.f32.mrb[0].mxu0
        %v1737 = vadd.f32 %v1424, %v1736
        %v1738 = vpop.f32.mrb[0].mxu0
        %1739 = vmatprep.mubr.bf16.mxu0 0
        %1740 = vmatmul.mubr.bf16.gmra.mrb[0].mxu0 %v1615
        %v1741 = vpop.f32.mrb[0].mxu0
        %v1742 = vadd.f32 %v1429, %v1741
        %v1743 = vpop.f32.mrb[0].mxu0
        %v1744 = vpop.f32.mrb[0].mxu0
        %v1745 = vadd.f32 %v1432, %v1744
        %v1746 = vpop.f32.mrb[0].mxu0
        %1747 = vmatprep.mubr.bf16.mxu0 0
        %1748 = vmatmul.mubr.bf16.gmra.mrb[0].mxu0 %v1618
        %v1749 = vpop.f32.mrb[0].mxu0
        %v1750 = vadd.f32 %v1437, %v1749
        %v1751 = vpop.f32.mrb[0].mxu0
        %v1752 = vpop.f32.mrb[0].mxu0
        %v1753 = vadd.f32 %v1440, %v1752
        %v1754 = vpop.f32.mrb[0].mxu0
        %1755 = vmatprep.mubr.bf16.mxu0 0
        %1756 = vmatmul.mubr.bf16.gmra.mrb[0].mxu0 %v1621
        %v1757 = vpop.f32.mrb[0].mxu0
        %v1758 = vadd.f32 %v1445, %v1757
        %v1759 = vpop.f32.mrb[0].mxu0
        %v1760 = vpop.f32.mrb[0].mxu0
        %v1761 = vadd.f32 %v1448, %v1760
        %v1762 = vpop.f32.mrb[0].mxu0
        %1763 = vmatprep.mubr.bf16.mxu0 0
        %1764 = vmatmul.mubr.bf16.gmra.mrb[0].mxu0 %v1624
        %v1765 = vpop.f32.mrb[0].mxu0
        %v1766 = vadd.f32 %v1453, %v1765
        %v1767 = vpop.f32.mrb[0].mxu0
        %v1768 = vpop.f32.mrb[0].mxu0
        %v1769 = vadd.f32 %v1456, %v1768
        %v1770 = vpop.f32.mrb[0].mxu0
        %1771 = vmatprep.mubr.bf16.mxu0 0
        %1772 = vmatmul.mubr.bf16.gmra.mrb[0].mxu0 %v1627
        %v1773 = vpop.f32.mrb[0].mxu0
        %v1774 = vadd.f32 %v1461, %v1773
        %v1775 = vpop.f32.mrb[0].mxu0
        %v1776 = vpop.f32.mrb[0].mxu0
        %v1777 = vadd.f32 %v1464, %v1776
        %v1778 = vpop.f32.mrb[0].mxu0
        %1779 = vmatprep.mubr.bf16.mxu0 0
        %1780 = vmatmul.mubr.bf16.gmra.mrb[0].mxu0 %v1630
        %v1781 = vpop.f32.mrb[0].mxu0
        %v1782 = vadd.f32 %v1469, %v1781
        %v1783 = vpop.f32.mrb[0].mxu0
        %v1784 = vpop.f32.mrb[0].mxu0
        %v1785 = vadd.f32 %v1472, %v1784
        %v1786 = vpop.f32.mrb[0].mxu0
        %1787 = vmatprep.mubr.bf16.mxu0 0
        %1788 = vmatmul.mubr.bf16.gmra.mrb[0].mxu0 %v1633
        %v1789 = vpop.f32.mrb[0].mxu0
        %v1790 = vadd.f32 %v1477, %v1789
        %v1791 = vpop.f32.mrb[0].mxu0
        %v1792 = vpop.f32.mrb[0].mxu0
        %v1793 = vadd.f32 %v1480, %v1792
        %v1794 = vpop.f32.mrb[0].mxu0
        %1795 = vdwg.mxu0
        %v1796 = vld [vmem:[#allocation2] sm:$0xe]
        %v1797 = vld [vmem:[#allocation2 + $0xc] sm:$0xe]
        %v1798 = vld [vmem:[#allocation2 + $0x18] sm:$0xe]
        %v1799 = vld [vmem:[#allocation2 + $0x24] sm:$0xe]
        %v1800 = vld [vmem:[#allocation2 + $0x30] sm:$0xe]
        %v1801 = vld [vmem:[#allocation2 + $0x3c] sm:$0xe]
        %v1802 = vld [vmem:[#allocation2 + $0x48] sm:$0xe]
        %v1803 = vld [vmem:[#allocation2 + $0x54] sm:$0xe]
        %v1804 = vld [vmem:[#allocation2 + $0x60] sm:$0xe]
        %v1805 = vld [vmem:[#allocation2 + $0x6c] sm:$0xe]
        %v1806 = vld [vmem:[#allocation2 + $0x78] sm:$0xe]
        %v1807 = vld [vmem:[#allocation2 + $0x84] sm:$0xe]
        %v1808 = vld [vmem:[#allocation2 + $0x90] sm:$0xe]
        %v1809 = vld [vmem:[#allocation2 + $0x9c] sm:$0xe]
        %v1810 = vld [vmem:[#allocation2 + $0xa8] sm:$0xe]
        %v1811 = vld [vmem:[#allocation2 + $0xb4] sm:$0xe]
        %vm1844 = vcmask 1042432
        %vm1845 = vcmask 1046532
        %vm1846 = vmor %vm1844, %vm1845
        %v1847 = vrot.slane %v1796, 5
        %v1848 = vrot.slane %v1847, 4
        %v1849 = vrot.slane %v750, 5
        %v1850 = vsel %vm1846, %v1848, %v1849
        %v1851 = vrot.slane %v1849, 4
        %v1852 = vrot.slane %v789, 5
        %v1853 = vsel %vm1846, %v1851, %v1852
        %v1854 = vrot.slane %v1797, 5
        %v1855 = vrot.slane %v1854, 4
        %v1856 = vrot.slane %v752, 5
        %v1857 = vsel %vm1846, %v1855, %v1856
        %v1858 = vrot.slane %v1856, 4
        %v1859 = vrot.slane %v790, 5
        %v1860 = vsel %vm1846, %v1858, %v1859
        %v1861 = vrot.slane %v1798, 5
        %v1862 = vrot.slane %v1861, 4
        %v1863 = vrot.slane %v754, 5
        %v1864 = vsel %vm1846, %v1862, %v1863
        %v1865 = vrot.slane %v1863, 4
        %v1866 = vrot.slane %v791, 5
        %v1867 = vsel %vm1846, %v1865, %v1866
        %v1868 = vrot.slane %v1799, 5
        %v1869 = vrot.slane %v1868, 4
        %v1870 = vrot.slane %v756, 5
        %v1871 = vsel %vm1846, %v1869, %v1870
        %v1872 = vrot.slane %v1870, 4
        %v1873 = vrot.slane %v792, 5
        %v1874 = vsel %vm1846, %v1872, %v1873
        %v1875 = vrot.slane %v1800, 5
        %v1876 = vrot.slane %v1875, 4
        %v1877 = vrot.slane %v758, 5
        %v1878 = vsel %vm1846, %v1876, %v1877
        %v1879 = vrot.slane %v1877, 4
        %v1880 = vrot.slane %v793, 5
        %v1881 = vsel %vm1846, %v1879, %v1880
        %v1882 = vrot.slane %v1801, 5
        %v1883 = vrot.slane %v1882, 4
        %v1884 = vrot.slane %v760, 5
        %v1885 = vsel %vm1846, %v1883, %v1884
        %v1886 = vrot.slane %v1884, 4
        %v1887 = vrot.slane %v794, 5
        %v1888 = vsel %vm1846, %v1886, %v1887
        %v1889 = vrot.slane %v1802, 5
        %v1890 = vrot.slane %v1889, 4
        %v1891 = vrot.slane %v762, 5
        %v1892 = vsel %vm1846, %v1890, %v1891
        %v1893 = vrot.slane %v1891, 4
        %v1894 = vrot.slane %v795, 5
        %v1895 = vsel %vm1846, %v1893, %v1894
        %v1896 = vrot.slane %v1803, 5
        %v1897 = vrot.slane %v1896, 4
        %v1898 = vrot.slane %v764, 5
        %v1899 = vsel %vm1846, %v1897, %v1898
        %v1900 = vrot.slane %v1898, 4
        %v1901 = vrot.slane %v796, 5
        %v1902 = vsel %vm1846, %v1900, %v1901
        %v1903 = vrot.slane %v1804, 5
        %v1904 = vrot.slane %v1903, 4
        %v1905 = vrot.slane %v766, 5
        %v1906 = vsel %vm1846, %v1904, %v1905
        %v1907 = vrot.slane %v1905, 4
        %v1908 = vrot.slane %v797, 5
        %v1909 = vsel %vm1846, %v1907, %v1908
        %v1910 = vrot.slane %v1805, 5
        %v1911 = vrot.slane %v1910, 4
        %v1912 = vrot.slane %v768, 5
        %v1913 = vsel %vm1846, %v1911, %v1912
        %v1914 = vrot.slane %v1912, 4
        %v1915 = vrot.slane %v798, 5
        %v1916 = vsel %vm1846, %v1914, %v1915
        %v1917 = vrot.slane %v1806, 5
        %v1918 = vrot.slane %v1917, 4
        %v1919 = vrot.slane %v770, 5
        %v1920 = vsel %vm1846, %v1918, %v1919
        %v1921 = vrot.slane %v1919, 4
        %v1922 = vrot.slane %v799, 5
        %v1923 = vsel %vm1846, %v1921, %v1922
        %v1924 = vrot.slane %v1807, 5
        %v1925 = vrot.slane %v1924, 4
        %v1926 = vrot.slane %v772, 5
        %v1927 = vsel %vm1846, %v1925, %v1926
        %v1928 = vrot.slane %v1926, 4
        %v1929 = vrot.slane %v800, 5
        %v1930 = vsel %vm1846, %v1928, %v1929
        %v1931 = vrot.slane %v1808, 5
        %v1932 = vrot.slane %v1931, 4
        %v1933 = vrot.slane %v774, 5
        %v1934 = vsel %vm1846, %v1932, %v1933
        %v1935 = vrot.slane %v1933, 4
        %v1936 = vrot.slane %v801, 5
        %v1937 = vsel %vm1846, %v1935, %v1936
        %v1938 = vrot.slane %v1809, 5
        %v1939 = vrot.slane %v1938, 4
        %v1940 = vrot.slane %v776, 5
        %v1941 = vsel %vm1846, %v1939, %v1940
        %v1942 = vrot.slane %v1940, 4
        %v1943 = vrot.slane %v802, 5
        %v1944 = vsel %vm1846, %v1942, %v1943
        %v1945 = vrot.slane %v1810, 5
        %v1946 = vrot.slane %v1945, 4
        %v1947 = vrot.slane %v778, 5
        %v1948 = vsel %vm1846, %v1946, %v1947
        %v1949 = vrot.slane %v1947, 4
        %v1950 = vrot.slane %v803, 5
        %v1951 = vsel %vm1846, %v1949, %v1950
        %v1952 = vrot.slane %v1811, 5
        %v1953 = vrot.slane %v1952, 4
        %v1954 = vrot.slane %v780, 5
        %v1955 = vsel %vm1846, %v1953, %v1954
        %v1956 = vrot.slane %v1954, 4
        %v1957 = vrot.slane %v804, 5
        %v1958 = vsel %vm1846, %v1956, %v1957
        %s1959 = scalar_lea.vmem %s1, 64
        %v1960 = vld [vmem:[%s1959] sm:$0xf]
        %v1961 = vld [vmem:[%s1959 + $0x4] sm:$0xf]
        %v1962 = vld [vmem:[%s1959 + $0x8] sm:$0xf]
        %v1963 = vld [vmem:[%s1959 + $0xc] sm:$0xf]
        %v1964 = vld [vmem:[%s1959 + $0x10] sm:$0xf]
        %v1965 = vld [vmem:[%s1959 + $0x14] sm:$0xf]
        %v1966 = vld [vmem:[%s1959 + $0x18] sm:$0xf]
        %v1967 = vld [vmem:[%s1959 + $0x1c] sm:$0xf]
        %v1968 = vunpack.c.l.b16 %v1850
        %v1969 = vunpack.c.l.b16 %v1853
        %v1970 = vunpack.c.l.b16 %v1857
        %v1971 = vunpack.c.l.b16 %v1860
        %v1972 = vunpack.c.l.b16 %v1864
        %v1973 = vunpack.c.l.b16 %v1867
        %v1974 = vunpack.c.l.b16 %v1871
        %v1975 = vunpack.c.l.b16 %v1874
        %v1976 = vunpack.c.l.b16 %v1878
        %v1977 = vunpack.c.l.b16 %v1881
        %v1978 = vunpack.c.l.b16 %v1885
        %v1979 = vunpack.c.l.b16 %v1888
        %v1980 = vunpack.c.l.b16 %v1892
        %v1981 = vunpack.c.l.b16 %v1895
        %v1982 = vunpack.c.l.b16 %v1899
        %v1983 = vunpack.c.l.b16 %v1902
        %v1984 = vunpack.c.l.b16 %v1906
        %v1985 = vunpack.c.l.b16 %v1909
        %v1986 = vunpack.c.l.b16 %v1913
        %v1987 = vunpack.c.l.b16 %v1916
        %v1988 = vunpack.c.l.b16 %v1920
        %v1989 = vunpack.c.l.b16 %v1923
        %v1990 = vunpack.c.l.b16 %v1927
        %v1991 = vunpack.c.l.b16 %v1930
        %v1992 = vunpack.c.l.b16 %v1934
        %v1993 = vunpack.c.l.b16 %v1937
        %v1994 = vunpack.c.l.b16 %v1941
        %v1995 = vunpack.c.l.b16 %v1944
        %v1996 = vunpack.c.l.b16 %v1948
        %v1997 = vunpack.c.l.b16 %v1951
        %v1998 = vunpack.c.l.b16 %v1955
        %v1999 = vunpack.c.l.b16 %v1958
        %v2000 = vpack.c.b16 %v1969, %v1968
        %v2001 = vpack.c.b16 %v1971, %v1970
        %v2002 = vpack.c.b16 %v1973, %v1972
        %v2003 = vpack.c.b16 %v1975, %v1974
        %v2004 = vpack.c.b16 %v1977, %v1976
        %v2005 = vpack.c.b16 %v1979, %v1978
        %v2006 = vpack.c.b16 %v1981, %v1980
        %v2007 = vpack.c.b16 %v1983, %v1982
        %v2008 = vpack.c.b16 %v1985, %v1984
        %v2009 = vpack.c.b16 %v1987, %v1986
        %v2010 = vpack.c.b16 %v1989, %v1988
        %v2011 = vpack.c.b16 %v1991, %v1990
        %v2012 = vpack.c.b16 %v1993, %v1992
        %v2013 = vpack.c.b16 %v1995, %v1994
        %v2014 = vpack.c.b16 %v1997, %v1996
        %v2015 = vpack.c.b16 %v1999, %v1998
        %v2024 = vunpack.c.l.b16 %v1960
        %v2025 = vunpack.c.l.b16 %v1961
        %v2026 = vunpack.c.l.b16 %v1962
        %v2027 = vunpack.c.l.b16 %v1963
        %v2028 = vunpack.c.l.b16 %v1964
        %v2029 = vunpack.c.l.b16 %v1965
        %v2030 = vunpack.c.l.b16 %v1966
        %v2031 = vunpack.c.l.b16 %v1967
        %v2032 = vpack.c.b16 %v2025, %v2024
        %v2033 = vpack.c.b16 %v2027, %v2026
        %v2034 = vpack.c.b16 %v2029, %v2028
        %v2035 = vpack.c.b16 %v2031, %v2030
        %v2041 = vsel %vm1273, %v2000, 0
        %v2044 = vsel %vm1273, %v2001, 0
        %v2047 = vsel %vm1273, %v2002, 0
        %v2050 = vsel %vm1273, %v2003, 0
        %v2053 = vsel %vm1273, %v2004, 0
        %v2056 = vsel %vm1273, %v2005, 0
        %v2059 = vsel %vm1273, %v2006, 0
        %v2062 = vsel %vm1273, %v2007, 0
        %v2065 = vsel %vm1273, %v2008, 0
        %v2068 = vsel %vm1273, %v2009, 0
        %v2071 = vsel %vm1273, %v2010, 0
        %v2074 = vsel %vm1273, %v2011, 0
        %v2077 = vsel %vm1273, %v2012, 0
        %v2080 = vsel %vm1273, %v2013, 0
        %v2083 = vsel %vm1273, %v2014, 0
        %v2086 = vsel %vm1273, %v2015, 0
        %2088 = vmatprep.subr.bf16.mxu0 0
        %2089 = vmatpush1.bf16.msra.mxu0 %v2032
        %2090 = vmatprep.subr.bf16.mxu0 0
        %2091 = vmatpush1.bf16.msra.mxu0 %v2033
        %2092 = vmatprep.subr.bf16.mxu0 0
        %2093 = vmatpush1.bf16.msra.mxu0 %v2034
        %2094 = vmatprep.subr.bf16.mxu0 0
        %2095 = vmatpush1.bf16.msra.mxu0 %v2035
        %2096 = vmatprep.subr.bf16.mxu0 0
        %2097 = vmatpush1.bf16.msra.mxu0 0
        %2098 = vmatprep.subr.bf16.mxu0 0
        %2099 = vmatpush1.bf16.msra.mxu0 0
        %2100 = vmatprep.subr.bf16.mxu0 0
        %2101 = vmatpush1.bf16.msra.mxu0 0
        %2102 = vmatprep.subr.bf16.mxu0 0
        %2103 = vmatpush1.bf16.msra.mxu0 0
        %2104 = vmatprep.subr.bf16.mxu0 0
        %2105 = vmatpush1.bf16.msra.mxu0 0
        %2106 = vmatprep.subr.bf16.mxu0 0
        %2107 = vmatpush1.bf16.msra.mxu0 0
        %2108 = vmatprep.subr.bf16.mxu0 0
        %2109 = vmatpush1.bf16.msra.mxu0 0
        %2110 = vmatprep.subr.bf16.mxu0 0
        %2111 = vmatpush1.bf16.msra.mxu0 0
        %2112 = vmatprep.subr.bf16.mxu0 0
        %2113 = vmatpush1.bf16.msra.mxu0 0
        %2114 = vmatprep.subr.bf16.mxu0 0
        %2115 = vmatpush1.bf16.msra.mxu0 0
        %2116 = vmatprep.subr.bf16.mxu0 0
        %2117 = vmatpush1.bf16.msra.mxu0 0
        %2118 = vmatprep.subr.bf16.mxu0 0
        %2119 = vmatpush1.bf16.msra.mxu0 0
        %2120 = vmatprep.mubr.bf16.mxu0 0
        %2121 = vmatmul.mubr.bf16.gmra.mrb[0].mxu0 %v2041
        %v2122 = vpop.f32.mrb[0].mxu0
        %v2123 = vadd.f32 0.0, %v2122
        %v2124 = vpop.f32.mrb[0].mxu0
        %v2125 = vpop.f32.mrb[0].mxu0
        %v2126 = vadd.f32 0.0, %v2125
        %v2127 = vpop.f32.mrb[0].mxu0
        %2128 = vmatprep.mubr.bf16.mxu0 0
        %2129 = vmatmul.mubr.bf16.gmra.mrb[0].mxu0 %v2044
        %v2130 = vpop.f32.mrb[0].mxu0
        %v2131 = vadd.f32 0.0, %v2130
        %v2132 = vpop.f32.mrb[0].mxu0
        %v2133 = vpop.f32.mrb[0].mxu0
        %v2134 = vadd.f32 0.0, %v2133
        %v2135 = vpop.f32.mrb[0].mxu0
        %2136 = vmatprep.mubr.bf16.mxu0 0
        %2137 = vmatmul.mubr.bf16.gmra.mrb[0].mxu0 %v2047
        %v2138 = vpop.f32.mrb[0].mxu0
        %v2139 = vadd.f32 0.0, %v2138
        %v2140 = vpop.f32.mrb[0].mxu0
        %v2141 = vpop.f32.mrb[0].mxu0
        %v2142 = vadd.f32 0.0, %v2141
        %v2143 = vpop.f32.mrb[0].mxu0
        %2144 = vmatprep.mubr.bf16.mxu0 0
        %2145 = vmatmul.mubr.bf16.gmra.mrb[0].mxu0 %v2050
        %v2146 = vpop.f32.mrb[0].mxu0
        %v2147 = vadd.f32 0.0, %v2146
        %v2148 = vpop.f32.mrb[0].mxu0
        %v2149 = vpop.f32.mrb[0].mxu0
        %v2150 = vadd.f32 0.0, %v2149
        %v2151 = vpop.f32.mrb[0].mxu0
        %2152 = vmatprep.mubr.bf16.mxu0 0
        %2153 = vmatmul.mubr.bf16.gmra.mrb[0].mxu0 %v2053
        %v2154 = vpop.f32.mrb[0].mxu0
        %v2155 = vadd.f32 0.0, %v2154
        %v2156 = vpop.f32.mrb[0].mxu0
        %v2157 = vpop.f32.mrb[0].mxu0
        %v2158 = vadd.f32 0.0, %v2157
        %v2159 = vpop.f32.mrb[0].mxu0
        %2160 = vmatprep.mubr.bf16.mxu0 0
        %2161 = vmatmul.mubr.bf16.gmra.mrb[0].mxu0 %v2056
        %v2162 = vpop.f32.mrb[0].mxu0
        %v2163 = vadd.f32 0.0, %v2162
        %v2164 = vpop.f32.mrb[0].mxu0
        %v2165 = vpop.f32.mrb[0].mxu0
        %v2166 = vadd.f32 0.0, %v2165
        %v2167 = vpop.f32.mrb[0].mxu0
        %2168 = vmatprep.mubr.bf16.mxu0 0
        %2169 = vmatmul.mubr.bf16.gmra.mrb[0].mxu0 %v2059
        %v2170 = vpop.f32.mrb[0].mxu0
        %v2171 = vadd.f32 0.0, %v2170
        %v2172 = vpop.f32.mrb[0].mxu0
        %v2173 = vpop.f32.mrb[0].mxu0
        %v2174 = vadd.f32 0.0, %v2173
        %v2175 = vpop.f32.mrb[0].mxu0
        %2176 = vmatprep.mubr.bf16.mxu0 0
        %2177 = vmatmul.mubr.bf16.gmra.mrb[0].mxu0 %v2062
        %v2178 = vpop.f32.mrb[0].mxu0
        %v2179 = vadd.f32 0.0, %v2178
        %v2180 = vpop.f32.mrb[0].mxu0
        %v2181 = vpop.f32.mrb[0].mxu0
        %v2182 = vadd.f32 0.0, %v2181
        %v2183 = vpop.f32.mrb[0].mxu0
        %2184 = vmatprep.mubr.bf16.mxu0 0
        %2185 = vmatmul.mubr.bf16.gmra.mrb[0].mxu0 %v2065
        %v2186 = vpop.f32.mrb[0].mxu0
        %v2187 = vadd.f32 0.0, %v2186
        %v2188 = vpop.f32.mrb[0].mxu0
        %v2189 = vpop.f32.mrb[0].mxu0
        %v2190 = vadd.f32 0.0, %v2189
        %v2191 = vpop.f32.mrb[0].mxu0
        %2192 = vmatprep.mubr.bf16.mxu0 0
        %2193 = vmatmul.mubr.bf16.gmra.mrb[0].mxu0 %v2068
        %v2194 = vpop.f32.mrb[0].mxu0
        %v2195 = vadd.f32 0.0, %v2194
        %v2196 = vpop.f32.mrb[0].mxu0
        %v2197 = vpop.f32.mrb[0].mxu0
        %v2198 = vadd.f32 0.0, %v2197
        %v2199 = vpop.f32.mrb[0].mxu0
        %2200 = vmatprep.mubr.bf16.mxu0 0
        %2201 = vmatmul.mubr.bf16.gmra.mrb[0].mxu0 %v2071
        %v2202 = vpop.f32.mrb[0].mxu0
        %v2203 = vadd.f32 0.0, %v2202
        %v2204 = vpop.f32.mrb[0].mxu0
        %v2205 = vpop.f32.mrb[0].mxu0
        %v2206 = vadd.f32 0.0, %v2205
        %v2207 = vpop.f32.mrb[0].mxu0
        %2208 = vmatprep.mubr.bf16.mxu0 0
        %2209 = vmatmul.mubr.bf16.gmra.mrb[0].mxu0 %v2074
        %v2210 = vpop.f32.mrb[0].mxu0
        %v2211 = vadd.f32 0.0, %v2210
        %v2212 = vpop.f32.mrb[0].mxu0
        %v2213 = vpop.f32.mrb[0].mxu0
        %v2214 = vadd.f32 0.0, %v2213
        %v2215 = vpop.f32.mrb[0].mxu0
        %2216 = vmatprep.mubr.bf16.mxu0 0
        %2217 = vmatmul.mubr.bf16.gmra.mrb[0].mxu0 %v2077
        %v2218 = vpop.f32.mrb[0].mxu0
        %v2219 = vadd.f32 0.0, %v2218
        %v2220 = vpop.f32.mrb[0].mxu0
        %v2221 = vpop.f32.mrb[0].mxu0
        %v2222 = vadd.f32 0.0, %v2221
        %v2223 = vpop.f32.mrb[0].mxu0
        %2224 = vmatprep.mubr.bf16.mxu0 0
        %2225 = vmatmul.mubr.bf16.gmra.mrb[0].mxu0 %v2080
        %v2226 = vpop.f32.mrb[0].mxu0
        %v2227 = vadd.f32 0.0, %v2226
        %v2228 = vpop.f32.mrb[0].mxu0
        %v2229 = vpop.f32.mrb[0].mxu0
        %v2230 = vadd.f32 0.0, %v2229
        %v2231 = vpop.f32.mrb[0].mxu0
        %2232 = vmatprep.mubr.bf16.mxu0 0
        %2233 = vmatmul.mubr.bf16.gmra.mrb[0].mxu0 %v2083
        %v2234 = vpop.f32.mrb[0].mxu0
        %v2235 = vadd.f32 0.0, %v2234
        %v2236 = vpop.f32.mrb[0].mxu0
        %v2237 = vpop.f32.mrb[0].mxu0
        %v2238 = vadd.f32 0.0, %v2237
        %v2239 = vpop.f32.mrb[0].mxu0
        %2240 = vmatprep.mubr.bf16.mxu0 0
        %2241 = vmatmul.mubr.bf16.gmra.mrb[0].mxu0 %v2086
        %v2242 = vpop.f32.mrb[0].mxu0
        %v2243 = vadd.f32 0.0, %v2242
        %v2244 = vpop.f32.mrb[0].mxu0
        %v2245 = vpop.f32.mrb[0].mxu0
        %v2246 = vadd.f32 0.0, %v2245
        %v2247 = vpop.f32.mrb[0].mxu0
        %2248 = vdwg.mxu0
        %v2249 = vadd.f32 %v1670, %v2123
        %v2250 = vadd.f32 %v1673, %v2126
        %v2251 = vadd.f32 %v1678, %v2131
        %v2252 = vadd.f32 %v1681, %v2134
        %v2253 = vadd.f32 %v1686, %v2139
        %v2254 = vadd.f32 %v1689, %v2142
        %v2255 = vadd.f32 %v1694, %v2147
        %v2256 = vadd.f32 %v1697, %v2150
        %v2257 = vadd.f32 %v1702, %v2155
        %v2258 = vadd.f32 %v1705, %v2158
        %v2259 = vadd.f32 %v1710, %v2163
        %v2260 = vadd.f32 %v1713, %v2166
        %v2261 = vadd.f32 %v1718, %v2171
        %v2262 = vadd.f32 %v1721, %v2174
        %v2263 = vadd.f32 %v1726, %v2179
        %v2264 = vadd.f32 %v1729, %v2182
        %v2265 = vadd.f32 %v1734, %v2187
        %v2266 = vadd.f32 %v1737, %v2190
        %v2267 = vadd.f32 %v1742, %v2195
        %v2268 = vadd.f32 %v1745, %v2198
        %v2269 = vadd.f32 %v1750, %v2203
        %v2270 = vadd.f32 %v1753, %v2206
        %v2271 = vadd.f32 %v1758, %v2211
        %v2272 = vadd.f32 %v1761, %v2214
        %v2273 = vadd.f32 %v1766, %v2219
        %v2274 = vadd.f32 %v1769, %v2222
        %v2275 = vadd.f32 %v1774, %v2227
        %v2276 = vadd.f32 %v1777, %v2230
        %v2277 = vadd.f32 %v1782, %v2235
        %v2278 = vadd.f32 %v1785, %v2238
        %v2279 = vadd.f32 %v1790, %v2243
        %v2280 = vadd.f32 %v1793, %v2246
        %v2281 = vld [vmem:[%s631] sm:$0xf]
        %v2282 = vld [vmem:[%s631 + $0x4] sm:$0xf]
        %v2283 = vld [vmem:[%s631 + $0xc] sm:$0xf]
        %v2284 = vld [vmem:[%s631 + $0x10] sm:$0xf]
        %v2285 = vld [vmem:[%s631 + $0x18] sm:$0xf]
        %v2286 = vld [vmem:[%s631 + $0x1c] sm:$0xf]
        %v2287 = vld [vmem:[%s631 + $0x24] sm:$0xf]
        %v2288 = vld [vmem:[%s631 + $0x28] sm:$0xf]
        %v2289 = vld [vmem:[%s631 + $0x30] sm:$0xf]
        %v2290 = vld [vmem:[%s631 + $0x34] sm:$0xf]
        %v2291 = vld [vmem:[%s631 + $0x3c] sm:$0xf]
        %v2292 = vld [vmem:[%s631 + $0x40] sm:$0xf]
        %v2293 = vld [vmem:[%s631 + $0x48] sm:$0xf]
        %v2294 = vld [vmem:[%s631 + $0x4c] sm:$0xf]
        %v2295 = vld [vmem:[%s631 + $0x54] sm:$0xf]
        %v2296 = vld [vmem:[%s631 + $0x58] sm:$0xf]
        %v2297 = vld [vmem:[%s631 + $0x60] sm:$0xf]
        %v2298 = vld [vmem:[%s631 + $0x64] sm:$0xf]
        %v2299 = vld [vmem:[%s631 + $0x6c] sm:$0xf]
        %v2300 = vld [vmem:[%s631 + $0x70] sm:$0xf]
        %v2301 = vld [vmem:[%s631 + $0x78] sm:$0xf]
        %v2302 = vld [vmem:[%s631 + $0x7c] sm:$0xf]
        %v2303 = vld [vmem:[%s631 + $0x84] sm:$0xf]
        %v2304 = vld [vmem:[%s631 + $0x88] sm:$0xf]
        %v2305 = vld [vmem:[%s631 + $0x90] sm:$0xf]
        %v2306 = vld [vmem:[%s631 + $0x94] sm:$0xf]
        %v2307 = vld [vmem:[%s631 + $0x9c] sm:$0xf]
        %v2308 = vld [vmem:[%s631 + $0xa0] sm:$0xf]
        %v2309 = vld [vmem:[%s631 + $0xa8] sm:$0xf]
        %v2310 = vld [vmem:[%s631 + $0xac] sm:$0xf]
        %v2311 = vld [vmem:[%s631 + $0xb4] sm:$0xf]
        %v2312 = vld [vmem:[%s631 + $0xb8] sm:$0xf]
        %s2313 = scalar_lea.vmem %s1, 96
        %v2314 = vld [vmem:[%s2313] sm:$0xf]
        %v2315 = vld [vmem:[%s2313 + $0x4] sm:$0xf]
        %v2316 = vld [vmem:[%s2313 + $0x8] sm:$0xf]
        %v2317 = vld [vmem:[%s2313 + $0xc] sm:$0xf]
        %v2318 = vld [vmem:[%s2313 + $0x10] sm:$0xf]
        %v2319 = vld [vmem:[%s2313 + $0x14] sm:$0xf]
        %v2320 = vld [vmem:[%s2313 + $0x18] sm:$0xf]
        %v2321 = vld [vmem:[%s2313 + $0x1c] sm:$0xf]
        %v2354 = vunpack.c.l.b16 %v2281
        %v2355 = vunpack.c.l.b16 %v2282
        %v2356 = vunpack.c.l.b16 %v2283
        %v2357 = vunpack.c.l.b16 %v2284
        %v2358 = vunpack.c.l.b16 %v2285
        %v2359 = vunpack.c.l.b16 %v2286
        %v2360 = vunpack.c.l.b16 %v2287
        %v2361 = vunpack.c.l.b16 %v2288
        %v2362 = vunpack.c.l.b16 %v2289
        %v2363 = vunpack.c.l.b16 %v2290
        %v2364 = vunpack.c.l.b16 %v2291
        %v2365 = vunpack.c.l.b16 %v2292
        %v2366 = vunpack.c.l.b16 %v2293
        %v2367 = vunpack.c.l.b16 %v2294
        %v2368 = vunpack.c.l.b16 %v2295
        %v2369 = vunpack.c.l.b16 %v2296
        %v2370 = vunpack.c.l.b16 %v2297
        %v2371 = vunpack.c.l.b16 %v2298
        %v2372 = vunpack.c.l.b16 %v2299
        %v2373 = vunpack.c.l.b16 %v2300
        %v2374 = vunpack.c.l.b16 %v2301
        %v2375 = vunpack.c.l.b16 %v2302
        %v2376 = vunpack.c.l.b16 %v2303
        %v2377 = vunpack.c.l.b16 %v2304
        %v2378 = vunpack.c.l.b16 %v2305
        %v2379 = vunpack.c.l.b16 %v2306
        %v2380 = vunpack.c.l.b16 %v2307
        %v2381 = vunpack.c.l.b16 %v2308
        %v2382 = vunpack.c.l.b16 %v2309
        %v2383 = vunpack.c.l.b16 %v2310
        %v2384 = vunpack.c.l.b16 %v2311
        %v2385 = vunpack.c.l.b16 %v2312
        %v2386 = vpack.c.b16 %v2355, %v2354
        %v2387 = vpack.c.b16 %v2357, %v2356
        %v2388 = vpack.c.b16 %v2359, %v2358
        %v2389 = vpack.c.b16 %v2361, %v2360
        %v2390 = vpack.c.b16 %v2363, %v2362
        %v2391 = vpack.c.b16 %v2365, %v2364
        %v2392 = vpack.c.b16 %v2367, %v2366
        %v2393 = vpack.c.b16 %v2369, %v2368
        %v2394 = vpack.c.b16 %v2371, %v2370
        %v2395 = vpack.c.b16 %v2373, %v2372
        %v2396 = vpack.c.b16 %v2375, %v2374
        %v2397 = vpack.c.b16 %v2377, %v2376
        %v2398 = vpack.c.b16 %v2379, %v2378
        %v2399 = vpack.c.b16 %v2381, %v2380
        %v2400 = vpack.c.b16 %v2383, %v2382
        %v2401 = vpack.c.b16 %v2385, %v2384
        %v2410 = vunpack.c.l.b16 %v2314
        %v2411 = vunpack.c.l.b16 %v2315
        %v2412 = vunpack.c.l.b16 %v2316
        %v2413 = vunpack.c.l.b16 %v2317
        %v2414 = vunpack.c.l.b16 %v2318
        %v2415 = vunpack.c.l.b16 %v2319
        %v2416 = vunpack.c.l.b16 %v2320
        %v2417 = vunpack.c.l.b16 %v2321
        %v2418 = vpack.c.b16 %v2411, %v2410
        %v2419 = vpack.c.b16 %v2413, %v2412
        %v2420 = vpack.c.b16 %v2415, %v2414
        %v2421 = vpack.c.b16 %v2417, %v2416
        %v2427 = vsel %vm1273, %v2386, 0
        %v2430 = vsel %vm1273, %v2387, 0
        %v2433 = vsel %vm1273, %v2388, 0
        %v2436 = vsel %vm1273, %v2389, 0
        %v2439 = vsel %vm1273, %v2390, 0
        %v2442 = vsel %vm1273, %v2391, 0
        %v2445 = vsel %vm1273, %v2392, 0
        %v2448 = vsel %vm1273, %v2393, 0
        %v2451 = vsel %vm1273, %v2394, 0
        %v2454 = vsel %vm1273, %v2395, 0
        %v2457 = vsel %vm1273, %v2396, 0
        %v2460 = vsel %vm1273, %v2397, 0
        %v2463 = vsel %vm1273, %v2398, 0
        %v2466 = vsel %vm1273, %v2399, 0
        %v2469 = vsel %vm1273, %v2400, 0
        %v2472 = vsel %vm1273, %v2401, 0
        %2474 = vmatprep.subr.bf16.mxu0 0
        %2475 = vmatpush1.bf16.msra.mxu0 %v2418
        %2476 = vmatprep.subr.bf16.mxu0 0
        %2477 = vmatpush1.bf16.msra.mxu0 %v2419
        %2478 = vmatprep.subr.bf16.mxu0 0
        %2479 = vmatpush1.bf16.msra.mxu0 %v2420
        %2480 = vmatprep.subr.bf16.mxu0 0
        %2481 = vmatpush1.bf16.msra.mxu0 %v2421
        %2482 = vmatprep.subr.bf16.mxu0 0
        %2483 = vmatpush1.bf16.msra.mxu0 0
        %2484 = vmatprep.subr.bf16.mxu0 0
        %2485 = vmatpush1.bf16.msra.mxu0 0
        %2486 = vmatprep.subr.bf16.mxu0 0
        %2487 = vmatpush1.bf16.msra.mxu0 0
        %2488 = vmatprep.subr.bf16.mxu0 0
        %2489 = vmatpush1.bf16.msra.mxu0 0
        %2490 = vmatprep.subr.bf16.mxu0 0
        %2491 = vmatpush1.bf16.msra.mxu0 0
        %2492 = vmatprep.subr.bf16.mxu0 0
        %2493 = vmatpush1.bf16.msra.mxu0 0
        %2494 = vmatprep.subr.bf16.mxu0 0
        %2495 = vmatpush1.bf16.msra.mxu0 0
        %2496 = vmatprep.subr.bf16.mxu0 0
        %2497 = vmatpush1.bf16.msra.mxu0 0
        %2498 = vmatprep.subr.bf16.mxu0 0
        %2499 = vmatpush1.bf16.msra.mxu0 0
        %2500 = vmatprep.subr.bf16.mxu0 0
        %2501 = vmatpush1.bf16.msra.mxu0 0
        %2502 = vmatprep.subr.bf16.mxu0 0
        %2503 = vmatpush1.bf16.msra.mxu0 0
        %2504 = vmatprep.subr.bf16.mxu0 0
        %2505 = vmatpush1.bf16.msra.mxu0 0
        %2506 = vmatprep.mubr.bf16.mxu0 0
        %2507 = vmatmul.mubr.bf16.gmra.mrb[0].mxu0 %v2427
        %v2508 = vpop.f32.mrb[0].mxu0
        %v2509 = vadd.f32 0.0, %v2508
        %v2510 = vpop.f32.mrb[0].mxu0
        %v2511 = vpop.f32.mrb[0].mxu0
        %v2512 = vadd.f32 0.0, %v2511
        %v2513 = vpop.f32.mrb[0].mxu0
        %2514 = vmatprep.mubr.bf16.mxu0 0
        %2515 = vmatmul.mubr.bf16.gmra.mrb[0].mxu0 %v2430
        %v2516 = vpop.f32.mrb[0].mxu0
        %v2517 = vadd.f32 0.0, %v2516
        %v2518 = vpop.f32.mrb[0].mxu0
        %v2519 = vpop.f32.mrb[0].mxu0
        %v2520 = vadd.f32 0.0, %v2519
        %v2521 = vpop.f32.mrb[0].mxu0
        %2522 = vmatprep.mubr.bf16.mxu0 0
        %2523 = vmatmul.mubr.bf16.gmra.mrb[0].mxu0 %v2433
        %v2524 = vpop.f32.mrb[0].mxu0
        %v2525 = vadd.f32 0.0, %v2524
        %v2526 = vpop.f32.mrb[0].mxu0
        %v2527 = vpop.f32.mrb[0].mxu0
        %v2528 = vadd.f32 0.0, %v2527
        %v2529 = vpop.f32.mrb[0].mxu0
        %2530 = vmatprep.mubr.bf16.mxu0 0
        %2531 = vmatmul.mubr.bf16.gmra.mrb[0].mxu0 %v2436
        %v2532 = vpop.f32.mrb[0].mxu0
        %v2533 = vadd.f32 0.0, %v2532
        %v2534 = vpop.f32.mrb[0].mxu0
        %v2535 = vpop.f32.mrb[0].mxu0
        %v2536 = vadd.f32 0.0, %v2535
        %v2537 = vpop.f32.mrb[0].mxu0
        %2538 = vmatprep.mubr.bf16.mxu0 0
        %2539 = vmatmul.mubr.bf16.gmra.mrb[0].mxu0 %v2439
        %v2540 = vpop.f32.mrb[0].mxu0
        %v2541 = vadd.f32 0.0, %v2540
        %v2542 = vpop.f32.mrb[0].mxu0
        %v2543 = vpop.f32.mrb[0].mxu0
        %v2544 = vadd.f32 0.0, %v2543
        %v2545 = vpop.f32.mrb[0].mxu0
        %2546 = vmatprep.mubr.bf16.mxu0 0
        %2547 = vmatmul.mubr.bf16.gmra.mrb[0].mxu0 %v2442
        %v2548 = vpop.f32.mrb[0].mxu0
        %v2549 = vadd.f32 0.0, %v2548
        %v2550 = vpop.f32.mrb[0].mxu0
        %v2551 = vpop.f32.mrb[0].mxu0
        %v2552 = vadd.f32 0.0, %v2551
        %v2553 = vpop.f32.mrb[0].mxu0
        %2554 = vmatprep.mubr.bf16.mxu0 0
        %2555 = vmatmul.mubr.bf16.gmra.mrb[0].mxu0 %v2445
        %v2556 = vpop.f32.mrb[0].mxu0
        %v2557 = vadd.f32 0.0, %v2556
        %v2558 = vpop.f32.mrb[0].mxu0
        %v2559 = vpop.f32.mrb[0].mxu0
        %v2560 = vadd.f32 0.0, %v2559
        %v2561 = vpop.f32.mrb[0].mxu0
        %2562 = vmatprep.mubr.bf16.mxu0 0
        %2563 = vmatmul.mubr.bf16.gmra.mrb[0].mxu0 %v2448
        %v2564 = vpop.f32.mrb[0].mxu0
        %v2565 = vadd.f32 0.0, %v2564
        %v2566 = vpop.f32.mrb[0].mxu0
        %v2567 = vpop.f32.mrb[0].mxu0
        %v2568 = vadd.f32 0.0, %v2567
        %v2569 = vpop.f32.mrb[0].mxu0
        %2570 = vmatprep.mubr.bf16.mxu0 0
        %2571 = vmatmul.mubr.bf16.gmra.mrb[0].mxu0 %v2451
        %v2572 = vpop.f32.mrb[0].mxu0
        %v2573 = vadd.f32 0.0, %v2572
        %v2574 = vpop.f32.mrb[0].mxu0
        %v2575 = vpop.f32.mrb[0].mxu0
        %v2576 = vadd.f32 0.0, %v2575
        %v2577 = vpop.f32.mrb[0].mxu0
        %2578 = vmatprep.mubr.bf16.mxu0 0
        %2579 = vmatmul.mubr.bf16.gmra.mrb[0].mxu0 %v2454
        %v2580 = vpop.f32.mrb[0].mxu0
        %v2581 = vadd.f32 0.0, %v2580
        %v2582 = vpop.f32.mrb[0].mxu0
        %v2583 = vpop.f32.mrb[0].mxu0
        %v2584 = vadd.f32 0.0, %v2583
        %v2585 = vpop.f32.mrb[0].mxu0
        %2586 = vmatprep.mubr.bf16.mxu0 0
        %2587 = vmatmul.mubr.bf16.gmra.mrb[0].mxu0 %v2457
        %v2588 = vpop.f32.mrb[0].mxu0
        %v2589 = vadd.f32 0.0, %v2588
        %v2590 = vpop.f32.mrb[0].mxu0
        %v2591 = vpop.f32.mrb[0].mxu0
        %v2592 = vadd.f32 0.0, %v2591
        %v2593 = vpop.f32.mrb[0].mxu0
        %2594 = vmatprep.mubr.bf16.mxu0 0
        %2595 = vmatmul.mubr.bf16.gmra.mrb[0].mxu0 %v2460
        %v2596 = vpop.f32.mrb[0].mxu0
        %v2597 = vadd.f32 0.0, %v2596
        %v2598 = vpop.f32.mrb[0].mxu0
        %v2599 = vpop.f32.mrb[0].mxu0
        %v2600 = vadd.f32 0.0, %v2599
        %v2601 = vpop.f32.mrb[0].mxu0
        %2602 = vmatprep.mubr.bf16.mxu0 0
        %2603 = vmatmul.mubr.bf16.gmra.mrb[0].mxu0 %v2463
        %v2604 = vpop.f32.mrb[0].mxu0
        %v2605 = vadd.f32 0.0, %v2604
        %v2606 = vpop.f32.mrb[0].mxu0
        %v2607 = vpop.f32.mrb[0].mxu0
        %v2608 = vadd.f32 0.0, %v2607
        %v2609 = vpop.f32.mrb[0].mxu0
        %2610 = vmatprep.mubr.bf16.mxu0 0
        %2611 = vmatmul.mubr.bf16.gmra.mrb[0].mxu0 %v2466
        %v2612 = vpop.f32.mrb[0].mxu0
        %v2613 = vadd.f32 0.0, %v2612
        %v2614 = vpop.f32.mrb[0].mxu0
        %v2615 = vpop.f32.mrb[0].mxu0
        %v2616 = vadd.f32 0.0, %v2615
        %v2617 = vpop.f32.mrb[0].mxu0
        %2618 = vmatprep.mubr.bf16.mxu0 0
        %2619 = vmatmul.mubr.bf16.gmra.mrb[0].mxu0 %v2469
        %v2620 = vpop.f32.mrb[0].mxu0
        %v2621 = vadd.f32 0.0, %v2620
        %v2622 = vpop.f32.mrb[0].mxu0
        %v2623 = vpop.f32.mrb[0].mxu0
        %v2624 = vadd.f32 0.0, %v2623
        %v2625 = vpop.f32.mrb[0].mxu0
        %2626 = vmatprep.mubr.bf16.mxu0 0
        %2627 = vmatmul.mubr.bf16.gmra.mrb[0].mxu0 %v2472
        %v2628 = vpop.f32.mrb[0].mxu0
        %v2629 = vadd.f32 0.0, %v2628
        %v2630 = vpop.f32.mrb[0].mxu0
        %v2631 = vpop.f32.mrb[0].mxu0
        %v2632 = vadd.f32 0.0, %v2631
        %v2633 = vpop.f32.mrb[0].mxu0
        %2634 = vdwg.mxu0
        %v2635 = vadd.f32 %v2249, %v2509
        %v2636 = vadd.f32 %v2250, %v2512
        %v2637 = vadd.f32 %v2251, %v2517
        %v2638 = vadd.f32 %v2252, %v2520
        %v2639 = vadd.f32 %v2253, %v2525
        %v2640 = vadd.f32 %v2254, %v2528
        %v2641 = vadd.f32 %v2255, %v2533
        %v2642 = vadd.f32 %v2256, %v2536
        %v2643 = vadd.f32 %v2257, %v2541
        %v2644 = vadd.f32 %v2258, %v2544
        %v2645 = vadd.f32 %v2259, %v2549
        %v2646 = vadd.f32 %v2260, %v2552
        %v2647 = vadd.f32 %v2261, %v2557
        %v2648 = vadd.f32 %v2262, %v2560
        %v2649 = vadd.f32 %v2263, %v2565
        %v2650 = vadd.f32 %v2264, %v2568
        %v2651 = vadd.f32 %v2265, %v2573
        %v2652 = vadd.f32 %v2266, %v2576
        %v2653 = vadd.f32 %v2267, %v2581
        %v2654 = vadd.f32 %v2268, %v2584
        %v2655 = vadd.f32 %v2269, %v2589
        %v2656 = vadd.f32 %v2270, %v2592
        %v2657 = vadd.f32 %v2271, %v2597
        %v2658 = vadd.f32 %v2272, %v2600
        %v2659 = vadd.f32 %v2273, %v2605
        %v2660 = vadd.f32 %v2274, %v2608
        %v2661 = vadd.f32 %v2275, %v2613
        %v2662 = vadd.f32 %v2276, %v2616
        %v2663 = vadd.f32 %v2277, %v2621
        %v2664 = vadd.f32 %v2278, %v2624
        %v2665 = vadd.f32 %v2279, %v2629
        %v2666 = vadd.f32 %v2280, %v2632
        %v2667 = vld [vmem:[%s631] sm:$0xf]
        %v2668 = vld [vmem:[%s631 + $0x4] sm:$0xf]
        %v2669 = vld [vmem:[%s631 + $0x8] sm:$0x1]
        %v2670 = vld [vmem:[%s631 + $0xc] sm:$0xf]
        %v2671 = vld [vmem:[%s631 + $0x10] sm:$0xf]
        %v2672 = vld [vmem:[%s631 + $0x14] sm:$0x1]
        %v2673 = vld [vmem:[%s631 + $0x18] sm:$0xf]
        %v2674 = vld [vmem:[%s631 + $0x1c] sm:$0xf]
        %v2675 = vld [vmem:[%s631 + $0x20] sm:$0x1]
        %v2676 = vld [vmem:[%s631 + $0x24] sm:$0xf]
        %v2677 = vld [vmem:[%s631 + $0x28] sm:$0xf]
        %v2678 = vld [vmem:[%s631 + $0x2c] sm:$0x1]
        %v2679 = vld [vmem:[%s631 + $0x30] sm:$0xf]
        %v2680 = vld [vmem:[%s631 + $0x34] sm:$0xf]
        %v2681 = vld [vmem:[%s631 + $0x38] sm:$0x1]
        %v2682 = vld [vmem:[%s631 + $0x3c] sm:$0xf]
        %v2683 = vld [vmem:[%s631 + $0x40] sm:$0xf]
        %v2684 = vld [vmem:[%s631 + $0x44] sm:$0x1]
        %v2685 = vld [vmem:[%s631 + $0x48] sm:$0xf]
        %v2686 = vld [vmem:[%s631 + $0x4c] sm:$0xf]
        %v2687 = vld [vmem:[%s631 + $0x50] sm:$0x1]
        %v2688 = vld [vmem:[%s631 + $0x54] sm:$0xf]
        %v2689 = vld [vmem:[%s631 + $0x58] sm:$0xf]
        %v2690 = vld [vmem:[%s631 + $0x5c] sm:$0x1]
        %v2691 = vld [vmem:[%s631 + $0x60] sm:$0xf]
        %v2692 = vld [vmem:[%s631 + $0x64] sm:$0xf]
        %v2693 = vld [vmem:[%s631 + $0x68] sm:$0x1]
        %v2694 = vld [vmem:[%s631 + $0x6c] sm:$0xf]
        %v2695 = vld [vmem:[%s631 + $0x70] sm:$0xf]
        %v2696 = vld [vmem:[%s631 + $0x74] sm:$0x1]
        %v2697 = vld [vmem:[%s631 + $0x78] sm:$0xf]
        %v2698 = vld [vmem:[%s631 + $0x7c] sm:$0xf]
        %v2699 = vld [vmem:[%s631 + $0x80] sm:$0x1]
        %v2700 = vld [vmem:[%s631 + $0x84] sm:$0xf]
        %v2701 = vld [vmem:[%s631 + $0x88] sm:$0xf]
        %v2702 = vld [vmem:[%s631 + $0x8c] sm:$0x1]
        %v2703 = vld [vmem:[%s631 + $0x90] sm:$0xf]
        %v2704 = vld [vmem:[%s631 + $0x94] sm:$0xf]
        %v2705 = vld [vmem:[%s631 + $0x98] sm:$0x1]
        %v2706 = vld [vmem:[%s631 + $0x9c] sm:$0xf]
        %v2707 = vld [vmem:[%s631 + $0xa0] sm:$0xf]
        %v2708 = vld [vmem:[%s631 + $0xa4] sm:$0x1]
        %v2709 = vld [vmem:[%s631 + $0xa8] sm:$0xf]
        %v2710 = vld [vmem:[%s631 + $0xac] sm:$0xf]
        %v2711 = vld [vmem:[%s631 + $0xb0] sm:$0x1]
        %v2712 = vld [vmem:[%s631 + $0xb4] sm:$0xf]
        %v2713 = vld [vmem:[%s631 + $0xb8] sm:$0xf]
        %v2714 = vld [vmem:[%s631 + $0xbc] sm:$0x1]
        %v2716 = vshrl.u32 %v2667, 16
        %v2718 = vrot.slane %v2716, 4
        %v2719 = vshll.u32 %v2667, 16
        %v2721 = vrot.slane %v2719, 5
        %v2722 = vor.u32 %v2718, %v2721
        %v2723 = vrot.slane %v2722, 4
        %v2725 = vshll.u32 %v2668, 16
        %v2727 = vrot.slane %v2725, 5
        %v2728 = vsel %vm807, %v2723, %v2727
        %v2729 = vshrl.u32 %v2668, 16
        %v2731 = vrot.slane %v2729, 4
        %v2732 = vor.u32 %v2731, %v2727
        %v2733 = vrot.slane %v2732, 4
        %v2735 = vshll.u32 %v2669, 16
        %v2737 = vrot.slane %v2735, 5
        %v2738 = vsel %vm807, %v2733, %v2737
        %v2740 = vshrl.u32 %v2670, 16
        %v2742 = vrot.slane %v2740, 4
        %v2743 = vshll.u32 %v2670, 16
        %v2745 = vrot.slane %v2743, 5
        %v2746 = vor.u32 %v2742, %v2745
        %v2747 = vrot.slane %v2746, 4
        %v2749 = vshll.u32 %v2671, 16
        %v2751 = vrot.slane %v2749, 5
        %v2752 = vsel %vm807, %v2747, %v2751
        %v2753 = vshrl.u32 %v2671, 16
        %v2755 = vrot.slane %v2753, 4
        %v2756 = vor.u32 %v2755, %v2751
        %v2757 = vrot.slane %v2756, 4
        %v2759 = vshll.u32 %v2672, 16
        %v2761 = vrot.slane %v2759, 5
        %v2762 = vsel %vm807, %v2757, %v2761
        %v2764 = vshrl.u32 %v2673, 16
        %v2766 = vrot.slane %v2764, 4
        %v2767 = vshll.u32 %v2673, 16
        %v2769 = vrot.slane %v2767, 5
        %v2770 = vor.u32 %v2766, %v2769
        %v2771 = vrot.slane %v2770, 4
        %v2773 = vshll.u32 %v2674, 16
        %v2775 = vrot.slane %v2773, 5
        %v2776 = vsel %vm807, %v2771, %v2775
        %v2777 = vshrl.u32 %v2674, 16
        %v2779 = vrot.slane %v2777, 4
        %v2780 = vor.u32 %v2779, %v2775
        %v2781 = vrot.slane %v2780, 4
        %v2783 = vshll.u32 %v2675, 16
        %v2785 = vrot.slane %v2783, 5
        %v2786 = vsel %vm807, %v2781, %v2785
        %v2788 = vshrl.u32 %v2676, 16
        %v2790 = vrot.slane %v2788, 4
        %v2791 = vshll.u32 %v2676, 16
        %v2793 = vrot.slane %v2791, 5
        %v2794 = vor.u32 %v2790, %v2793
        %v2795 = vrot.slane %v2794, 4
        %v2797 = vshll.u32 %v2677, 16
        %v2799 = vrot.slane %v2797, 5
        %v2800 = vsel %vm807, %v2795, %v2799
        %v2801 = vshrl.u32 %v2677, 16
        %v2803 = vrot.slane %v2801, 4
        %v2804 = vor.u32 %v2803, %v2799
        %v2805 = vrot.slane %v2804, 4
        %v2807 = vshll.u32 %v2678, 16
        %v2809 = vrot.slane %v2807, 5
        %v2810 = vsel %vm807, %v2805, %v2809
        %v2812 = vshrl.u32 %v2679, 16
        %v2814 = vrot.slane %v2812, 4
        %v2815 = vshll.u32 %v2679, 16
        %v2817 = vrot.slane %v2815, 5
        %v2818 = vor.u32 %v2814, %v2817
        %v2819 = vrot.slane %v2818, 4
        %v2821 = vshll.u32 %v2680, 16
        %v2823 = vrot.slane %v2821, 5
        %v2824 = vsel %vm807, %v2819, %v2823
        %v2825 = vshrl.u32 %v2680, 16
        %v2827 = vrot.slane %v2825, 4
        %v2828 = vor.u32 %v2827, %v2823
        %v2829 = vrot.slane %v2828, 4
        %v2831 = vshll.u32 %v2681, 16
        %v2833 = vrot.slane %v2831, 5
        %v2834 = vsel %vm807, %v2829, %v2833
        %v2836 = vshrl.u32 %v2682, 16
        %v2838 = vrot.slane %v2836, 4
        %v2839 = vshll.u32 %v2682, 16
        %v2841 = vrot.slane %v2839, 5
        %v2842 = vor.u32 %v2838, %v2841
        %v2843 = vrot.slane %v2842, 4
        %v2845 = vshll.u32 %v2683, 16
        %v2847 = vrot.slane %v2845, 5
        %v2848 = vsel %vm807, %v2843, %v2847
        %v2849 = vshrl.u32 %v2683, 16
        %v2851 = vrot.slane %v2849, 4
        %v2852 = vor.u32 %v2851, %v2847
        %v2853 = vrot.slane %v2852, 4
        %v2855 = vshll.u32 %v2684, 16
        %v2857 = vrot.slane %v2855, 5
        %v2858 = vsel %vm807, %v2853, %v2857
        %v2860 = vshrl.u32 %v2685, 16
        %v2862 = vrot.slane %v2860, 4
        %v2863 = vshll.u32 %v2685, 16
        %v2865 = vrot.slane %v2863, 5
        %v2866 = vor.u32 %v2862, %v2865
        %v2867 = vrot.slane %v2866, 4
        %v2869 = vshll.u32 %v2686, 16
        %v2871 = vrot.slane %v2869, 5
        %v2872 = vsel %vm807, %v2867, %v2871
        %v2873 = vshrl.u32 %v2686, 16
        %v2875 = vrot.slane %v2873, 4
        %v2876 = vor.u32 %v2875, %v2871
        %v2877 = vrot.slane %v2876, 4
        %v2879 = vshll.u32 %v2687, 16
        %v2881 = vrot.slane %v2879, 5
        %v2882 = vsel %vm807, %v2877, %v2881
        %v2884 = vshrl.u32 %v2688, 16
        %v2886 = vrot.slane %v2884, 4
        %v2887 = vshll.u32 %v2688, 16
        %v2889 = vrot.slane %v2887, 5
        %v2890 = vor.u32 %v2886, %v2889
        %v2891 = vrot.slane %v2890, 4
        %v2893 = vshll.u32 %v2689, 16
        %v2895 = vrot.slane %v2893, 5
        %v2896 = vsel %vm807, %v2891, %v2895
        %v2897 = vshrl.u32 %v2689, 16
        %v2899 = vrot.slane %v2897, 4
        %v2900 = vor.u32 %v2899, %v2895
        %v2901 = vrot.slane %v2900, 4
        %v2903 = vshll.u32 %v2690, 16
        %v2905 = vrot.slane %v2903, 5
        %v2906 = vsel %vm807, %v2901, %v2905
        %v2908 = vshrl.u32 %v2691, 16
        %v2910 = vrot.slane %v2908, 4
        %v2911 = vshll.u32 %v2691, 16
        %v2913 = vrot.slane %v2911, 5
        %v2914 = vor.u32 %v2910, %v2913
        %v2915 = vrot.slane %v2914, 4
        %v2917 = vshll.u32 %v2692, 16
        %v2919 = vrot.slane %v2917, 5
        %v2920 = vsel %vm807, %v2915, %v2919
        %v2921 = vshrl.u32 %v2692, 16
        %v2923 = vrot.slane %v2921, 4
        %v2924 = vor.u32 %v2923, %v2919
        %v2925 = vrot.slane %v2924, 4
        %v2927 = vshll.u32 %v2693, 16
        %v2929 = vrot.slane %v2927, 5
        %v2930 = vsel %vm807, %v2925, %v2929
        %v2932 = vshrl.u32 %v2694, 16
        %v2934 = vrot.slane %v2932, 4
        %v2935 = vshll.u32 %v2694, 16
        %v2937 = vrot.slane %v2935, 5
        %v2938 = vor.u32 %v2934, %v2937
        %v2939 = vrot.slane %v2938, 4
        %v2941 = vshll.u32 %v2695, 16
        %v2943 = vrot.slane %v2941, 5
        %v2944 = vsel %vm807, %v2939, %v2943
        %v2945 = vshrl.u32 %v2695, 16
        %v2947 = vrot.slane %v2945, 4
        %v2948 = vor.u32 %v2947, %v2943
        %v2949 = vrot.slane %v2948, 4
        %v2951 = vshll.u32 %v2696, 16
        %v2953 = vrot.slane %v2951, 5
        %v2954 = vsel %vm807, %v2949, %v2953
        %v2956 = vshrl.u32 %v2697, 16
        %v2958 = vrot.slane %v2956, 4
        %v2959 = vshll.u32 %v2697, 16
        %v2961 = vrot.slane %v2959, 5
        %v2962 = vor.u32 %v2958, %v2961
        %v2963 = vrot.slane %v2962, 4
        %v2965 = vshll.u32 %v2698, 16
        %v2967 = vrot.slane %v2965, 5
        %v2968 = vsel %vm807, %v2963, %v2967
        %v2969 = vshrl.u32 %v2698, 16
        %v2971 = vrot.slane %v2969, 4
        %v2972 = vor.u32 %v2971, %v2967
        %v2973 = vrot.slane %v2972, 4
        %v2975 = vshll.u32 %v2699, 16
        %v2977 = vrot.slane %v2975, 5
        %v2978 = vsel %vm807, %v2973, %v2977
        %v2980 = vshrl.u32 %v2700, 16
        %v2982 = vrot.slane %v2980, 4
        %v2983 = vshll.u32 %v2700, 16
        %v2985 = vrot.slane %v2983, 5
        %v2986 = vor.u32 %v2982, %v2985
        %v2987 = vrot.slane %v2986, 4
        %v2989 = vshll.u32 %v2701, 16
        %v2991 = vrot.slane %v2989, 5
        %v2992 = vsel %vm807, %v2987, %v2991
        %v2993 = vshrl.u32 %v2701, 16
        %v2995 = vrot.slane %v2993, 4
        %v2996 = vor.u32 %v2995, %v2991
        %v2997 = vrot.slane %v2996, 4
        %v2999 = vshll.u32 %v2702, 16
        %v3001 = vrot.slane %v2999, 5
        %v3002 = vsel %vm807, %v2997, %v3001
        %v3004 = vshrl.u32 %v2703, 16
        %v3006 = vrot.slane %v3004, 4
        %v3007 = vshll.u32 %v2703, 16
        %v3009 = vrot.slane %v3007, 5
        %v3010 = vor.u32 %v3006, %v3009
        %v3011 = vrot.slane %v3010, 4
        %v3013 = vshll.u32 %v2704, 16
        %v3015 = vrot.slane %v3013, 5
        %v3016 = vsel %vm807, %v3011, %v3015
        %v3017 = vshrl.u32 %v2704, 16
        %v3019 = vrot.slane %v3017, 4
        %v3020 = vor.u32 %v3019, %v3015
        %v3021 = vrot.slane %v3020, 4
        %v3023 = vshll.u32 %v2705, 16
        %v3025 = vrot.slane %v3023, 5
        %v3026 = vsel %vm807, %v3021, %v3025
        %v3028 = vshrl.u32 %v2706, 16
        %v3030 = vrot.slane %v3028, 4
        %v3031 = vshll.u32 %v2706, 16
        %v3033 = vrot.slane %v3031, 5
        %v3034 = vor.u32 %v3030, %v3033
        %v3035 = vrot.slane %v3034, 4
        %v3037 = vshll.u32 %v2707, 16
        %v3039 = vrot.slane %v3037, 5
        %v3040 = vsel %vm807, %v3035, %v3039
        %v3041 = vshrl.u32 %v2707, 16
        %v3043 = vrot.slane %v3041, 4
        %v3044 = vor.u32 %v3043, %v3039
        %v3045 = vrot.slane %v3044, 4
        %v3047 = vshll.u32 %v2708, 16
        %v3049 = vrot.slane %v3047, 5
        %v3050 = vsel %vm807, %v3045, %v3049
        %v3052 = vshrl.u32 %v2709, 16
        %v3054 = vrot.slane %v3052, 4
        %v3055 = vshll.u32 %v2709, 16
        %v3057 = vrot.slane %v3055, 5
        %v3058 = vor.u32 %v3054, %v3057
        %v3059 = vrot.slane %v3058, 4
        %v3061 = vshll.u32 %v2710, 16
        %v3063 = vrot.slane %v3061, 5
        %v3064 = vsel %vm807, %v3059, %v3063
        %v3065 = vshrl.u32 %v2710, 16
        %v3067 = vrot.slane %v3065, 4
        %v3068 = vor.u32 %v3067, %v3063
        %v3069 = vrot.slane %v3068, 4
        %v3071 = vshll.u32 %v2711, 16
        %v3073 = vrot.slane %v3071, 5
        %v3074 = vsel %vm807, %v3069, %v3073
        %v3076 = vshrl.u32 %v2712, 16
        %v3078 = vrot.slane %v3076, 4
        %v3079 = vshll.u32 %v2712, 16
        %v3081 = vrot.slane %v3079, 5
        %v3082 = vor.u32 %v3078, %v3081
        %v3083 = vrot.slane %v3082, 4
        %v3085 = vshll.u32 %v2713, 16
        %v3087 = vrot.slane %v3085, 5
        %v3088 = vsel %vm807, %v3083, %v3087
        %v3089 = vshrl.u32 %v2713, 16
        %v3091 = vrot.slane %v3089, 4
        %v3092 = vor.u32 %v3091, %v3087
        %v3093 = vrot.slane %v3092, 4
        %v3095 = vshll.u32 %v2714, 16
        %v3097 = vrot.slane %v3095, 5
        %v3098 = vsel %vm807, %v3093, %v3097
        %s3099 = scalar_lea.vmem %s1, 128
        %v3100 = vld [vmem:[%s3099] sm:$0xf]
        %v3101 = vld [vmem:[%s3099 + $0x4] sm:$0xf]
        %v3102 = vld [vmem:[%s3099 + $0x8] sm:$0xf]
        %v3103 = vld [vmem:[%s3099 + $0xc] sm:$0xf]
        %v3104 = vld [vmem:[%s3099 + $0x10] sm:$0xf]
        %v3105 = vld [vmem:[%s3099 + $0x14] sm:$0xf]
        %v3106 = vld [vmem:[%s3099 + $0x18] sm:$0xf]
        %v3107 = vld [vmem:[%s3099 + $0x1c] sm:$0xf]
        %v3108 = vunpack.c.l.b16 %v2728
        %v3109 = vunpack.c.l.b16 %v2738
        %v3110 = vunpack.c.l.b16 %v2752
        %v3111 = vunpack.c.l.b16 %v2762
        %v3112 = vunpack.c.l.b16 %v2776
        %v3113 = vunpack.c.l.b16 %v2786
        %v3114 = vunpack.c.l.b16 %v2800
        %v3115 = vunpack.c.l.b16 %v2810
        %v3116 = vunpack.c.l.b16 %v2824
        %v3117 = vunpack.c.l.b16 %v2834
        %v3118 = vunpack.c.l.b16 %v2848
        %v3119 = vunpack.c.l.b16 %v2858
        %v3120 = vunpack.c.l.b16 %v2872
        %v3121 = vunpack.c.l.b16 %v2882
        %v3122 = vunpack.c.l.b16 %v2896
        %v3123 = vunpack.c.l.b16 %v2906
        %v3124 = vunpack.c.l.b16 %v2920
        %v3125 = vunpack.c.l.b16 %v2930
        %v3126 = vunpack.c.l.b16 %v2944
        %v3127 = vunpack.c.l.b16 %v2954
        %v3128 = vunpack.c.l.b16 %v2968
        %v3129 = vunpack.c.l.b16 %v2978
        %v3130 = vunpack.c.l.b16 %v2992
        %v3131 = vunpack.c.l.b16 %v3002
        %v3132 = vunpack.c.l.b16 %v3016
        %v3133 = vunpack.c.l.b16 %v3026
        %v3134 = vunpack.c.l.b16 %v3040
        %v3135 = vunpack.c.l.b16 %v3050
        %v3136 = vunpack.c.l.b16 %v3064
        %v3137 = vunpack.c.l.b16 %v3074
        %v3138 = vunpack.c.l.b16 %v3088
        %v3139 = vunpack.c.l.b16 %v3098
        %v3140 = vpack.c.b16 %v3109, %v3108
        %v3141 = vpack.c.b16 %v3111, %v3110
        %v3142 = vpack.c.b16 %v3113, %v3112
        %v3143 = vpack.c.b16 %v3115, %v3114
        %v3144 = vpack.c.b16 %v3117, %v3116
        %v3145 = vpack.c.b16 %v3119, %v3118
        %v3146 = vpack.c.b16 %v3121, %v3120
        %v3147 = vpack.c.b16 %v3123, %v3122
        %v3148 = vpack.c.b16 %v3125, %v3124
        %v3149 = vpack.c.b16 %v3127, %v3126
        %v3150 = vpack.c.b16 %v3129, %v3128
        %v3151 = vpack.c.b16 %v3131, %v3130
        %v3152 = vpack.c.b16 %v3133, %v3132
        %v3153 = vpack.c.b16 %v3135, %v3134
        %v3154 = vpack.c.b16 %v3137, %v3136
        %v3155 = vpack.c.b16 %v3139, %v3138
        %v3164 = vunpack.c.l.b16 %v3100
        %v3165 = vunpack.c.l.b16 %v3101
        %v3166 = vunpack.c.l.b16 %v3102
        %v3167 = vunpack.c.l.b16 %v3103
        %v3168 = vunpack.c.l.b16 %v3104
        %v3169 = vunpack.c.l.b16 %v3105
        %v3170 = vunpack.c.l.b16 %v3106
        %v3171 = vunpack.c.l.b16 %v3107
        %v3172 = vpack.c.b16 %v3165, %v3164
        %v3173 = vpack.c.b16 %v3167, %v3166
        %v3174 = vpack.c.b16 %v3169, %v3168
        %v3175 = vpack.c.b16 %v3171, %v3170
        %v3181 = vsel %vm1273, %v3140, 0
        %v3184 = vsel %vm1273, %v3141, 0
        %v3187 = vsel %vm1273, %v3142, 0
        %v3190 = vsel %vm1273, %v3143, 0
        %v3193 = vsel %vm1273, %v3144, 0
        %v3196 = vsel %vm1273, %v3145, 0
        %v3199 = vsel %vm1273, %v3146, 0
        %v3202 = vsel %vm1273, %v3147, 0
        %v3205 = vsel %vm1273, %v3148, 0
        %v3208 = vsel %vm1273, %v3149, 0
        %v3211 = vsel %vm1273, %v3150, 0
        %v3214 = vsel %vm1273, %v3151, 0
        %v3217 = vsel %vm1273, %v3152, 0
        %v3220 = vsel %vm1273, %v3153, 0
        %v3223 = vsel %vm1273, %v3154, 0
        %v3226 = vsel %vm1273, %v3155, 0
        %3228 = vmatprep.subr.bf16.mxu0 0
        %3229 = vmatpush1.bf16.msra.mxu0 %v3172
        %3230 = vmatprep.subr.bf16.mxu0 0
        %3231 = vmatpush1.bf16.msra.mxu0 %v3173
        %3232 = vmatprep.subr.bf16.mxu0 0
        %3233 = vmatpush1.bf16.msra.mxu0 %v3174
        %3234 = vmatprep.subr.bf16.mxu0 0
        %3235 = vmatpush1.bf16.msra.mxu0 %v3175
        %3236 = vmatprep.subr.bf16.mxu0 0
        %3237 = vmatpush1.bf16.msra.mxu0 0
        %3238 = vmatprep.subr.bf16.mxu0 0
        %3239 = vmatpush1.bf16.msra.mxu0 0
        %3240 = vmatprep.subr.bf16.mxu0 0
        %3241 = vmatpush1.bf16.msra.mxu0 0
        %3242 = vmatprep.subr.bf16.mxu0 0
        %3243 = vmatpush1.bf16.msra.mxu0 0
        %3244 = vmatprep.subr.bf16.mxu0 0
        %3245 = vmatpush1.bf16.msra.mxu0 0
        %3246 = vmatprep.subr.bf16.mxu0 0
        %3247 = vmatpush1.bf16.msra.mxu0 0
        %3248 = vmatprep.subr.bf16.mxu0 0
        %3249 = vmatpush1.bf16.msra.mxu0 0
        %3250 = vmatprep.subr.bf16.mxu0 0
        %3251 = vmatpush1.bf16.msra.mxu0 0
        %3252 = vmatprep.subr.bf16.mxu0 0
        %3253 = vmatpush1.bf16.msra.mxu0 0
        %3254 = vmatprep.subr.bf16.mxu0 0
        %3255 = vmatpush1.bf16.msra.mxu0 0
        %3256 = vmatprep.subr.bf16.mxu0 0
        %3257 = vmatpush1.bf16.msra.mxu0 0
        %3258 = vmatprep.subr.bf16.mxu0 0
        %3259 = vmatpush1.bf16.msra.mxu0 0
        %3260 = vmatprep.mubr.bf16.mxu0 0
        %3261 = vmatmul.mubr.bf16.gmra.mrb[0].mxu0 %v3181
        %v3262 = vpop.f32.mrb[0].mxu0
        %v3263 = vadd.f32 0.0, %v3262
        %v3264 = vpop.f32.mrb[0].mxu0
        %v3265 = vpop.f32.mrb[0].mxu0
        %v3266 = vadd.f32 0.0, %v3265
        %v3267 = vpop.f32.mrb[0].mxu0
        %3268 = vmatprep.mubr.bf16.mxu0 0
        %3269 = vmatmul.mubr.bf16.gmra.mrb[0].mxu0 %v3184
        %v3270 = vpop.f32.mrb[0].mxu0
        %v3271 = vadd.f32 0.0, %v3270
        %v3272 = vpop.f32.mrb[0].mxu0
        %v3273 = vpop.f32.mrb[0].mxu0
        %v3274 = vadd.f32 0.0, %v3273
        %v3275 = vpop.f32.mrb[0].mxu0
        %3276 = vmatprep.mubr.bf16.mxu0 0
        %3277 = vmatmul.mubr.bf16.gmra.mrb[0].mxu0 %v3187
        %v3278 = vpop.f32.mrb[0].mxu0
        %v3279 = vadd.f32 0.0, %v3278
        %v3280 = vpop.f32.mrb[0].mxu0
        %v3281 = vpop.f32.mrb[0].mxu0
        %v3282 = vadd.f32 0.0, %v3281
        %v3283 = vpop.f32.mrb[0].mxu0
        %3284 = vmatprep.mubr.bf16.mxu0 0
        %3285 = vmatmul.mubr.bf16.gmra.mrb[0].mxu0 %v3190
        %v3286 = vpop.f32.mrb[0].mxu0
        %v3287 = vadd.f32 0.0, %v3286
        %v3288 = vpop.f32.mrb[0].mxu0
        %v3289 = vpop.f32.mrb[0].mxu0
        %v3290 = vadd.f32 0.0, %v3289
        %v3291 = vpop.f32.mrb[0].mxu0
        %3292 = vmatprep.mubr.bf16.mxu0 0
        %3293 = vmatmul.mubr.bf16.gmra.mrb[0].mxu0 %v3193
        %v3294 = vpop.f32.mrb[0].mxu0
        %v3295 = vadd.f32 0.0, %v3294
        %v3296 = vpop.f32.mrb[0].mxu0
        %v3297 = vpop.f32.mrb[0].mxu0
        %v3298 = vadd.f32 0.0, %v3297
        %v3299 = vpop.f32.mrb[0].mxu0
        %3300 = vmatprep.mubr.bf16.mxu0 0
        %3301 = vmatmul.mubr.bf16.gmra.mrb[0].mxu0 %v3196
        %v3302 = vpop.f32.mrb[0].mxu0
        %v3303 = vadd.f32 0.0, %v3302
        %v3304 = vpop.f32.mrb[0].mxu0
        %v3305 = vpop.f32.mrb[0].mxu0
        %v3306 = vadd.f32 0.0, %v3305
        %v3307 = vpop.f32.mrb[0].mxu0
        %3308 = vmatprep.mubr.bf16.mxu0 0
        %3309 = vmatmul.mubr.bf16.gmra.mrb[0].mxu0 %v3199
        %v3310 = vpop.f32.mrb[0].mxu0
        %v3311 = vadd.f32 0.0, %v3310
        %v3312 = vpop.f32.mrb[0].mxu0
        %v3313 = vpop.f32.mrb[0].mxu0
        %v3314 = vadd.f32 0.0, %v3313
        %v3315 = vpop.f32.mrb[0].mxu0
        %3316 = vmatprep.mubr.bf16.mxu0 0
        %3317 = vmatmul.mubr.bf16.gmra.mrb[0].mxu0 %v3202
        %v3318 = vpop.f32.mrb[0].mxu0
        %v3319 = vadd.f32 0.0, %v3318
        %v3320 = vpop.f32.mrb[0].mxu0
        %v3321 = vpop.f32.mrb[0].mxu0
        %v3322 = vadd.f32 0.0, %v3321
        %v3323 = vpop.f32.mrb[0].mxu0
        %3324 = vmatprep.mubr.bf16.mxu0 0
        %3325 = vmatmul.mubr.bf16.gmra.mrb[0].mxu0 %v3205
        %v3326 = vpop.f32.mrb[0].mxu0
        %v3327 = vadd.f32 0.0, %v3326
        %v3328 = vpop.f32.mrb[0].mxu0
        %v3329 = vpop.f32.mrb[0].mxu0
        %v3330 = vadd.f32 0.0, %v3329
        %v3331 = vpop.f32.mrb[0].mxu0
        %3332 = vmatprep.mubr.bf16.mxu0 0
        %3333 = vmatmul.mubr.bf16.gmra.mrb[0].mxu0 %v3208
        %v3334 = vpop.f32.mrb[0].mxu0
        %v3335 = vadd.f32 0.0, %v3334
        %v3336 = vpop.f32.mrb[0].mxu0
        %v3337 = vpop.f32.mrb[0].mxu0
        %v3338 = vadd.f32 0.0, %v3337
        %v3339 = vpop.f32.mrb[0].mxu0
        %3340 = vmatprep.mubr.bf16.mxu0 0
        %3341 = vmatmul.mubr.bf16.gmra.mrb[0].mxu0 %v3211
        %v3342 = vpop.f32.mrb[0].mxu0
        %v3343 = vadd.f32 0.0, %v3342
        %v3344 = vpop.f32.mrb[0].mxu0
        %v3345 = vpop.f32.mrb[0].mxu0
        %v3346 = vadd.f32 0.0, %v3345
        %v3347 = vpop.f32.mrb[0].mxu0
        %3348 = vmatprep.mubr.bf16.mxu0 0
        %3349 = vmatmul.mubr.bf16.gmra.mrb[0].mxu0 %v3214
        %v3350 = vpop.f32.mrb[0].mxu0
        %v3351 = vadd.f32 0.0, %v3350
        %v3352 = vpop.f32.mrb[0].mxu0
        %v3353 = vpop.f32.mrb[0].mxu0
        %v3354 = vadd.f32 0.0, %v3353
        %v3355 = vpop.f32.mrb[0].mxu0
        %3356 = vmatprep.mubr.bf16.mxu0 0
        %3357 = vmatmul.mubr.bf16.gmra.mrb[0].mxu0 %v3217
        %v3358 = vpop.f32.mrb[0].mxu0
        %v3359 = vadd.f32 0.0, %v3358
        %v3360 = vpop.f32.mrb[0].mxu0
        %v3361 = vpop.f32.mrb[0].mxu0
        %v3362 = vadd.f32 0.0, %v3361
        %v3363 = vpop.f32.mrb[0].mxu0
        %3364 = vmatprep.mubr.bf16.mxu0 0
        %3365 = vmatmul.mubr.bf16.gmra.mrb[0].mxu0 %v3220
        %v3366 = vpop.f32.mrb[0].mxu0
        %v3367 = vadd.f32 0.0, %v3366
        %v3368 = vpop.f32.mrb[0].mxu0
        %v3369 = vpop.f32.mrb[0].mxu0
        %v3370 = vadd.f32 0.0, %v3369
        %v3371 = vpop.f32.mrb[0].mxu0
        %3372 = vmatprep.mubr.bf16.mxu0 0
        %3373 = vmatmul.mubr.bf16.gmra.mrb[0].mxu0 %v3223
        %v3374 = vpop.f32.mrb[0].mxu0
        %v3375 = vadd.f32 0.0, %v3374
        %v3376 = vpop.f32.mrb[0].mxu0
        %v3377 = vpop.f32.mrb[0].mxu0
        %v3378 = vadd.f32 0.0, %v3377
        %v3379 = vpop.f32.mrb[0].mxu0
        %3380 = vmatprep.mubr.bf16.mxu0 0
        %3381 = vmatmul.mubr.bf16.gmra.mrb[0].mxu0 %v3226
        %v3382 = vpop.f32.mrb[0].mxu0
        %v3383 = vadd.f32 0.0, %v3382
        %v3384 = vpop.f32.mrb[0].mxu0
        %v3385 = vpop.f32.mrb[0].mxu0
        %v3386 = vadd.f32 0.0, %v3385
        %v3387 = vpop.f32.mrb[0].mxu0
        %3388 = vdwg.mxu0
        %v3389 = vadd.f32 %v2635, %v3263
        %v3390 = vadd.f32 %v2636, %v3266
        %v3391 = vadd.f32 %v2637, %v3271
        %v3392 = vadd.f32 %v2638, %v3274
        %v3393 = vadd.f32 %v2639, %v3279
        %v3394 = vadd.f32 %v2640, %v3282
        %v3395 = vadd.f32 %v2641, %v3287
        %v3396 = vadd.f32 %v2642, %v3290
        %v3397 = vadd.f32 %v2643, %v3295
        %v3398 = vadd.f32 %v2644, %v3298
        %v3399 = vadd.f32 %v2645, %v3303
        %v3400 = vadd.f32 %v2646, %v3306
        %v3401 = vadd.f32 %v2647, %v3311
        %v3402 = vadd.f32 %v2648, %v3314
        %v3403 = vadd.f32 %v2649, %v3319
        %v3404 = vadd.f32 %v2650, %v3322
        %v3405 = vadd.f32 %v2651, %v3327
        %v3406 = vadd.f32 %v2652, %v3330
        %v3407 = vadd.f32 %v2653, %v3335
        %v3408 = vadd.f32 %v2654, %v3338
        %v3409 = vadd.f32 %v2655, %v3343
        %v3410 = vadd.f32 %v2656, %v3346
        %v3411 = vadd.f32 %v2657, %v3351
        %v3412 = vadd.f32 %v2658, %v3354
        %v3413 = vadd.f32 %v2659, %v3359
        %v3414 = vadd.f32 %v2660, %v3362
        %v3415 = vadd.f32 %v2661, %v3367
        %v3416 = vadd.f32 %v2662, %v3370
        %v3417 = vadd.f32 %v2663, %v3375
        %v3418 = vadd.f32 %v2664, %v3378
        %v3419 = vadd.f32 %v2665, %v3383
        %v3420 = vadd.f32 %v2666, %v3386
        %v3421 = vld [vmem:[%s631] sm:$0xe]
        %v3422 = vld [vmem:[%s631 + $0xc] sm:$0xe]
        %v3423 = vld [vmem:[%s631 + $0x18] sm:$0xe]
        %v3424 = vld [vmem:[%s631 + $0x24] sm:$0xe]
        %v3425 = vld [vmem:[%s631 + $0x30] sm:$0xe]
        %v3426 = vld [vmem:[%s631 + $0x3c] sm:$0xe]
        %v3427 = vld [vmem:[%s631 + $0x48] sm:$0xe]
        %v3428 = vld [vmem:[%s631 + $0x54] sm:$0xe]
        %v3429 = vld [vmem:[%s631 + $0x60] sm:$0xe]
        %v3430 = vld [vmem:[%s631 + $0x6c] sm:$0xe]
        %v3431 = vld [vmem:[%s631 + $0x78] sm:$0xe]
        %v3432 = vld [vmem:[%s631 + $0x84] sm:$0xe]
        %v3433 = vld [vmem:[%s631 + $0x90] sm:$0xe]
        %v3434 = vld [vmem:[%s631 + $0x9c] sm:$0xe]
        %v3435 = vld [vmem:[%s631 + $0xa8] sm:$0xe]
        %v3436 = vld [vmem:[%s631 + $0xb4] sm:$0xe]
        %v3485 = vrot.slane %v3421, 5
        %v3486 = vrot.slane %v3485, 4
        %v3487 = vrot.slane %v2668, 5
        %v3488 = vsel %vm1846, %v3486, %v3487
        %v3489 = vrot.slane %v3487, 4
        %v3490 = vrot.slane %v2669, 5
        %v3491 = vsel %vm1846, %v3489, %v3490
        %v3492 = vrot.slane %v3422, 5
        %v3493 = vrot.slane %v3492, 4
        %v3494 = vrot.slane %v2671, 5
        %v3495 = vsel %vm1846, %v3493, %v3494
        %v3496 = vrot.slane %v3494, 4
        %v3497 = vrot.slane %v2672, 5
        %v3498 = vsel %vm1846, %v3496, %v3497
        %v3499 = vrot.slane %v3423, 5
        %v3500 = vrot.slane %v3499, 4
        %v3501 = vrot.slane %v2674, 5
        %v3502 = vsel %vm1846, %v3500, %v3501
        %v3503 = vrot.slane %v3501, 4
        %v3504 = vrot.slane %v2675, 5
        %v3505 = vsel %vm1846, %v3503, %v3504
        %v3506 = vrot.slane %v3424, 5
        %v3507 = vrot.slane %v3506, 4
        %v3508 = vrot.slane %v2677, 5
        %v3509 = vsel %vm1846, %v3507, %v3508
        %v3510 = vrot.slane %v3508, 4
        %v3511 = vrot.slane %v2678, 5
        %v3512 = vsel %vm1846, %v3510, %v3511
        %v3513 = vrot.slane %v3425, 5
        %v3514 = vrot.slane %v3513, 4
        %v3515 = vrot.slane %v2680, 5
        %v3516 = vsel %vm1846, %v3514, %v3515
        %v3517 = vrot.slane %v3515, 4
        %v3518 = vrot.slane %v2681, 5
        %v3519 = vsel %vm1846, %v3517, %v3518
        %v3520 = vrot.slane %v3426, 5
        %v3521 = vrot.slane %v3520, 4
        %v3522 = vrot.slane %v2683, 5
        %v3523 = vsel %vm1846, %v3521, %v3522
        %v3524 = vrot.slane %v3522, 4
        %v3525 = vrot.slane %v2684, 5
        %v3526 = vsel %vm1846, %v3524, %v3525
        %v3527 = vrot.slane %v3427, 5
        %v3528 = vrot.slane %v3527, 4
        %v3529 = vrot.slane %v2686, 5
        %v3530 = vsel %vm1846, %v3528, %v3529
        %v3531 = vrot.slane %v3529, 4
        %v3532 = vrot.slane %v2687, 5
        %v3533 = vsel %vm1846, %v3531, %v3532
        %v3534 = vrot.slane %v3428, 5
        %v3535 = vrot.slane %v3534, 4
        %v3536 = vrot.slane %v2689, 5
        %v3537 = vsel %vm1846, %v3535, %v3536
        %v3538 = vrot.slane %v3536, 4
        %v3539 = vrot.slane %v2690, 5
        %v3540 = vsel %vm1846, %v3538, %v3539
        %v3541 = vrot.slane %v3429, 5
        %v3542 = vrot.slane %v3541, 4
        %v3543 = vrot.slane %v2692, 5
        %v3544 = vsel %vm1846, %v3542, %v3543
        %v3545 = vrot.slane %v3543, 4
        %v3546 = vrot.slane %v2693, 5
        %v3547 = vsel %vm1846, %v3545, %v3546
        %v3548 = vrot.slane %v3430, 5
        %v3549 = vrot.slane %v3548, 4
        %v3550 = vrot.slane %v2695, 5
        %v3551 = vsel %vm1846, %v3549, %v3550
        %v3552 = vrot.slane %v3550, 4
        %v3553 = vrot.slane %v2696, 5
        %v3554 = vsel %vm1846, %v3552, %v3553
        %v3555 = vrot.slane %v3431, 5
        %v3556 = vrot.slane %v3555, 4
        %v3557 = vrot.slane %v2698, 5
        %v3558 = vsel %vm1846, %v3556, %v3557
        %v3559 = vrot.slane %v3557, 4
        %v3560 = vrot.slane %v2699, 5
        %v3561 = vsel %vm1846, %v3559, %v3560
        %v3562 = vrot.slane %v3432, 5
        %v3563 = vrot.slane %v3562, 4
        %v3564 = vrot.slane %v2701, 5
        %v3565 = vsel %vm1846, %v3563, %v3564
        %v3566 = vrot.slane %v3564, 4
        %v3567 = vrot.slane %v2702, 5
        %v3568 = vsel %vm1846, %v3566, %v3567
        %v3569 = vrot.slane %v3433, 5
        %v3570 = vrot.slane %v3569, 4
        %v3571 = vrot.slane %v2704, 5
        %v3572 = vsel %vm1846, %v3570, %v3571
        %v3573 = vrot.slane %v3571, 4
        %v3574 = vrot.slane %v2705, 5
        %v3575 = vsel %vm1846, %v3573, %v3574
        %v3576 = vrot.slane %v3434, 5
        %v3577 = vrot.slane %v3576, 4
        %v3578 = vrot.slane %v2707, 5
        %v3579 = vsel %vm1846, %v3577, %v3578
        %v3580 = vrot.slane %v3578, 4
        %v3581 = vrot.slane %v2708, 5
        %v3582 = vsel %vm1846, %v3580, %v3581
        %v3583 = vrot.slane %v3435, 5
        %v3584 = vrot.slane %v3583, 4
        %v3585 = vrot.slane %v2710, 5
        %v3586 = vsel %vm1846, %v3584, %v3585
        %v3587 = vrot.slane %v3585, 4
        %v3588 = vrot.slane %v2711, 5
        %v3589 = vsel %vm1846, %v3587, %v3588
        %v3590 = vrot.slane %v3436, 5
        %v3591 = vrot.slane %v3590, 4
        %v3592 = vrot.slane %v2713, 5
        %v3593 = vsel %vm1846, %v3591, %v3592
        %v3594 = vrot.slane %v3592, 4
        %v3595 = vrot.slane %v2714, 5
        %v3596 = vsel %vm1846, %v3594, %v3595
        %s3597 = scalar_lea.vmem %s1, 160
        %v3598 = vld [vmem:[%s3597] sm:$0xf]
        %v3599 = vld [vmem:[%s3597 + $0x4] sm:$0xf]
        %v3600 = vld [vmem:[%s3597 + $0x8] sm:$0xf]
        %v3601 = vld [vmem:[%s3597 + $0xc] sm:$0xf]
        %v3602 = vld [vmem:[%s3597 + $0x10] sm:$0xf]
        %v3603 = vld [vmem:[%s3597 + $0x14] sm:$0xf]
        %v3604 = vld [vmem:[%s3597 + $0x18] sm:$0xf]
        %v3605 = vld [vmem:[%s3597 + $0x1c] sm:$0xf]
        %v3606 = vunpack.c.l.b16 %v3488
        %v3607 = vunpack.c.l.b16 %v3491
        %v3608 = vunpack.c.l.b16 %v3495
        %v3609 = vunpack.c.l.b16 %v3498
        %v3610 = vunpack.c.l.b16 %v3502
        %v3611 = vunpack.c.l.b16 %v3505
        %v3612 = vunpack.c.l.b16 %v3509
        %v3613 = vunpack.c.l.b16 %v3512
        %v3614 = vunpack.c.l.b16 %v3516
        %v3615 = vunpack.c.l.b16 %v3519
        %v3616 = vunpack.c.l.b16 %v3523
        %v3617 = vunpack.c.l.b16 %v3526
        %v3618 = vunpack.c.l.b16 %v3530
        %v3619 = vunpack.c.l.b16 %v3533
        %v3620 = vunpack.c.l.b16 %v3537
        %v3621 = vunpack.c.l.b16 %v3540
        %v3622 = vunpack.c.l.b16 %v3544
        %v3623 = vunpack.c.l.b16 %v3547
        %v3624 = vunpack.c.l.b16 %v3551
        %v3625 = vunpack.c.l.b16 %v3554
        %v3626 = vunpack.c.l.b16 %v3558
        %v3627 = vunpack.c.l.b16 %v3561
        %v3628 = vunpack.c.l.b16 %v3565
        %v3629 = vunpack.c.l.b16 %v3568
        %v3630 = vunpack.c.l.b16 %v3572
        %v3631 = vunpack.c.l.b16 %v3575
        %v3632 = vunpack.c.l.b16 %v3579
        %v3633 = vunpack.c.l.b16 %v3582
        %v3634 = vunpack.c.l.b16 %v3586
        %v3635 = vunpack.c.l.b16 %v3589
        %v3636 = vunpack.c.l.b16 %v3593
        %v3637 = vunpack.c.l.b16 %v3596
        %v3638 = vpack.c.b16 %v3607, %v3606
        %v3639 = vpack.c.b16 %v3609, %v3608
        %v3640 = vpack.c.b16 %v3611, %v3610
        %v3641 = vpack.c.b16 %v3613, %v3612
        %v3642 = vpack.c.b16 %v3615, %v3614
        %v3643 = vpack.c.b16 %v3617, %v3616
        %v3644 = vpack.c.b16 %v3619, %v3618
        %v3645 = vpack.c.b16 %v3621, %v3620
        %v3646 = vpack.c.b16 %v3623, %v3622
        %v3647 = vpack.c.b16 %v3625, %v3624
        %v3648 = vpack.c.b16 %v3627, %v3626
        %v3649 = vpack.c.b16 %v3629, %v3628
        %v3650 = vpack.c.b16 %v3631, %v3630
        %v3651 = vpack.c.b16 %v3633, %v3632
        %v3652 = vpack.c.b16 %v3635, %v3634
        %v3653 = vpack.c.b16 %v3637, %v3636
        %v3662 = vunpack.c.l.b16 %v3598
        %v3663 = vunpack.c.l.b16 %v3599
        %v3664 = vunpack.c.l.b16 %v3600
        %v3665 = vunpack.c.l.b16 %v3601
        %v3666 = vunpack.c.l.b16 %v3602
        %v3667 = vunpack.c.l.b16 %v3603
        %v3668 = vunpack.c.l.b16 %v3604
        %v3669 = vunpack.c.l.b16 %v3605
        %v3670 = vpack.c.b16 %v3663, %v3662
        %v3671 = vpack.c.b16 %v3665, %v3664
        %v3672 = vpack.c.b16 %v3667, %v3666
        %v3673 = vpack.c.b16 %v3669, %v3668
        %v3679 = vsel %vm1273, %v3638, 0
        %v3682 = vsel %vm1273, %v3639, 0
        %v3685 = vsel %vm1273, %v3640, 0
        %v3688 = vsel %vm1273, %v3641, 0
        %v3691 = vsel %vm1273, %v3642, 0
        %v3694 = vsel %vm1273, %v3643, 0
        %v3697 = vsel %vm1273, %v3644, 0
        %v3700 = vsel %vm1273, %v3645, 0
        %v3703 = vsel %vm1273, %v3646, 0
        %v3706 = vsel %vm1273, %v3647, 0
        %v3709 = vsel %vm1273, %v3648, 0
        %v3712 = vsel %vm1273, %v3649, 0
        %v3715 = vsel %vm1273, %v3650, 0
        %v3718 = vsel %vm1273, %v3651, 0
        %v3721 = vsel %vm1273, %v3652, 0
        %v3724 = vsel %vm1273, %v3653, 0
        %3726 = vmatprep.subr.bf16.mxu0 0
        %3727 = vmatpush1.bf16.msra.mxu0 %v3670
        %3728 = vmatprep.subr.bf16.mxu0 0
        %3729 = vmatpush1.bf16.msra.mxu0 %v3671
        %3730 = vmatprep.subr.bf16.mxu0 0
        %3731 = vmatpush1.bf16.msra.mxu0 %v3672
        %3732 = vmatprep.subr.bf16.mxu0 0
        %3733 = vmatpush1.bf16.msra.mxu0 %v3673
        %3734 = vmatprep.subr.bf16.mxu0 0
        %3735 = vmatpush1.bf16.msra.mxu0 0
        %3736 = vmatprep.subr.bf16.mxu0 0
        %3737 = vmatpush1.bf16.msra.mxu0 0
        %3738 = vmatprep.subr.bf16.mxu0 0
        %3739 = vmatpush1.bf16.msra.mxu0 0
        %3740 = vmatprep.subr.bf16.mxu0 0
        %3741 = vmatpush1.bf16.msra.mxu0 0
        %3742 = vmatprep.subr.bf16.mxu0 0
        %3743 = vmatpush1.bf16.msra.mxu0 0
        %3744 = vmatprep.subr.bf16.mxu0 0
        %3745 = vmatpush1.bf16.msra.mxu0 0
        %3746 = vmatprep.subr.bf16.mxu0 0
        %3747 = vmatpush1.bf16.msra.mxu0 0
        %3748 = vmatprep.subr.bf16.mxu0 0
        %3749 = vmatpush1.bf16.msra.mxu0 0
        %3750 = vmatprep.subr.bf16.mxu0 0
        %3751 = vmatpush1.bf16.msra.mxu0 0
        %3752 = vmatprep.subr.bf16.mxu0 0
        %3753 = vmatpush1.bf16.msra.mxu0 0
        %3754 = vmatprep.subr.bf16.mxu0 0
        %3755 = vmatpush1.bf16.msra.mxu0 0
        %3756 = vmatprep.subr.bf16.mxu0 0
        %3757 = vmatpush1.bf16.msra.mxu0 0
        %3758 = vmatprep.mubr.bf16.mxu0 0
        %3759 = vmatmul.mubr.bf16.gmra.mrb[0].mxu0 %v3679
        %v3760 = vpop.f32.mrb[0].mxu0
        %v3761 = vadd.f32 0.0, %v3760
        %v3762 = vpop.f32.mrb[0].mxu0
        %v3763 = vpop.f32.mrb[0].mxu0
        %v3764 = vadd.f32 0.0, %v3763
        %v3765 = vpop.f32.mrb[0].mxu0
        %3766 = vmatprep.mubr.bf16.mxu0 0
        %3767 = vmatmul.mubr.bf16.gmra.mrb[0].mxu0 %v3682
        %v3768 = vpop.f32.mrb[0].mxu0
        %v3769 = vadd.f32 0.0, %v3768
        %v3770 = vpop.f32.mrb[0].mxu0
        %v3771 = vpop.f32.mrb[0].mxu0
        %v3772 = vadd.f32 0.0, %v3771
        %v3773 = vpop.f32.mrb[0].mxu0
        %3774 = vmatprep.mubr.bf16.mxu0 0
        %3775 = vmatmul.mubr.bf16.gmra.mrb[0].mxu0 %v3685
        %v3776 = vpop.f32.mrb[0].mxu0
        %v3777 = vadd.f32 0.0, %v3776
        %v3778 = vpop.f32.mrb[0].mxu0
        %v3779 = vpop.f32.mrb[0].mxu0
        %v3780 = vadd.f32 0.0, %v3779
        %v3781 = vpop.f32.mrb[0].mxu0
        %3782 = vmatprep.mubr.bf16.mxu0 0
        %3783 = vmatmul.mubr.bf16.gmra.mrb[0].mxu0 %v3688
        %v3784 = vpop.f32.mrb[0].mxu0
        %v3785 = vadd.f32 0.0, %v3784
        %v3786 = vpop.f32.mrb[0].mxu0
        %v3787 = vpop.f32.mrb[0].mxu0
        %v3788 = vadd.f32 0.0, %v3787
        %v3789 = vpop.f32.mrb[0].mxu0
        %3790 = vmatprep.mubr.bf16.mxu0 0
        %3791 = vmatmul.mubr.bf16.gmra.mrb[0].mxu0 %v3691
        %v3792 = vpop.f32.mrb[0].mxu0
        %v3793 = vadd.f32 0.0, %v3792
        %v3794 = vpop.f32.mrb[0].mxu0
        %v3795 = vpop.f32.mrb[0].mxu0
        %v3796 = vadd.f32 0.0, %v3795
        %v3797 = vpop.f32.mrb[0].mxu0
        %3798 = vmatprep.mubr.bf16.mxu0 0
        %3799 = vmatmul.mubr.bf16.gmra.mrb[0].mxu0 %v3694
        %v3800 = vpop.f32.mrb[0].mxu0
        %v3801 = vadd.f32 0.0, %v3800
        %v3802 = vpop.f32.mrb[0].mxu0
        %v3803 = vpop.f32.mrb[0].mxu0
        %v3804 = vadd.f32 0.0, %v3803
        %v3805 = vpop.f32.mrb[0].mxu0
        %3806 = vmatprep.mubr.bf16.mxu0 0
        %3807 = vmatmul.mubr.bf16.gmra.mrb[0].mxu0 %v3697
        %v3808 = vpop.f32.mrb[0].mxu0
        %v3809 = vadd.f32 0.0, %v3808
        %v3810 = vpop.f32.mrb[0].mxu0
        %v3811 = vpop.f32.mrb[0].mxu0
        %v3812 = vadd.f32 0.0, %v3811
        %v3813 = vpop.f32.mrb[0].mxu0
        %3814 = vmatprep.mubr.bf16.mxu0 0
        %3815 = vmatmul.mubr.bf16.gmra.mrb[0].mxu0 %v3700
        %v3816 = vpop.f32.mrb[0].mxu0
        %v3817 = vadd.f32 0.0, %v3816
        %v3818 = vpop.f32.mrb[0].mxu0
        %v3819 = vpop.f32.mrb[0].mxu0
        %v3820 = vadd.f32 0.0, %v3819
        %v3821 = vpop.f32.mrb[0].mxu0
        %3822 = vmatprep.mubr.bf16.mxu0 0
        %3823 = vmatmul.mubr.bf16.gmra.mrb[0].mxu0 %v3703
        %v3824 = vpop.f32.mrb[0].mxu0
        %v3825 = vadd.f32 0.0, %v3824
        %v3826 = vpop.f32.mrb[0].mxu0
        %v3827 = vpop.f32.mrb[0].mxu0
        %v3828 = vadd.f32 0.0, %v3827
        %v3829 = vpop.f32.mrb[0].mxu0
        %3830 = vmatprep.mubr.bf16.mxu0 0
        %3831 = vmatmul.mubr.bf16.gmra.mrb[0].mxu0 %v3706
        %v3832 = vpop.f32.mrb[0].mxu0
        %v3833 = vadd.f32 0.0, %v3832
        %v3834 = vpop.f32.mrb[0].mxu0
        %v3835 = vpop.f32.mrb[0].mxu0
        %v3836 = vadd.f32 0.0, %v3835
        %v3837 = vpop.f32.mrb[0].mxu0
        %3838 = vmatprep.mubr.bf16.mxu0 0
        %3839 = vmatmul.mubr.bf16.gmra.mrb[0].mxu0 %v3709
        %v3840 = vpop.f32.mrb[0].mxu0
        %v3841 = vadd.f32 0.0, %v3840
        %v3842 = vpop.f32.mrb[0].mxu0
        %v3843 = vpop.f32.mrb[0].mxu0
        %v3844 = vadd.f32 0.0, %v3843
        %v3845 = vpop.f32.mrb[0].mxu0
        %3846 = vmatprep.mubr.bf16.mxu0 0
        %3847 = vmatmul.mubr.bf16.gmra.mrb[0].mxu0 %v3712
        %v3848 = vpop.f32.mrb[0].mxu0
        %v3849 = vadd.f32 0.0, %v3848
        %v3850 = vpop.f32.mrb[0].mxu0
        %v3851 = vpop.f32.mrb[0].mxu0
        %v3852 = vadd.f32 0.0, %v3851
        %v3853 = vpop.f32.mrb[0].mxu0
        %3854 = vmatprep.mubr.bf16.mxu0 0
        %3855 = vmatmul.mubr.bf16.gmra.mrb[0].mxu0 %v3715
        %v3856 = vpop.f32.mrb[0].mxu0
        %v3857 = vadd.f32 0.0, %v3856
        %v3858 = vpop.f32.mrb[0].mxu0
        %v3859 = vpop.f32.mrb[0].mxu0
        %v3860 = vadd.f32 0.0, %v3859
        %v3861 = vpop.f32.mrb[0].mxu0
        %3862 = vmatprep.mubr.bf16.mxu0 0
        %3863 = vmatmul.mubr.bf16.gmra.mrb[0].mxu0 %v3718
        %v3864 = vpop.f32.mrb[0].mxu0
        %v3865 = vadd.f32 0.0, %v3864
        %v3866 = vpop.f32.mrb[0].mxu0
        %v3867 = vpop.f32.mrb[0].mxu0
        %v3868 = vadd.f32 0.0, %v3867
        %v3869 = vpop.f32.mrb[0].mxu0
        %3870 = vmatprep.mubr.bf16.mxu0 0
        %3871 = vmatmul.mubr.bf16.gmra.mrb[0].mxu0 %v3721
        %v3872 = vpop.f32.mrb[0].mxu0
        %v3873 = vadd.f32 0.0, %v3872
        %v3874 = vpop.f32.mrb[0].mxu0
        %v3875 = vpop.f32.mrb[0].mxu0
        %v3876 = vadd.f32 0.0, %v3875
        %v3877 = vpop.f32.mrb[0].mxu0
        %3878 = vmatprep.mubr.bf16.mxu0 0
        %3879 = vmatmul.mubr.bf16.gmra.mrb[0].mxu0 %v3724
        %v3880 = vpop.f32.mrb[0].mxu0
        %v3881 = vadd.f32 0.0, %v3880
        %v3882 = vpop.f32.mrb[0].mxu0
        %v3883 = vpop.f32.mrb[0].mxu0
        %v3884 = vadd.f32 0.0, %v3883
        %v3885 = vpop.f32.mrb[0].mxu0
        %3886 = vdwg.mxu0
        %v3887 = vadd.f32 %v3389, %v3761
        %v3888 = vadd.f32 %v3390, %v3764
        %v3889 = vadd.f32 %v3391, %v3769
        %v3890 = vadd.f32 %v3392, %v3772
        %v3891 = vadd.f32 %v3393, %v3777
        %v3892 = vadd.f32 %v3394, %v3780
        %v3893 = vadd.f32 %v3395, %v3785
        %v3894 = vadd.f32 %v3396, %v3788
        %v3895 = vadd.f32 %v3397, %v3793
        %v3896 = vadd.f32 %v3398, %v3796
        %v3897 = vadd.f32 %v3399, %v3801
        %v3898 = vadd.f32 %v3400, %v3804
        %v3899 = vadd.f32 %v3401, %v3809
        %v3900 = vadd.f32 %v3402, %v3812
        %v3901 = vadd.f32 %v3403, %v3817
        %v3902 = vadd.f32 %v3404, %v3820
        %v3903 = vadd.f32 %v3405, %v3825
        %v3904 = vadd.f32 %v3406, %v3828
        %v3905 = vadd.f32 %v3407, %v3833
        %v3906 = vadd.f32 %v3408, %v3836
        %v3907 = vadd.f32 %v3409, %v3841
        %v3908 = vadd.f32 %v3410, %v3844
        %v3909 = vadd.f32 %v3411, %v3849
        %v3910 = vadd.f32 %v3412, %v3852
        %v3911 = vadd.f32 %v3413, %v3857
        %v3912 = vadd.f32 %v3414, %v3860
        %v3913 = vadd.f32 %v3415, %v3865
        %v3914 = vadd.f32 %v3416, %v3868
        %v3915 = vadd.f32 %v3417, %v3873
        %v3916 = vadd.f32 %v3418, %v3876
        %v3917 = vadd.f32 %v3419, %v3881
        %v3918 = vadd.f32 %v3420, %v3884
        %s3919 = scalar_lea.vmem [#allocation2], 24
        %v3920 = vld [vmem:[%s3919] sm:$0xf]
        %v3921 = vld [vmem:[%s3919 + $0x4] sm:$0xf]
        %v3922 = vld [vmem:[%s3919 + $0xc] sm:$0xf]
        %v3923 = vld [vmem:[%s3919 + $0x10] sm:$0xf]
        %v3924 = vld [vmem:[%s3919 + $0x18] sm:$0xf]
        %v3925 = vld [vmem:[%s3919 + $0x1c] sm:$0xf]
        %v3926 = vld [vmem:[%s3919 + $0x24] sm:$0xf]
        %v3927 = vld [vmem:[%s3919 + $0x28] sm:$0xf]
        %v3928 = vld [vmem:[%s3919 + $0x30] sm:$0xf]
        %v3929 = vld [vmem:[%s3919 + $0x34] sm:$0xf]
        %v3930 = vld [vmem:[%s3919 + $0x3c] sm:$0xf]
        %v3931 = vld [vmem:[%s3919 + $0x40] sm:$0xf]
        %v3932 = vld [vmem:[%s3919 + $0x48] sm:$0xf]
        %v3933 = vld [vmem:[%s3919 + $0x4c] sm:$0xf]
        %v3934 = vld [vmem:[%s3919 + $0x54] sm:$0xf]
        %v3935 = vld [vmem:[%s3919 + $0x58] sm:$0xf]
        %v3936 = vld [vmem:[%s3919 + $0x60] sm:$0xf]
        %v3937 = vld [vmem:[%s3919 + $0x64] sm:$0xf]
        %v3938 = vld [vmem:[%s3919 + $0x6c] sm:$0xf]
        %v3939 = vld [vmem:[%s3919 + $0x70] sm:$0xf]
        %v3940 = vld [vmem:[%s3919 + $0x78] sm:$0xf]
        %v3941 = vld [vmem:[%s3919 + $0x7c] sm:$0xf]
        %v3942 = vld [vmem:[%s3919 + $0x84] sm:$0xf]
        %v3943 = vld [vmem:[%s3919 + $0x88] sm:$0xf]
        %v3944 = vld [vmem:[%s3919 + $0x90] sm:$0xf]
        %v3945 = vld [vmem:[%s3919 + $0x94] sm:$0xf]
        %v3946 = vld [vmem:[%s3919 + $0x9c] sm:$0xf]
        %v3947 = vld [vmem:[%s3919 + $0xa0] sm:$0xf]
        %v3948 = vld [vmem:[%s3919 + $0xa8] sm:$0xf]
        %v3949 = vld [vmem:[%s3919 + $0xac] sm:$0xf]
        %v3950 = vld [vmem:[%s3919 + $0xb4] sm:$0xf]
        %v3951 = vld [vmem:[%s3919 + $0xb8] sm:$0xf]
        %s3952 = scalar_lea.vmem %s1, 192
        %v3953 = vld [vmem:[%s3952] sm:$0xf]
        %v3954 = vld [vmem:[%s3952 + $0x4] sm:$0xf]
        %v3955 = vld [vmem:[%s3952 + $0x8] sm:$0xf]
        %v3956 = vld [vmem:[%s3952 + $0xc] sm:$0xf]
        %v3957 = vld [vmem:[%s3952 + $0x10] sm:$0xf]
        %v3958 = vld [vmem:[%s3952 + $0x14] sm:$0xf]
        %v3959 = vld [vmem:[%s3952 + $0x18] sm:$0xf]
        %v3960 = vld [vmem:[%s3952 + $0x1c] sm:$0xf]
        %v3993 = vunpack.c.l.b16 %v3920
        %v3994 = vunpack.c.l.b16 %v3921
        %v3995 = vunpack.c.l.b16 %v3922
        %v3996 = vunpack.c.l.b16 %v3923
        %v3997 = vunpack.c.l.b16 %v3924
        %v3998 = vunpack.c.l.b16 %v3925
        %v3999 = vunpack.c.l.b16 %v3926
        %v4000 = vunpack.c.l.b16 %v3927
        %v4001 = vunpack.c.l.b16 %v3928
        %v4002 = vunpack.c.l.b16 %v3929
        %v4003 = vunpack.c.l.b16 %v3930
        %v4004 = vunpack.c.l.b16 %v3931
        %v4005 = vunpack.c.l.b16 %v3932
        %v4006 = vunpack.c.l.b16 %v3933
        %v4007 = vunpack.c.l.b16 %v3934
        %v4008 = vunpack.c.l.b16 %v3935
        %v4009 = vunpack.c.l.b16 %v3936
        %v4010 = vunpack.c.l.b16 %v3937
        %v4011 = vunpack.c.l.b16 %v3938
        %v4012 = vunpack.c.l.b16 %v3939
        %v4013 = vunpack.c.l.b16 %v3940
        %v4014 = vunpack.c.l.b16 %v3941
        %v4015 = vunpack.c.l.b16 %v3942
        %v4016 = vunpack.c.l.b16 %v3943
        %v4017 = vunpack.c.l.b16 %v3944
        %v4018 = vunpack.c.l.b16 %v3945
        %v4019 = vunpack.c.l.b16 %v3946
        %v4020 = vunpack.c.l.b16 %v3947
        %v4021 = vunpack.c.l.b16 %v3948
        %v4022 = vunpack.c.l.b16 %v3949
        %v4023 = vunpack.c.l.b16 %v3950
        %v4024 = vunpack.c.l.b16 %v3951
        %v4025 = vpack.c.b16 %v3994, %v3993
        %v4026 = vpack.c.b16 %v3996, %v3995
        %v4027 = vpack.c.b16 %v3998, %v3997
        %v4028 = vpack.c.b16 %v4000, %v3999
        %v4029 = vpack.c.b16 %v4002, %v4001
        %v4030 = vpack.c.b16 %v4004, %v4003
        %v4031 = vpack.c.b16 %v4006, %v4005
        %v4032 = vpack.c.b16 %v4008, %v4007
        %v4033 = vpack.c.b16 %v4010, %v4009
        %v4034 = vpack.c.b16 %v4012, %v4011
        %v4035 = vpack.c.b16 %v4014, %v4013
        %v4036 = vpack.c.b16 %v4016, %v4015
        %v4037 = vpack.c.b16 %v4018, %v4017
        %v4038 = vpack.c.b16 %v4020, %v4019
        %v4039 = vpack.c.b16 %v4022, %v4021
        %v4040 = vpack.c.b16 %v4024, %v4023
        %v4049 = vunpack.c.l.b16 %v3953
        %v4050 = vunpack.c.l.b16 %v3954
        %v4051 = vunpack.c.l.b16 %v3955
        %v4052 = vunpack.c.l.b16 %v3956
        %v4053 = vunpack.c.l.b16 %v3957
        %v4054 = vunpack.c.l.b16 %v3958
        %v4055 = vunpack.c.l.b16 %v3959
        %v4056 = vunpack.c.l.b16 %v3960
        %v4057 = vpack.c.b16 %v4050, %v4049
        %v4058 = vpack.c.b16 %v4052, %v4051
        %v4059 = vpack.c.b16 %v4054, %v4053
        %v4060 = vpack.c.b16 %v4056, %v4055
        %v4066 = vsel %vm1273, %v4025, 0
        %v4069 = vsel %vm1273, %v4026, 0
        %v4072 = vsel %vm1273, %v4027, 0
        %v4075 = vsel %vm1273, %v4028, 0
        %v4078 = vsel %vm1273, %v4029, 0
        %v4081 = vsel %vm1273, %v4030, 0
        %v4084 = vsel %vm1273, %v4031, 0
        %v4087 = vsel %vm1273, %v4032, 0
        %v4090 = vsel %vm1273, %v4033, 0
        %v4093 = vsel %vm1273, %v4034, 0
        %v4096 = vsel %vm1273, %v4035, 0
        %v4099 = vsel %vm1273, %v4036, 0
        %v4102 = vsel %vm1273, %v4037, 0
        %v4105 = vsel %vm1273, %v4038, 0
        %v4108 = vsel %vm1273, %v4039, 0
        %v4111 = vsel %vm1273, %v4040, 0
        %4113 = vmatprep.subr.bf16.mxu0 0
        %4114 = vmatpush1.bf16.msra.mxu0 %v4057
        %4115 = vmatprep.subr.bf16.mxu0 0
        %4116 = vmatpush1.bf16.msra.mxu0 %v4058
        %4117 = vmatprep.subr.bf16.mxu0 0
        %4118 = vmatpush1.bf16.msra.mxu0 %v4059
        %4119 = vmatprep.subr.bf16.mxu0 0
        %4120 = vmatpush1.bf16.msra.mxu0 %v4060
        %4121 = vmatprep.subr.bf16.mxu0 0
        %4122 = vmatpush1.bf16.msra.mxu0 0
        %4123 = vmatprep.subr.bf16.mxu0 0
        %4124 = vmatpush1.bf16.msra.mxu0 0
        %4125 = vmatprep.subr.bf16.mxu0 0
        %4126 = vmatpush1.bf16.msra.mxu0 0
        %4127 = vmatprep.subr.bf16.mxu0 0
        %4128 = vmatpush1.bf16.msra.mxu0 0
        %4129 = vmatprep.subr.bf16.mxu0 0
        %4130 = vmatpush1.bf16.msra.mxu0 0
        %4131 = vmatprep.subr.bf16.mxu0 0
        %4132 = vmatpush1.bf16.msra.mxu0 0
        %4133 = vmatprep.subr.bf16.mxu0 0
        %4134 = vmatpush1.bf16.msra.mxu0 0
        %4135 = vmatprep.subr.bf16.mxu0 0
        %4136 = vmatpush1.bf16.msra.mxu0 0
        %4137 = vmatprep.subr.bf16.mxu0 0
        %4138 = vmatpush1.bf16.msra.mxu0 0
        %4139 = vmatprep.subr.bf16.mxu0 0
        %4140 = vmatpush1.bf16.msra.mxu0 0
        %4141 = vmatprep.subr.bf16.mxu0 0
        %4142 = vmatpush1.bf16.msra.mxu0 0
        %4143 = vmatprep.subr.bf16.mxu0 0
        %4144 = vmatpush1.bf16.msra.mxu0 0
        %4145 = vmatprep.mubr.bf16.mxu0 0
        %4146 = vmatmul.mubr.bf16.gmra.mrb[0].mxu0 %v4066
        %v4147 = vpop.f32.mrb[0].mxu0
        %v4148 = vadd.f32 0.0, %v4147
        %v4149 = vpop.f32.mrb[0].mxu0
        %v4150 = vpop.f32.mrb[0].mxu0
        %v4151 = vadd.f32 0.0, %v4150
        %v4152 = vpop.f32.mrb[0].mxu0
        %4153 = vmatprep.mubr.bf16.mxu0 0
        %4154 = vmatmul.mubr.bf16.gmra.mrb[0].mxu0 %v4069
        %v4155 = vpop.f32.mrb[0].mxu0
        %v4156 = vadd.f32 0.0, %v4155
        %v4157 = vpop.f32.mrb[0].mxu0
        %v4158 = vpop.f32.mrb[0].mxu0
        %v4159 = vadd.f32 0.0, %v4158
        %v4160 = vpop.f32.mrb[0].mxu0
        %4161 = vmatprep.mubr.bf16.mxu0 0
        %4162 = vmatmul.mubr.bf16.gmra.mrb[0].mxu0 %v4072
        %v4163 = vpop.f32.mrb[0].mxu0
        %v4164 = vadd.f32 0.0, %v4163
        %v4165 = vpop.f32.mrb[0].mxu0
        %v4166 = vpop.f32.mrb[0].mxu0
        %v4167 = vadd.f32 0.0, %v4166
        %v4168 = vpop.f32.mrb[0].mxu0
        %4169 = vmatprep.mubr.bf16.mxu0 0
        %4170 = vmatmul.mubr.bf16.gmra.mrb[0].mxu0 %v4075
        %v4171 = vpop.f32.mrb[0].mxu0
        %v4172 = vadd.f32 0.0, %v4171
        %v4173 = vpop.f32.mrb[0].mxu0
        %v4174 = vpop.f32.mrb[0].mxu0
        %v4175 = vadd.f32 0.0, %v4174
        %v4176 = vpop.f32.mrb[0].mxu0
        %4177 = vmatprep.mubr.bf16.mxu0 0
        %4178 = vmatmul.mubr.bf16.gmra.mrb[0].mxu0 %v4078
        %v4179 = vpop.f32.mrb[0].mxu0
        %v4180 = vadd.f32 0.0, %v4179
        %v4181 = vpop.f32.mrb[0].mxu0
        %v4182 = vpop.f32.mrb[0].mxu0
        %v4183 = vadd.f32 0.0, %v4182
        %v4184 = vpop.f32.mrb[0].mxu0
        %4185 = vmatprep.mubr.bf16.mxu0 0
        %4186 = vmatmul.mubr.bf16.gmra.mrb[0].mxu0 %v4081
        %v4187 = vpop.f32.mrb[0].mxu0
        %v4188 = vadd.f32 0.0, %v4187
        %v4189 = vpop.f32.mrb[0].mxu0
        %v4190 = vpop.f32.mrb[0].mxu0
        %v4191 = vadd.f32 0.0, %v4190
        %v4192 = vpop.f32.mrb[0].mxu0
        %4193 = vmatprep.mubr.bf16.mxu0 0
        %4194 = vmatmul.mubr.bf16.gmra.mrb[0].mxu0 %v4084
        %v4195 = vpop.f32.mrb[0].mxu0
        %v4196 = vadd.f32 0.0, %v4195
        %v4197 = vpop.f32.mrb[0].mxu0
        %v4198 = vpop.f32.mrb[0].mxu0
        %v4199 = vadd.f32 0.0, %v4198
        %v4200 = vpop.f32.mrb[0].mxu0
        %4201 = vmatprep.mubr.bf16.mxu0 0
        %4202 = vmatmul.mubr.bf16.gmra.mrb[0].mxu0 %v4087
        %v4203 = vpop.f32.mrb[0].mxu0
        %v4204 = vadd.f32 0.0, %v4203
        %v4205 = vpop.f32.mrb[0].mxu0
        %v4206 = vpop.f32.mrb[0].mxu0
        %v4207 = vadd.f32 0.0, %v4206
        %v4208 = vpop.f32.mrb[0].mxu0
        %4209 = vmatprep.mubr.bf16.mxu0 0
        %4210 = vmatmul.mubr.bf16.gmra.mrb[0].mxu0 %v4090
        %v4211 = vpop.f32.mrb[0].mxu0
        %v4212 = vadd.f32 0.0, %v4211
        %v4213 = vpop.f32.mrb[0].mxu0
        %v4214 = vpop.f32.mrb[0].mxu0
        %v4215 = vadd.f32 0.0, %v4214
        %v4216 = vpop.f32.mrb[0].mxu0
        %4217 = vmatprep.mubr.bf16.mxu0 0
        %4218 = vmatmul.mubr.bf16.gmra.mrb[0].mxu0 %v4093
        %v4219 = vpop.f32.mrb[0].mxu0
        %v4220 = vadd.f32 0.0, %v4219
        %v4221 = vpop.f32.mrb[0].mxu0
        %v4222 = vpop.f32.mrb[0].mxu0
        %v4223 = vadd.f32 0.0, %v4222
        %v4224 = vpop.f32.mrb[0].mxu0
        %4225 = vmatprep.mubr.bf16.mxu0 0
        %4226 = vmatmul.mubr.bf16.gmra.mrb[0].mxu0 %v4096
        %v4227 = vpop.f32.mrb[0].mxu0
        %v4228 = vadd.f32 0.0, %v4227
        %v4229 = vpop.f32.mrb[0].mxu0
        %v4230 = vpop.f32.mrb[0].mxu0
        %v4231 = vadd.f32 0.0, %v4230
        %v4232 = vpop.f32.mrb[0].mxu0
        %4233 = vmatprep.mubr.bf16.mxu0 0
        %4234 = vmatmul.mubr.bf16.gmra.mrb[0].mxu0 %v4099
        %v4235 = vpop.f32.mrb[0].mxu0
        %v4236 = vadd.f32 0.0, %v4235
        %v4237 = vpop.f32.mrb[0].mxu0
        %v4238 = vpop.f32.mrb[0].mxu0
        %v4239 = vadd.f32 0.0, %v4238
        %v4240 = vpop.f32.mrb[0].mxu0
        %4241 = vmatprep.mubr.bf16.mxu0 0
        %4242 = vmatmul.mubr.bf16.gmra.mrb[0].mxu0 %v4102
        %v4243 = vpop.f32.mrb[0].mxu0
        %v4244 = vadd.f32 0.0, %v4243
        %v4245 = vpop.f32.mrb[0].mxu0
        %v4246 = vpop.f32.mrb[0].mxu0
        %v4247 = vadd.f32 0.0, %v4246
        %v4248 = vpop.f32.mrb[0].mxu0
        %4249 = vmatprep.mubr.bf16.mxu0 0
        %4250 = vmatmul.mubr.bf16.gmra.mrb[0].mxu0 %v4105
        %v4251 = vpop.f32.mrb[0].mxu0
        %v4252 = vadd.f32 0.0, %v4251
        %v4253 = vpop.f32.mrb[0].mxu0
        %v4254 = vpop.f32.mrb[0].mxu0
        %v4255 = vadd.f32 0.0, %v4254
        %v4256 = vpop.f32.mrb[0].mxu0
        %4257 = vmatprep.mubr.bf16.mxu0 0
        %4258 = vmatmul.mubr.bf16.gmra.mrb[0].mxu0 %v4108
        %v4259 = vpop.f32.mrb[0].mxu0
        %v4260 = vadd.f32 0.0, %v4259
        %v4261 = vpop.f32.mrb[0].mxu0
        %v4262 = vpop.f32.mrb[0].mxu0
        %v4263 = vadd.f32 0.0, %v4262
        %v4264 = vpop.f32.mrb[0].mxu0
        %4265 = vmatprep.mubr.bf16.mxu0 0
        %4266 = vmatmul.mubr.bf16.gmra.mrb[0].mxu0 %v4111
        %v4267 = vpop.f32.mrb[0].mxu0
        %v4268 = vadd.f32 0.0, %v4267
        %v4269 = vpop.f32.mrb[0].mxu0
        %v4270 = vpop.f32.mrb[0].mxu0
        %v4271 = vadd.f32 0.0, %v4270
        %v4272 = vpop.f32.mrb[0].mxu0
        %4273 = vdwg.mxu0
        %v4274 = vadd.f32 %v3887, %v4148
        %v4275 = vadd.f32 %v3888, %v4151
        %v4276 = vadd.f32 %v3889, %v4156
        %v4277 = vadd.f32 %v3890, %v4159
        %v4278 = vadd.f32 %v3891, %v4164
        %v4279 = vadd.f32 %v3892, %v4167
        %v4280 = vadd.f32 %v3893, %v4172
        %v4281 = vadd.f32 %v3894, %v4175
        %v4282 = vadd.f32 %v3895, %v4180
        %v4283 = vadd.f32 %v3896, %v4183
        %v4284 = vadd.f32 %v3897, %v4188
        %v4285 = vadd.f32 %v3898, %v4191
        %v4286 = vadd.f32 %v3899, %v4196
        %v4287 = vadd.f32 %v3900, %v4199
        %v4288 = vadd.f32 %v3901, %v4204
        %v4289 = vadd.f32 %v3902, %v4207
        %v4290 = vadd.f32 %v3903, %v4212
        %v4291 = vadd.f32 %v3904, %v4215
        %v4292 = vadd.f32 %v3905, %v4220
        %v4293 = vadd.f32 %v3906, %v4223
        %v4294 = vadd.f32 %v3907, %v4228
        %v4295 = vadd.f32 %v3908, %v4231
        %v4296 = vadd.f32 %v3909, %v4236
        %v4297 = vadd.f32 %v3910, %v4239
        %v4298 = vadd.f32 %v3911, %v4244
        %v4299 = vadd.f32 %v3912, %v4247
        %v4300 = vadd.f32 %v3913, %v4252
        %v4301 = vadd.f32 %v3914, %v4255
        %v4302 = vadd.f32 %v3915, %v4260
        %v4303 = vadd.f32 %v3916, %v4263
        %v4304 = vadd.f32 %v3917, %v4268
        %v4305 = vadd.f32 %v3918, %v4271
        %v4306 = vld [vmem:[%s3919] sm:$0xf]
        %v4307 = vld [vmem:[%s3919 + $0x4] sm:$0xf]
        %v4308 = vld [vmem:[%s3919 + $0x8] sm:$0x1]
        %v4309 = vld [vmem:[%s3919 + $0xc] sm:$0xf]
        %v4310 = vld [vmem:[%s3919 + $0x10] sm:$0xf]
        %v4311 = vld [vmem:[%s3919 + $0x14] sm:$0x1]
        %v4312 = vld [vmem:[%s3919 + $0x18] sm:$0xf]
        %v4313 = vld [vmem:[%s3919 + $0x1c] sm:$0xf]
        %v4314 = vld [vmem:[%s3919 + $0x20] sm:$0x1]
        %v4315 = vld [vmem:[%s3919 + $0x24] sm:$0xf]
        %v4316 = vld [vmem:[%s3919 + $0x28] sm:$0xf]
        %v4317 = vld [vmem:[%s3919 + $0x2c] sm:$0x1]
        %v4318 = vld [vmem:[%s3919 + $0x30] sm:$0xf]
        %v4319 = vld [vmem:[%s3919 + $0x34] sm:$0xf]
        %v4320 = vld [vmem:[%s3919 + $0x38] sm:$0x1]
        %v4321 = vld [vmem:[%s3919 + $0x3c] sm:$0xf]
        %v4322 = vld [vmem:[%s3919 + $0x40] sm:$0xf]
        %v4323 = vld [vmem:[%s3919 + $0x44] sm:$0x1]
        %v4324 = vld [vmem:[%s3919 + $0x48] sm:$0xf]
        %v4325 = vld [vmem:[%s3919 + $0x4c] sm:$0xf]
        %v4326 = vld [vmem:[%s3919 + $0x50] sm:$0x1]
        %v4327 = vld [vmem:[%s3919 + $0x54] sm:$0xf]
        %v4328 = vld [vmem:[%s3919 + $0x58] sm:$0xf]
        %v4329 = vld [vmem:[%s3919 + $0x5c] sm:$0x1]
        %v4330 = vld [vmem:[%s3919 + $0x60] sm:$0xf]
        %v4331 = vld [vmem:[%s3919 + $0x64] sm:$0xf]
        %v4332 = vld [vmem:[%s3919 + $0x68] sm:$0x1]
        %v4333 = vld [vmem:[%s3919 + $0x6c] sm:$0xf]
        %v4334 = vld [vmem:[%s3919 + $0x70] sm:$0xf]
        %v4335 = vld [vmem:[%s3919 + $0x74] sm:$0x1]
        %v4336 = vld [vmem:[%s3919 + $0x78] sm:$0xf]
        %v4337 = vld [vmem:[%s3919 + $0x7c] sm:$0xf]
        %v4338 = vld [vmem:[%s3919 + $0x80] sm:$0x1]
        %v4339 = vld [vmem:[%s3919 + $0x84] sm:$0xf]
        %v4340 = vld [vmem:[%s3919 + $0x88] sm:$0xf]
        %v4341 = vld [vmem:[%s3919 + $0x8c] sm:$0x1]
        %v4342 = vld [vmem:[%s3919 + $0x90] sm:$0xf]
        %v4343 = vld [vmem:[%s3919 + $0x94] sm:$0xf]
        %v4344 = vld [vmem:[%s3919 + $0x98] sm:$0x1]
        %v4345 = vld [vmem:[%s3919 + $0x9c] sm:$0xf]
        %v4346 = vld [vmem:[%s3919 + $0xa0] sm:$0xf]
        %v4347 = vld [vmem:[%s3919 + $0xa4] sm:$0x1]
        %v4348 = vld [vmem:[%s3919 + $0xa8] sm:$0xf]
        %v4349 = vld [vmem:[%s3919 + $0xac] sm:$0xf]
        %v4350 = vld [vmem:[%s3919 + $0xb0] sm:$0x1]
        %v4351 = vld [vmem:[%s3919 + $0xb4] sm:$0xf]
        %v4352 = vld [vmem:[%s3919 + $0xb8] sm:$0xf]
        %v4353 = vld [vmem:[%s3919 + $0xbc] sm:$0x1]
        %v4355 = vshrl.u32 %v4306, 16
        %v4357 = vrot.slane %v4355, 4
        %v4358 = vshll.u32 %v4306, 16
        %v4360 = vrot.slane %v4358, 5
        %v4361 = vor.u32 %v4357, %v4360
        %v4362 = vrot.slane %v4361, 4
        %v4364 = vshll.u32 %v4307, 16
        %v4366 = vrot.slane %v4364, 5
        %v4367 = vsel %vm807, %v4362, %v4366
        %v4368 = vshrl.u32 %v4307, 16
        %v4370 = vrot.slane %v4368, 4
        %v4371 = vor.u32 %v4370, %v4366
        %v4372 = vrot.slane %v4371, 4
        %v4374 = vshll.u32 %v4308, 16
        %v4376 = vrot.slane %v4374, 5
        %v4377 = vsel %vm807, %v4372, %v4376
        %v4379 = vshrl.u32 %v4309, 16
        %v4381 = vrot.slane %v4379, 4
        %v4382 = vshll.u32 %v4309, 16
        %v4384 = vrot.slane %v4382, 5
        %v4385 = vor.u32 %v4381, %v4384
        %v4386 = vrot.slane %v4385, 4
        %v4388 = vshll.u32 %v4310, 16
        %v4390 = vrot.slane %v4388, 5
        %v4391 = vsel %vm807, %v4386, %v4390
        %v4392 = vshrl.u32 %v4310, 16
        %v4394 = vrot.slane %v4392, 4
        %v4395 = vor.u32 %v4394, %v4390
        %v4396 = vrot.slane %v4395, 4
        %v4398 = vshll.u32 %v4311, 16
        %v4400 = vrot.slane %v4398, 5
        %v4401 = vsel %vm807, %v4396, %v4400
        %v4403 = vshrl.u32 %v4312, 16
        %v4405 = vrot.slane %v4403, 4
        %v4406 = vshll.u32 %v4312, 16
        %v4408 = vrot.slane %v4406, 5
        %v4409 = vor.u32 %v4405, %v4408
        %v4410 = vrot.slane %v4409, 4
        %v4412 = vshll.u32 %v4313, 16
        %v4414 = vrot.slane %v4412, 5
        %v4415 = vsel %vm807, %v4410, %v4414
        %v4416 = vshrl.u32 %v4313, 16
        %v4418 = vrot.slane %v4416, 4
        %v4419 = vor.u32 %v4418, %v4414
        %v4420 = vrot.slane %v4419, 4
        %v4422 = vshll.u32 %v4314, 16
        %v4424 = vrot.slane %v4422, 5
        %v4425 = vsel %vm807, %v4420, %v4424
        %v4427 = vshrl.u32 %v4315, 16
        %v4429 = vrot.slane %v4427, 4
        %v4430 = vshll.u32 %v4315, 16
        %v4432 = vrot.slane %v4430, 5
        %v4433 = vor.u32 %v4429, %v4432
        %v4434 = vrot.slane %v4433, 4
        %v4436 = vshll.u32 %v4316, 16
        %v4438 = vrot.slane %v4436, 5
        %v4439 = vsel %vm807, %v4434, %v4438
        %v4440 = vshrl.u32 %v4316, 16
        %v4442 = vrot.slane %v4440, 4
        %v4443 = vor.u32 %v4442, %v4438
        %v4444 = vrot.slane %v4443, 4
        %v4446 = vshll.u32 %v4317, 16
        %v4448 = vrot.slane %v4446, 5
        %v4449 = vsel %vm807, %v4444, %v4448
        %v4451 = vshrl.u32 %v4318, 16
        %v4453 = vrot.slane %v4451, 4
        %v4454 = vshll.u32 %v4318, 16
        %v4456 = vrot.slane %v4454, 5
        %v4457 = vor.u32 %v4453, %v4456
        %v4458 = vrot.slane %v4457, 4
        %v4460 = vshll.u32 %v4319, 16
        %v4462 = vrot.slane %v4460, 5
        %v4463 = vsel %vm807, %v4458, %v4462
        %v4464 = vshrl.u32 %v4319, 16
        %v4466 = vrot.slane %v4464, 4
        %v4467 = vor.u32 %v4466, %v4462
        %v4468 = vrot.slane %v4467, 4
        %v4470 = vshll.u32 %v4320, 16
        %v4472 = vrot.slane %v4470, 5
        %v4473 = vsel %vm807, %v4468, %v4472
        %v4475 = vshrl.u32 %v4321, 16
        %v4477 = vrot.slane %v4475, 4
        %v4478 = vshll.u32 %v4321, 16
        %v4480 = vrot.slane %v4478, 5
        %v4481 = vor.u32 %v4477, %v4480
        %v4482 = vrot.slane %v4481, 4
        %v4484 = vshll.u32 %v4322, 16
        %v4486 = vrot.slane %v4484, 5
        %v4487 = vsel %vm807, %v4482, %v4486
        %v4488 = vshrl.u32 %v4322, 16
        %v4490 = vrot.slane %v4488, 4
        %v4491 = vor.u32 %v4490, %v4486
        %v4492 = vrot.slane %v4491, 4
        %v4494 = vshll.u32 %v4323, 16
        %v4496 = vrot.slane %v4494, 5
        %v4497 = vsel %vm807, %v4492, %v4496
        %v4499 = vshrl.u32 %v4324, 16
        %v4501 = vrot.slane %v4499, 4
        %v4502 = vshll.u32 %v4324, 16
        %v4504 = vrot.slane %v4502, 5
        %v4505 = vor.u32 %v4501, %v4504
        %v4506 = vrot.slane %v4505, 4
        %v4508 = vshll.u32 %v4325, 16
        %v4510 = vrot.slane %v4508, 5
        %v4511 = vsel %vm807, %v4506, %v4510
        %v4512 = vshrl.u32 %v4325, 16
        %v4514 = vrot.slane %v4512, 4
        %v4515 = vor.u32 %v4514, %v4510
        %v4516 = vrot.slane %v4515, 4
        %v4518 = vshll.u32 %v4326, 16
        %v4520 = vrot.slane %v4518, 5
        %v4521 = vsel %vm807, %v4516, %v4520
        %v4523 = vshrl.u32 %v4327, 16
        %v4525 = vrot.slane %v4523, 4
        %v4526 = vshll.u32 %v4327, 16
        %v4528 = vrot.slane %v4526, 5
        %v4529 = vor.u32 %v4525, %v4528
        %v4530 = vrot.slane %v4529, 4
        %v4532 = vshll.u32 %v4328, 16
        %v4534 = vrot.slane %v4532, 5
        %v4535 = vsel %vm807, %v4530, %v4534
        %v4536 = vshrl.u32 %v4328, 16
        %v4538 = vrot.slane %v4536, 4
        %v4539 = vor.u32 %v4538, %v4534
        %v4540 = vrot.slane %v4539, 4
        %v4542 = vshll.u32 %v4329, 16
        %v4544 = vrot.slane %v4542, 5
        %v4545 = vsel %vm807, %v4540, %v4544
        %v4547 = vshrl.u32 %v4330, 16
        %v4549 = vrot.slane %v4547, 4
        %v4550 = vshll.u32 %v4330, 16
        %v4552 = vrot.slane %v4550, 5
        %v4553 = vor.u32 %v4549, %v4552
        %v4554 = vrot.slane %v4553, 4
        %v4556 = vshll.u32 %v4331, 16
        %v4558 = vrot.slane %v4556, 5
        %v4559 = vsel %vm807, %v4554, %v4558
        %v4560 = vshrl.u32 %v4331, 16
        %v4562 = vrot.slane %v4560, 4
        %v4563 = vor.u32 %v4562, %v4558
        %v4564 = vrot.slane %v4563, 4
        %v4566 = vshll.u32 %v4332, 16
        %v4568 = vrot.slane %v4566, 5
        %v4569 = vsel %vm807, %v4564, %v4568
        %v4571 = vshrl.u32 %v4333, 16
        %v4573 = vrot.slane %v4571, 4
        %v4574 = vshll.u32 %v4333, 16
        %v4576 = vrot.slane %v4574, 5
        %v4577 = vor.u32 %v4573, %v4576
        %v4578 = vrot.slane %v4577, 4
        %v4580 = vshll.u32 %v4334, 16
        %v4582 = vrot.slane %v4580, 5
        %v4583 = vsel %vm807, %v4578, %v4582
        %v4584 = vshrl.u32 %v4334, 16
        %v4586 = vrot.slane %v4584, 4
        %v4587 = vor.u32 %v4586, %v4582
        %v4588 = vrot.slane %v4587, 4
        %v4590 = vshll.u32 %v4335, 16
        %v4592 = vrot.slane %v4590, 5
        %v4593 = vsel %vm807, %v4588, %v4592
        %v4595 = vshrl.u32 %v4336, 16
        %v4597 = vrot.slane %v4595, 4
        %v4598 = vshll.u32 %v4336, 16
        %v4600 = vrot.slane %v4598, 5
        %v4601 = vor.u32 %v4597, %v4600
        %v4602 = vrot.slane %v4601, 4
        %v4604 = vshll.u32 %v4337, 16
        %v4606 = vrot.slane %v4604, 5
        %v4607 = vsel %vm807, %v4602, %v4606
        %v4608 = vshrl.u32 %v4337, 16
        %v4610 = vrot.slane %v4608, 4
        %v4611 = vor.u32 %v4610, %v4606
        %v4612 = vrot.slane %v4611, 4
        %v4614 = vshll.u32 %v4338, 16
        %v4616 = vrot.slane %v4614, 5
        %v4617 = vsel %vm807, %v4612, %v4616
        %v4619 = vshrl.u32 %v4339, 16
        %v4621 = vrot.slane %v4619, 4
        %v4622 = vshll.u32 %v4339, 16
        %v4624 = vrot.slane %v4622, 5
        %v4625 = vor.u32 %v4621, %v4624
        %v4626 = vrot.slane %v4625, 4
        %v4628 = vshll.u32 %v4340, 16
        %v4630 = vrot.slane %v4628, 5
        %v4631 = vsel %vm807, %v4626, %v4630
        %v4632 = vshrl.u32 %v4340, 16
        %v4634 = vrot.slane %v4632, 4
        %v4635 = vor.u32 %v4634, %v4630
        %v4636 = vrot.slane %v4635, 4
        %v4638 = vshll.u32 %v4341, 16
        %v4640 = vrot.slane %v4638, 5
        %v4641 = vsel %vm807, %v4636, %v4640
        %v4643 = vshrl.u32 %v4342, 16
        %v4645 = vrot.slane %v4643, 4
        %v4646 = vshll.u32 %v4342, 16
        %v4648 = vrot.slane %v4646, 5
        %v4649 = vor.u32 %v4645, %v4648
        %v4650 = vrot.slane %v4649, 4
        %v4652 = vshll.u32 %v4343, 16
        %v4654 = vrot.slane %v4652, 5
        %v4655 = vsel %vm807, %v4650, %v4654
        %v4656 = vshrl.u32 %v4343, 16
        %v4658 = vrot.slane %v4656, 4
        %v4659 = vor.u32 %v4658, %v4654
        %v4660 = vrot.slane %v4659, 4
        %v4662 = vshll.u32 %v4344, 16
        %v4664 = vrot.slane %v4662, 5
        %v4665 = vsel %vm807, %v4660, %v4664
        %v4667 = vshrl.u32 %v4345, 16
        %v4669 = vrot.slane %v4667, 4
        %v4670 = vshll.u32 %v4345, 16
        %v4672 = vrot.slane %v4670, 5
        %v4673 = vor.u32 %v4669, %v4672
        %v4674 = vrot.slane %v4673, 4
        %v4676 = vshll.u32 %v4346, 16
        %v4678 = vrot.slane %v4676, 5
        %v4679 = vsel %vm807, %v4674, %v4678
        %v4680 = vshrl.u32 %v4346, 16
        %v4682 = vrot.slane %v4680, 4
        %v4683 = vor.u32 %v4682, %v4678
        %v4684 = vrot.slane %v4683, 4
        %v4686 = vshll.u32 %v4347, 16
        %v4688 = vrot.slane %v4686, 5
        %v4689 = vsel %vm807, %v4684, %v4688
        %v4691 = vshrl.u32 %v4348, 16
        %v4693 = vrot.slane %v4691, 4
        %v4694 = vshll.u32 %v4348, 16
        %v4696 = vrot.slane %v4694, 5
        %v4697 = vor.u32 %v4693, %v4696
        %v4698 = vrot.slane %v4697, 4
        %v4700 = vshll.u32 %v4349, 16
        %v4702 = vrot.slane %v4700, 5
        %v4703 = vsel %vm807, %v4698, %v4702
        %v4704 = vshrl.u32 %v4349, 16
        %v4706 = vrot.slane %v4704, 4
        %v4707 = vor.u32 %v4706, %v4702
        %v4708 = vrot.slane %v4707, 4
        %v4710 = vshll.u32 %v4350, 16
        %v4712 = vrot.slane %v4710, 5
        %v4713 = vsel %vm807, %v4708, %v4712
        %v4715 = vshrl.u32 %v4351, 16
        %v4717 = vrot.slane %v4715, 4
        %v4718 = vshll.u32 %v4351, 16
        %v4720 = vrot.slane %v4718, 5
        %v4721 = vor.u32 %v4717, %v4720
        %v4722 = vrot.slane %v4721, 4
        %v4724 = vshll.u32 %v4352, 16
        %v4726 = vrot.slane %v4724, 5
        %v4727 = vsel %vm807, %v4722, %v4726
        %v4728 = vshrl.u32 %v4352, 16
        %v4730 = vrot.slane %v4728, 4
        %v4731 = vor.u32 %v4730, %v4726
        %v4732 = vrot.slane %v4731, 4
        %v4734 = vshll.u32 %v4353, 16
        %v4736 = vrot.slane %v4734, 5
        %v4737 = vsel %vm807, %v4732, %v4736
        %s4738 = scalar_lea.vmem %s1, 224
        %v4739 = vld [vmem:[%s4738] sm:$0xf]
        %v4740 = vld [vmem:[%s4738 + $0x4] sm:$0xf]
        %v4741 = vld [vmem:[%s4738 + $0x8] sm:$0xf]
        %v4742 = vld [vmem:[%s4738 + $0xc] sm:$0xf]
        %v4743 = vld [vmem:[%s4738 + $0x10] sm:$0xf]
        %v4744 = vld [vmem:[%s4738 + $0x14] sm:$0xf]
        %v4745 = vld [vmem:[%s4738 + $0x18] sm:$0xf]
        %v4746 = vld [vmem:[%s4738 + $0x1c] sm:$0xf]
        %v4747 = vunpack.c.l.b16 %v4367
        %v4748 = vunpack.c.l.b16 %v4377
        %v4749 = vunpack.c.l.b16 %v4391
        %v4750 = vunpack.c.l.b16 %v4401
        %v4751 = vunpack.c.l.b16 %v4415
        %v4752 = vunpack.c.l.b16 %v4425
        %v4753 = vunpack.c.l.b16 %v4439
        %v4754 = vunpack.c.l.b16 %v4449
        %v4755 = vunpack.c.l.b16 %v4463
        %v4756 = vunpack.c.l.b16 %v4473
        %v4757 = vunpack.c.l.b16 %v4487
        %v4758 = vunpack.c.l.b16 %v4497
        %v4759 = vunpack.c.l.b16 %v4511
        %v4760 = vunpack.c.l.b16 %v4521
        %v4761 = vunpack.c.l.b16 %v4535
        %v4762 = vunpack.c.l.b16 %v4545
        %v4763 = vunpack.c.l.b16 %v4559
        %v4764 = vunpack.c.l.b16 %v4569
        %v4765 = vunpack.c.l.b16 %v4583
        %v4766 = vunpack.c.l.b16 %v4593
        %v4767 = vunpack.c.l.b16 %v4607
        %v4768 = vunpack.c.l.b16 %v4617
        %v4769 = vunpack.c.l.b16 %v4631
        %v4770 = vunpack.c.l.b16 %v4641
        %v4771 = vunpack.c.l.b16 %v4655
        %v4772 = vunpack.c.l.b16 %v4665
        %v4773 = vunpack.c.l.b16 %v4679
        %v4774 = vunpack.c.l.b16 %v4689
        %v4775 = vunpack.c.l.b16 %v4703
        %v4776 = vunpack.c.l.b16 %v4713
        %v4777 = vunpack.c.l.b16 %v4727
        %v4778 = vunpack.c.l.b16 %v4737
        %v4779 = vpack.c.b16 %v4748, %v4747
        %v4780 = vpack.c.b16 %v4750, %v4749
        %v4781 = vpack.c.b16 %v4752, %v4751
        %v4782 = vpack.c.b16 %v4754, %v4753
        %v4783 = vpack.c.b16 %v4756, %v4755
        %v4784 = vpack.c.b16 %v4758, %v4757
        %v4785 = vpack.c.b16 %v4760, %v4759
        %v4786 = vpack.c.b16 %v4762, %v4761
        %v4787 = vpack.c.b16 %v4764, %v4763
        %v4788 = vpack.c.b16 %v4766, %v4765
        %v4789 = vpack.c.b16 %v4768, %v4767
        %v4790 = vpack.c.b16 %v4770, %v4769
        %v4791 = vpack.c.b16 %v4772, %v4771
        %v4792 = vpack.c.b16 %v4774, %v4773
        %v4793 = vpack.c.b16 %v4776, %v4775
        %v4794 = vpack.c.b16 %v4778, %v4777
        %v4803 = vunpack.c.l.b16 %v4739
        %v4804 = vunpack.c.l.b16 %v4740
        %v4805 = vunpack.c.l.b16 %v4741
        %v4806 = vunpack.c.l.b16 %v4742
        %v4807 = vunpack.c.l.b16 %v4743
        %v4808 = vunpack.c.l.b16 %v4744
        %v4809 = vunpack.c.l.b16 %v4745
        %v4810 = vunpack.c.l.b16 %v4746
        %v4811 = vpack.c.b16 %v4804, %v4803
        %v4812 = vpack.c.b16 %v4806, %v4805
        %v4813 = vpack.c.b16 %v4808, %v4807
        %v4814 = vpack.c.b16 %v4810, %v4809
        %v4820 = vsel %vm1273, %v4779, 0
        %v4823 = vsel %vm1273, %v4780, 0
        %v4826 = vsel %vm1273, %v4781, 0
        %v4829 = vsel %vm1273, %v4782, 0
        %v4832 = vsel %vm1273, %v4783, 0
        %v4835 = vsel %vm1273, %v4784, 0
        %v4838 = vsel %vm1273, %v4785, 0
        %v4841 = vsel %vm1273, %v4786, 0
        %v4844 = vsel %vm1273, %v4787, 0
        %v4847 = vsel %vm1273, %v4788, 0
        %v4850 = vsel %vm1273, %v4789, 0
        %v4853 = vsel %vm1273, %v4790, 0
        %v4856 = vsel %vm1273, %v4791, 0
        %v4859 = vsel %vm1273, %v4792, 0
        %v4862 = vsel %vm1273, %v4793, 0
        %v4865 = vsel %vm1273, %v4794, 0
        %4867 = vmatprep.subr.bf16.mxu0 0
        %4868 = vmatpush1.bf16.msra.mxu0 %v4811
        %4869 = vmatprep.subr.bf16.mxu0 0
        %4870 = vmatpush1.bf16.msra.mxu0 %v4812
        %4871 = vmatprep.subr.bf16.mxu0 0
        %4872 = vmatpush1.bf16.msra.mxu0 %v4813
        %4873 = vmatprep.subr.bf16.mxu0 0
        %4874 = vmatpush1.bf16.msra.mxu0 %v4814
        %4875 = vmatprep.subr.bf16.mxu0 0
        %4876 = vmatpush1.bf16.msra.mxu0 0
        %4877 = vmatprep.subr.bf16.mxu0 0
        %4878 = vmatpush1.bf16.msra.mxu0 0
        %4879 = vmatprep.subr.bf16.mxu0 0
        %4880 = vmatpush1.bf16.msra.mxu0 0
        %4881 = vmatprep.subr.bf16.mxu0 0
        %4882 = vmatpush1.bf16.msra.mxu0 0
        %4883 = vmatprep.subr.bf16.mxu0 0
        %4884 = vmatpush1.bf16.msra.mxu0 0
        %4885 = vmatprep.subr.bf16.mxu0 0
        %4886 = vmatpush1.bf16.msra.mxu0 0
        %4887 = vmatprep.subr.bf16.mxu0 0
        %4888 = vmatpush1.bf16.msra.mxu0 0
        %4889 = vmatprep.subr.bf16.mxu0 0
        %4890 = vmatpush1.bf16.msra.mxu0 0
        %4891 = vmatprep.subr.bf16.mxu0 0
        %4892 = vmatpush1.bf16.msra.mxu0 0
        %4893 = vmatprep.subr.bf16.mxu0 0
        %4894 = vmatpush1.bf16.msra.mxu0 0
        %4895 = vmatprep.subr.bf16.mxu0 0
        %4896 = vmatpush1.bf16.msra.mxu0 0
        %4897 = vmatprep.subr.bf16.mxu0 0
        %4898 = vmatpush1.bf16.msra.mxu0 0
        %4899 = vmatprep.mubr.bf16.mxu0 0
        %4900 = vmatmul.mubr.bf16.gmra.mrb[0].mxu0 %v4820
        %v4901 = vpop.f32.mrb[0].mxu0
        %v4902 = vadd.f32 0.0, %v4901
        %v4903 = vpop.f32.mrb[0].mxu0
        %v4904 = vpop.f32.mrb[0].mxu0
        %v4905 = vadd.f32 0.0, %v4904
        %v4906 = vpop.f32.mrb[0].mxu0
        %4907 = vmatprep.mubr.bf16.mxu0 0
        %4908 = vmatmul.mubr.bf16.gmra.mrb[0].mxu0 %v4823
        %v4909 = vpop.f32.mrb[0].mxu0
        %v4910 = vadd.f32 0.0, %v4909
        %v4911 = vpop.f32.mrb[0].mxu0
        %v4912 = vpop.f32.mrb[0].mxu0
        %v4913 = vadd.f32 0.0, %v4912
        %v4914 = vpop.f32.mrb[0].mxu0
        %4915 = vmatprep.mubr.bf16.mxu0 0
        %4916 = vmatmul.mubr.bf16.gmra.mrb[0].mxu0 %v4826
        %v4917 = vpop.f32.mrb[0].mxu0
        %v4918 = vadd.f32 0.0, %v4917
        %v4919 = vpop.f32.mrb[0].mxu0
        %v4920 = vpop.f32.mrb[0].mxu0
        %v4921 = vadd.f32 0.0, %v4920
        %v4922 = vpop.f32.mrb[0].mxu0
        %4923 = vmatprep.mubr.bf16.mxu0 0
        %4924 = vmatmul.mubr.bf16.gmra.mrb[0].mxu0 %v4829
        %v4925 = vpop.f32.mrb[0].mxu0
        %v4926 = vadd.f32 0.0, %v4925
        %v4927 = vpop.f32.mrb[0].mxu0
        %v4928 = vpop.f32.mrb[0].mxu0
        %v4929 = vadd.f32 0.0, %v4928
        %v4930 = vpop.f32.mrb[0].mxu0
        %4931 = vmatprep.mubr.bf16.mxu0 0
        %4932 = vmatmul.mubr.bf16.gmra.mrb[0].mxu0 %v4832
        %v4933 = vpop.f32.mrb[0].mxu0
        %v4934 = vadd.f32 0.0, %v4933
        %v4935 = vpop.f32.mrb[0].mxu0
        %v4936 = vpop.f32.mrb[0].mxu0
        %v4937 = vadd.f32 0.0, %v4936
        %v4938 = vpop.f32.mrb[0].mxu0
        %4939 = vmatprep.mubr.bf16.mxu0 0
        %4940 = vmatmul.mubr.bf16.gmra.mrb[0].mxu0 %v4835
        %v4941 = vpop.f32.mrb[0].mxu0
        %v4942 = vadd.f32 0.0, %v4941
        %v4943 = vpop.f32.mrb[0].mxu0
        %v4944 = vpop.f32.mrb[0].mxu0
        %v4945 = vadd.f32 0.0, %v4944
        %v4946 = vpop.f32.mrb[0].mxu0
        %4947 = vmatprep.mubr.bf16.mxu0 0
        %4948 = vmatmul.mubr.bf16.gmra.mrb[0].mxu0 %v4838
        %v4949 = vpop.f32.mrb[0].mxu0
        %v4950 = vadd.f32 0.0, %v4949
        %v4951 = vpop.f32.mrb[0].mxu0
        %v4952 = vpop.f32.mrb[0].mxu0
        %v4953 = vadd.f32 0.0, %v4952
        %v4954 = vpop.f32.mrb[0].mxu0
        %4955 = vmatprep.mubr.bf16.mxu0 0
        %4956 = vmatmul.mubr.bf16.gmra.mrb[0].mxu0 %v4841
        %v4957 = vpop.f32.mrb[0].mxu0
        %v4958 = vadd.f32 0.0, %v4957
        %v4959 = vpop.f32.mrb[0].mxu0
        %v4960 = vpop.f32.mrb[0].mxu0
        %v4961 = vadd.f32 0.0, %v4960
        %v4962 = vpop.f32.mrb[0].mxu0
        %4963 = vmatprep.mubr.bf16.mxu0 0
        %4964 = vmatmul.mubr.bf16.gmra.mrb[0].mxu0 %v4844
        %v4965 = vpop.f32.mrb[0].mxu0
        %v4966 = vadd.f32 0.0, %v4965
        %v4967 = vpop.f32.mrb[0].mxu0
        %v4968 = vpop.f32.mrb[0].mxu0
        %v4969 = vadd.f32 0.0, %v4968
        %v4970 = vpop.f32.mrb[0].mxu0
        %4971 = vmatprep.mubr.bf16.mxu0 0
        %4972 = vmatmul.mubr.bf16.gmra.mrb[0].mxu0 %v4847
        %v4973 = vpop.f32.mrb[0].mxu0
        %v4974 = vadd.f32 0.0, %v4973
        %v4975 = vpop.f32.mrb[0].mxu0
        %v4976 = vpop.f32.mrb[0].mxu0
        %v4977 = vadd.f32 0.0, %v4976
        %v4978 = vpop.f32.mrb[0].mxu0
        %4979 = vmatprep.mubr.bf16.mxu0 0
        %4980 = vmatmul.mubr.bf16.gmra.mrb[0].mxu0 %v4850
        %v4981 = vpop.f32.mrb[0].mxu0
        %v4982 = vadd.f32 0.0, %v4981
        %v4983 = vpop.f32.mrb[0].mxu0
        %v4984 = vpop.f32.mrb[0].mxu0
        %v4985 = vadd.f32 0.0, %v4984
        %v4986 = vpop.f32.mrb[0].mxu0
        %4987 = vmatprep.mubr.bf16.mxu0 0
        %4988 = vmatmul.mubr.bf16.gmra.mrb[0].mxu0 %v4853
        %v4989 = vpop.f32.mrb[0].mxu0
        %v4990 = vadd.f32 0.0, %v4989
        %v4991 = vpop.f32.mrb[0].mxu0
        %v4992 = vpop.f32.mrb[0].mxu0
        %v4993 = vadd.f32 0.0, %v4992
        %v4994 = vpop.f32.mrb[0].mxu0
        %4995 = vmatprep.mubr.bf16.mxu0 0
        %4996 = vmatmul.mubr.bf16.gmra.mrb[0].mxu0 %v4856
        %v4997 = vpop.f32.mrb[0].mxu0
        %v4998 = vadd.f32 0.0, %v4997
        %v4999 = vpop.f32.mrb[0].mxu0
        %v5000 = vpop.f32.mrb[0].mxu0
        %v5001 = vadd.f32 0.0, %v5000
        %v5002 = vpop.f32.mrb[0].mxu0
        %5003 = vmatprep.mubr.bf16.mxu0 0
        %5004 = vmatmul.mubr.bf16.gmra.mrb[0].mxu0 %v4859
        %v5005 = vpop.f32.mrb[0].mxu0
        %v5006 = vadd.f32 0.0, %v5005
        %v5007 = vpop.f32.mrb[0].mxu0
        %v5008 = vpop.f32.mrb[0].mxu0
        %v5009 = vadd.f32 0.0, %v5008
        %v5010 = vpop.f32.mrb[0].mxu0
        %5011 = vmatprep.mubr.bf16.mxu0 0
        %5012 = vmatmul.mubr.bf16.gmra.mrb[0].mxu0 %v4862
        %v5013 = vpop.f32.mrb[0].mxu0
        %v5014 = vadd.f32 0.0, %v5013
        %v5015 = vpop.f32.mrb[0].mxu0
        %v5016 = vpop.f32.mrb[0].mxu0
        %v5017 = vadd.f32 0.0, %v5016
        %v5018 = vpop.f32.mrb[0].mxu0
        %5019 = vmatprep.mubr.bf16.mxu0 0
        %5020 = vmatmul.mubr.bf16.gmra.mrb[0].mxu0 %v4865
        %v5021 = vpop.f32.mrb[0].mxu0
        %v5022 = vadd.f32 0.0, %v5021
        %v5023 = vpop.f32.mrb[0].mxu0
        %v5024 = vpop.f32.mrb[0].mxu0
        %v5025 = vadd.f32 0.0, %v5024
        %v5026 = vpop.f32.mrb[0].mxu0
        %5027 = vdwg.mxu0
        %v5028 = vadd.f32 %v4274, %v4902
        %v5029 = vadd.f32 %v4275, %v4905
        %v5030 = vadd.f32 %v4276, %v4910
        %v5031 = vadd.f32 %v4277, %v4913
        %v5032 = vadd.f32 %v4278, %v4918
        %v5033 = vadd.f32 %v4279, %v4921
        %v5034 = vadd.f32 %v4280, %v4926
        %v5035 = vadd.f32 %v4281, %v4929
        %v5036 = vadd.f32 %v4282, %v4934
        %v5037 = vadd.f32 %v4283, %v4937
        %v5038 = vadd.f32 %v4284, %v4942
        %v5039 = vadd.f32 %v4285, %v4945
        %v5040 = vadd.f32 %v4286, %v4950
        %v5041 = vadd.f32 %v4287, %v4953
        %v5042 = vadd.f32 %v4288, %v4958
        %v5043 = vadd.f32 %v4289, %v4961
        %v5044 = vadd.f32 %v4290, %v4966
        %v5045 = vadd.f32 %v4291, %v4969
        %v5046 = vadd.f32 %v4292, %v4974
        %v5047 = vadd.f32 %v4293, %v4977
        %v5048 = vadd.f32 %v4294, %v4982
        %v5049 = vadd.f32 %v4295, %v4985
        %v5050 = vadd.f32 %v4296, %v4990
        %v5051 = vadd.f32 %v4297, %v4993
        %v5052 = vadd.f32 %v4298, %v4998
        %v5053 = vadd.f32 %v4299, %v5001
        %v5054 = vadd.f32 %v4300, %v5006
        %v5055 = vadd.f32 %v4301, %v5009
        %v5056 = vadd.f32 %v4302, %v5014
        %v5057 = vadd.f32 %v4303, %v5017
        %v5058 = vadd.f32 %v4304, %v5022
        %v5059 = vadd.f32 %v4305, %v5025
        %v5060 = vld [vmem:[%s3919] sm:$0xe]
        %v5061 = vld [vmem:[%s3919 + $0xc] sm:$0xe]
        %v5062 = vld [vmem:[%s3919 + $0x18] sm:$0xe]
        %v5063 = vld [vmem:[%s3919 + $0x24] sm:$0xe]
        %v5064 = vld [vmem:[%s3919 + $0x30] sm:$0xe]
        %v5065 = vld [vmem:[%s3919 + $0x3c] sm:$0xe]
        %v5066 = vld [vmem:[%s3919 + $0x48] sm:$0xe]
        %v5067 = vld [vmem:[%s3919 + $0x54] sm:$0xe]
        %v5068 = vld [vmem:[%s3919 + $0x60] sm:$0xe]
        %v5069 = vld [vmem:[%s3919 + $0x6c] sm:$0xe]
        %v5070 = vld [vmem:[%s3919 + $0x78] sm:$0xe]
        %v5071 = vld [vmem:[%s3919 + $0x84] sm:$0xe]
        %v5072 = vld [vmem:[%s3919 + $0x90] sm:$0xe]
        %v5073 = vld [vmem:[%s3919 + $0x9c] sm:$0xe]
        %v5074 = vld [vmem:[%s3919 + $0xa8] sm:$0xe]
        %v5075 = vld [vmem:[%s3919 + $0xb4] sm:$0xe]
        %v5124 = vrot.slane %v5060, 5
        %v5125 = vrot.slane %v5124, 4
        %v5126 = vrot.slane %v4307, 5
        %v5127 = vsel %vm1846, %v5125, %v5126
        %v5128 = vrot.slane %v5126, 4
        %v5129 = vrot.slane %v4308, 5
        %v5130 = vsel %vm1846, %v5128, %v5129
        %v5131 = vrot.slane %v5061, 5
        %v5132 = vrot.slane %v5131, 4
        %v5133 = vrot.slane %v4310, 5
        %v5134 = vsel %vm1846, %v5132, %v5133
        %v5135 = vrot.slane %v5133, 4
        %v5136 = vrot.slane %v4311, 5
        %v5137 = vsel %vm1846, %v5135, %v5136
        %v5138 = vrot.slane %v5062, 5
        %v5139 = vrot.slane %v5138, 4
        %v5140 = vrot.slane %v4313, 5
        %v5141 = vsel %vm1846, %v5139, %v5140
        %v5142 = vrot.slane %v5140, 4
        %v5143 = vrot.slane %v4314, 5
        %v5144 = vsel %vm1846, %v5142, %v5143
        %v5145 = vrot.slane %v5063, 5
        %v5146 = vrot.slane %v5145, 4
        %v5147 = vrot.slane %v4316, 5
        %v5148 = vsel %vm1846, %v5146, %v5147
        %v5149 = vrot.slane %v5147, 4
        %v5150 = vrot.slane %v4317, 5
        %v5151 = vsel %vm1846, %v5149, %v5150
        %v5152 = vrot.slane %v5064, 5
        %v5153 = vrot.slane %v5152, 4
        %v5154 = vrot.slane %v4319, 5
        %v5155 = vsel %vm1846, %v5153, %v5154
        %v5156 = vrot.slane %v5154, 4
        %v5157 = vrot.slane %v4320, 5
        %v5158 = vsel %vm1846, %v5156, %v5157
        %v5159 = vrot.slane %v5065, 5
        %v5160 = vrot.slane %v5159, 4
        %v5161 = vrot.slane %v4322, 5
        %v5162 = vsel %vm1846, %v5160, %v5161
        %v5163 = vrot.slane %v5161, 4
        %v5164 = vrot.slane %v4323, 5
        %v5165 = vsel %vm1846, %v5163, %v5164
        %v5166 = vrot.slane %v5066, 5
        %v5167 = vrot.slane %v5166, 4
        %v5168 = vrot.slane %v4325, 5
        %v5169 = vsel %vm1846, %v5167, %v5168
        %v5170 = vrot.slane %v5168, 4
        %v5171 = vrot.slane %v4326, 5
        %v5172 = vsel %vm1846, %v5170, %v5171
        %v5173 = vrot.slane %v5067, 5
        %v5174 = vrot.slane %v5173, 4
        %v5175 = vrot.slane %v4328, 5
        %v5176 = vsel %vm1846, %v5174, %v5175
        %v5177 = vrot.slane %v5175, 4
        %v5178 = vrot.slane %v4329, 5
        %v5179 = vsel %vm1846, %v5177, %v5178
        %v5180 = vrot.slane %v5068, 5
        %v5181 = vrot.slane %v5180, 4
        %v5182 = vrot.slane %v4331, 5
        %v5183 = vsel %vm1846, %v5181, %v5182
        %v5184 = vrot.slane %v5182, 4
        %v5185 = vrot.slane %v4332, 5
        %v5186 = vsel %vm1846, %v5184, %v5185
        %v5187 = vrot.slane %v5069, 5
        %v5188 = vrot.slane %v5187, 4
        %v5189 = vrot.slane %v4334, 5
        %v5190 = vsel %vm1846, %v5188, %v5189
        %v5191 = vrot.slane %v5189, 4
        %v5192 = vrot.slane %v4335, 5
        %v5193 = vsel %vm1846, %v5191, %v5192
        %v5194 = vrot.slane %v5070, 5
        %v5195 = vrot.slane %v5194, 4
        %v5196 = vrot.slane %v4337, 5
        %v5197 = vsel %vm1846, %v5195, %v5196
        %v5198 = vrot.slane %v5196, 4
        %v5199 = vrot.slane %v4338, 5
        %v5200 = vsel %vm1846, %v5198, %v5199
        %v5201 = vrot.slane %v5071, 5
        %v5202 = vrot.slane %v5201, 4
        %v5203 = vrot.slane %v4340, 5
        %v5204 = vsel %vm1846, %v5202, %v5203
        %v5205 = vrot.slane %v5203, 4
        %v5206 = vrot.slane %v4341, 5
        %v5207 = vsel %vm1846, %v5205, %v5206
        %v5208 = vrot.slane %v5072, 5
        %v5209 = vrot.slane %v5208, 4
        %v5210 = vrot.slane %v4343, 5
        %v5211 = vsel %vm1846, %v5209, %v5210
        %v5212 = vrot.slane %v5210, 4
        %v5213 = vrot.slane %v4344, 5
        %v5214 = vsel %vm1846, %v5212, %v5213
        %v5215 = vrot.slane %v5073, 5
        %v5216 = vrot.slane %v5215, 4
        %v5217 = vrot.slane %v4346, 5
        %v5218 = vsel %vm1846, %v5216, %v5217
        %v5219 = vrot.slane %v5217, 4
        %v5220 = vrot.slane %v4347, 5
        %v5221 = vsel %vm1846, %v5219, %v5220
        %v5222 = vrot.slane %v5074, 5
        %v5223 = vrot.slane %v5222, 4
        %v5224 = vrot.slane %v4349, 5
        %v5225 = vsel %vm1846, %v5223, %v5224
        %v5226 = vrot.slane %v5224, 4
        %v5227 = vrot.slane %v4350, 5
        %v5228 = vsel %vm1846, %v5226, %v5227
        %v5229 = vrot.slane %v5075, 5
        %v5230 = vrot.slane %v5229, 4
        %v5231 = vrot.slane %v4352, 5
        %v5232 = vsel %vm1846, %v5230, %v5231
        %v5233 = vrot.slane %v5231, 4
        %v5234 = vrot.slane %v4353, 5
        %v5235 = vsel %vm1846, %v5233, %v5234
        %s5236 = scalar_lea.vmem %s1, 256
        %v5237 = vld [vmem:[%s5236] sm:$0xf]
        %v5238 = vld [vmem:[%s5236 + $0x4] sm:$0xf]
        %v5239 = vld [vmem:[%s5236 + $0x8] sm:$0xf]
        %v5240 = vld [vmem:[%s5236 + $0xc] sm:$0xf]
        %v5241 = vld [vmem:[%s5236 + $0x10] sm:$0xf]
        %v5242 = vld [vmem:[%s5236 + $0x14] sm:$0xf]
        %v5243 = vld [vmem:[%s5236 + $0x18] sm:$0xf]
        %v5244 = vld [vmem:[%s5236 + $0x1c] sm:$0xf]
        %v5245 = vunpack.c.l.b16 %v5127
        %v5246 = vunpack.c.l.b16 %v5130
        %v5247 = vunpack.c.l.b16 %v5134
        %v5248 = vunpack.c.l.b16 %v5137
        %v5249 = vunpack.c.l.b16 %v5141
        %v5250 = vunpack.c.l.b16 %v5144
        %v5251 = vunpack.c.l.b16 %v5148
        %v5252 = vunpack.c.l.b16 %v5151
        %v5253 = vunpack.c.l.b16 %v5155
        %v5254 = vunpack.c.l.b16 %v5158
        %v5255 = vunpack.c.l.b16 %v5162
        %v5256 = vunpack.c.l.b16 %v5165
        %v5257 = vunpack.c.l.b16 %v5169
        %v5258 = vunpack.c.l.b16 %v5172
        %v5259 = vunpack.c.l.b16 %v5176
        %v5260 = vunpack.c.l.b16 %v5179
        %v5261 = vunpack.c.l.b16 %v5183
        %v5262 = vunpack.c.l.b16 %v5186
        %v5263 = vunpack.c.l.b16 %v5190
        %v5264 = vunpack.c.l.b16 %v5193
        %v5265 = vunpack.c.l.b16 %v5197
        %v5266 = vunpack.c.l.b16 %v5200
        %v5267 = vunpack.c.l.b16 %v5204
        %v5268 = vunpack.c.l.b16 %v5207
        %v5269 = vunpack.c.l.b16 %v5211
        %v5270 = vunpack.c.l.b16 %v5214
        %v5271 = vunpack.c.l.b16 %v5218
        %v5272 = vunpack.c.l.b16 %v5221
        %v5273 = vunpack.c.l.b16 %v5225
        %v5274 = vunpack.c.l.b16 %v5228
        %v5275 = vunpack.c.l.b16 %v5232
        %v5276 = vunpack.c.l.b16 %v5235
        %v5277 = vpack.c.b16 %v5246, %v5245
        %v5278 = vpack.c.b16 %v5248, %v5247
        %v5279 = vpack.c.b16 %v5250, %v5249
        %v5280 = vpack.c.b16 %v5252, %v5251
        %v5281 = vpack.c.b16 %v5254, %v5253
        %v5282 = vpack.c.b16 %v5256, %v5255
        %v5283 = vpack.c.b16 %v5258, %v5257
        %v5284 = vpack.c.b16 %v5260, %v5259
        %v5285 = vpack.c.b16 %v5262, %v5261
        %v5286 = vpack.c.b16 %v5264, %v5263
        %v5287 = vpack.c.b16 %v5266, %v5265
        %v5288 = vpack.c.b16 %v5268, %v5267
        %v5289 = vpack.c.b16 %v5270, %v5269
        %v5290 = vpack.c.b16 %v5272, %v5271
        %v5291 = vpack.c.b16 %v5274, %v5273
        %v5292 = vpack.c.b16 %v5276, %v5275
        %v5301 = vunpack.c.l.b16 %v5237
        %v5302 = vunpack.c.l.b16 %v5238
        %v5303 = vunpack.c.l.b16 %v5239
        %v5304 = vunpack.c.l.b16 %v5240
        %v5305 = vunpack.c.l.b16 %v5241
        %v5306 = vunpack.c.l.b16 %v5242
        %v5307 = vunpack.c.l.b16 %v5243
        %v5308 = vunpack.c.l.b16 %v5244
        %v5309 = vpack.c.b16 %v5302, %v5301
        %v5310 = vpack.c.b16 %v5304, %v5303
        %v5311 = vpack.c.b16 %v5306, %v5305
        %v5312 = vpack.c.b16 %v5308, %v5307
        %v5318 = vsel %vm1273, %v5277, 0
        %v5321 = vsel %vm1273, %v5278, 0
        %v5324 = vsel %vm1273, %v5279, 0
        %v5327 = vsel %vm1273, %v5280, 0
        %v5330 = vsel %vm1273, %v5281, 0
        %v5333 = vsel %vm1273, %v5282, 0
        %v5336 = vsel %vm1273, %v5283, 0
        %v5339 = vsel %vm1273, %v5284, 0
        %v5342 = vsel %vm1273, %v5285, 0
        %v5345 = vsel %vm1273, %v5286, 0
        %v5348 = vsel %vm1273, %v5287, 0
        %v5351 = vsel %vm1273, %v5288, 0
        %v5354 = vsel %vm1273, %v5289, 0
        %v5357 = vsel %vm1273, %v5290, 0
        %v5360 = vsel %vm1273, %v5291, 0
        %v5363 = vsel %vm1273, %v5292, 0
        %5365 = vmatprep.subr.bf16.mxu0 0
        %5366 = vmatpush1.bf16.msra.mxu0 %v5309
        %5367 = vmatprep.subr.bf16.mxu0 0
        %5368 = vmatpush1.bf16.msra.mxu0 %v5310
        %5369 = vmatprep.subr.bf16.mxu0 0
        %5370 = vmatpush1.bf16.msra.mxu0 %v5311
        %5371 = vmatprep.subr.bf16.mxu0 0
        %5372 = vmatpush1.bf16.msra.mxu0 %v5312
        %5373 = vmatprep.subr.bf16.mxu0 0
        %5374 = vmatpush1.bf16.msra.mxu0 0
        %5375 = vmatprep.subr.bf16.mxu0 0
        %5376 = vmatpush1.bf16.msra.mxu0 0
        %5377 = vmatprep.subr.bf16.mxu0 0
        %5378 = vmatpush1.bf16.msra.mxu0 0
        %5379 = vmatprep.subr.bf16.mxu0 0
        %5380 = vmatpush1.bf16.msra.mxu0 0
        %5381 = vmatprep.subr.bf16.mxu0 0
        %5382 = vmatpush1.bf16.msra.mxu0 0
        %5383 = vmatprep.subr.bf16.mxu0 0
        %5384 = vmatpush1.bf16.msra.mxu0 0
        %5385 = vmatprep.subr.bf16.mxu0 0
        %5386 = vmatpush1.bf16.msra.mxu0 0
        %5387 = vmatprep.subr.bf16.mxu0 0
        %5388 = vmatpush1.bf16.msra.mxu0 0
        %5389 = vmatprep.subr.bf16.mxu0 0
        %5390 = vmatpush1.bf16.msra.mxu0 0
        %5391 = vmatprep.subr.bf16.mxu0 0
        %5392 = vmatpush1.bf16.msra.mxu0 0
        %5393 = vmatprep.subr.bf16.mxu0 0
        %5394 = vmatpush1.bf16.msra.mxu0 0
        %5395 = vmatprep.subr.bf16.mxu0 0
        %5396 = vmatpush1.bf16.msra.mxu0 0
        %5397 = vmatprep.mubr.bf16.mxu0 0
        %5398 = vmatmul.mubr.bf16.gmra.mrb[0].mxu0 %v5318
        %v5399 = vpop.f32.mrb[0].mxu0
        %v5400 = vadd.f32 0.0, %v5399
        %v5401 = vpop.f32.mrb[0].mxu0
        %v5402 = vpop.f32.mrb[0].mxu0
        %v5403 = vadd.f32 0.0, %v5402
        %v5404 = vpop.f32.mrb[0].mxu0
        %5405 = vmatprep.mubr.bf16.mxu0 0
        %5406 = vmatmul.mubr.bf16.gmra.mrb[0].mxu0 %v5321
        %v5407 = vpop.f32.mrb[0].mxu0
        %v5408 = vadd.f32 0.0, %v5407
        %v5409 = vpop.f32.mrb[0].mxu0
        %v5410 = vpop.f32.mrb[0].mxu0
        %v5411 = vadd.f32 0.0, %v5410
        %v5412 = vpop.f32.mrb[0].mxu0
        %5413 = vmatprep.mubr.bf16.mxu0 0
        %5414 = vmatmul.mubr.bf16.gmra.mrb[0].mxu0 %v5324
        %v5415 = vpop.f32.mrb[0].mxu0
        %v5416 = vadd.f32 0.0, %v5415
        %v5417 = vpop.f32.mrb[0].mxu0
        %v5418 = vpop.f32.mrb[0].mxu0
        %v5419 = vadd.f32 0.0, %v5418
        %v5420 = vpop.f32.mrb[0].mxu0
        %5421 = vmatprep.mubr.bf16.mxu0 0
        %5422 = vmatmul.mubr.bf16.gmra.mrb[0].mxu0 %v5327
        %v5423 = vpop.f32.mrb[0].mxu0
        %v5424 = vadd.f32 0.0, %v5423
        %v5425 = vpop.f32.mrb[0].mxu0
        %v5426 = vpop.f32.mrb[0].mxu0
        %v5427 = vadd.f32 0.0, %v5426
        %v5428 = vpop.f32.mrb[0].mxu0
        %5429 = vmatprep.mubr.bf16.mxu0 0
        %5430 = vmatmul.mubr.bf16.gmra.mrb[0].mxu0 %v5330
        %v5431 = vpop.f32.mrb[0].mxu0
        %v5432 = vadd.f32 0.0, %v5431
        %v5433 = vpop.f32.mrb[0].mxu0
        %v5434 = vpop.f32.mrb[0].mxu0
        %v5435 = vadd.f32 0.0, %v5434
        %v5436 = vpop.f32.mrb[0].mxu0
        %5437 = vmatprep.mubr.bf16.mxu0 0
        %5438 = vmatmul.mubr.bf16.gmra.mrb[0].mxu0 %v5333
        %v5439 = vpop.f32.mrb[0].mxu0
        %v5440 = vadd.f32 0.0, %v5439
        %v5441 = vpop.f32.mrb[0].mxu0
        %v5442 = vpop.f32.mrb[0].mxu0
        %v5443 = vadd.f32 0.0, %v5442
        %v5444 = vpop.f32.mrb[0].mxu0
        %5445 = vmatprep.mubr.bf16.mxu0 0
        %5446 = vmatmul.mubr.bf16.gmra.mrb[0].mxu0 %v5336
        %v5447 = vpop.f32.mrb[0].mxu0
        %v5448 = vadd.f32 0.0, %v5447
        %v5449 = vpop.f32.mrb[0].mxu0
        %v5450 = vpop.f32.mrb[0].mxu0
        %v5451 = vadd.f32 0.0, %v5450
        %v5452 = vpop.f32.mrb[0].mxu0
        %5453 = vmatprep.mubr.bf16.mxu0 0
        %5454 = vmatmul.mubr.bf16.gmra.mrb[0].mxu0 %v5339
        %v5455 = vpop.f32.mrb[0].mxu0
        %v5456 = vadd.f32 0.0, %v5455
        %v5457 = vpop.f32.mrb[0].mxu0
        %v5458 = vpop.f32.mrb[0].mxu0
        %v5459 = vadd.f32 0.0, %v5458
        %v5460 = vpop.f32.mrb[0].mxu0
        %5461 = vmatprep.mubr.bf16.mxu0 0
        %5462 = vmatmul.mubr.bf16.gmra.mrb[0].mxu0 %v5342
        %v5463 = vpop.f32.mrb[0].mxu0
        %v5464 = vadd.f32 0.0, %v5463
        %v5465 = vpop.f32.mrb[0].mxu0
        %v5466 = vpop.f32.mrb[0].mxu0
        %v5467 = vadd.f32 0.0, %v5466
        %v5468 = vpop.f32.mrb[0].mxu0
        %5469 = vmatprep.mubr.bf16.mxu0 0
        %5470 = vmatmul.mubr.bf16.gmra.mrb[0].mxu0 %v5345
        %v5471 = vpop.f32.mrb[0].mxu0
        %v5472 = vadd.f32 0.0, %v5471
        %v5473 = vpop.f32.mrb[0].mxu0
        %v5474 = vpop.f32.mrb[0].mxu0
        %v5475 = vadd.f32 0.0, %v5474
        %v5476 = vpop.f32.mrb[0].mxu0
        %5477 = vmatprep.mubr.bf16.mxu0 0
        %5478 = vmatmul.mubr.bf16.gmra.mrb[0].mxu0 %v5348
        %v5479 = vpop.f32.mrb[0].mxu0
        %v5480 = vadd.f32 0.0, %v5479
        %v5481 = vpop.f32.mrb[0].mxu0
        %v5482 = vpop.f32.mrb[0].mxu0
        %v5483 = vadd.f32 0.0, %v5482
        %v5484 = vpop.f32.mrb[0].mxu0
        %5485 = vmatprep.mubr.bf16.mxu0 0
        %5486 = vmatmul.mubr.bf16.gmra.mrb[0].mxu0 %v5351
        %v5487 = vpop.f32.mrb[0].mxu0
        %v5488 = vadd.f32 0.0, %v5487
        %v5489 = vpop.f32.mrb[0].mxu0
        %v5490 = vpop.f32.mrb[0].mxu0
        %v5491 = vadd.f32 0.0, %v5490
        %v5492 = vpop.f32.mrb[0].mxu0
        %5493 = vmatprep.mubr.bf16.mxu0 0
        %5494 = vmatmul.mubr.bf16.gmra.mrb[0].mxu0 %v5354
        %v5495 = vpop.f32.mrb[0].mxu0
        %v5496 = vadd.f32 0.0, %v5495
        %v5497 = vpop.f32.mrb[0].mxu0
        %v5498 = vpop.f32.mrb[0].mxu0
        %v5499 = vadd.f32 0.0, %v5498
        %v5500 = vpop.f32.mrb[0].mxu0
        %5501 = vmatprep.mubr.bf16.mxu0 0
        %5502 = vmatmul.mubr.bf16.gmra.mrb[0].mxu0 %v5357
        %v5503 = vpop.f32.mrb[0].mxu0
        %v5504 = vadd.f32 0.0, %v5503
        %v5505 = vpop.f32.mrb[0].mxu0
        %v5506 = vpop.f32.mrb[0].mxu0
        %v5507 = vadd.f32 0.0, %v5506
        %v5508 = vpop.f32.mrb[0].mxu0
        %5509 = vmatprep.mubr.bf16.mxu0 0
        %5510 = vmatmul.mubr.bf16.gmra.mrb[0].mxu0 %v5360
        %v5511 = vpop.f32.mrb[0].mxu0
        %v5512 = vadd.f32 0.0, %v5511
        %v5513 = vpop.f32.mrb[0].mxu0
        %v5514 = vpop.f32.mrb[0].mxu0
        %v5515 = vadd.f32 0.0, %v5514
        %v5516 = vpop.f32.mrb[0].mxu0
        %5517 = vmatprep.mubr.bf16.mxu0 0
        %5518 = vmatmul.mubr.bf16.gmra.mrb[0].mxu0 %v5363
        %v5519 = vpop.f32.mrb[0].mxu0
        %v5520 = vadd.f32 0.0, %v5519
        %v5521 = vpop.f32.mrb[0].mxu0
        %v5522 = vpop.f32.mrb[0].mxu0
        %v5523 = vadd.f32 0.0, %v5522
        %v5524 = vpop.f32.mrb[0].mxu0
        %5525 = vdwg.mxu0
        %v5526 = vadd.f32 %v5028, %v5400
        %v5527 = vadd.f32 %v5029, %v5403
        %v5528 = vadd.f32 %v5030, %v5408
        %v5529 = vadd.f32 %v5031, %v5411
        %v5530 = vadd.f32 %v5032, %v5416
        %v5531 = vadd.f32 %v5033, %v5419
        %v5532 = vadd.f32 %v5034, %v5424
        %v5533 = vadd.f32 %v5035, %v5427
        %v5534 = vadd.f32 %v5036, %v5432
        %v5535 = vadd.f32 %v5037, %v5435
        %v5536 = vadd.f32 %v5038, %v5440
        %v5537 = vadd.f32 %v5039, %v5443
        %v5538 = vadd.f32 %v5040, %v5448
        %v5539 = vadd.f32 %v5041, %v5451
        %v5540 = vadd.f32 %v5042, %v5456
        %v5541 = vadd.f32 %v5043, %v5459
        %v5542 = vadd.f32 %v5044, %v5464
        %v5543 = vadd.f32 %v5045, %v5467
        %v5544 = vadd.f32 %v5046, %v5472
        %v5545 = vadd.f32 %v5047, %v5475
        %v5546 = vadd.f32 %v5048, %v5480
        %v5547 = vadd.f32 %v5049, %v5483
        %v5548 = vadd.f32 %v5050, %v5488
        %v5549 = vadd.f32 %v5051, %v5491
        %v5550 = vadd.f32 %v5052, %v5496
        %v5551 = vadd.f32 %v5053, %v5499
        %v5552 = vadd.f32 %v5054, %v5504
        %v5553 = vadd.f32 %v5055, %v5507
        %v5554 = vadd.f32 %v5056, %v5512
        %v5555 = vadd.f32 %v5057, %v5515
        %v5556 = vadd.f32 %v5058, %v5520
        %v5557 = vadd.f32 %v5059, %v5523
        %v5558 = vld [vmem:[%s216] sm:$0xf]
        %v5559 = vld [vmem:[%s216 + $0x4] sm:$0xf]
        %v5560 = vld [vmem:[%s216 + $0x8] sm:$0xf]
        %v5561 = vld [vmem:[%s216 + $0xc] sm:$0xf]
        %v5562 = vld [vmem:[%s216 + $0x10] sm:$0xf]
        %v5563 = vld [vmem:[%s216 + $0x14] sm:$0xf]
        %v5564 = vld [vmem:[%s216 + $0x18] sm:$0xf]
        %v5565 = vld [vmem:[%s216 + $0x1c] sm:$0xf]
        %v5566 = vld [vmem:[%s216 + $0x20] sm:$0xf]
        %v5567 = vld [vmem:[%s216 + $0x24] sm:$0xf]
        %v5568 = vld [vmem:[%s216 + $0x28] sm:$0xf]
        %v5569 = vld [vmem:[%s216 + $0x2c] sm:$0xf]
        %v5570 = vld [vmem:[%s216 + $0x30] sm:$0xf]
        %v5571 = vld [vmem:[%s216 + $0x34] sm:$0xf]
        %v5572 = vld [vmem:[%s216 + $0x38] sm:$0xf]
        %v5573 = vld [vmem:[%s216 + $0x3c] sm:$0xf]
        %v5574 = vld [vmem:[%s216 + $0x40] sm:$0xf]
        %v5575 = vld [vmem:[%s216 + $0x44] sm:$0xf]
        %v5576 = vld [vmem:[%s216 + $0x48] sm:$0xf]
        %v5577 = vld [vmem:[%s216 + $0x4c] sm:$0xf]
        %v5578 = vld [vmem:[%s216 + $0x50] sm:$0xf]
        %v5579 = vld [vmem:[%s216 + $0x54] sm:$0xf]
        %v5580 = vld [vmem:[%s216 + $0x58] sm:$0xf]
        %v5581 = vld [vmem:[%s216 + $0x5c] sm:$0xf]
        %v5582 = vld [vmem:[%s216 + $0x60] sm:$0xf]
        %v5583 = vld [vmem:[%s216 + $0x64] sm:$0xf]
        %v5584 = vld [vmem:[%s216 + $0x68] sm:$0xf]
        %v5585 = vld [vmem:[%s216 + $0x6c] sm:$0xf]
        %v5586 = vld [vmem:[%s216 + $0x70] sm:$0xf]
        %v5587 = vld [vmem:[%s216 + $0x74] sm:$0xf]
        %v5588 = vld [vmem:[%s216 + $0x78] sm:$0xf]
        %v5589 = vld [vmem:[%s216 + $0x7c] sm:$0xf]
        %v5590 = vunpack.c.l.bf16 %v5558
        %v5591 = vunpack.c.l.bf16 %v5559
        %v5592 = vunpack.c.l.bf16 %v5560
        %v5593 = vunpack.c.l.bf16 %v5561
        %v5594 = vunpack.c.l.bf16 %v5562
        %v5595 = vunpack.c.l.bf16 %v5563
        %v5596 = vunpack.c.l.bf16 %v5564
        %v5597 = vunpack.c.l.bf16 %v5565
        %v5598 = vunpack.c.l.bf16 %v5566
        %v5599 = vunpack.c.l.bf16 %v5567
        %v5600 = vunpack.c.l.bf16 %v5568
        %v5601 = vunpack.c.l.bf16 %v5569
        %v5602 = vunpack.c.l.bf16 %v5570
        %v5603 = vunpack.c.l.bf16 %v5571
        %v5604 = vunpack.c.l.bf16 %v5572
        %v5605 = vunpack.c.l.bf16 %v5573
        %v5606 = vunpack.c.l.bf16 %v5574
        %v5607 = vunpack.c.l.bf16 %v5575
        %v5608 = vunpack.c.l.bf16 %v5576
        %v5609 = vunpack.c.l.bf16 %v5577
        %v5610 = vunpack.c.l.bf16 %v5578
        %v5611 = vunpack.c.l.bf16 %v5579
        %v5612 = vunpack.c.l.bf16 %v5580
        %v5613 = vunpack.c.l.bf16 %v5581
        %v5614 = vunpack.c.l.bf16 %v5582
        %v5615 = vunpack.c.l.bf16 %v5583
        %v5616 = vunpack.c.l.bf16 %v5584
        %v5617 = vunpack.c.l.bf16 %v5585
        %v5618 = vunpack.c.l.bf16 %v5586
        %v5619 = vunpack.c.l.bf16 %v5587
        %v5620 = vunpack.c.l.bf16 %v5588
        %v5621 = vunpack.c.l.bf16 %v5589
        %v5622 = vadd.f32 %v5526, %v5590
        %v5623 = vadd.f32 %v5527, %v5591
        %v5624 = vadd.f32 %v5528, %v5592
        %v5625 = vadd.f32 %v5529, %v5593
        %v5626 = vadd.f32 %v5530, %v5594
        %v5627 = vadd.f32 %v5531, %v5595
        %v5628 = vadd.f32 %v5532, %v5596
        %v5629 = vadd.f32 %v5533, %v5597
        %v5630 = vadd.f32 %v5534, %v5598
        %v5631 = vadd.f32 %v5535, %v5599
        %v5632 = vadd.f32 %v5536, %v5600
        %v5633 = vadd.f32 %v5537, %v5601
        %v5634 = vadd.f32 %v5538, %v5602
        %v5635 = vadd.f32 %v5539, %v5603
        %v5636 = vadd.f32 %v5540, %v5604
        %v5637 = vadd.f32 %v5541, %v5605
        %v5638 = vadd.f32 %v5542, %v5606
        %v5639 = vadd.f32 %v5543, %v5607
        %v5640 = vadd.f32 %v5544, %v5608
        %v5641 = vadd.f32 %v5545, %v5609
        %v5642 = vadd.f32 %v5546, %v5610
        %v5643 = vadd.f32 %v5547, %v5611
        %v5644 = vadd.f32 %v5548, %v5612
        %v5645 = vadd.f32 %v5549, %v5613
        %v5646 = vadd.f32 %v5550, %v5614
        %v5647 = vadd.f32 %v5551, %v5615
        %v5648 = vadd.f32 %v5552, %v5616
        %v5649 = vadd.f32 %v5553, %v5617
        %v5650 = vadd.f32 %v5554, %v5618
        %v5651 = vadd.f32 %v5555, %v5619
        %v5652 = vadd.f32 %v5556, %v5620
        %v5653 = vadd.f32 %v5557, %v5621
        %v5654 = vld [vmem:[%s3] sm:$0x1]
        %v5655 = vlaneseq
        %v5656 = vshrl.u32 %v5655, 7
        %v5657 = vsub.s32 0, %v5656
        %v5658 = vrot.slane %v5654, %v5657
        %v5659 = vmul.f32 %v5622, %v5658
        %v5660 = vmul.f32 %v5623, %v5658
        %v5661 = vmul.f32 %v5624, %v5658
        %v5662 = vmul.f32 %v5625, %v5658
        %v5663 = vmul.f32 %v5626, %v5658
        %v5664 = vmul.f32 %v5627, %v5658
        %v5665 = vmul.f32 %v5628, %v5658
        %v5666 = vmul.f32 %v5629, %v5658
        %v5667 = vmul.f32 %v5630, %v5658
        %v5668 = vmul.f32 %v5631, %v5658
        %v5669 = vmul.f32 %v5632, %v5658
        %v5670 = vmul.f32 %v5633, %v5658
        %v5671 = vmul.f32 %v5634, %v5658
        %v5672 = vmul.f32 %v5635, %v5658
        %v5673 = vmul.f32 %v5636, %v5658
        %v5674 = vmul.f32 %v5637, %v5658
        %v5675 = vmul.f32 %v5638, %v5658
        %v5676 = vmul.f32 %v5639, %v5658
        %v5677 = vmul.f32 %v5640, %v5658
        %v5678 = vmul.f32 %v5641, %v5658
        %v5679 = vmul.f32 %v5642, %v5658
        %v5680 = vmul.f32 %v5643, %v5658
        %v5681 = vmul.f32 %v5644, %v5658
        %v5682 = vmul.f32 %v5645, %v5658
        %v5683 = vmul.f32 %v5646, %v5658
        %v5684 = vmul.f32 %v5647, %v5658
        %v5685 = vmul.f32 %v5648, %v5658
        %v5686 = vmul.f32 %v5649, %v5658
        %v5687 = vmul.f32 %v5650, %v5658
        %v5688 = vmul.f32 %v5651, %v5658
        %v5689 = vmul.f32 %v5652, %v5658
        %v5690 = vmul.f32 %v5653, %v5658
        %v5691 = vld [vmem:[%s3 + $0x1] sm:$0x1]
        %v5692 = vlaneseq
        %v5693 = vshrl.u32 %v5692, 7
        %v5694 = vsub.s32 0, %v5693
        %v5695 = vrot.slane %v5691, %v5694
        %v5696 = vadd.f32 %v5659, %v5695
        %v5697 = vadd.f32 %v5660, %v5695
        %v5698 = vadd.f32 %v5661, %v5695
        %v5699 = vadd.f32 %v5662, %v5695
        %v5700 = vadd.f32 %v5663, %v5695
        %v5701 = vadd.f32 %v5664, %v5695
        %v5702 = vadd.f32 %v5665, %v5695
        %v5703 = vadd.f32 %v5666, %v5695
        %v5704 = vadd.f32 %v5667, %v5695
        %v5705 = vadd.f32 %v5668, %v5695
        %v5706 = vadd.f32 %v5669, %v5695
        %v5707 = vadd.f32 %v5670, %v5695
        %v5708 = vadd.f32 %v5671, %v5695
        %v5709 = vadd.f32 %v5672, %v5695
        %v5710 = vadd.f32 %v5673, %v5695
        %v5711 = vadd.f32 %v5674, %v5695
        %v5712 = vadd.f32 %v5675, %v5695
        %v5713 = vadd.f32 %v5676, %v5695
        %v5714 = vadd.f32 %v5677, %v5695
        %v5715 = vadd.f32 %v5678, %v5695
        %v5716 = vadd.f32 %v5679, %v5695
        %v5717 = vadd.f32 %v5680, %v5695
        %v5718 = vadd.f32 %v5681, %v5695
        %v5719 = vadd.f32 %v5682, %v5695
        %v5720 = vadd.f32 %v5683, %v5695
        %v5721 = vadd.f32 %v5684, %v5695
        %v5722 = vadd.f32 %v5685, %v5695
        %v5723 = vadd.f32 %v5686, %v5695
        %v5724 = vadd.f32 %v5687, %v5695
        %v5725 = vadd.f32 %v5688, %v5695
        %v5726 = vadd.f32 %v5689, %v5695
        %v5727 = vadd.f32 %v5690, %v5695
        %vm5728 = vcmp.gt.f32.partialorder %v5696, 0.0
        %vm5729 = vcmp.gt.f32.partialorder %v5697, 0.0
        %vm5730 = vcmp.gt.f32.partialorder %v5698, 0.0
        %vm5731 = vcmp.gt.f32.partialorder %v5699, 0.0
        %vm5732 = vcmp.gt.f32.partialorder %v5700, 0.0
        %vm5733 = vcmp.gt.f32.partialorder %v5701, 0.0
        %vm5734 = vcmp.gt.f32.partialorder %v5702, 0.0
        %vm5735 = vcmp.gt.f32.partialorder %v5703, 0.0
        %vm5736 = vcmp.gt.f32.partialorder %v5704, 0.0
        %vm5737 = vcmp.gt.f32.partialorder %v5705, 0.0
        %vm5738 = vcmp.gt.f32.partialorder %v5706, 0.0
        %vm5739 = vcmp.gt.f32.partialorder %v5707, 0.0
        %vm5740 = vcmp.gt.f32.partialorder %v5708, 0.0
        %vm5741 = vcmp.gt.f32.partialorder %v5709, 0.0
        %vm5742 = vcmp.gt.f32.partialorder %v5710, 0.0
        %vm5743 = vcmp.gt.f32.partialorder %v5711, 0.0
        %vm5744 = vcmp.gt.f32.partialorder %v5712, 0.0
        %vm5745 = vcmp.gt.f32.partialorder %v5713, 0.0
        %vm5746 = vcmp.gt.f32.partialorder %v5714, 0.0
        %vm5747 = vcmp.gt.f32.partialorder %v5715, 0.0
        %vm5748 = vcmp.gt.f32.partialorder %v5716, 0.0
        %vm5749 = vcmp.gt.f32.partialorder %v5717, 0.0
        %vm5750 = vcmp.gt.f32.partialorder %v5718, 0.0
        %vm5751 = vcmp.gt.f32.partialorder %v5719, 0.0
        %vm5752 = vcmp.gt.f32.partialorder %v5720, 0.0
        %vm5753 = vcmp.gt.f32.partialorder %v5721, 0.0
        %vm5754 = vcmp.gt.f32.partialorder %v5722, 0.0
        %vm5755 = vcmp.gt.f32.partialorder %v5723, 0.0
        %vm5756 = vcmp.gt.f32.partialorder %v5724, 0.0
        %vm5757 = vcmp.gt.f32.partialorder %v5725, 0.0
        %vm5758 = vcmp.gt.f32.partialorder %v5726, 0.0
        %vm5759 = vcmp.gt.f32.partialorder %v5727, 0.0
        %v5760 = vmul.f32 %v5696, 1.442695
        %v5761 = vpow.pop %v5760
        %v5762 = vmul.f32 %v5697, 1.442695
        %v5763 = vpow.pop %v5762
        %v5764 = vmul.f32 %v5698, 1.442695
        %v5765 = vpow.pop %v5764
        %v5766 = vmul.f32 %v5699, 1.442695
        %v5767 = vpow.pop %v5766
        %v5768 = vmul.f32 %v5700, 1.442695
        %v5769 = vpow.pop %v5768
        %v5770 = vmul.f32 %v5701, 1.442695
        %v5771 = vpow.pop %v5770
        %v5772 = vmul.f32 %v5702, 1.442695
        %v5773 = vpow.pop %v5772
        %v5774 = vmul.f32 %v5703, 1.442695
        %v5775 = vpow.pop %v5774
        %v5776 = vmul.f32 %v5704, 1.442695
        %v5777 = vpow.pop %v5776
        %v5778 = vmul.f32 %v5705, 1.442695
        %v5779 = vpow.pop %v5778
        %v5780 = vmul.f32 %v5706, 1.442695
        %v5781 = vpow.pop %v5780
        %v5782 = vmul.f32 %v5707, 1.442695
        %v5783 = vpow.pop %v5782
        %v5784 = vmul.f32 %v5708, 1.442695
        %v5785 = vpow.pop %v5784
        %v5786 = vmul.f32 %v5709, 1.442695
        %v5787 = vpow.pop %v5786
        %v5788 = vmul.f32 %v5710, 1.442695
        %v5789 = vpow.pop %v5788
        %v5790 = vmul.f32 %v5711, 1.442695
        %v5791 = vpow.pop %v5790
        %v5792 = vmul.f32 %v5712, 1.442695
        %v5793 = vpow.pop %v5792
        %v5794 = vmul.f32 %v5713, 1.442695
        %v5795 = vpow.pop %v5794
        %v5796 = vmul.f32 %v5714, 1.442695
        %v5797 = vpow.pop %v5796
        %v5798 = vmul.f32 %v5715, 1.442695
        %v5799 = vpow.pop %v5798
        %v5800 = vmul.f32 %v5716, 1.442695
        %v5801 = vpow.pop %v5800
        %v5802 = vmul.f32 %v5717, 1.442695
        %v5803 = vpow.pop %v5802
        %v5804 = vmul.f32 %v5718, 1.442695
        %v5805 = vpow.pop %v5804
        %v5806 = vmul.f32 %v5719, 1.442695
        %v5807 = vpow.pop %v5806
        %v5808 = vmul.f32 %v5720, 1.442695
        %v5809 = vpow.pop %v5808
        %v5810 = vmul.f32 %v5721, 1.442695
        %v5811 = vpow.pop %v5810
        %v5812 = vmul.f32 %v5722, 1.442695
        %v5813 = vpow.pop %v5812
        %v5814 = vmul.f32 %v5723, 1.442695
        %v5815 = vpow.pop %v5814
        %v5816 = vmul.f32 %v5724, 1.442695
        %v5817 = vpow.pop %v5816
        %v5818 = vmul.f32 %v5725, 1.442695
        %v5819 = vpow.pop %v5818
        %v5820 = vmul.f32 %v5726, 1.442695
        %v5821 = vpow.pop %v5820
        %v5822 = vmul.f32 %v5727, 1.442695
        %v5823 = vpow.pop %v5822
        %v5824 = vsub.f32 %v5761, 1.0
        %v5825 = vsub.f32 %v5763, 1.0
        %v5826 = vsub.f32 %v5765, 1.0
        %v5827 = vsub.f32 %v5767, 1.0
        %v5828 = vsub.f32 %v5769, 1.0
        %v5829 = vsub.f32 %v5771, 1.0
        %v5830 = vsub.f32 %v5773, 1.0
        %v5831 = vsub.f32 %v5775, 1.0
        %v5832 = vsub.f32 %v5777, 1.0
        %v5833 = vsub.f32 %v5779, 1.0
        %v5834 = vsub.f32 %v5781, 1.0
        %v5835 = vsub.f32 %v5783, 1.0
        %v5836 = vsub.f32 %v5785, 1.0
        %v5837 = vsub.f32 %v5787, 1.0
        %v5838 = vsub.f32 %v5789, 1.0
        %v5839 = vsub.f32 %v5791, 1.0
        %v5840 = vsub.f32 %v5793, 1.0
        %v5841 = vsub.f32 %v5795, 1.0
        %v5842 = vsub.f32 %v5797, 1.0
        %v5843 = vsub.f32 %v5799, 1.0
        %v5844 = vsub.f32 %v5801, 1.0
        %v5845 = vsub.f32 %v5803, 1.0
        %v5846 = vsub.f32 %v5805, 1.0
        %v5847 = vsub.f32 %v5807, 1.0
        %v5848 = vsub.f32 %v5809, 1.0
        %v5849 = vsub.f32 %v5811, 1.0
        %v5850 = vsub.f32 %v5813, 1.0
        %v5851 = vsub.f32 %v5815, 1.0
        %v5852 = vsub.f32 %v5817, 1.0
        %v5853 = vsub.f32 %v5819, 1.0
        %v5854 = vsub.f32 %v5821, 1.0
        %v5855 = vsub.f32 %v5823, 1.0
        %v5856 = vsel %vm5728, %v5696, %v5824
        %v5857 = vsel %vm5729, %v5697, %v5825
        %v5858 = vsel %vm5730, %v5698, %v5826
        %v5859 = vsel %vm5731, %v5699, %v5827
        %v5860 = vsel %vm5732, %v5700, %v5828
        %v5861 = vsel %vm5733, %v5701, %v5829
        %v5862 = vsel %vm5734, %v5702, %v5830
        %v5863 = vsel %vm5735, %v5703, %v5831
        %v5864 = vsel %vm5736, %v5704, %v5832
        %v5865 = vsel %vm5737, %v5705, %v5833
        %v5866 = vsel %vm5738, %v5706, %v5834
        %v5867 = vsel %vm5739, %v5707, %v5835
        %v5868 = vsel %vm5740, %v5708, %v5836
        %v5869 = vsel %vm5741, %v5709, %v5837
        %v5870 = vsel %vm5742, %v5710, %v5838
        %v5871 = vsel %vm5743, %v5711, %v5839
        %v5872 = vsel %vm5744, %v5712, %v5840
        %v5873 = vsel %vm5745, %v5713, %v5841
        %v5874 = vsel %vm5746, %v5714, %v5842
        %v5875 = vsel %vm5747, %v5715, %v5843
        %v5876 = vsel %vm5748, %v5716, %v5844
        %v5877 = vsel %vm5749, %v5717, %v5845
        %v5878 = vsel %vm5750, %v5718, %v5846
        %v5879 = vsel %vm5751, %v5719, %v5847
        %v5880 = vsel %vm5752, %v5720, %v5848
        %v5881 = vsel %vm5753, %v5721, %v5849
        %v5882 = vsel %vm5754, %v5722, %v5850
        %v5883 = vsel %vm5755, %v5723, %v5851
        %v5884 = vsel %vm5756, %v5724, %v5852
        %v5885 = vsel %vm5757, %v5725, %v5853
        %v5886 = vsel %vm5758, %v5726, %v5854
        %v5887 = vsel %vm5759, %v5727, %v5855
        %5888 = vst.msk [vmem:[%s206] sm:$0xff] %vm1273, %v5856
        %5889 = vst.msk [vmem:[%s206 + $0x8] sm:$0xff] %vm1273, %v5857
        %5890 = vst.msk [vmem:[%s206 + $0x10] sm:$0xff] %vm1273, %v5858
        %5891 = vst.msk [vmem:[%s206 + $0x18] sm:$0xff] %vm1273, %v5859
        %5892 = vst.msk [vmem:[%s206 + $0x20] sm:$0xff] %vm1273, %v5860
        %5893 = vst.msk [vmem:[%s206 + $0x28] sm:$0xff] %vm1273, %v5861
        %5894 = vst.msk [vmem:[%s206 + $0x30] sm:$0xff] %vm1273, %v5862
        %5895 = vst.msk [vmem:[%s206 + $0x38] sm:$0xff] %vm1273, %v5863
        %5896 = vst.msk [vmem:[%s206 + $0x40] sm:$0xff] %vm1273, %v5864
        %5897 = vst.msk [vmem:[%s206 + $0x48] sm:$0xff] %vm1273, %v5865
        %5898 = vst.msk [vmem:[%s206 + $0x50] sm:$0xff] %vm1273, %v5866
        %5899 = vst.msk [vmem:[%s206 + $0x58] sm:$0xff] %vm1273, %v5867
        %5900 = vst.msk [vmem:[%s206 + $0x60] sm:$0xff] %vm1273, %v5868
        %5901 = vst.msk [vmem:[%s206 + $0x68] sm:$0xff] %vm1273, %v5869
        %5902 = vst.msk [vmem:[%s206 + $0x70] sm:$0xff] %vm1273, %v5870
        %5903 = vst.msk [vmem:[%s206 + $0x78] sm:$0xff] %vm1273, %v5871
        %5904 = vst.msk [vmem:[%s206 + $0x80] sm:$0xff] %vm1273, %v5872
        %5905 = vst.msk [vmem:[%s206 + $0x88] sm:$0xff] %vm1273, %v5873
        %5906 = vst.msk [vmem:[%s206 + $0x90] sm:$0xff] %vm1273, %v5874
        %5907 = vst.msk [vmem:[%s206 + $0x98] sm:$0xff] %vm1273, %v5875
        %5908 = vst.msk [vmem:[%s206 + $0xa0] sm:$0xff] %vm1273, %v5876
        %5909 = vst.msk [vmem:[%s206 + $0xa8] sm:$0xff] %vm1273, %v5877
        %5910 = vst.msk [vmem:[%s206 + $0xb0] sm:$0xff] %vm1273, %v5878
        %5911 = vst.msk [vmem:[%s206 + $0xb8] sm:$0xff] %vm1273, %v5879
        %5912 = vst.msk [vmem:[%s206 + $0xc0] sm:$0xff] %vm1273, %v5880
        %5913 = vst.msk [vmem:[%s206 + $0xc8] sm:$0xff] %vm1273, %v5881
        %5914 = vst.msk [vmem:[%s206 + $0xd0] sm:$0xff] %vm1273, %v5882
        %5915 = vst.msk [vmem:[%s206 + $0xd8] sm:$0xff] %vm1273, %v5883
        %5916 = vst.msk [vmem:[%s206 + $0xe0] sm:$0xff] %vm1273, %v5884
        %5917 = vst.msk [vmem:[%s206 + $0xe8] sm:$0xff] %vm1273, %v5885
        %5918 = vst.msk [vmem:[%s206 + $0xf0] sm:$0xff] %vm1273, %v5886
        %5919 = vst.msk [vmem:[%s206 + $0xf8] sm:$0xff] %vm1273, %v5887
        %s5920 = sand.u32 %s120, 1
        %s5921 = scalar_lea.sflag [#allocation4], %s5920
        %s5922 = sand.u32 %s120, 1
        %s5923 = smul.addr %s5922, 256
        %s5924 = scalar_lea.vmem [#allocation3], %s5923
        // Predicated region
        $region37: #{res_up_forward.3} parent=35 // pred_check
          %p5925 = pneg %p130
        $region38: #{res_up_forward.3} parent=35 // pred_check_branch
          %5927 = sbr.rel (%p5925) target = $region40
        $region39: #{res_up_forward.3} parent=35 // pred_region
          %s5928 = smul.u32 32, %s18
          %s5930 = ssub.s32 4096, 4096
          %5931 = vsyncadd %s5921, %s5930
          %s5932 = smul.addr %s5928, 128
          %s5933 = scalar_lea.hbm %s4, %s5932
          %s5934 = sshll.u32 %s5924, 4
          %s5935 = int_to_ptr.vmem [resolvable:$true] %s5934
          %5940 = dma.vmem_to_hbm [thread:$0]  %s5935, 4096, %s5933, %s5921, 128, 128, 8
        $region40: #{res_up_forward.3} parent=35 // pred_fallthru
          _
      $region36: #{res_up_forward.3} parent=5 // pred_fallthru
        _
      %p5941 = scmp.le.s32.totalorder 2, %s13
      // Predicated region
      $region41: #{res_up_forward.3} parent=5 // pred_check
        %p5942 = pneg %p5941
      $region42: #{res_up_forward.3} parent=5 // pred_check_branch
        %5944 = sbr.rel (%p5942) target = $region44
      $region43: #{res_up_forward.3} parent=5 // pred_region
        %s5945 = ssub.s32 %s13, 2
        // Predicated region
        $region45: #{res_up_forward.3} parent=43 // pred_check
          %p5946 = pneg %p136
        $region46: #{res_up_forward.3} parent=43 // pred_check_branch
          %5948 = sbr.rel (%p5946) target = $region48
        $region47: #{res_up_forward.3} parent=43 // pred_region
          %s5949 = sand.u32 %s121, 1
          %s5950 = scalar_lea.sflag [#allocation4], %s5949
          %s5951 = sand.u32 %s121, 1
          %s5952 = smul.addr %s5951, 256
          %s5953 = scalar_lea.vmem [#allocation3], %s5952
          %5954 = dma.done %s5950, 4096
        $region48: #{res_up_forward.3} parent=43 // pred_fallthru
          _
      $region44: #{res_up_forward.3} parent=5 // pred_fallthru
        _
    $region6: #{res_up_forward.3} parent=1 // loop_footer
      %s17 = sadd.s32 1, %s13
    $region7: #{res_up_forward.3} parent=1 // loop_footer_branch
      %12 = sbr.rel target = $region3
    $region8: #{res_up_forward.3} parent=1 // loop_exit
      _
    %5955 = vsyncpa [#allocation4], 1
    %s5956 = scalar_lea.sflag [#allocation4], 1
    %5957 = vsyncpa %s5956, 1

</llo_original>
